<compile_context>
chip_gen: v5e
topology: v5e:2x2
jax: 0.10.0
libtpu: 0.0.40
codegen_flags: <defaults>
</compile_context>

<pallas_src>
import numpy as np
import jax
import jax.numpy as jnp
from jax import lax
from jax.experimental import pallas as pl
from jax.experimental.pallas import tpu as pltpu

NB = 8  # images processed per grid step (multiple of 8 -> sublane aligned)


# ------------------------------ fused kernel --------------------------------

def _net_kernel(x_ref, w1_ref, b1_ref, w2_ref, b2_ref,
                wfc1_ref, bfc1_ref, wfc2_ref, bfc2_ref, o_ref):
    # x_ref: (NB, 32, 128) bf16.  Per image, position 7*(y%4) + y//4 holds image
    # row y (mod-4 row grouping); rows 28..31 and columns 28..127 are zero.
    x = x_ref[...]
    nb = x.shape[0]
    f32 = jnp.float32

    # ---- conv1 + relu + horizontal half of maxpool#1 -------------------------
    # Output rows grouped by y mod 4: group g holds y = 4t+g at sublane t
    # (t = 0..5 valid, t = 6..7 junk, never read downstream).
    # Output column layout: col1(x, co) = 256*(x%2) + 20*(x//2) + co, so the
    # 2x2-pool horizontal partner of column c is exactly column c + 256.
    hq = []
    for g in range(4):
        taps = []
        for i in range(5):                       # conv kernel row i
            s = g + i                            # needed image row = 4t + s
            start = 7 * (s % 4) + s // 4         # position in mod-4 grouping
            taps.append(x[:, start:start + 8, :])            # (NB, 8, 128) bf16
        lhs = jnp.concatenate(taps, axis=-1).reshape(nb * 8, 640)   # K-fused
        a = jnp.dot(lhs, w1_ref[...], preferred_element_type=f32)
        a = jnp.maximum(a + b1_ref[...], 0.0).reshape(nb, 8, 512)
        # horizontal pool: partner 256 lanes away -> aligned slice max
        hq.append(jnp.maximum(a[:, :, 0:256], a[:, :, 256:512]))   # (NB, 8, 256)

    # vertical half of maxpool#1: conv1 rows 4t / 4t+1 -> pooled row 2t (pe),
    # rows 4t+2 / 4t+3 -> pooled row 2t+1 (po).  Columns = 20*xo + ci.
    pe = jnp.maximum(hq[0], hq[1])               # (NB, 8, 256) f32, rows yo = 2t
    po = jnp.maximum(hq[2], hq[3])               # rows yo = 2t+1

    # ---- conv2 + relu (single K-fused dot) ------------------------------------
    # Per-image output sublanes r=0..3 hold rows y2 = 2r; sublanes 4..7 hold
    # y2 = 2(r-4)+1.  Tap i needs pool1 row y2 + i.
    taps = []
    for i in range(5):
        a_ = i // 2
        if i % 2 == 0:
            top, bot = pe[:, a_:a_ + 4, :], po[:, a_:a_ + 4, :]
        else:
            top, bot = po[:, a_:a_ + 4, :], pe[:, a_ + 1:a_ + 5, :]
        taps.append(jnp.concatenate([top, bot], axis=1))     # (NB, 8, 256)
    lhs2 = jnp.concatenate(taps, axis=-1).reshape(nb * 8, 1280)
    lhs2 = lhs2.astype(jnp.bfloat16)
    a2 = jnp.dot(lhs2, w2_ref[...], preferred_element_type=f32)
    # output column layout: col2(x2, c2) = 256*(x2%2) + 50*(x2//2) + c2
    a2 = jnp.maximum(a2 + b2_ref[...], 0.0).reshape(nb, 8, 512)

    # ---- maxpool 2x2 (#2) ------------------------------------------------------
    v = jnp.maximum(a2[:, 0:4, :], a2[:, 4:8, :])       # rows: y2=2s vs y2=2s+1
    p2 = jnp.maximum(v[:, :, 0:256], v[:, :, 256:512])  # (NB, 4, 256), col=50*xo2+c2

    # ---- fc1 + relu (one K-fused dot over the 4 pooled rows) -------------------
    feats = jnp.concatenate([p2[:, s, :] for s in range(4)], axis=-1)  # (NB, 1024)
    feats = feats.astype(jnp.bfloat16)
    h = jnp.dot(feats, wfc1_ref[...], preferred_element_type=f32)
    h = jnp.maximum(h + bfc1_ref[...], 0.0).astype(jnp.bfloat16)       # (NB, 512)

    # ---- fc2 + log_softmax -----------------------------------------------------
    # Padded logit lanes (10..127) carry a -1e30 f32 bias -> vanish in max/sum-exp.
    logits = jnp.dot(h, wfc2_ref[...], preferred_element_type=f32) + bfc2_ref[...]
    m = jnp.max(logits, axis=-1, keepdims=True)
    z = logits - m
    lse = jnp.log(jnp.sum(jnp.exp(z), axis=-1, keepdims=True))
    o_ref[...] = z - lse                                   # (NB, 128) dense store


# ------------------------- host-side weight lowering -------------------------

def prepare_params(params):
    """Lower PyTorch-layout params into lane-dense, K-fused bf16 matrices (once)."""
    w1 = np.asarray(params["conv1_w"], np.float32)   # (20, 1, 5, 5)
    b1 = np.asarray(params["conv1_b"], np.float32)
    w2 = np.asarray(params["conv2_w"], np.float32)   # (50, 20, 5, 5)
    b2 = np.asarray(params["conv2_b"], np.float32)
    fw1 = np.asarray(params["fc1_w"], np.float32)    # (500, 800)
    fb1 = np.asarray(params["fc1_b"], np.float32)
    fw2 = np.asarray(params["fc2_w"], np.float32)    # (10, 500)
    fb2 = np.asarray(params["fc2_b"], np.float32)

    def col1(x, co):                                 # conv1 output columns
        return 256 * (x % 2) + 20 * (x // 2) + co

    def col2(x2, c2):                                # conv2 output columns
        return 256 * (x2 % 2) + 50 * (x2 // 2) + c2

    # conv1, K-fused over kernel rows i: row index = 128*i + (x + j)
    W1 = np.zeros((640, 512), np.float32)
    B1 = np.zeros((1, 512), np.float32)
    for x in range(24):
        for co in range(20):
            B1[0, col1(x, co)] = b1[co]
        for i in range(5):
            for j in range(5):
                W1[128 * i + x + j, col1(x, 0):col1(x, 0) + 20] = w1[:, 0, i, j]

    # conv2, K-fused: LHS tap-i block columns are 20*xo + ci (pool1 layout);
    # row index = 256*i + 20*(x2 + j) + ci ; output column = col2(x2, c2)
    W2 = np.zeros((1280, 512), np.float32)
    B2 = np.zeros((1, 512), np.float32)
    for x2 in range(8):
        for c2 in range(50):
            B2[0, col2(x2, c2)] = b2[c2]
        for i in range(5):
            for j in range(5):
                for ci in range(20):
                    W2[256 * i + 20 * (x2 + j) + ci,
                       col2(x2, 0):col2(x2, 0) + 50] = w2[:, ci, i, j]

    # fc1, K-fused over the 4 pooled rows s (= yo2): row index = 256*s + 50*xo2 + c2
    # PyTorch flatten index (NCHW) = c2*16 + yo2*4 + xo2.
    Wfc1 = np.zeros((1024, 512), np.float32)
    Bfc1 = np.zeros((1, 512), np.float32)
    Bfc1[0, :500] = fb1
    for s in range(4):
        for xo2 in range(4):
            for c2 in range(50):
                Wfc1[256 * s + 50 * xo2 + c2, :500] = fw1[:, c2 * 16 + s * 4 + xo2]

    # fc2: pad N 10 -> 128; padded columns carry a -1e30 bias (kept in f32).
    Wfc2 = np.zeros((512, 128), np.float32)
    Wfc2[:500, :10] = fw2.T
    Bfc2 = np.full((1, 128), -1e30, np.float32)
    Bfc2[0, :10] = fb2

    return {
        "W1": jnp.asarray(W1, jnp.bfloat16), "B1": jnp.asarray(B1),
        "W2": jnp.asarray(W2, jnp.bfloat16), "B2": jnp.asarray(B2),
        "Wfc1": jnp.asarray(Wfc1, jnp.bfloat16), "Bfc1": jnp.asarray(Bfc1),
        "Wfc2": jnp.asarray(Wfc2, jnp.bfloat16), "Bfc2": jnp.asarray(Bfc2),
    }


# --------------------------------- forward ----------------------------------

def net_forward(prep, x_nchw):
    n = x_nchw.shape[0]
    x = x_nchw[:, 0, :, :].astype(jnp.float32)                       # (N, 28, 28)
    # Group image rows by (row mod 4): position 7*r + q holds image row 4q + r,
    # so every in-kernel conv1 tap window is a contiguous 8-row slice.
    xg = jnp.concatenate([x[:, r::4, :] for r in range(4)], axis=1)  # (N, 28, 28)
    xg = jnp.pad(xg, ((0, 0), (0, 4), (0, 100))).astype(jnp.bfloat16)  # (N, 32, 128)

    n_pad = ((n + NB - 1) // NB) * NB
    if n_pad != n:
        xg = jnp.pad(xg, ((0, n_pad - n), (0, 0), (0, 0)))

    out = pl.pallas_call(
        _net_kernel,
        out_shape=jax.ShapeDtypeStruct((n_pad, 128), jnp.float32),
        grid=(n_pad // NB,),
        in_specs=[
            pl.BlockSpec((NB, 32, 128), lambda b: (b, 0, 0)),   # image block
            pl.BlockSpec((640, 512), lambda b: (0, 0)),         # W1 (resident)
            pl.BlockSpec((1, 512), lambda b: (0, 0)),           # B1
            pl.BlockSpec((1280, 512), lambda b: (0, 0)),        # W2
            pl.BlockSpec((1, 512), lambda b: (0, 0)),           # B2
            pl.BlockSpec((1024, 512), lambda b: (0, 0)),        # Wfc1
            pl.BlockSpec((1, 512), lambda b: (0, 0)),           # Bfc1
            pl.BlockSpec((512, 128), lambda b: (0, 0)),         # Wfc2
            pl.BlockSpec((1, 128), lambda b: (0, 0)),           # Bfc2
        ],
        out_specs=pl.BlockSpec((NB, 128), lambda b: (b, 0)),    # dense output block
        compiler_params=pltpu.CompilerParams(
            dimension_semantics=("parallel",),
            vmem_limit_bytes=32 * 1024 * 1024),   # ~10 MiB used; fits all gens
    )(xg, prep["W1"], prep["B1"], prep["W2"], prep["B2"],
      prep["Wfc1"], prep["Bfc1"], prep["Wfc2"], prep["Bfc2"])
    return out[:n, :10]


# ------------------------------ init & reference ----------------------------

def init_params(key):
    """Deterministic PyTorch-like uniform(-1/sqrt(fan_in), 1/sqrt(fan_in)) init."""
    ks = jax.random.split(key, 8)

    def u(k, shape, fan_in):
        bound = 1.0 / float(fan_in) ** 0.5
        return jax.random.uniform(k, shape, jnp.float32, -bound, bound)

    return {
        "conv1_w": u(ks[0], (20, 1, 5, 5), 1 * 5 * 5),      # (O, I, kh, kw)
        "conv1_b": u(ks[1], (20,), 1 * 5 * 5),
        "conv2_w": u(ks[2], (50, 20, 5, 5), 20 * 5 * 5),
        "conv2_b": u(ks[3], (50,), 20 * 5 * 5),
        "fc1_w": u(ks[4], (500, 800), 800),                 # (out, in) like nn.Linear
        "fc1_b": u(ks[5], (500,), 800),
        "fc2_w": u(ks[6], (10, 500), 500),
        "fc2_b": u(ks[7], (10,), 500),
    }


def reference_forward(params, x_nchw):
    """Pure-JAX f32 reference of the PyTorch forward (for validation)."""
    dn = ("NCHW", "OIHW", "NCHW")
    y = lax.conv_general_dilated(x_nchw.astype(jnp.float32), params["conv1_w"],
                                 (1, 1), "VALID", dimension_numbers=dn)
    y = jnp.maximum(y + params["conv1_b"][None, :, None, None], 0.0)
    y = lax.reduce_window(y, -jnp.inf, lax.max, (1, 1, 2, 2), (1, 1, 2, 2), "VALID")
    y = lax.conv_general_dilated(y, params["conv2_w"], (1, 1), "VALID",
                                 dimension_numbers=dn)
    y = jnp.maximum(y + params["conv2_b"][None, :, None, None], 0.0)
    y = lax.reduce_window(y, -jnp.inf, lax.max, (1, 1, 2, 2), (1, 1, 2, 2), "VALID")
    y = y.reshape(y.shape[0], -1)                          # (N, 800), NCHW order
    y = jnp.maximum(y @ params["fc1_w"].T + params["fc1_b"], 0.0)
    y = y @ params["fc2_w"].T + params["fc2_b"]
    return jax.nn.log_softmax(y, axis=1)


if __name__ == "__main__":
    key = jax.random.PRNGKey(0)
    pkey, xkey = jax.random.split(key)
    params = init_params(pkey)
    prep = prepare_params(params)       # weight lowering done once, outside jit

    # batch 16 -> grid of 2 steps of NB=8 images (exercises megacore split).
    x = jax.random.normal(xkey, (16, 1, 28, 28), jnp.float32)   # NCHW like PyTorch

    fwd = jax.jit(net_forward)
    out = jax.block_until_ready(fwd(prep, x))

    assert out.shape == (16, 10)
    probs_sum = jnp.exp(out).sum(axis=1)
    assert bool(jnp.all(jnp.abs(probs_sum - 1.0) < 1e-3)), "log_softmax check failed"

    ref = reference_forward(params, x)
    err = float(jnp.max(jnp.abs(out - ref)))
    # bf16 operands with f32 accumulation: expected error ~1e-2; a layout /
    # index bug would be >> 5e-2 (tightened from the previous 1e-1 bound).
    assert err < 5e-2, f"mismatch vs JAX reference: max abs err = {err}"
    print("KERNEL_OK")
</pallas_src>

<mosaic_0001>
module attributes {stable_mosaic.version = 11 : i64} {
  func.func @_net_kernel(%arg0: i32, %arg1: memref<8x32x128xbf16, #tpu.memory_space<vmem>>, %arg2: memref<640x512xbf16, #tpu.memory_space<vmem>>, %arg3: memref<1x512xf32, #tpu.memory_space<vmem>>, %arg4: memref<1280x512xbf16, #tpu.memory_space<vmem>>, %arg5: memref<1x512xf32, #tpu.memory_space<vmem>>, %arg6: memref<1024x512xbf16, #tpu.memory_space<vmem>>, %arg7: memref<1x512xf32, #tpu.memory_space<vmem>>, %arg8: memref<512x128xbf16, #tpu.memory_space<vmem>>, %arg9: memref<1x128xf32, #tpu.memory_space<vmem>>, %arg10: memref<8x128xf32, #tpu.memory_space<vmem>>) attributes {dimension_semantics = [#tpu.dimension_semantics<parallel>], iteration_bounds = array<i64: 2>, scalar_prefetch = 0 : i64, scratch_operands = 0 : i64, tpu.core_type = #tpu.core_type<tc>, window_params = [{transform_indices = @transform_0, window_bounds = array<i64: 8, 32, 128>}, {pipeline_mode = #tpu.pipeline_mode<synchronous>, transform_indices = @transform_1, window_bounds = array<i64: 640, 512>}, {pipeline_mode = #tpu.pipeline_mode<synchronous>, transform_indices = @transform_2, window_bounds = array<i64: 1, 512>}, {pipeline_mode = #tpu.pipeline_mode<synchronous>, transform_indices = @transform_3, window_bounds = array<i64: 1280, 512>}, {pipeline_mode = #tpu.pipeline_mode<synchronous>, transform_indices = @transform_4, window_bounds = array<i64: 1, 512>}, {pipeline_mode = #tpu.pipeline_mode<synchronous>, transform_indices = @transform_5, window_bounds = array<i64: 1024, 512>}, {pipeline_mode = #tpu.pipeline_mode<synchronous>, transform_indices = @transform_6, window_bounds = array<i64: 1, 512>}, {pipeline_mode = #tpu.pipeline_mode<synchronous>, transform_indices = @transform_7, window_bounds = array<i64: 512, 128>}, {pipeline_mode = #tpu.pipeline_mode<synchronous>, transform_indices = @transform_8, window_bounds = array<i64: 1, 128>}, {transform_indices = @transform_9, window_bounds = array<i64: 8, 128>}]} {
    %c0 = arith.constant 0 : index
    %c0_0 = arith.constant 0 : index
    %c0_1 = arith.constant 0 : index
    %0 = vector.load %arg1[%c0, %c0_0, %c0_1] : memref<8x32x128xbf16, #tpu.memory_space<vmem>>, vector<8x32x128xbf16>
    %1 = vector.extract_strided_slice %0 {offsets = [0, 0, 0], sizes = [8, 8, 128], strides = [1, 1, 1]} : vector<8x32x128xbf16> to vector<8x8x128xbf16>
    %2 = vector.extract_strided_slice %0 {offsets = [0, 7, 0], sizes = [8, 8, 128], strides = [1, 1, 1]} : vector<8x32x128xbf16> to vector<8x8x128xbf16>
    %3 = vector.extract_strided_slice %0 {offsets = [0, 14, 0], sizes = [8, 8, 128], strides = [1, 1, 1]} : vector<8x32x128xbf16> to vector<8x8x128xbf16>
    %4 = vector.extract_strided_slice %0 {offsets = [0, 21, 0], sizes = [8, 8, 128], strides = [1, 1, 1]} : vector<8x32x128xbf16> to vector<8x8x128xbf16>
    %5 = vector.extract_strided_slice %0 {offsets = [0, 1, 0], sizes = [8, 8, 128], strides = [1, 1, 1]} : vector<8x32x128xbf16> to vector<8x8x128xbf16>
    %6 = tpu.concatenate %1, %2, %3, %4, %5 in 2 : vector<8x8x128xbf16>, vector<8x8x128xbf16>, vector<8x8x128xbf16>, vector<8x8x128xbf16>, vector<8x8x128xbf16> -> vector<8x8x640xbf16>
    %7 = vector.shape_cast %6 : vector<8x8x640xbf16> to vector<64x640xbf16>
    %c0_2 = arith.constant 0 : index
    %c0_3 = arith.constant 0 : index
    %8 = vector.load %arg2[%c0_2, %c0_3] : memref<640x512xbf16, #tpu.memory_space<vmem>>, vector<640x512xbf16>
    %cst = arith.constant dense<0.000000e+00> : vector<64x512xf32>
    %9 = tpu.matmul %7, %8, %cst {dimension_numbers = #tpu.dot_dimension_numbers<[1], [0], [0], [1], [0, 0, 1, 1], [], []>} : vector<64x640xbf16>, vector<640x512xbf16>, vector<64x512xf32> -> vector<64x512xf32>
    %c0_4 = arith.constant 0 : index
    %c0_5 = arith.constant 0 : index
    %10 = vector.load %arg3[%c0_4, %c0_5] : memref<1x512xf32, #tpu.memory_space<vmem>>, vector<1x512xf32>
    %11 = vector.broadcast %10 : vector<1x512xf32> to vector<64x512xf32>
    %12 = arith.addf %9, %11 : vector<64x512xf32>
    %cst_6 = arith.constant 0.000000e+00 : f32
    %13 = vector.broadcast %cst_6 : f32 to vector<64x512xf32>
    %14 = arith.maximumf %12, %13 : vector<64x512xf32>
    %15 = vector.shape_cast %14 : vector<64x512xf32> to vector<8x8x512xf32>
    %16 = vector.extract_strided_slice %15 {offsets = [0, 0, 0], sizes = [8, 8, 256], strides = [1, 1, 1]} : vector<8x8x512xf32> to vector<8x8x256xf32>
    %17 = vector.extract_strided_slice %15 {offsets = [0, 0, 256], sizes = [8, 8, 256], strides = [1, 1, 1]} : vector<8x8x512xf32> to vector<8x8x256xf32>
    %18 = arith.maximumf %16, %17 : vector<8x8x256xf32>
    %19 = vector.extract_strided_slice %0 {offsets = [0, 7, 0], sizes = [8, 8, 128], strides = [1, 1, 1]} : vector<8x32x128xbf16> to vector<8x8x128xbf16>
    %20 = vector.extract_strided_slice %0 {offsets = [0, 14, 0], sizes = [8, 8, 128], strides = [1, 1, 1]} : vector<8x32x128xbf16> to vector<8x8x128xbf16>
    %21 = vector.extract_strided_slice %0 {offsets = [0, 21, 0], sizes = [8, 8, 128], strides = [1, 1, 1]} : vector<8x32x128xbf16> to vector<8x8x128xbf16>
    %22 = vector.extract_strided_slice %0 {offsets = [0, 1, 0], sizes = [8, 8, 128], strides = [1, 1, 1]} : vector<8x32x128xbf16> to vector<8x8x128xbf16>
    %23 = vector.extract_strided_slice %0 {offsets = [0, 8, 0], sizes = [8, 8, 128], strides = [1, 1, 1]} : vector<8x32x128xbf16> to vector<8x8x128xbf16>
    %24 = tpu.concatenate %19, %20, %21, %22, %23 in 2 : vector<8x8x128xbf16>, vector<8x8x128xbf16>, vector<8x8x128xbf16>, vector<8x8x128xbf16>, vector<8x8x128xbf16> -> vector<8x8x640xbf16>
    %25 = vector.shape_cast %24 : vector<8x8x640xbf16> to vector<64x640xbf16>
    %c0_7 = arith.constant 0 : index
    %c0_8 = arith.constant 0 : index
    %26 = vector.load %arg2[%c0_7, %c0_8] : memref<640x512xbf16, #tpu.memory_space<vmem>>, vector<640x512xbf16>
    %cst_9 = arith.constant dense<0.000000e+00> : vector<64x512xf32>
    %27 = tpu.matmul %25, %26, %cst_9 {dimension_numbers = #tpu.dot_dimension_numbers<[1], [0], [0], [1], [0, 0, 1, 1], [], []>} : vector<64x640xbf16>, vector<640x512xbf16>, vector<64x512xf32> -> vector<64x512xf32>
    %c0_10 = arith.constant 0 : index
    %c0_11 = arith.constant 0 : index
    %28 = vector.load %arg3[%c0_10, %c0_11] : memref<1x512xf32, #tpu.memory_space<vmem>>, vector<1x512xf32>
    %29 = vector.broadcast %28 : vector<1x512xf32> to vector<64x512xf32>
    %30 = arith.addf %27, %29 : vector<64x512xf32>
    %cst_12 = arith.constant 0.000000e+00 : f32
    %31 = vector.broadcast %cst_12 : f32 to vector<64x512xf32>
    %32 = arith.maximumf %30, %31 : vector<64x512xf32>
    %33 = vector.shape_cast %32 : vector<64x512xf32> to vector<8x8x512xf32>
    %34 = vector.extract_strided_slice %33 {offsets = [0, 0, 0], sizes = [8, 8, 256], strides = [1, 1, 1]} : vector<8x8x512xf32> to vector<8x8x256xf32>
    %35 = vector.extract_strided_slice %33 {offsets = [0, 0, 256], sizes = [8, 8, 256], strides = [1, 1, 1]} : vector<8x8x512xf32> to vector<8x8x256xf32>
    %36 = arith.maximumf %34, %35 : vector<8x8x256xf32>
    %37 = vector.extract_strided_slice %0 {offsets = [0, 14, 0], sizes = [8, 8, 128], strides = [1, 1, 1]} : vector<8x32x128xbf16> to vector<8x8x128xbf16>
    %38 = vector.extract_strided_slice %0 {offsets = [0, 21, 0], sizes = [8, 8, 128], strides = [1, 1, 1]} : vector<8x32x128xbf16> to vector<8x8x128xbf16>
    %39 = vector.extract_strided_slice %0 {offsets = [0, 1, 0], sizes = [8, 8, 128], strides = [1, 1, 1]} : vector<8x32x128xbf16> to vector<8x8x128xbf16>
    %40 = vector.extract_strided_slice %0 {offsets = [0, 8, 0], sizes = [8, 8, 128], strides = [1, 1, 1]} : vector<8x32x128xbf16> to vector<8x8x128xbf16>
    %41 = vector.extract_strided_slice %0 {offsets = [0, 15, 0], sizes = [8, 8, 128], strides = [1, 1, 1]} : vector<8x32x128xbf16> to vector<8x8x128xbf16>
    %42 = tpu.concatenate %37, %38, %39, %40, %41 in 2 : vector<8x8x128xbf16>, vector<8x8x128xbf16>, vector<8x8x128xbf16>, vector<8x8x128xbf16>, vector<8x8x128xbf16> -> vector<8x8x640xbf16>
    %43 = vector.shape_cast %42 : vector<8x8x640xbf16> to vector<64x640xbf16>
    %c0_13 = arith.constant 0 : index
    %c0_14 = arith.constant 0 : index
    %44 = vector.load %arg2[%c0_13, %c0_14] : memref<640x512xbf16, #tpu.memory_space<vmem>>, vector<640x512xbf16>
    %cst_15 = arith.constant dense<0.000000e+00> : vector<64x512xf32>
    %45 = tpu.matmul %43, %44, %cst_15 {dimension_numbers = #tpu.dot_dimension_numbers<[1], [0], [0], [1], [0, 0, 1, 1], [], []>} : vector<64x640xbf16>, vector<640x512xbf16>, vector<64x512xf32> -> vector<64x512xf32>
    %c0_16 = arith.constant 0 : index
    %c0_17 = arith.constant 0 : index
    %46 = vector.load %arg3[%c0_16, %c0_17] : memref<1x512xf32, #tpu.memory_space<vmem>>, vector<1x512xf32>
    %47 = vector.broadcast %46 : vector<1x512xf32> to vector<64x512xf32>
    %48 = arith.addf %45, %47 : vector<64x512xf32>
    %cst_18 = arith.constant 0.000000e+00 : f32
    %49 = vector.broadcast %cst_18 : f32 to vector<64x512xf32>
    %50 = arith.maximumf %48, %49 : vector<64x512xf32>
    %51 = vector.shape_cast %50 : vector<64x512xf32> to vector<8x8x512xf32>
    %52 = vector.extract_strided_slice %51 {offsets = [0, 0, 0], sizes = [8, 8, 256], strides = [1, 1, 1]} : vector<8x8x512xf32> to vector<8x8x256xf32>
    %53 = vector.extract_strided_slice %51 {offsets = [0, 0, 256], sizes = [8, 8, 256], strides = [1, 1, 1]} : vector<8x8x512xf32> to vector<8x8x256xf32>
    %54 = arith.maximumf %52, %53 : vector<8x8x256xf32>
    %55 = vector.extract_strided_slice %0 {offsets = [0, 21, 0], sizes = [8, 8, 128], strides = [1, 1, 1]} : vector<8x32x128xbf16> to vector<8x8x128xbf16>
    %56 = vector.extract_strided_slice %0 {offsets = [0, 1, 0], sizes = [8, 8, 128], strides = [1, 1, 1]} : vector<8x32x128xbf16> to vector<8x8x128xbf16>
    %57 = vector.extract_strided_slice %0 {offsets = [0, 8, 0], sizes = [8, 8, 128], strides = [1, 1, 1]} : vector<8x32x128xbf16> to vector<8x8x128xbf16>
    %58 = vector.extract_strided_slice %0 {offsets = [0, 15, 0], sizes = [8, 8, 128], strides = [1, 1, 1]} : vector<8x32x128xbf16> to vector<8x8x128xbf16>
    %59 = vector.extract_strided_slice %0 {offsets = [0, 22, 0], sizes = [8, 8, 128], strides = [1, 1, 1]} : vector<8x32x128xbf16> to vector<8x8x128xbf16>
    %60 = tpu.concatenate %55, %56, %57, %58, %59 in 2 : vector<8x8x128xbf16>, vector<8x8x128xbf16>, vector<8x8x128xbf16>, vector<8x8x128xbf16>, vector<8x8x128xbf16> -> vector<8x8x640xbf16>
    %61 = vector.shape_cast %60 : vector<8x8x640xbf16> to vector<64x640xbf16>
    %c0_19 = arith.constant 0 : index
    %c0_20 = arith.constant 0 : index
    %62 = vector.load %arg2[%c0_19, %c0_20] : memref<640x512xbf16, #tpu.memory_space<vmem>>, vector<640x512xbf16>
    %cst_21 = arith.constant dense<0.000000e+00> : vector<64x512xf32>
    %63 = tpu.matmul %61, %62, %cst_21 {dimension_numbers = #tpu.dot_dimension_numbers<[1], [0], [0], [1], [0, 0, 1, 1], [], []>} : vector<64x640xbf16>, vector<640x512xbf16>, vector<64x512xf32> -> vector<64x512xf32>
    %c0_22 = arith.constant 0 : index
    %c0_23 = arith.constant 0 : index
    %64 = vector.load %arg3[%c0_22, %c0_23] : memref<1x512xf32, #tpu.memory_space<vmem>>, vector<1x512xf32>
    %65 = vector.broadcast %64 : vector<1x512xf32> to vector<64x512xf32>
    %66 = arith.addf %63, %65 : vector<64x512xf32>
    %cst_24 = arith.constant 0.000000e+00 : f32
    %67 = vector.broadcast %cst_24 : f32 to vector<64x512xf32>
    %68 = arith.maximumf %66, %67 : vector<64x512xf32>
    %69 = vector.shape_cast %68 : vector<64x512xf32> to vector<8x8x512xf32>
    %70 = vector.extract_strided_slice %69 {offsets = [0, 0, 0], sizes = [8, 8, 256], strides = [1, 1, 1]} : vector<8x8x512xf32> to vector<8x8x256xf32>
    %71 = vector.extract_strided_slice %69 {offsets = [0, 0, 256], sizes = [8, 8, 256], strides = [1, 1, 1]} : vector<8x8x512xf32> to vector<8x8x256xf32>
    %72 = arith.maximumf %70, %71 : vector<8x8x256xf32>
    %73 = arith.maximumf %18, %36 : vector<8x8x256xf32>
    %74 = arith.maximumf %54, %72 : vector<8x8x256xf32>
    %75 = vector.extract_strided_slice %73 {offsets = [0, 0, 0], sizes = [8, 4, 256], strides = [1, 1, 1]} : vector<8x8x256xf32> to vector<8x4x256xf32>
    %76 = vector.extract_strided_slice %74 {offsets = [0, 0, 0], sizes = [8, 4, 256], strides = [1, 1, 1]} : vector<8x8x256xf32> to vector<8x4x256xf32>
    %77 = tpu.concatenate %75, %76 in 1 : vector<8x4x256xf32>, vector<8x4x256xf32> -> vector<8x8x256xf32>
    %78 = vector.extract_strided_slice %74 {offsets = [0, 0, 0], sizes = [8, 4, 256], strides = [1, 1, 1]} : vector<8x8x256xf32> to vector<8x4x256xf32>
    %79 = vector.extract_strided_slice %73 {offsets = [0, 1, 0], sizes = [8, 4, 256], strides = [1, 1, 1]} : vector<8x8x256xf32> to vector<8x4x256xf32>
    %80 = tpu.concatenate %78, %79 in 1 : vector<8x4x256xf32>, vector<8x4x256xf32> -> vector<8x8x256xf32>
    %81 = vector.extract_strided_slice %73 {offsets = [0, 1, 0], sizes = [8, 4, 256], strides = [1, 1, 1]} : vector<8x8x256xf32> to vector<8x4x256xf32>
    %82 = vector.extract_strided_slice %74 {offsets = [0, 1, 0], sizes = [8, 4, 256], strides = [1, 1, 1]} : vector<8x8x256xf32> to vector<8x4x256xf32>
    %83 = tpu.concatenate %81, %82 in 1 : vector<8x4x256xf32>, vector<8x4x256xf32> -> vector<8x8x256xf32>
    %84 = vector.extract_strided_slice %74 {offsets = [0, 1, 0], sizes = [8, 4, 256], strides = [1, 1, 1]} : vector<8x8x256xf32> to vector<8x4x256xf32>
    %85 = vector.extract_strided_slice %73 {offsets = [0, 2, 0], sizes = [8, 4, 256], strides = [1, 1, 1]} : vector<8x8x256xf32> to vector<8x4x256xf32>
    %86 = tpu.concatenate %84, %85 in 1 : vector<8x4x256xf32>, vector<8x4x256xf32> -> vector<8x8x256xf32>
    %87 = vector.extract_strided_slice %73 {offsets = [0, 2, 0], sizes = [8, 4, 256], strides = [1, 1, 1]} : vector<8x8x256xf32> to vector<8x4x256xf32>
    %88 = vector.extract_strided_slice %74 {offsets = [0, 2, 0], sizes = [8, 4, 256], strides = [1, 1, 1]} : vector<8x8x256xf32> to vector<8x4x256xf32>
    %89 = tpu.concatenate %87, %88 in 1 : vector<8x4x256xf32>, vector<8x4x256xf32> -> vector<8x8x256xf32>
    %90 = tpu.concatenate %77, %80, %83, %86, %89 in 2 : vector<8x8x256xf32>, vector<8x8x256xf32>, vector<8x8x256xf32>, vector<8x8x256xf32>, vector<8x8x256xf32> -> vector<8x8x1280xf32>
    %91 = vector.shape_cast %90 : vector<8x8x1280xf32> to vector<64x1280xf32>
    %92 = arith.truncf %91 : vector<64x1280xf32> to vector<64x1280xbf16>
    %c0_25 = arith.constant 0 : index
    %c0_26 = arith.constant 0 : index
    %93 = vector.load %arg4[%c0_25, %c0_26] : memref<1280x512xbf16, #tpu.memory_space<vmem>>, vector<1280x512xbf16>
    %cst_27 = arith.constant dense<0.000000e+00> : vector<64x512xf32>
    %94 = tpu.matmul %92, %93, %cst_27 {dimension_numbers = #tpu.dot_dimension_numbers<[1], [0], [0], [1], [0, 0, 1, 1], [], []>} : vector<64x1280xbf16>, vector<1280x512xbf16>, vector<64x512xf32> -> vector<64x512xf32>
    %c0_28 = arith.constant 0 : index
    %c0_29 = arith.constant 0 : index
    %95 = vector.load %arg5[%c0_28, %c0_29] : memref<1x512xf32, #tpu.memory_space<vmem>>, vector<1x512xf32>
    %96 = vector.broadcast %95 : vector<1x512xf32> to vector<64x512xf32>
    %97 = arith.addf %94, %96 : vector<64x512xf32>
    %cst_30 = arith.constant 0.000000e+00 : f32
    %98 = vector.broadcast %cst_30 : f32 to vector<64x512xf32>
    %99 = arith.maximumf %97, %98 : vector<64x512xf32>
    %100 = vector.shape_cast %99 : vector<64x512xf32> to vector<8x8x512xf32>
    %101 = vector.extract_strided_slice %100 {offsets = [0, 0, 0], sizes = [8, 4, 512], strides = [1, 1, 1]} : vector<8x8x512xf32> to vector<8x4x512xf32>
    %102 = vector.extract_strided_slice %100 {offsets = [0, 4, 0], sizes = [8, 4, 512], strides = [1, 1, 1]} : vector<8x8x512xf32> to vector<8x4x512xf32>
    %103 = arith.maximumf %101, %102 : vector<8x4x512xf32>
    %104 = vector.extract_strided_slice %103 {offsets = [0, 0, 0], sizes = [8, 4, 256], strides = [1, 1, 1]} : vector<8x4x512xf32> to vector<8x4x256xf32>
    %105 = vector.extract_strided_slice %103 {offsets = [0, 0, 256], sizes = [8, 4, 256], strides = [1, 1, 1]} : vector<8x4x512xf32> to vector<8x4x256xf32>
    %106 = arith.maximumf %104, %105 : vector<8x4x256xf32>
    %107 = vector.extract_strided_slice %106 {offsets = [0, 0, 0], sizes = [8, 1, 256], strides = [1, 1, 1]} : vector<8x4x256xf32> to vector<8x1x256xf32>
    %108 = vector.shape_cast %107 : vector<8x1x256xf32> to vector<8x256xf32>
    %109 = vector.extract_strided_slice %106 {offsets = [0, 1, 0], sizes = [8, 1, 256], strides = [1, 1, 1]} : vector<8x4x256xf32> to vector<8x1x256xf32>
    %110 = vector.shape_cast %109 : vector<8x1x256xf32> to vector<8x256xf32>
    %111 = vector.extract_strided_slice %106 {offsets = [0, 2, 0], sizes = [8, 1, 256], strides = [1, 1, 1]} : vector<8x4x256xf32> to vector<8x1x256xf32>
    %112 = vector.shape_cast %111 : vector<8x1x256xf32> to vector<8x256xf32>
    %113 = vector.extract_strided_slice %106 {offsets = [0, 3, 0], sizes = [8, 1, 256], strides = [1, 1, 1]} : vector<8x4x256xf32> to vector<8x1x256xf32>
    %114 = vector.shape_cast %113 : vector<8x1x256xf32> to vector<8x256xf32>
    %115 = tpu.concatenate %108, %110, %112, %114 in 1 : vector<8x256xf32>, vector<8x256xf32>, vector<8x256xf32>, vector<8x256xf32> -> vector<8x1024xf32>
    %116 = arith.truncf %115 : vector<8x1024xf32> to vector<8x1024xbf16>
    %c0_31 = arith.constant 0 : index
    %c0_32 = arith.constant 0 : index
    %117 = vector.load %arg6[%c0_31, %c0_32] : memref<1024x512xbf16, #tpu.memory_space<vmem>>, vector<1024x512xbf16>
    %cst_33 = arith.constant dense<0.000000e+00> : vector<8x512xf32>
    %118 = tpu.matmul %116, %117, %cst_33 {dimension_numbers = #tpu.dot_dimension_numbers<[1], [0], [0], [1], [0, 0, 1, 1], [], []>} : vector<8x1024xbf16>, vector<1024x512xbf16>, vector<8x512xf32> -> vector<8x512xf32>
    %c0_34 = arith.constant 0 : index
    %c0_35 = arith.constant 0 : index
    %119 = vector.load %arg7[%c0_34, %c0_35] : memref<1x512xf32, #tpu.memory_space<vmem>>, vector<1x512xf32>
    %120 = vector.broadcast %119 : vector<1x512xf32> to vector<8x512xf32>
    %121 = arith.addf %118, %120 : vector<8x512xf32>
    %cst_36 = arith.constant 0.000000e+00 : f32
    %122 = vector.broadcast %cst_36 : f32 to vector<8x512xf32>
    %123 = arith.maximumf %121, %122 : vector<8x512xf32>
    %124 = arith.truncf %123 : vector<8x512xf32> to vector<8x512xbf16>
    %c0_37 = arith.constant 0 : index
    %c0_38 = arith.constant 0 : index
    %125 = vector.load %arg8[%c0_37, %c0_38] : memref<512x128xbf16, #tpu.memory_space<vmem>>, vector<512x128xbf16>
    %cst_39 = arith.constant dense<0.000000e+00> : vector<8x128xf32>
    %126 = tpu.matmul %124, %125, %cst_39 {dimension_numbers = #tpu.dot_dimension_numbers<[1], [0], [0], [1], [0, 0, 1, 1], [], []>} : vector<8x512xbf16>, vector<512x128xbf16>, vector<8x128xf32> -> vector<8x128xf32>
    %c0_40 = arith.constant 0 : index
    %c0_41 = arith.constant 0 : index
    %127 = vector.load %arg9[%c0_40, %c0_41] : memref<1x128xf32, #tpu.memory_space<vmem>>, vector<1x128xf32>
    %128 = vector.broadcast %127 : vector<1x128xf32> to vector<8x128xf32>
    %129 = arith.addf %126, %128 : vector<8x128xf32>
    %cst_42 = arith.constant dense<0xFF800000> : vector<8xf32>
    %130 = vector.multi_reduction <maximumf>, %129, %cst_42 [1] : vector<8x128xf32> to vector<8xf32>
    %131 = vector.shape_cast %130 : vector<8xf32> to vector<8x1xf32>
    %132 = vector.broadcast %131 : vector<8x1xf32> to vector<8x128xf32>
    %133 = arith.subf %129, %132 : vector<8x128xf32>
    %134 = math.exp %133 : vector<8x128xf32>
    %cst_43 = arith.constant dense<0.000000e+00> : vector<8xf32>
    %135 = vector.multi_reduction <add>, %134, %cst_43 [1] : vector<8x128xf32> to vector<8xf32>
    %136 = vector.shape_cast %135 : vector<8xf32> to vector<8x1xf32>
    %137 = math.log %136 : vector<8x1xf32>
    %138 = vector.broadcast %137 : vector<8x1xf32> to vector<8x128xf32>
    %139 = arith.subf %133, %138 : vector<8x128xf32>
    %c0_44 = arith.constant 0 : index
    %c0_45 = arith.constant 0 : index
    %140 = vector.load %arg10[%c0_44, %c0_45] : memref<8x128xf32, #tpu.memory_space<vmem>>, vector<8x128xf32>
    tpu.vector_store %arg10[%c0_44, %c0_45], %139 {strides = array<i32>} : memref<8x128xf32, #tpu.memory_space<vmem>>, vector<8x128xf32>,
    return
  }
  func.func @transform_0(%arg0: i32) -> (i32, i32, i32) {
    %c0_i32 = arith.constant 0 : i32
    %c0_i32_0 = arith.constant 0 : i32
    %c0_i32_1 = arith.constant 0 : i32
    return %arg0, %c0_i32, %c0_i32_0 : i32, i32, i32
  }
  func.func @transform_1(%arg0: i32) -> (i32, i32) {
    %c0_i32 = arith.constant 0 : i32
    %c0_i32_0 = arith.constant 0 : i32
    %c0_i32_1 = arith.constant 0 : i32
    return %c0_i32, %c0_i32_0 : i32, i32
  }
  func.func @transform_2(%arg0: i32) -> (i32, i32) {
    %c0_i32 = arith.constant 0 : i32
    %c0_i32_0 = arith.constant 0 : i32
    %c0_i32_1 = arith.constant 0 : i32
    return %c0_i32, %c0_i32_0 : i32, i32
  }
  func.func @transform_3(%arg0: i32) -> (i32, i32) {
    %c0_i32 = arith.constant 0 : i32
    %c0_i32_0 = arith.constant 0 : i32
    %c0_i32_1 = arith.constant 0 : i32
    return %c0_i32, %c0_i32_0 : i32, i32
  }
  func.func @transform_4(%arg0: i32) -> (i32, i32) {
    %c0_i32 = arith.constant 0 : i32
    %c0_i32_0 = arith.constant 0 : i32
    %c0_i32_1 = arith.constant 0 : i32
    return %c0_i32, %c0_i32_0 : i32, i32
  }
  func.func @transform_5(%arg0: i32) -> (i32, i32) {
    %c0_i32 = arith.constant 0 : i32
    %c0_i32_0 = arith.constant 0 : i32
    %c0_i32_1 = arith.constant 0 : i32
    return %c0_i32, %c0_i32_0 : i32, i32
  }
  func.func @transform_6(%arg0: i32) -> (i32, i32) {
    %c0_i32 = arith.constant 0 : i32
    %c0_i32_0 = arith.constant 0 : i32
    %c0_i32_1 = arith.constant 0 : i32
    return %c0_i32, %c0_i32_0 : i32, i32
  }
  func.func @transform_7(%arg0: i32) -> (i32, i32) {
    %c0_i32 = arith.constant 0 : i32
    %c0_i32_0 = arith.constant 0 : i32
    %c0_i32_1 = arith.constant 0 : i32
    return %c0_i32, %c0_i32_0 : i32, i32
  }
  func.func @transform_8(%arg0: i32) -> (i32, i32) {
    %c0_i32 = arith.constant 0 : i32
    %c0_i32_0 = arith.constant 0 : i32
    %c0_i32_1 = arith.constant 0 : i32
    return %c0_i32, %c0_i32_0 : i32, i32
  }
  func.func @transform_9(%arg0: i32) -> (i32, i32) {
    %c0_i32 = arith.constant 0 : i32
    %c0_i32_0 = arith.constant 0 : i32
    return %arg0, %c0_i32 : i32, i32
  }
}

</mosaic_0001>

<llo_original>
// kernel: net_forward.1
$region0: #{net_forward.1}
  #allocation0 [shape = 'u32[]', space=smem, size = 0x4, offset = 0x4, fixed_abs, tag = 'smem constant byte address 0x4 - core index']
  #allocation1 [shape = 'u32[72,128]{1,0:T(1,128)}', space=vmem, size = 0x9000, scoped, tag = 'internal scratch']
  %s0 = inlined_call_operand.vmem [shape: bf16[16,32,128], index: 0, kind: input, shape index: {}]
  %s1 = inlined_call_operand.hbm [shape: bf16[640,512], index: 1, kind: input, shape index: {}]
  %s2 = inlined_call_operand.hbm [shape: f32[1,512], index: 2, kind: input, shape index: {}]
  %s3 = inlined_call_operand.hbm [shape: bf16[1280,512], index: 3, kind: input, shape index: {}]
  %s4 = inlined_call_operand.hbm [shape: f32[1,512], index: 4, kind: input, shape index: {}]
  %s5 = inlined_call_operand.hbm [shape: bf16[1024,512], index: 5, kind: input, shape index: {}]
  %s6 = inlined_call_operand.hbm [shape: f32[1,512], index: 6, kind: input, shape index: {}]
  %s7 = inlined_call_operand.hbm [shape: bf16[512,128], index: 7, kind: input, shape index: {}]
  %s8 = inlined_call_operand.hbm [shape: f32[1,128], index: 8, kind: input, shape index: {}]
  %s9 = inlined_call_operand.hbm [shape: f32[16,128], index: 9, kind: output, shape index: {}]
  %s10 = sld [smem:[#allocation0]]
  $region101: #{net_forward.1} parent=0
    _
  %s12 = ssub.s32 1, %s10
  %s13 = scalar_select 0, %s12, %s10
  $region1: #{net_forward.1} parent=0
    #allocation2 [shape = 'u8[655360]{0}', space=vmem, size = 0xa0000, scoped, tag = 'input window, operand 1, single buffered']
    #allocation3 [shape = 's32[2]{0}', space=sflag, size = 0x8, scoped, tag = 'scoped memory for net_forward.1']
    #allocation4 [shape = 's32[2]{0}', space=sflag, size = 0x8, scoped, tag = 'scoped memory for net_forward.1']
    #allocation5 [shape = 'u8[2048]{0}', space=vmem, size = 0x800, scoped, tag = 'input window, operand 2, single buffered']
    #allocation6 [shape = 's32[1]{0}', space=sflag, size = 0x4, scoped, tag = 'scoped memory for net_forward.1']
    #allocation7 [shape = 'u8[1310720]{0}', space=vmem, size = 0x140000, scoped, tag = 'input window, operand 3, single buffered']
    #allocation8 [shape = 'u8[2048]{0}', space=vmem, size = 0x800, scoped, tag = 'input window, operand 4, single buffered']
    #allocation9 [shape = 's32[1]{0}', space=sflag, size = 0x4, scoped, tag = 'scoped memory for net_forward.1']
    #allocation10 [shape = 'u8[1048576]{0}', space=vmem, size = 0x100000, scoped, tag = 'input window, operand 5, single buffered']
    #allocation11 [shape = 'u8[2048]{0}', space=vmem, size = 0x800, scoped, tag = 'input window, operand 6, single buffered']
    #allocation12 [shape = 's32[1]{0}', space=sflag, size = 0x4, scoped, tag = 'scoped memory for net_forward.1']
    #allocation13 [shape = 'u8[131072]{0}', space=vmem, size = 0x20000, scoped, tag = 'input window, operand 7, single buffered']
    #allocation14 [shape = 'u8[512]{0}', space=vmem, size = 0x400, scoped, tag = 'input window, operand 8, single buffered']
    #allocation15 [shape = 's32[1]{0}', space=sflag, size = 0x4, scoped, tag = 'scoped memory for net_forward.1']
    #allocation16 [shape = 'u8[8192]{0}', space=vmem, size = 0x2000, scoped, tag = 'output window, operand 0']
    %14 = vsyncpa [#allocation3], 0
    %15 = vsyncpa [#allocation6], 0
    %16 = vsyncpa [#allocation9], 0
    %17 = vsyncpa [#allocation12], 0
    %18 = vsyncpa [#allocation15], 0
    %19 = vsyncpa [#allocation4], 0
    %s20 = scalar_lea.sflag [#allocation4], 1
    %21 = vsyncpa %s20, 0
    loop: start=0, step=1, limit=4
    $region2: #{net_forward.1} parent=1 // loop_pre_header
      _
    $region3: #{net_forward.1} parent=1 // loop_header
      %s23 = sphi 0, %s27
      %p24 = scmp.ge.s32.totalorder %s23, 4
      %s33 = sphi 0, %s35
      %s36 = sphi 0, %s33
      %s37 = sphi 0, %s36
      %s53 = sphi 0, %s37
      %s57 = sphi 0, %s57
      %s59 = sphi 0, %s57
      %s60 = sphi 0, %s59
      %s74 = sphi 0, %s60
      %s78 = sphi 0, %s78
      %s80 = sphi 0, %s78
      %s81 = sphi 0, %s80
      %s95 = sphi 0, %s81
      %s99 = sphi 0, %s99
      %s101 = sphi 0, %s99
      %s102 = sphi 0, %s101
      %s116 = sphi 0, %s102
      %s120 = sphi 0, %s120
      %s122 = sphi 0, %s120
      %s123 = sphi 0, %s122
      %s137 = sphi 0, %s123
      %s141 = sphi 0, %s141
      %s143 = sphi 0, %s141
      %s144 = sphi 0, %s143
      %s158 = sphi 0, %s144
      %s162 = sphi 0, %s162
      %s164 = sphi 0, %s162
      %s165 = sphi 0, %s164
      %s179 = sphi 0, %s165
      %s183 = sphi 0, %s183
      %s185 = sphi 0, %s183
      %s186 = sphi 0, %s185
      %s200 = sphi 0, %s186
      %s204 = sphi 0, %s204
      %s206 = sphi 0, %s204
      %s207 = sphi 0, %s206
      %s221 = sphi 0, %s207
      %s227 = sphi 0, %s229
      %s230 = sphi 0, %s227
      %s231 = sphi 0, %s230
      %s247 = sphi 0, %s231
    $region4: #{net_forward.1} parent=1 // loop_header_branch
      %26 = sbr.rel (%p24) target = $region8
    $region5: #{net_forward.1} parent=1 // loop_body
      %s28 = ssub.s32 %s23, 1
      %s29 = ssub.s32 %s23, 2
      %s30 = sadd.s32 %s23, 1
      %s31 = ssub.s32 %s23, %s30
      %p32 = scmp.eq.s32.totalorder %s31, 0
      %s34 = sadd.s32 %s33, 1
      %s35 = scalar_select %p32, %s33, %s34
      %p38 = pneg %p32
      %p39 = scmp.eq.s32.totalorder %s23, 1
      %p40 = por %p38, %p39
      %p41 = scmp.ne.s32.totalorder %s33, %s36
      %p42 = scmp.eq.s32.totalorder %s23, 0
      %p43 = por %p41, %p42
      %p44 = scmp.ne.s32.totalorder %s33, %s36
      %p45 = scmp.eq.s32.totalorder %s28, 1
      %p46 = por %p44, %p45
      %p47 = scmp.ne.s32.totalorder %s36, %s37
      %p48 = scmp.eq.s32.totalorder %s28, 0
      %p49 = por %p47, %p48
      %p50 = scmp.ne.s32.totalorder %s36, %s37
      %p51 = scmp.eq.s32.totalorder %s29, 1
      %p52 = por %p50, %p51
      %p54 = scmp.ne.s32.totalorder %s37, %s53
      %p55 = scmp.eq.s32.totalorder %s29, 0
      %p56 = por %p54, %p55
      %s58 = sadd.s32 %s57, 1
      %p61 = scmp.eq.s32.totalorder %s23, 1
      %p62 = scmp.ne.s32.totalorder %s57, %s59
      %p63 = scmp.eq.s32.totalorder %s23, 0
      %p64 = por %p62, %p63
      %p65 = scmp.ne.s32.totalorder %s57, %s59
      %p66 = scmp.eq.s32.totalorder %s28, 1
      %p67 = por %p65, %p66
      %p68 = scmp.ne.s32.totalorder %s59, %s60
      %p69 = scmp.eq.s32.totalorder %s28, 0
      %p70 = por %p68, %p69
      %p71 = scmp.ne.s32.totalorder %s59, %s60
      %p72 = scmp.eq.s32.totalorder %s29, 1
      %p73 = por %p71, %p72
      %p75 = scmp.ne.s32.totalorder %s60, %s74
      %p76 = scmp.eq.s32.totalorder %s29, 0
      %p77 = por %p75, %p76
      %s79 = sadd.s32 %s78, 1
      %p82 = scmp.eq.s32.totalorder %s23, 1
      %p83 = scmp.ne.s32.totalorder %s78, %s80
      %p84 = scmp.eq.s32.totalorder %s23, 0
      %p85 = por %p83, %p84
      %p86 = scmp.ne.s32.totalorder %s78, %s80
      %p87 = scmp.eq.s32.totalorder %s28, 1
      %p88 = por %p86, %p87
      %p89 = scmp.ne.s32.totalorder %s80, %s81
      %p90 = scmp.eq.s32.totalorder %s28, 0
      %p91 = por %p89, %p90
      %p92 = scmp.ne.s32.totalorder %s80, %s81
      %p93 = scmp.eq.s32.totalorder %s29, 1
      %p94 = por %p92, %p93
      %p96 = scmp.ne.s32.totalorder %s81, %s95
      %p97 = scmp.eq.s32.totalorder %s29, 0
      %p98 = por %p96, %p97
      %s100 = sadd.s32 %s99, 1
      %p103 = scmp.eq.s32.totalorder %s23, 1
      %p104 = scmp.ne.s32.totalorder %s99, %s101
      %p105 = scmp.eq.s32.totalorder %s23, 0
      %p106 = por %p104, %p105
      %p107 = scmp.ne.s32.totalorder %s99, %s101
      %p108 = scmp.eq.s32.totalorder %s28, 1
      %p109 = por %p107, %p108
      %p110 = scmp.ne.s32.totalorder %s101, %s102
      %p111 = scmp.eq.s32.totalorder %s28, 0
      %p112 = por %p110, %p111
      %p113 = scmp.ne.s32.totalorder %s101, %s102
      %p114 = scmp.eq.s32.totalorder %s29, 1
      %p115 = por %p113, %p114
      %p117 = scmp.ne.s32.totalorder %s102, %s116
      %p118 = scmp.eq.s32.totalorder %s29, 0
      %p119 = por %p117, %p118
      %s121 = sadd.s32 %s120, 1
      %p124 = scmp.eq.s32.totalorder %s23, 1
      %p125 = scmp.ne.s32.totalorder %s120, %s122
      %p126 = scmp.eq.s32.totalorder %s23, 0
      %p127 = por %p125, %p126
      %p128 = scmp.ne.s32.totalorder %s120, %s122
      %p129 = scmp.eq.s32.totalorder %s28, 1
      %p130 = por %p128, %p129
      %p131 = scmp.ne.s32.totalorder %s122, %s123
      %p132 = scmp.eq.s32.totalorder %s28, 0
      %p133 = por %p131, %p132
      %p134 = scmp.ne.s32.totalorder %s122, %s123
      %p135 = scmp.eq.s32.totalorder %s29, 1
      %p136 = por %p134, %p135
      %p138 = scmp.ne.s32.totalorder %s123, %s137
      %p139 = scmp.eq.s32.totalorder %s29, 0
      %p140 = por %p138, %p139
      %s142 = sadd.s32 %s141, 1
      %p145 = scmp.eq.s32.totalorder %s23, 1
      %p146 = scmp.ne.s32.totalorder %s141, %s143
      %p147 = scmp.eq.s32.totalorder %s23, 0
      %p148 = por %p146, %p147
      %p149 = scmp.ne.s32.totalorder %s141, %s143
      %p150 = scmp.eq.s32.totalorder %s28, 1
      %p151 = por %p149, %p150
      %p152 = scmp.ne.s32.totalorder %s143, %s144
      %p153 = scmp.eq.s32.totalorder %s28, 0
      %p154 = por %p152, %p153
      %p155 = scmp.ne.s32.totalorder %s143, %s144
      %p156 = scmp.eq.s32.totalorder %s29, 1
      %p157 = por %p155, %p156
      %p159 = scmp.ne.s32.totalorder %s144, %s158
      %p160 = scmp.eq.s32.totalorder %s29, 0
      %p161 = por %p159, %p160
      %s163 = sadd.s32 %s162, 1
      %p166 = scmp.eq.s32.totalorder %s23, 1
      %p167 = scmp.ne.s32.totalorder %s162, %s164
      %p168 = scmp.eq.s32.totalorder %s23, 0
      %p169 = por %p167, %p168
      %p170 = scmp.ne.s32.totalorder %s162, %s164
      %p171 = scmp.eq.s32.totalorder %s28, 1
      %p172 = por %p170, %p171
      %p173 = scmp.ne.s32.totalorder %s164, %s165
      %p174 = scmp.eq.s32.totalorder %s28, 0
      %p175 = por %p173, %p174
      %p176 = scmp.ne.s32.totalorder %s164, %s165
      %p177 = scmp.eq.s32.totalorder %s29, 1
      %p178 = por %p176, %p177
      %p180 = scmp.ne.s32.totalorder %s165, %s179
      %p181 = scmp.eq.s32.totalorder %s29, 0
      %p182 = por %p180, %p181
      %s184 = sadd.s32 %s183, 1
      %p187 = scmp.eq.s32.totalorder %s23, 1
      %p188 = scmp.ne.s32.totalorder %s183, %s185
      %p189 = scmp.eq.s32.totalorder %s23, 0
      %p190 = por %p188, %p189
      %p191 = scmp.ne.s32.totalorder %s183, %s185
      %p192 = scmp.eq.s32.totalorder %s28, 1
      %p193 = por %p191, %p192
      %p194 = scmp.ne.s32.totalorder %s185, %s186
      %p195 = scmp.eq.s32.totalorder %s28, 0
      %p196 = por %p194, %p195
      %p197 = scmp.ne.s32.totalorder %s185, %s186
      %p198 = scmp.eq.s32.totalorder %s29, 1
      %p199 = por %p197, %p198
      %p201 = scmp.ne.s32.totalorder %s186, %s200
      %p202 = scmp.eq.s32.totalorder %s29, 0
      %p203 = por %p201, %p202
      %s205 = sadd.s32 %s204, 1
      %p208 = scmp.eq.s32.totalorder %s23, 1
      %p209 = scmp.ne.s32.totalorder %s204, %s206
      %p210 = scmp.eq.s32.totalorder %s23, 0
      %p211 = por %p209, %p210
      %p212 = scmp.ne.s32.totalorder %s204, %s206
      %p213 = scmp.eq.s32.totalorder %s28, 1
      %p214 = por %p212, %p213
      %p215 = scmp.ne.s32.totalorder %s206, %s207
      %p216 = scmp.eq.s32.totalorder %s28, 0
      %p217 = por %p215, %p216
      %p218 = scmp.ne.s32.totalorder %s206, %s207
      %p219 = scmp.eq.s32.totalorder %s29, 1
      %p220 = por %p218, %p219
      %p222 = scmp.ne.s32.totalorder %s207, %s221
      %p223 = scmp.eq.s32.totalorder %s29, 0
      %p224 = por %p222, %p223
      %s225 = ssub.s32 %s23, %s30
      %p226 = scmp.eq.s32.totalorder %s225, 0
      %s228 = sadd.s32 %s227, 1
      %s229 = scalar_select %p226, %s227, %s228
      %p232 = pneg %p226
      %p233 = scmp.eq.s32.totalorder %s23, 1
      %p234 = por %p232, %p233
      %p235 = scmp.ne.s32.totalorder %s227, %s230
      %p236 = scmp.eq.s32.totalorder %s23, 0
      %p237 = por %p235, %p236
      %p238 = scmp.ne.s32.totalorder %s227, %s230
      %p239 = scmp.eq.s32.totalorder %s28, 1
      %p240 = por %p238, %p239
      %p241 = scmp.ne.s32.totalorder %s230, %s231
      %p242 = scmp.eq.s32.totalorder %s28, 0
      %p243 = por %p241, %p242
      %p244 = scmp.ne.s32.totalorder %s230, %s231
      %p245 = scmp.eq.s32.totalorder %s29, 1
      %p246 = por %p244, %p245
      %p248 = scmp.ne.s32.totalorder %s231, %s247
      %p249 = scmp.eq.s32.totalorder %s29, 0
      %p250 = por %p248, %p249
      %p251 = scmp.le.s32.totalorder 1, %s23
      %p252 = scmp.lt.s32.totalorder %s23, 3
      %p253 = pnand %p251, %p252
      %p254 = pneg %p253
      // Predicated region
      $region9: #{net_forward.1} parent=5 // pred_check
        _
      $region10: #{net_forward.1} parent=5 // pred_check_branch
        %256 = sbr.rel (%p253) target = $region12
      $region11: #{net_forward.1} parent=5 // pred_region
        %s257 = ssub.s32 %s23, 1
        // Predicated region
        $region13: #{net_forward.1} parent=11 // pred_check
          %p258 = pneg %p70
        $region14: #{net_forward.1} parent=11 // pred_check_branch
          %260 = sbr.rel (%p258) target = $region16
        $region15: #{net_forward.1} parent=11 // pred_region
          %262 = vsyncadd [#allocation3], 0
          %s263 = sshll.u32 %s1, 4
          %s264 = int_to_ptr.hbm [resolvable:$true] %s263
          %s265 = sshll.u32 [#allocation2], 4
          %s266 = int_to_ptr.vmem [resolvable:$true] %s265
          %271 = dma.hbm_to_vmem [thread:$0]  %s264, 20480, %s266, [#allocation3], 256, 256, 16
        $region16: #{net_forward.1} parent=11 // pred_fallthru
          _
        // Predicated region
        $region17: #{net_forward.1} parent=11 // pred_check
          %p272 = pneg %p91
        $region18: #{net_forward.1} parent=11 // pred_check_branch
          %274 = sbr.rel (%p272) target = $region20
        $region19: #{net_forward.1} parent=11 // pred_region
          %276 = vsyncadd [#allocation6], 0
          %s278 = sshll.u32 %s2, 4
          %s279 = int_to_ptr.hbm [resolvable:$true] %s278
          %s280 = sshll.u32 [#allocation5], 4
          %s281 = int_to_ptr.vmem [resolvable:$true] %s280
          %283 = dma.hbm_to_vmem [thread:$0]  %s279, 64, %s281, [#allocation6]
        $region20: #{net_forward.1} parent=11 // pred_fallthru
          _
        // Predicated region
        $region21: #{net_forward.1} parent=11 // pred_check
          %p284 = pneg %p112
        $region22: #{net_forward.1} parent=11 // pred_check_branch
          %286 = sbr.rel (%p284) target = $region24
        $region23: #{net_forward.1} parent=11 // pred_region
          %288 = vsyncadd [#allocation6], 0
          %s289 = sshll.u32 %s3, 4
          %s290 = int_to_ptr.hbm [resolvable:$true] %s289
          %s291 = sshll.u32 [#allocation7], 4
          %s292 = int_to_ptr.vmem [resolvable:$true] %s291
          %297 = dma.hbm_to_vmem [thread:$0]  %s290, 40960, %s292, [#allocation6], 256, 256, 16
        $region24: #{net_forward.1} parent=11 // pred_fallthru
          _
        // Predicated region
        $region25: #{net_forward.1} parent=11 // pred_check
          %p298 = pneg %p133
        $region26: #{net_forward.1} parent=11 // pred_check_branch
          %300 = sbr.rel (%p298) target = $region28
        $region27: #{net_forward.1} parent=11 // pred_region
          %302 = vsyncadd [#allocation9], 0
          %s304 = sshll.u32 %s4, 4
          %s305 = int_to_ptr.hbm [resolvable:$true] %s304
          %s306 = sshll.u32 [#allocation8], 4
          %s307 = int_to_ptr.vmem [resolvable:$true] %s306
          %309 = dma.hbm_to_vmem [thread:$0]  %s305, 64, %s307, [#allocation9]
        $region28: #{net_forward.1} parent=11 // pred_fallthru
          _
        // Predicated region
        $region29: #{net_forward.1} parent=11 // pred_check
          %p310 = pneg %p154
        $region30: #{net_forward.1} parent=11 // pred_check_branch
          %312 = sbr.rel (%p310) target = $region32
        $region31: #{net_forward.1} parent=11 // pred_region
          %314 = vsyncadd [#allocation9], 0
          %s315 = sshll.u32 %s5, 4
          %s316 = int_to_ptr.hbm [resolvable:$true] %s315
          %s317 = sshll.u32 [#allocation10], 4
          %s318 = int_to_ptr.vmem [resolvable:$true] %s317
          %323 = dma.hbm_to_vmem [thread:$0]  %s316, 32768, %s318, [#allocation9], 256, 256, 16
        $region32: #{net_forward.1} parent=11 // pred_fallthru
          _
        // Predicated region
        $region33: #{net_forward.1} parent=11 // pred_check
          %p324 = pneg %p175
        $region34: #{net_forward.1} parent=11 // pred_check_branch
          %326 = sbr.rel (%p324) target = $region36
        $region35: #{net_forward.1} parent=11 // pred_region
          %328 = vsyncadd [#allocation12], 0
          %s330 = sshll.u32 %s6, 4
          %s331 = int_to_ptr.hbm [resolvable:$true] %s330
          %s332 = sshll.u32 [#allocation11], 4
          %s333 = int_to_ptr.vmem [resolvable:$true] %s332
          %335 = dma.hbm_to_vmem [thread:$0]  %s331, 64, %s333, [#allocation12]
        $region36: #{net_forward.1} parent=11 // pred_fallthru
          _
        // Predicated region
        $region37: #{net_forward.1} parent=11 // pred_check
          %p336 = pneg %p196
        $region38: #{net_forward.1} parent=11 // pred_check_branch
          %338 = sbr.rel (%p336) target = $region40
        $region39: #{net_forward.1} parent=11 // pred_region
          %340 = vsyncadd [#allocation12], 0
          %s341 = sshll.u32 %s7, 4
          %s342 = int_to_ptr.hbm [resolvable:$true] %s341
          %s343 = sshll.u32 [#allocation13], 4
          %s344 = int_to_ptr.vmem [resolvable:$true] %s343
          %349 = dma.hbm_to_vmem [thread:$0]  %s342, 4096, %s344, [#allocation12], 64, 64, 4
        $region40: #{net_forward.1} parent=11 // pred_fallthru
          _
        // Predicated region
        $region41: #{net_forward.1} parent=11 // pred_check
          %p350 = pneg %p217
        $region42: #{net_forward.1} parent=11 // pred_check_branch
          %352 = sbr.rel (%p350) target = $region44
        $region43: #{net_forward.1} parent=11 // pred_region
          %354 = vsyncadd [#allocation15], 0
          %s356 = sshll.u32 %s8, 4
          %s357 = int_to_ptr.hbm [resolvable:$true] %s356
          %s358 = sshll.u32 [#allocation14], 4
          %s359 = int_to_ptr.vmem [resolvable:$true] %s358
          %361 = dma.hbm_to_vmem [thread:$0]  %s357, 16, %s359, [#allocation15]
        $region44: #{net_forward.1} parent=11 // pred_fallthru
          _
      $region12: #{net_forward.1} parent=5 // pred_fallthru
        _
      %p362 = scmp.lt.s32.totalorder %s23, 2
      // Predicated region
      $region45: #{net_forward.1} parent=5 // pred_check
        %p363 = pneg %p362
      $region46: #{net_forward.1} parent=5 // pred_check_branch
        %365 = sbr.rel (%p363) target = $region48
      $region47: #{net_forward.1} parent=5 // pred_region
        // Predicated region
        $region49: #{net_forward.1} parent=47 // pred_check
          %p366 = pneg %p43
        $region50: #{net_forward.1} parent=47 // pred_check_branch
          %368 = sbr.rel (%p366) target = $region52
        $region51: #{net_forward.1} parent=47 // pred_region
          %s369 = smul.u32 8, %s23
          %p370 = scmp.lt.s32.totalorder %s369, 15
          %s371 = scalar_select %p370, %s369, 15
          %s372 = smul.addr %s371, 4
          %s373 = smul.addr %s372, 4
          %s374 = scalar_lea.vmem %s0, %s373
          %s375 = smul.u32 8, %s23
        $region52: #{net_forward.1} parent=47 // pred_fallthru
          _
      $region48: #{net_forward.1} parent=5 // pred_fallthru
        _
      %p376 = scmp.le.s32.totalorder 1, %s23
      %p377 = scmp.lt.s32.totalorder %s23, 3
      %p378 = pnand %p376, %p377
      %p379 = pneg %p378
      // Predicated region
      $region53: #{net_forward.1} parent=5 // pred_check
        _
      $region54: #{net_forward.1} parent=5 // pred_check_branch
        %381 = sbr.rel (%p378) target = $region56
      $region55: #{net_forward.1} parent=5 // pred_region
        %s382 = ssub.s32 %s23, 1
        // Predicated region
        $region57: #{net_forward.1} parent=55 // pred_check
          %p383 = pneg %p70
        $region58: #{net_forward.1} parent=55 // pred_check_branch
          %385 = sbr.rel (%p383) target = $region60
        $region59: #{net_forward.1} parent=55 // pred_region
          %387 = dma.done [#allocation3], 20480
        $region60: #{net_forward.1} parent=55 // pred_fallthru
          _
        // Predicated region
        $region61: #{net_forward.1} parent=55 // pred_check
          %p388 = pneg %p91
        $region62: #{net_forward.1} parent=55 // pred_check_branch
          %390 = sbr.rel (%p388) target = $region64
        $region63: #{net_forward.1} parent=55 // pred_region
          %392 = dma.done [#allocation6], 64
        $region64: #{net_forward.1} parent=55 // pred_fallthru
          _
        // Predicated region
        $region65: #{net_forward.1} parent=55 // pred_check
          %p393 = pneg %p112
        $region66: #{net_forward.1} parent=55 // pred_check_branch
          %395 = sbr.rel (%p393) target = $region68
        $region67: #{net_forward.1} parent=55 // pred_region
          %397 = dma.done [#allocation6], 40960
        $region68: #{net_forward.1} parent=55 // pred_fallthru
          _
        // Predicated region
        $region69: #{net_forward.1} parent=55 // pred_check
          %p398 = pneg %p133
        $region70: #{net_forward.1} parent=55 // pred_check_branch
          %400 = sbr.rel (%p398) target = $region72
        $region71: #{net_forward.1} parent=55 // pred_region
          %402 = dma.done [#allocation9], 64
        $region72: #{net_forward.1} parent=55 // pred_fallthru
          _
        // Predicated region
        $region73: #{net_forward.1} parent=55 // pred_check
          %p403 = pneg %p154
        $region74: #{net_forward.1} parent=55 // pred_check_branch
          %405 = sbr.rel (%p403) target = $region76
        $region75: #{net_forward.1} parent=55 // pred_region
          %407 = dma.done [#allocation9], 32768
        $region76: #{net_forward.1} parent=55 // pred_fallthru
          _
        // Predicated region
        $region77: #{net_forward.1} parent=55 // pred_check
          %p408 = pneg %p175
        $region78: #{net_forward.1} parent=55 // pred_check_branch
          %410 = sbr.rel (%p408) target = $region80
        $region79: #{net_forward.1} parent=55 // pred_region
          %412 = dma.done [#allocation12], 64
        $region80: #{net_forward.1} parent=55 // pred_fallthru
          _
        // Predicated region
        $region81: #{net_forward.1} parent=55 // pred_check
          %p413 = pneg %p196
        $region82: #{net_forward.1} parent=55 // pred_check_branch
          %415 = sbr.rel (%p413) target = $region84
        $region83: #{net_forward.1} parent=55 // pred_region
          %417 = dma.done [#allocation12], 4096
        $region84: #{net_forward.1} parent=55 // pred_fallthru
          _
        // Predicated region
        $region85: #{net_forward.1} parent=55 // pred_check
          %p418 = pneg %p217
        $region86: #{net_forward.1} parent=55 // pred_check_branch
          %420 = sbr.rel (%p418) target = $region88
        $region87: #{net_forward.1} parent=55 // pred_region
          %422 = dma.done [#allocation15], 16
        $region88: #{net_forward.1} parent=55 // pred_fallthru
          _
        %s423 = smul.u32 8, %s28
        %p424 = scmp.lt.s32.totalorder %s423, 15
        %s425 = scalar_select %p424, %s423, 15
        %s426 = smul.addr %s425, 4
        %s427 = smul.addr %s426, 4
        %s428 = scalar_lea.vmem %s0, %s427
        %p429 = pneg %p49
        %p430 = pneg %p46
        %p431 = pneg %p70
        %p432 = pneg %p67
        %p433 = pneg %p91
        %p434 = pneg %p88
        %p435 = pneg %p112
        %p436 = pneg %p109
        %p437 = pneg %p133
        %p438 = pneg %p130
        %p439 = pneg %p154
        %p440 = pneg %p151
        %p441 = pneg %p175
        %p442 = pneg %p172
        %p443 = pneg %p196
        %p444 = pneg %p193
        %p445 = pneg %p217
        %p446 = pneg %p214
        %p447 = pneg %p243
        %p448 = pneg %p240
        %s449 = sand.u32 %s230, 1
        %s450 = scalar_lea.sflag [#allocation4], %s449
        %s451 = sand.u32 %s230, 1
        %s452 = smul.addr %s451, 8
        %s453 = scalar_lea.vmem [#allocation16], %s452
        %s454 = smul.u32 8, %s28
        %p455 = scmp.lt.s32.totalorder %s454, 15
        %s456 = scalar_select %p455, %s454, 15
        %s457 = smul.addr %s456, 4
        %s458 = smul.addr %s457, 4
        %s459 = scalar_lea.vmem %s0, %s458
        %s460 = smul.u32 8, %s28
        %v461 = vld [vmem:[%s459] sm:$0xf]
        %v462 = vld [vmem:[%s459 + $0x4] sm:$0xf]
        %v463 = vld [vmem:[%s459 + $0x8] sm:$0xf]
        %v464 = vld [vmem:[%s459 + $0xc] sm:$0xf]
        %v465 = vld [vmem:[%s459 + $0x10] sm:$0xf]
        %v466 = vld [vmem:[%s459 + $0x14] sm:$0xf]
        %v467 = vld [vmem:[%s459 + $0x18] sm:$0xf]
        %v468 = vld [vmem:[%s459 + $0x1c] sm:$0xf]
        %v469 = vld [vmem:[%s459 + $0x20] sm:$0xf]
        %v470 = vld [vmem:[%s459 + $0x24] sm:$0xf]
        %v471 = vld [vmem:[%s459 + $0x28] sm:$0xf]
        %v472 = vld [vmem:[%s459 + $0x2c] sm:$0xf]
        %v473 = vld [vmem:[%s459 + $0x30] sm:$0xf]
        %v474 = vld [vmem:[%s459 + $0x34] sm:$0xf]
        %v475 = vld [vmem:[%s459 + $0x38] sm:$0xf]
        %v476 = vld [vmem:[%s459 + $0x3c] sm:$0xf]
        %v477 = vld [vmem:[%s459 + $0x40] sm:$0xf]
        %v478 = vld [vmem:[%s459 + $0x44] sm:$0xf]
        %v479 = vld [vmem:[%s459 + $0x48] sm:$0xf]
        %v480 = vld [vmem:[%s459 + $0x4c] sm:$0xf]
        %v481 = vld [vmem:[%s459 + $0x50] sm:$0xf]
        %v482 = vld [vmem:[%s459 + $0x54] sm:$0xf]
        %v483 = vld [vmem:[%s459 + $0x58] sm:$0xf]
        %v484 = vld [vmem:[%s459 + $0x5c] sm:$0xf]
        %v485 = vld [vmem:[%s459 + $0x60] sm:$0xf]
        %v486 = vld [vmem:[%s459 + $0x64] sm:$0xf]
        %v487 = vld [vmem:[%s459 + $0x68] sm:$0xf]
        %v488 = vld [vmem:[%s459 + $0x6c] sm:$0xf]
        %v489 = vld [vmem:[%s459 + $0x70] sm:$0xf]
        %v490 = vld [vmem:[%s459 + $0x74] sm:$0xf]
        %v491 = vld [vmem:[%s459 + $0x78] sm:$0xf]
        %v492 = vld [vmem:[%s459 + $0x7c] sm:$0xf]
        %v509 = vunpack.c.l.b16 %v461
        %v510 = vunpack.c.l.b16 %v462
        %v511 = vunpack.c.l.b16 %v465
        %v512 = vunpack.c.l.b16 %v466
        %v513 = vunpack.c.l.b16 %v469
        %v514 = vunpack.c.l.b16 %v470
        %v515 = vunpack.c.l.b16 %v473
        %v516 = vunpack.c.l.b16 %v474
        %v517 = vunpack.c.l.b16 %v477
        %v518 = vunpack.c.l.b16 %v478
        %v519 = vunpack.c.l.b16 %v481
        %v520 = vunpack.c.l.b16 %v482
        %v521 = vunpack.c.l.b16 %v485
        %v522 = vunpack.c.l.b16 %v486
        %v523 = vunpack.c.l.b16 %v489
        %v524 = vunpack.c.l.b16 %v490
        %v525 = vpack.c.b16 %v510, %v509
        %v526 = vpack.c.b16 %v512, %v511
        %v527 = vpack.c.b16 %v514, %v513
        %v528 = vpack.c.b16 %v516, %v515
        %v529 = vpack.c.b16 %v518, %v517
        %v530 = vpack.c.b16 %v520, %v519
        %v531 = vpack.c.b16 %v522, %v521
        %v532 = vpack.c.b16 %v524, %v523
        %v534 = vshrl.u32 %v525, 16
        %v536 = vrot.slane %v534, 3
        %v537 = vshll.u32 %v525, 16
        %v539 = vrot.slane %v537, 4
        %v540 = vor.u32 %v536, %v539
        %v542 = vshrl.u32 %v526, 16
        %v544 = vrot.slane %v542, 3
        %v545 = vshll.u32 %v526, 16
        %v547 = vrot.slane %v545, 4
        %v548 = vor.u32 %v544, %v547
        %v550 = vshrl.u32 %v527, 16
        %v552 = vrot.slane %v550, 3
        %v553 = vshll.u32 %v527, 16
        %v555 = vrot.slane %v553, 4
        %v556 = vor.u32 %v552, %v555
        %v558 = vshrl.u32 %v528, 16
        %v560 = vrot.slane %v558, 3
        %v561 = vshll.u32 %v528, 16
        %v563 = vrot.slane %v561, 4
        %v564 = vor.u32 %v560, %v563
        %v566 = vshrl.u32 %v529, 16
        %v568 = vrot.slane %v566, 3
        %v569 = vshll.u32 %v529, 16
        %v571 = vrot.slane %v569, 4
        %v572 = vor.u32 %v568, %v571
        %v574 = vshrl.u32 %v530, 16
        %v576 = vrot.slane %v574, 3
        %v577 = vshll.u32 %v530, 16
        %v579 = vrot.slane %v577, 4
        %v580 = vor.u32 %v576, %v579
        %v582 = vshrl.u32 %v531, 16
        %v584 = vrot.slane %v582, 3
        %v585 = vshll.u32 %v531, 16
        %v587 = vrot.slane %v585, 4
        %v588 = vor.u32 %v584, %v587
        %v590 = vshrl.u32 %v532, 16
        %v592 = vrot.slane %v590, 3
        %v593 = vshll.u32 %v532, 16
        %v595 = vrot.slane %v593, 4
        %v596 = vor.u32 %v592, %v595
        %v605 = vunpack.c.l.b16 %v463
        %v606 = vunpack.c.l.b16 %v467
        %v607 = vunpack.c.l.b16 %v471
        %v608 = vunpack.c.l.b16 %v475
        %v609 = vunpack.c.l.b16 %v479
        %v610 = vunpack.c.l.b16 %v483
        %v611 = vunpack.c.l.b16 %v487
        %v612 = vunpack.c.l.b16 %v491
        %v613 = vpack.c.b16 %v605, %v510
        %v614 = vpack.c.b16 %v606, %v512
        %v615 = vpack.c.b16 %v607, %v514
        %v616 = vpack.c.b16 %v608, %v516
        %v617 = vpack.c.b16 %v609, %v518
        %v618 = vpack.c.b16 %v610, %v520
        %v619 = vpack.c.b16 %v611, %v522
        %v620 = vpack.c.b16 %v612, %v524
        %v621 = vrot.slane %v613, 3
        %v622 = vrot.slane %v614, 3
        %v623 = vrot.slane %v615, 3
        %v624 = vrot.slane %v616, 3
        %v625 = vrot.slane %v617, 3
        %v626 = vrot.slane %v618, 3
        %v627 = vrot.slane %v619, 3
        %v628 = vrot.slane %v620, 3
        %v637 = vunpack.c.l.b16 %v464
        %v638 = vunpack.c.l.b16 %v468
        %v639 = vunpack.c.l.b16 %v472
        %v640 = vunpack.c.l.b16 %v476
        %v641 = vunpack.c.l.b16 %v480
        %v642 = vunpack.c.l.b16 %v484
        %v643 = vunpack.c.l.b16 %v488
        %v644 = vunpack.c.l.b16 %v492
        %v645 = vpack.c.b16 %v637, %v605
        %v646 = vpack.c.b16 %v638, %v606
        %v647 = vpack.c.b16 %v639, %v607
        %v648 = vpack.c.b16 %v640, %v608
        %v649 = vpack.c.b16 %v641, %v609
        %v650 = vpack.c.b16 %v642, %v610
        %v651 = vpack.c.b16 %v643, %v611
        %v652 = vpack.c.b16 %v644, %v612
        %v654 = vshrl.u32 %v645, 16
        %v656 = vrot.slane %v654, 2
        %v657 = vshll.u32 %v645, 16
        %v659 = vrot.slane %v657, 3
        %v660 = vor.u32 %v656, %v659
        %v662 = vshrl.u32 %v646, 16
        %v664 = vrot.slane %v662, 2
        %v665 = vshll.u32 %v646, 16
        %v667 = vrot.slane %v665, 3
        %v668 = vor.u32 %v664, %v667
        %v670 = vshrl.u32 %v647, 16
        %v672 = vrot.slane %v670, 2
        %v673 = vshll.u32 %v647, 16
        %v675 = vrot.slane %v673, 3
        %v676 = vor.u32 %v672, %v675
        %v678 = vshrl.u32 %v648, 16
        %v680 = vrot.slane %v678, 2
        %v681 = vshll.u32 %v648, 16
        %v683 = vrot.slane %v681, 3
        %v684 = vor.u32 %v680, %v683
        %v686 = vshrl.u32 %v649, 16
        %v688 = vrot.slane %v686, 2
        %v689 = vshll.u32 %v649, 16
        %v691 = vrot.slane %v689, 3
        %v692 = vor.u32 %v688, %v691
        %v694 = vshrl.u32 %v650, 16
        %v696 = vrot.slane %v694, 2
        %v697 = vshll.u32 %v650, 16
        %v699 = vrot.slane %v697, 3
        %v700 = vor.u32 %v696, %v699
        %v702 = vshrl.u32 %v651, 16
        %v704 = vrot.slane %v702, 2
        %v705 = vshll.u32 %v651, 16
        %v707 = vrot.slane %v705, 3
        %v708 = vor.u32 %v704, %v707
        %v710 = vshrl.u32 %v652, 16
        %v712 = vrot.slane %v710, 2
        %v713 = vshll.u32 %v652, 16
        %v715 = vrot.slane %v713, 3
        %v716 = vor.u32 %v712, %v715
        %v717 = vrot.slane %v537, 1
        %v718 = vor.u32 %v534, %v717
        %v719 = vrot.slane %v545, 1
        %v720 = vor.u32 %v542, %v719
        %v721 = vrot.slane %v553, 1
        %v722 = vor.u32 %v550, %v721
        %v723 = vrot.slane %v561, 1
        %v724 = vor.u32 %v558, %v723
        %v725 = vrot.slane %v569, 1
        %v726 = vor.u32 %v566, %v725
        %v727 = vrot.slane %v577, 1
        %v728 = vor.u32 %v574, %v727
        %v729 = vrot.slane %v585, 1
        %v730 = vor.u32 %v582, %v729
        %v731 = vrot.slane %v593, 1
        %v732 = vor.u32 %v590, %v731
        %v733 = vunpack.c.l.b16 %v540
        %v734 = vunpack.c.l.b16 %v621
        %v735 = vunpack.c.l.b16 %v660
        %v736 = vunpack.c.l.b16 %v718
        %v737 = vunpack.c.l.b16 %v548
        %v738 = vunpack.c.l.b16 %v622
        %v739 = vunpack.c.l.b16 %v668
        %v740 = vunpack.c.l.b16 %v720
        %v741 = vunpack.c.l.b16 %v556
        %v742 = vunpack.c.l.b16 %v623
        %v743 = vunpack.c.l.b16 %v676
        %v744 = vunpack.c.l.b16 %v722
        %v745 = vunpack.c.l.b16 %v564
        %v746 = vunpack.c.l.b16 %v624
        %v747 = vunpack.c.l.b16 %v684
        %v748 = vunpack.c.l.b16 %v724
        %v749 = vunpack.c.l.b16 %v572
        %v750 = vunpack.c.l.b16 %v625
        %v751 = vunpack.c.l.b16 %v692
        %v752 = vunpack.c.l.b16 %v726
        %v753 = vunpack.c.l.b16 %v580
        %v754 = vunpack.c.l.b16 %v626
        %v755 = vunpack.c.l.b16 %v700
        %v756 = vunpack.c.l.b16 %v728
        %v757 = vunpack.c.l.b16 %v588
        %v758 = vunpack.c.l.b16 %v627
        %v759 = vunpack.c.l.b16 %v708
        %v760 = vunpack.c.l.b16 %v730
        %v761 = vunpack.c.l.b16 %v596
        %v762 = vunpack.c.l.b16 %v628
        %v763 = vunpack.c.l.b16 %v716
        %v764 = vunpack.c.l.b16 %v732
        %v765 = vld [vmem:[#allocation2] sm:$0xff]
        %v766 = vld [vmem:[#allocation2 + $0x8] sm:$0xff]
        %v767 = vld [vmem:[#allocation2 + $0x10] sm:$0xff]
        %v768 = vld [vmem:[#allocation2 + $0x18] sm:$0xff]
        %v769 = vld [vmem:[#allocation2 + $0x20] sm:$0xff]
        %v770 = vld [vmem:[#allocation2 + $0x28] sm:$0xff]
        %v771 = vld [vmem:[#allocation2 + $0x30] sm:$0xff]
        %v772 = vld [vmem:[#allocation2 + $0x38] sm:$0xff]
        %v773 = vld [vmem:[#allocation2 + $0x40] sm:$0xff]
        %v774 = vld [vmem:[#allocation2 + $0x48] sm:$0xff]
        %v775 = vld [vmem:[#allocation2 + $0x50] sm:$0xff]
        %v776 = vld [vmem:[#allocation2 + $0x58] sm:$0xff]
        %v777 = vld [vmem:[#allocation2 + $0x60] sm:$0xff]
        %v778 = vld [vmem:[#allocation2 + $0x68] sm:$0xff]
        %v779 = vld [vmem:[#allocation2 + $0x70] sm:$0xff]
        %v780 = vld [vmem:[#allocation2 + $0x78] sm:$0xff]
        %v781 = vld [vmem:[#allocation2 + $0x80] sm:$0xff]
        %v782 = vld [vmem:[#allocation2 + $0x88] sm:$0xff]
        %v783 = vld [vmem:[#allocation2 + $0x90] sm:$0xff]
        %v784 = vld [vmem:[#allocation2 + $0x98] sm:$0xff]
        %v785 = vld [vmem:[#allocation2 + $0xa0] sm:$0xff]
        %v786 = vld [vmem:[#allocation2 + $0xa8] sm:$0xff]
        %v787 = vld [vmem:[#allocation2 + $0xb0] sm:$0xff]
        %v788 = vld [vmem:[#allocation2 + $0xb8] sm:$0xff]
        %v789 = vld [vmem:[#allocation2 + $0xc0] sm:$0xff]
        %v790 = vld [vmem:[#allocation2 + $0xc8] sm:$0xff]
        %v791 = vld [vmem:[#allocation2 + $0xd0] sm:$0xff]
        %v792 = vld [vmem:[#allocation2 + $0xd8] sm:$0xff]
        %v793 = vld [vmem:[#allocation2 + $0xe0] sm:$0xff]
        %v794 = vld [vmem:[#allocation2 + $0xe8] sm:$0xff]
        %v795 = vld [vmem:[#allocation2 + $0xf0] sm:$0xff]
        %v796 = vld [vmem:[#allocation2 + $0xf8] sm:$0xff]
        %v797 = vld [vmem:[#allocation2 + $0x100] sm:$0xff]
        %v798 = vld [vmem:[#allocation2 + $0x108] sm:$0xff]
        %v799 = vld [vmem:[#allocation2 + $0x110] sm:$0xff]
        %v800 = vld [vmem:[#allocation2 + $0x118] sm:$0xff]
        %v801 = vld [vmem:[#allocation2 + $0x120] sm:$0xff]
        %v802 = vld [vmem:[#allocation2 + $0x128] sm:$0xff]
        %v803 = vld [vmem:[#allocation2 + $0x130] sm:$0xff]
        %v804 = vld [vmem:[#allocation2 + $0x138] sm:$0xff]
        %v805 = vld [vmem:[#allocation2 + $0x140] sm:$0xff]
        %v806 = vld [vmem:[#allocation2 + $0x148] sm:$0xff]
        %v807 = vld [vmem:[#allocation2 + $0x150] sm:$0xff]
        %v808 = vld [vmem:[#allocation2 + $0x158] sm:$0xff]
        %v809 = vld [vmem:[#allocation2 + $0x160] sm:$0xff]
        %v810 = vld [vmem:[#allocation2 + $0x168] sm:$0xff]
        %v811 = vld [vmem:[#allocation2 + $0x170] sm:$0xff]
        %v812 = vld [vmem:[#allocation2 + $0x178] sm:$0xff]
        %v813 = vld [vmem:[#allocation2 + $0x180] sm:$0xff]
        %v814 = vld [vmem:[#allocation2 + $0x188] sm:$0xff]
        %v815 = vld [vmem:[#allocation2 + $0x190] sm:$0xff]
        %v816 = vld [vmem:[#allocation2 + $0x198] sm:$0xff]
        %v817 = vld [vmem:[#allocation2 + $0x1a0] sm:$0xff]
        %v818 = vld [vmem:[#allocation2 + $0x1a8] sm:$0xff]
        %v819 = vld [vmem:[#allocation2 + $0x1b0] sm:$0xff]
        %v820 = vld [vmem:[#allocation2 + $0x1b8] sm:$0xff]
        %v821 = vld [vmem:[#allocation2 + $0x1c0] sm:$0xff]
        %v822 = vld [vmem:[#allocation2 + $0x1c8] sm:$0xff]
        %v823 = vld [vmem:[#allocation2 + $0x1d0] sm:$0xff]
        %v824 = vld [vmem:[#allocation2 + $0x1d8] sm:$0xff]
        %v825 = vld [vmem:[#allocation2 + $0x1e0] sm:$0xff]
        %v826 = vld [vmem:[#allocation2 + $0x1e8] sm:$0xff]
        %v827 = vld [vmem:[#allocation2 + $0x1f0] sm:$0xff]
        %v828 = vld [vmem:[#allocation2 + $0x1f8] sm:$0xff]
        %v829 = vld [vmem:[#allocation2 + $0x200] sm:$0xff]
        %v830 = vld [vmem:[#allocation2 + $0x208] sm:$0xff]
        %v831 = vld [vmem:[#allocation2 + $0x210] sm:$0xff]
        %v832 = vld [vmem:[#allocation2 + $0x218] sm:$0xff]
        %v833 = vld [vmem:[#allocation2 + $0x220] sm:$0xff]
        %v834 = vld [vmem:[#allocation2 + $0x228] sm:$0xff]
        %v835 = vld [vmem:[#allocation2 + $0x230] sm:$0xff]
        %v836 = vld [vmem:[#allocation2 + $0x238] sm:$0xff]
        %v837 = vld [vmem:[#allocation2 + $0x240] sm:$0xff]
        %v838 = vld [vmem:[#allocation2 + $0x248] sm:$0xff]
        %v839 = vld [vmem:[#allocation2 + $0x250] sm:$0xff]
        %v840 = vld [vmem:[#allocation2 + $0x258] sm:$0xff]
        %v841 = vld [vmem:[#allocation2 + $0x260] sm:$0xff]
        %v842 = vld [vmem:[#allocation2 + $0x268] sm:$0xff]
        %v843 = vld [vmem:[#allocation2 + $0x270] sm:$0xff]
        %v844 = vld [vmem:[#allocation2 + $0x278] sm:$0xff]
        %v845 = vld [vmem:[#allocation2 + $0x280] sm:$0xff]
        %v846 = vld [vmem:[#allocation2 + $0x288] sm:$0xff]
        %v847 = vld [vmem:[#allocation2 + $0x290] sm:$0xff]
        %v848 = vld [vmem:[#allocation2 + $0x298] sm:$0xff]
        %v849 = vld [vmem:[#allocation2 + $0x2a0] sm:$0xff]
        %v850 = vld [vmem:[#allocation2 + $0x2a8] sm:$0xff]
        %v851 = vld [vmem:[#allocation2 + $0x2b0] sm:$0xff]
        %v852 = vld [vmem:[#allocation2 + $0x2b8] sm:$0xff]
        %v853 = vld [vmem:[#allocation2 + $0x2c0] sm:$0xff]
        %v854 = vld [vmem:[#allocation2 + $0x2c8] sm:$0xff]
        %v855 = vld [vmem:[#allocation2 + $0x2d0] sm:$0xff]
        %v856 = vld [vmem:[#allocation2 + $0x2d8] sm:$0xff]
        %v857 = vld [vmem:[#allocation2 + $0x2e0] sm:$0xff]
        %v858 = vld [vmem:[#allocation2 + $0x2e8] sm:$0xff]
        %v859 = vld [vmem:[#allocation2 + $0x2f0] sm:$0xff]
        %v860 = vld [vmem:[#allocation2 + $0x2f8] sm:$0xff]
        %v861 = vld [vmem:[#allocation2 + $0x300] sm:$0xff]
        %v862 = vld [vmem:[#allocation2 + $0x308] sm:$0xff]
        %v863 = vld [vmem:[#allocation2 + $0x310] sm:$0xff]
        %v864 = vld [vmem:[#allocation2 + $0x318] sm:$0xff]
        %v865 = vld [vmem:[#allocation2 + $0x320] sm:$0xff]
        %v866 = vld [vmem:[#allocation2 + $0x328] sm:$0xff]
        %v867 = vld [vmem:[#allocation2 + $0x330] sm:$0xff]
        %v868 = vld [vmem:[#allocation2 + $0x338] sm:$0xff]
        %v869 = vld [vmem:[#allocation2 + $0x340] sm:$0xff]
        %v870 = vld [vmem:[#allocation2 + $0x348] sm:$0xff]
        %v871 = vld [vmem:[#allocation2 + $0x350] sm:$0xff]
        %v872 = vld [vmem:[#allocation2 + $0x358] sm:$0xff]
        %v873 = vld [vmem:[#allocation2 + $0x360] sm:$0xff]
        %v874 = vld [vmem:[#allocation2 + $0x368] sm:$0xff]
        %v875 = vld [vmem:[#allocation2 + $0x370] sm:$0xff]
        %v876 = vld [vmem:[#allocation2 + $0x378] sm:$0xff]
        %v877 = vld [vmem:[#allocation2 + $0x380] sm:$0xff]
        %v878 = vld [vmem:[#allocation2 + $0x388] sm:$0xff]
        %v879 = vld [vmem:[#allocation2 + $0x390] sm:$0xff]
        %v880 = vld [vmem:[#allocation2 + $0x398] sm:$0xff]
        %v881 = vld [vmem:[#allocation2 + $0x3a0] sm:$0xff]
        %v882 = vld [vmem:[#allocation2 + $0x3a8] sm:$0xff]
        %v883 = vld [vmem:[#allocation2 + $0x3b0] sm:$0xff]
        %v884 = vld [vmem:[#allocation2 + $0x3b8] sm:$0xff]
        %v885 = vld [vmem:[#allocation2 + $0x3c0] sm:$0xff]
        %v886 = vld [vmem:[#allocation2 + $0x3c8] sm:$0xff]
        %v887 = vld [vmem:[#allocation2 + $0x3d0] sm:$0xff]
        %v888 = vld [vmem:[#allocation2 + $0x3d8] sm:$0xff]
        %v889 = vld [vmem:[#allocation2 + $0x3e0] sm:$0xff]
        %v890 = vld [vmem:[#allocation2 + $0x3e8] sm:$0xff]
        %v891 = vld [vmem:[#allocation2 + $0x3f0] sm:$0xff]
        %v892 = vld [vmem:[#allocation2 + $0x3f8] sm:$0xff]
        %v893 = vld [vmem:[#allocation2 + $0x400] sm:$0xff]
        %v894 = vld [vmem:[#allocation2 + $0x408] sm:$0xff]
        %v895 = vld [vmem:[#allocation2 + $0x410] sm:$0xff]
        %v896 = vld [vmem:[#allocation2 + $0x418] sm:$0xff]
        %v897 = vld [vmem:[#allocation2 + $0x420] sm:$0xff]
        %v898 = vld [vmem:[#allocation2 + $0x428] sm:$0xff]
        %v899 = vld [vmem:[#allocation2 + $0x430] sm:$0xff]
        %v900 = vld [vmem:[#allocation2 + $0x438] sm:$0xff]
        %v901 = vld [vmem:[#allocation2 + $0x440] sm:$0xff]
        %v902 = vld [vmem:[#allocation2 + $0x448] sm:$0xff]
        %v903 = vld [vmem:[#allocation2 + $0x450] sm:$0xff]
        %v904 = vld [vmem:[#allocation2 + $0x458] sm:$0xff]
        %v905 = vld [vmem:[#allocation2 + $0x460] sm:$0xff]
        %v906 = vld [vmem:[#allocation2 + $0x468] sm:$0xff]
        %v907 = vld [vmem:[#allocation2 + $0x470] sm:$0xff]
        %v908 = vld [vmem:[#allocation2 + $0x478] sm:$0xff]
        %v909 = vld [vmem:[#allocation2 + $0x480] sm:$0xff]
        %v910 = vld [vmem:[#allocation2 + $0x488] sm:$0xff]
        %v911 = vld [vmem:[#allocation2 + $0x490] sm:$0xff]
        %v912 = vld [vmem:[#allocation2 + $0x498] sm:$0xff]
        %v913 = vld [vmem:[#allocation2 + $0x4a0] sm:$0xff]
        %v914 = vld [vmem:[#allocation2 + $0x4a8] sm:$0xff]
        %v915 = vld [vmem:[#allocation2 + $0x4b0] sm:$0xff]
        %v916 = vld [vmem:[#allocation2 + $0x4b8] sm:$0xff]
        %v917 = vld [vmem:[#allocation2 + $0x4c0] sm:$0xff]
        %v918 = vld [vmem:[#allocation2 + $0x4c8] sm:$0xff]
        %v919 = vld [vmem:[#allocation2 + $0x4d0] sm:$0xff]
        %v920 = vld [vmem:[#allocation2 + $0x4d8] sm:$0xff]
        %v921 = vld [vmem:[#allocation2 + $0x4e0] sm:$0xff]
        %v922 = vld [vmem:[#allocation2 + $0x4e8] sm:$0xff]
        %v923 = vld [vmem:[#allocation2 + $0x4f0] sm:$0xff]
        %v924 = vld [vmem:[#allocation2 + $0x4f8] sm:$0xff]
        %v925 = vld [vmem:[#allocation5] sm:$0xf]
        %v927 = vperm.slane %v925, 0
        %v928 = vperm.slane %v925, 1
        %v929 = vperm.slane %v925, 2
        %v930 = vperm.slane %v925, 3
        %v935 = vpack.c.b16 %v511, %v509
        %v936 = vpack.c.b16 %v737, %v733
        %v937 = vpack.c.b16 %v738, %v734
        %v938 = vpack.c.b16 %v739, %v735
        %v939 = vpack.c.b16 %v740, %v736
        %v940 = vpack.c.b16 %v515, %v513
        %v941 = vpack.c.b16 %v745, %v741
        %v942 = vpack.c.b16 %v746, %v742
        %v943 = vpack.c.b16 %v747, %v743
        %v944 = vpack.c.b16 %v748, %v744
        %v945 = vpack.c.b16 %v519, %v517
        %v946 = vpack.c.b16 %v753, %v749
        %v947 = vpack.c.b16 %v754, %v750
        %v948 = vpack.c.b16 %v755, %v751
        %v949 = vpack.c.b16 %v756, %v752
        %v950 = vpack.c.b16 %v523, %v521
        %v951 = vpack.c.b16 %v761, %v757
        %v952 = vpack.c.b16 %v762, %v758
        %v953 = vpack.c.b16 %v763, %v759
        %v954 = vpack.c.b16 %v764, %v760
        %v1135 = vunpack.c.l.b16 %v765
        %v1136 = vunpack.c.h.b16 %v765
        %v1137 = vunpack.c.l.b16 %v766
        %v1138 = vunpack.c.h.b16 %v766
        %v1139 = vunpack.c.l.b16 %v767
        %v1140 = vunpack.c.h.b16 %v767
        %v1141 = vunpack.c.l.b16 %v768
        %v1142 = vunpack.c.h.b16 %v768
        %v1143 = vunpack.c.l.b16 %v769
        %v1144 = vunpack.c.h.b16 %v769
        %v1145 = vunpack.c.l.b16 %v770
        %v1146 = vunpack.c.h.b16 %v770
        %v1147 = vunpack.c.l.b16 %v771
        %v1148 = vunpack.c.h.b16 %v771
        %v1149 = vunpack.c.l.b16 %v772
        %v1150 = vunpack.c.h.b16 %v772
        %v1151 = vunpack.c.l.b16 %v773
        %v1152 = vunpack.c.h.b16 %v773
        %v1153 = vunpack.c.l.b16 %v774
        %v1154 = vunpack.c.h.b16 %v774
        %v1155 = vunpack.c.l.b16 %v775
        %v1156 = vunpack.c.h.b16 %v775
        %v1157 = vunpack.c.l.b16 %v776
        %v1158 = vunpack.c.h.b16 %v776
        %v1159 = vunpack.c.l.b16 %v777
        %v1160 = vunpack.c.h.b16 %v777
        %v1161 = vunpack.c.l.b16 %v778
        %v1162 = vunpack.c.h.b16 %v778
        %v1163 = vunpack.c.l.b16 %v779
        %v1164 = vunpack.c.h.b16 %v779
        %v1165 = vunpack.c.l.b16 %v780
        %v1166 = vunpack.c.h.b16 %v780
        %v1167 = vunpack.c.l.b16 %v781
        %v1168 = vunpack.c.h.b16 %v781
        %v1169 = vunpack.c.l.b16 %v782
        %v1170 = vunpack.c.h.b16 %v782
        %v1171 = vunpack.c.l.b16 %v783
        %v1172 = vunpack.c.h.b16 %v783
        %v1173 = vunpack.c.l.b16 %v784
        %v1174 = vunpack.c.h.b16 %v784
        %v1175 = vunpack.c.l.b16 %v785
        %v1176 = vunpack.c.h.b16 %v785
        %v1177 = vunpack.c.l.b16 %v786
        %v1178 = vunpack.c.h.b16 %v786
        %v1179 = vunpack.c.l.b16 %v787
        %v1180 = vunpack.c.h.b16 %v787
        %v1181 = vunpack.c.l.b16 %v788
        %v1182 = vunpack.c.h.b16 %v788
        %v1183 = vunpack.c.l.b16 %v789
        %v1184 = vunpack.c.h.b16 %v789
        %v1185 = vunpack.c.l.b16 %v790
        %v1186 = vunpack.c.h.b16 %v790
        %v1187 = vunpack.c.l.b16 %v791
        %v1188 = vunpack.c.h.b16 %v791
        %v1189 = vunpack.c.l.b16 %v792
        %v1190 = vunpack.c.h.b16 %v792
        %v1191 = vunpack.c.l.b16 %v793
        %v1192 = vunpack.c.h.b16 %v793
        %v1193 = vunpack.c.l.b16 %v794
        %v1194 = vunpack.c.h.b16 %v794
        %v1195 = vunpack.c.l.b16 %v795
        %v1196 = vunpack.c.h.b16 %v795
        %v1197 = vunpack.c.l.b16 %v796
        %v1198 = vunpack.c.h.b16 %v796
        %v1199 = vunpack.c.l.b16 %v797
        %v1200 = vunpack.c.h.b16 %v797
        %v1201 = vunpack.c.l.b16 %v798
        %v1202 = vunpack.c.h.b16 %v798
        %v1203 = vunpack.c.l.b16 %v799
        %v1204 = vunpack.c.h.b16 %v799
        %v1205 = vunpack.c.l.b16 %v800
        %v1206 = vunpack.c.h.b16 %v800
        %v1207 = vunpack.c.l.b16 %v801
        %v1208 = vunpack.c.h.b16 %v801
        %v1209 = vunpack.c.l.b16 %v802
        %v1210 = vunpack.c.h.b16 %v802
        %v1211 = vunpack.c.l.b16 %v803
        %v1212 = vunpack.c.h.b16 %v803
        %v1213 = vunpack.c.l.b16 %v804
        %v1214 = vunpack.c.h.b16 %v804
        %v1215 = vunpack.c.l.b16 %v805
        %v1216 = vunpack.c.h.b16 %v805
        %v1217 = vunpack.c.l.b16 %v806
        %v1218 = vunpack.c.h.b16 %v806
        %v1219 = vunpack.c.l.b16 %v807
        %v1220 = vunpack.c.h.b16 %v807
        %v1221 = vunpack.c.l.b16 %v808
        %v1222 = vunpack.c.h.b16 %v808
        %v1223 = vunpack.c.l.b16 %v809
        %v1224 = vunpack.c.h.b16 %v809
        %v1225 = vunpack.c.l.b16 %v810
        %v1226 = vunpack.c.h.b16 %v810
        %v1227 = vunpack.c.l.b16 %v811
        %v1228 = vunpack.c.h.b16 %v811
        %v1229 = vunpack.c.l.b16 %v812
        %v1230 = vunpack.c.h.b16 %v812
        %v1231 = vunpack.c.l.b16 %v813
        %v1232 = vunpack.c.h.b16 %v813
        %v1233 = vunpack.c.l.b16 %v814
        %v1234 = vunpack.c.h.b16 %v814
        %v1235 = vunpack.c.l.b16 %v815
        %v1236 = vunpack.c.h.b16 %v815
        %v1237 = vunpack.c.l.b16 %v816
        %v1238 = vunpack.c.h.b16 %v816
        %v1239 = vunpack.c.l.b16 %v817
        %v1240 = vunpack.c.h.b16 %v817
        %v1241 = vunpack.c.l.b16 %v818
        %v1242 = vunpack.c.h.b16 %v818
        %v1243 = vunpack.c.l.b16 %v819
        %v1244 = vunpack.c.h.b16 %v819
        %v1245 = vunpack.c.l.b16 %v820
        %v1246 = vunpack.c.h.b16 %v820
        %v1247 = vunpack.c.l.b16 %v821
        %v1248 = vunpack.c.h.b16 %v821
        %v1249 = vunpack.c.l.b16 %v822
        %v1250 = vunpack.c.h.b16 %v822
        %v1251 = vunpack.c.l.b16 %v823
        %v1252 = vunpack.c.h.b16 %v823
        %v1253 = vunpack.c.l.b16 %v824
        %v1254 = vunpack.c.h.b16 %v824
        %v1255 = vunpack.c.l.b16 %v825
        %v1256 = vunpack.c.h.b16 %v825
        %v1257 = vunpack.c.l.b16 %v826
        %v1258 = vunpack.c.h.b16 %v826
        %v1259 = vunpack.c.l.b16 %v827
        %v1260 = vunpack.c.h.b16 %v827
        %v1261 = vunpack.c.l.b16 %v828
        %v1262 = vunpack.c.h.b16 %v828
        %v1263 = vunpack.c.l.b16 %v829
        %v1264 = vunpack.c.h.b16 %v829
        %v1265 = vunpack.c.l.b16 %v830
        %v1266 = vunpack.c.h.b16 %v830
        %v1267 = vunpack.c.l.b16 %v831
        %v1268 = vunpack.c.h.b16 %v831
        %v1269 = vunpack.c.l.b16 %v832
        %v1270 = vunpack.c.h.b16 %v832
        %v1271 = vunpack.c.l.b16 %v833
        %v1272 = vunpack.c.h.b16 %v833
        %v1273 = vunpack.c.l.b16 %v834
        %v1274 = vunpack.c.h.b16 %v834
        %v1275 = vunpack.c.l.b16 %v835
        %v1276 = vunpack.c.h.b16 %v835
        %v1277 = vunpack.c.l.b16 %v836
        %v1278 = vunpack.c.h.b16 %v836
        %v1279 = vunpack.c.l.b16 %v837
        %v1280 = vunpack.c.h.b16 %v837
        %v1281 = vunpack.c.l.b16 %v838
        %v1282 = vunpack.c.h.b16 %v838
        %v1283 = vunpack.c.l.b16 %v839
        %v1284 = vunpack.c.h.b16 %v839
        %v1285 = vunpack.c.l.b16 %v840
        %v1286 = vunpack.c.h.b16 %v840
        %v1287 = vunpack.c.l.b16 %v841
        %v1288 = vunpack.c.h.b16 %v841
        %v1289 = vunpack.c.l.b16 %v842
        %v1290 = vunpack.c.h.b16 %v842
        %v1291 = vunpack.c.l.b16 %v843
        %v1292 = vunpack.c.h.b16 %v843
        %v1293 = vunpack.c.l.b16 %v844
        %v1294 = vunpack.c.h.b16 %v844
        %v1295 = vunpack.c.l.b16 %v845
        %v1296 = vunpack.c.h.b16 %v845
        %v1297 = vunpack.c.l.b16 %v846
        %v1298 = vunpack.c.h.b16 %v846
        %v1299 = vunpack.c.l.b16 %v847
        %v1300 = vunpack.c.h.b16 %v847
        %v1301 = vunpack.c.l.b16 %v848
        %v1302 = vunpack.c.h.b16 %v848
        %v1303 = vunpack.c.l.b16 %v849
        %v1304 = vunpack.c.h.b16 %v849
        %v1305 = vunpack.c.l.b16 %v850
        %v1306 = vunpack.c.h.b16 %v850
        %v1307 = vunpack.c.l.b16 %v851
        %v1308 = vunpack.c.h.b16 %v851
        %v1309 = vunpack.c.l.b16 %v852
        %v1310 = vunpack.c.h.b16 %v852
        %v1311 = vunpack.c.l.b16 %v853
        %v1312 = vunpack.c.h.b16 %v853
        %v1313 = vunpack.c.l.b16 %v854
        %v1314 = vunpack.c.h.b16 %v854
        %v1315 = vunpack.c.l.b16 %v855
        %v1316 = vunpack.c.h.b16 %v855
        %v1317 = vunpack.c.l.b16 %v856
        %v1318 = vunpack.c.h.b16 %v856
        %v1319 = vunpack.c.l.b16 %v857
        %v1320 = vunpack.c.h.b16 %v857
        %v1321 = vunpack.c.l.b16 %v858
        %v1322 = vunpack.c.h.b16 %v858
        %v1323 = vunpack.c.l.b16 %v859
        %v1324 = vunpack.c.h.b16 %v859
        %v1325 = vunpack.c.l.b16 %v860
        %v1326 = vunpack.c.h.b16 %v860
        %v1327 = vunpack.c.l.b16 %v861
        %v1328 = vunpack.c.h.b16 %v861
        %v1329 = vunpack.c.l.b16 %v862
        %v1330 = vunpack.c.h.b16 %v862
        %v1331 = vunpack.c.l.b16 %v863
        %v1332 = vunpack.c.h.b16 %v863
        %v1333 = vunpack.c.l.b16 %v864
        %v1334 = vunpack.c.h.b16 %v864
        %v1335 = vunpack.c.l.b16 %v865
        %v1336 = vunpack.c.h.b16 %v865
        %v1337 = vunpack.c.l.b16 %v866
        %v1338 = vunpack.c.h.b16 %v866
        %v1339 = vunpack.c.l.b16 %v867
        %v1340 = vunpack.c.h.b16 %v867
        %v1341 = vunpack.c.l.b16 %v868
        %v1342 = vunpack.c.h.b16 %v868
        %v1343 = vunpack.c.l.b16 %v869
        %v1344 = vunpack.c.h.b16 %v869
        %v1345 = vunpack.c.l.b16 %v870
        %v1346 = vunpack.c.h.b16 %v870
        %v1347 = vunpack.c.l.b16 %v871
        %v1348 = vunpack.c.h.b16 %v871
        %v1349 = vunpack.c.l.b16 %v872
        %v1350 = vunpack.c.h.b16 %v872
        %v1351 = vunpack.c.l.b16 %v873
        %v1352 = vunpack.c.h.b16 %v873
        %v1353 = vunpack.c.l.b16 %v874
        %v1354 = vunpack.c.h.b16 %v874
        %v1355 = vunpack.c.l.b16 %v875
        %v1356 = vunpack.c.h.b16 %v875
        %v1357 = vunpack.c.l.b16 %v876
        %v1358 = vunpack.c.h.b16 %v876
        %v1359 = vunpack.c.l.b16 %v877
        %v1360 = vunpack.c.h.b16 %v877
        %v1361 = vunpack.c.l.b16 %v878
        %v1362 = vunpack.c.h.b16 %v878
        %v1363 = vunpack.c.l.b16 %v879
        %v1364 = vunpack.c.h.b16 %v879
        %v1365 = vunpack.c.l.b16 %v880
        %v1366 = vunpack.c.h.b16 %v880
        %v1367 = vunpack.c.l.b16 %v881
        %v1368 = vunpack.c.h.b16 %v881
        %v1369 = vunpack.c.l.b16 %v882
        %v1370 = vunpack.c.h.b16 %v882
        %v1371 = vunpack.c.l.b16 %v883
        %v1372 = vunpack.c.h.b16 %v883
        %v1373 = vunpack.c.l.b16 %v884
        %v1374 = vunpack.c.h.b16 %v884
        %v1375 = vunpack.c.l.b16 %v885
        %v1376 = vunpack.c.h.b16 %v885
        %v1377 = vunpack.c.l.b16 %v886
        %v1378 = vunpack.c.h.b16 %v886
        %v1379 = vunpack.c.l.b16 %v887
        %v1380 = vunpack.c.h.b16 %v887
        %v1381 = vunpack.c.l.b16 %v888
        %v1382 = vunpack.c.h.b16 %v888
        %v1383 = vunpack.c.l.b16 %v889
        %v1384 = vunpack.c.h.b16 %v889
        %v1385 = vunpack.c.l.b16 %v890
        %v1386 = vunpack.c.h.b16 %v890
        %v1387 = vunpack.c.l.b16 %v891
        %v1388 = vunpack.c.h.b16 %v891
        %v1389 = vunpack.c.l.b16 %v892
        %v1390 = vunpack.c.h.b16 %v892
        %v1391 = vunpack.c.l.b16 %v893
        %v1392 = vunpack.c.h.b16 %v893
        %v1393 = vunpack.c.l.b16 %v894
        %v1394 = vunpack.c.h.b16 %v894
        %v1395 = vunpack.c.l.b16 %v895
        %v1396 = vunpack.c.h.b16 %v895
        %v1397 = vunpack.c.l.b16 %v896
        %v1398 = vunpack.c.h.b16 %v896
        %v1399 = vunpack.c.l.b16 %v897
        %v1400 = vunpack.c.h.b16 %v897
        %v1401 = vunpack.c.l.b16 %v898
        %v1402 = vunpack.c.h.b16 %v898
        %v1403 = vunpack.c.l.b16 %v899
        %v1404 = vunpack.c.h.b16 %v899
        %v1405 = vunpack.c.l.b16 %v900
        %v1406 = vunpack.c.h.b16 %v900
        %v1407 = vunpack.c.l.b16 %v901
        %v1408 = vunpack.c.h.b16 %v901
        %v1409 = vunpack.c.l.b16 %v902
        %v1410 = vunpack.c.h.b16 %v902
        %v1411 = vunpack.c.l.b16 %v903
        %v1412 = vunpack.c.h.b16 %v903
        %v1413 = vunpack.c.l.b16 %v904
        %v1414 = vunpack.c.h.b16 %v904
        %v1415 = vunpack.c.l.b16 %v905
        %v1416 = vunpack.c.h.b16 %v905
        %v1417 = vunpack.c.l.b16 %v906
        %v1418 = vunpack.c.h.b16 %v906
        %v1419 = vunpack.c.l.b16 %v907
        %v1420 = vunpack.c.h.b16 %v907
        %v1421 = vunpack.c.l.b16 %v908
        %v1422 = vunpack.c.h.b16 %v908
        %v1423 = vunpack.c.l.b16 %v909
        %v1424 = vunpack.c.h.b16 %v909
        %v1425 = vunpack.c.l.b16 %v910
        %v1426 = vunpack.c.h.b16 %v910
        %v1427 = vunpack.c.l.b16 %v911
        %v1428 = vunpack.c.h.b16 %v911
        %v1429 = vunpack.c.l.b16 %v912
        %v1430 = vunpack.c.h.b16 %v912
        %v1431 = vunpack.c.l.b16 %v913
        %v1432 = vunpack.c.h.b16 %v913
        %v1433 = vunpack.c.l.b16 %v914
        %v1434 = vunpack.c.h.b16 %v914
        %v1435 = vunpack.c.l.b16 %v915
        %v1436 = vunpack.c.h.b16 %v915
        %v1437 = vunpack.c.l.b16 %v916
        %v1438 = vunpack.c.h.b16 %v916
        %v1439 = vunpack.c.l.b16 %v917
        %v1440 = vunpack.c.h.b16 %v917
        %v1441 = vunpack.c.l.b16 %v918
        %v1442 = vunpack.c.h.b16 %v918
        %v1443 = vunpack.c.l.b16 %v919
        %v1444 = vunpack.c.h.b16 %v919
        %v1445 = vunpack.c.l.b16 %v920
        %v1446 = vunpack.c.h.b16 %v920
        %v1447 = vunpack.c.l.b16 %v921
        %v1448 = vunpack.c.h.b16 %v921
        %v1449 = vunpack.c.l.b16 %v922
        %v1450 = vunpack.c.h.b16 %v922
        %v1451 = vunpack.c.l.b16 %v923
        %v1452 = vunpack.c.h.b16 %v923
        %v1453 = vunpack.c.l.b16 %v924
        %v1454 = vunpack.c.h.b16 %v924
        %v1455 = vpack.c.b16 %v1139, %v1135
        %v1456 = vpack.c.b16 %v1140, %v1136
        %v1457 = vpack.c.b16 %v1141, %v1137
        %v1458 = vpack.c.b16 %v1142, %v1138
        %v1459 = vpack.c.b16 %v1147, %v1143
        %v1460 = vpack.c.b16 %v1148, %v1144
        %v1461 = vpack.c.b16 %v1149, %v1145
        %v1462 = vpack.c.b16 %v1150, %v1146
        %v1463 = vpack.c.b16 %v1155, %v1151
        %v1464 = vpack.c.b16 %v1156, %v1152
        %v1465 = vpack.c.b16 %v1157, %v1153
        %v1466 = vpack.c.b16 %v1158, %v1154
        %v1467 = vpack.c.b16 %v1163, %v1159
        %v1468 = vpack.c.b16 %v1164, %v1160
        %v1469 = vpack.c.b16 %v1165, %v1161
        %v1470 = vpack.c.b16 %v1166, %v1162
        %v1471 = vpack.c.b16 %v1171, %v1167
        %v1472 = vpack.c.b16 %v1172, %v1168
        %v1473 = vpack.c.b16 %v1173, %v1169
        %v1474 = vpack.c.b16 %v1174, %v1170
        %v1475 = vpack.c.b16 %v1179, %v1175
        %v1476 = vpack.c.b16 %v1180, %v1176
        %v1477 = vpack.c.b16 %v1181, %v1177
        %v1478 = vpack.c.b16 %v1182, %v1178
        %v1479 = vpack.c.b16 %v1187, %v1183
        %v1480 = vpack.c.b16 %v1188, %v1184
        %v1481 = vpack.c.b16 %v1189, %v1185
        %v1482 = vpack.c.b16 %v1190, %v1186
        %v1483 = vpack.c.b16 %v1195, %v1191
        %v1484 = vpack.c.b16 %v1196, %v1192
        %v1485 = vpack.c.b16 %v1197, %v1193
        %v1486 = vpack.c.b16 %v1198, %v1194
        %v1487 = vpack.c.b16 %v1203, %v1199
        %v1488 = vpack.c.b16 %v1204, %v1200
        %v1489 = vpack.c.b16 %v1205, %v1201
        %v1490 = vpack.c.b16 %v1206, %v1202
        %v1491 = vpack.c.b16 %v1211, %v1207
        %v1492 = vpack.c.b16 %v1212, %v1208
        %v1493 = vpack.c.b16 %v1213, %v1209
        %v1494 = vpack.c.b16 %v1214, %v1210
        %v1495 = vpack.c.b16 %v1219, %v1215
        %v1496 = vpack.c.b16 %v1220, %v1216
        %v1497 = vpack.c.b16 %v1221, %v1217
        %v1498 = vpack.c.b16 %v1222, %v1218
        %v1499 = vpack.c.b16 %v1227, %v1223
        %v1500 = vpack.c.b16 %v1228, %v1224
        %v1501 = vpack.c.b16 %v1229, %v1225
        %v1502 = vpack.c.b16 %v1230, %v1226
        %v1503 = vpack.c.b16 %v1235, %v1231
        %v1504 = vpack.c.b16 %v1236, %v1232
        %v1505 = vpack.c.b16 %v1237, %v1233
        %v1506 = vpack.c.b16 %v1238, %v1234
        %v1507 = vpack.c.b16 %v1243, %v1239
        %v1508 = vpack.c.b16 %v1244, %v1240
        %v1509 = vpack.c.b16 %v1245, %v1241
        %v1510 = vpack.c.b16 %v1246, %v1242
        %v1511 = vpack.c.b16 %v1251, %v1247
        %v1512 = vpack.c.b16 %v1252, %v1248
        %v1513 = vpack.c.b16 %v1253, %v1249
        %v1514 = vpack.c.b16 %v1254, %v1250
        %v1515 = vpack.c.b16 %v1259, %v1255
        %v1516 = vpack.c.b16 %v1260, %v1256
        %v1517 = vpack.c.b16 %v1261, %v1257
        %v1518 = vpack.c.b16 %v1262, %v1258
        %v1519 = vpack.c.b16 %v1267, %v1263
        %v1520 = vpack.c.b16 %v1268, %v1264
        %v1521 = vpack.c.b16 %v1269, %v1265
        %v1522 = vpack.c.b16 %v1270, %v1266
        %v1523 = vpack.c.b16 %v1275, %v1271
        %v1524 = vpack.c.b16 %v1276, %v1272
        %v1525 = vpack.c.b16 %v1277, %v1273
        %v1526 = vpack.c.b16 %v1278, %v1274
        %v1527 = vpack.c.b16 %v1283, %v1279
        %v1528 = vpack.c.b16 %v1284, %v1280
        %v1529 = vpack.c.b16 %v1285, %v1281
        %v1530 = vpack.c.b16 %v1286, %v1282
        %v1531 = vpack.c.b16 %v1291, %v1287
        %v1532 = vpack.c.b16 %v1292, %v1288
        %v1533 = vpack.c.b16 %v1293, %v1289
        %v1534 = vpack.c.b16 %v1294, %v1290
        %v1535 = vpack.c.b16 %v1299, %v1295
        %v1536 = vpack.c.b16 %v1300, %v1296
        %v1537 = vpack.c.b16 %v1301, %v1297
        %v1538 = vpack.c.b16 %v1302, %v1298
        %v1539 = vpack.c.b16 %v1307, %v1303
        %v1540 = vpack.c.b16 %v1308, %v1304
        %v1541 = vpack.c.b16 %v1309, %v1305
        %v1542 = vpack.c.b16 %v1310, %v1306
        %v1543 = vpack.c.b16 %v1315, %v1311
        %v1544 = vpack.c.b16 %v1316, %v1312
        %v1545 = vpack.c.b16 %v1317, %v1313
        %v1546 = vpack.c.b16 %v1318, %v1314
        %v1547 = vpack.c.b16 %v1323, %v1319
        %v1548 = vpack.c.b16 %v1324, %v1320
        %v1549 = vpack.c.b16 %v1325, %v1321
        %v1550 = vpack.c.b16 %v1326, %v1322
        %v1551 = vpack.c.b16 %v1331, %v1327
        %v1552 = vpack.c.b16 %v1332, %v1328
        %v1553 = vpack.c.b16 %v1333, %v1329
        %v1554 = vpack.c.b16 %v1334, %v1330
        %v1555 = vpack.c.b16 %v1339, %v1335
        %v1556 = vpack.c.b16 %v1340, %v1336
        %v1557 = vpack.c.b16 %v1341, %v1337
        %v1558 = vpack.c.b16 %v1342, %v1338
        %v1559 = vpack.c.b16 %v1347, %v1343
        %v1560 = vpack.c.b16 %v1348, %v1344
        %v1561 = vpack.c.b16 %v1349, %v1345
        %v1562 = vpack.c.b16 %v1350, %v1346
        %v1563 = vpack.c.b16 %v1355, %v1351
        %v1564 = vpack.c.b16 %v1356, %v1352
        %v1565 = vpack.c.b16 %v1357, %v1353
        %v1566 = vpack.c.b16 %v1358, %v1354
        %v1567 = vpack.c.b16 %v1363, %v1359
        %v1568 = vpack.c.b16 %v1364, %v1360
        %v1569 = vpack.c.b16 %v1365, %v1361
        %v1570 = vpack.c.b16 %v1366, %v1362
        %v1571 = vpack.c.b16 %v1371, %v1367
        %v1572 = vpack.c.b16 %v1372, %v1368
        %v1573 = vpack.c.b16 %v1373, %v1369
        %v1574 = vpack.c.b16 %v1374, %v1370
        %v1575 = vpack.c.b16 %v1379, %v1375
        %v1576 = vpack.c.b16 %v1380, %v1376
        %v1577 = vpack.c.b16 %v1381, %v1377
        %v1578 = vpack.c.b16 %v1382, %v1378
        %v1579 = vpack.c.b16 %v1387, %v1383
        %v1580 = vpack.c.b16 %v1388, %v1384
        %v1581 = vpack.c.b16 %v1389, %v1385
        %v1582 = vpack.c.b16 %v1390, %v1386
        %v1583 = vpack.c.b16 %v1395, %v1391
        %v1584 = vpack.c.b16 %v1396, %v1392
        %v1585 = vpack.c.b16 %v1397, %v1393
        %v1586 = vpack.c.b16 %v1398, %v1394
        %v1587 = vpack.c.b16 %v1403, %v1399
        %v1588 = vpack.c.b16 %v1404, %v1400
        %v1589 = vpack.c.b16 %v1405, %v1401
        %v1590 = vpack.c.b16 %v1406, %v1402
        %v1591 = vpack.c.b16 %v1411, %v1407
        %v1592 = vpack.c.b16 %v1412, %v1408
        %v1593 = vpack.c.b16 %v1413, %v1409
        %v1594 = vpack.c.b16 %v1414, %v1410
        %v1595 = vpack.c.b16 %v1419, %v1415
        %v1596 = vpack.c.b16 %v1420, %v1416
        %v1597 = vpack.c.b16 %v1421, %v1417
        %v1598 = vpack.c.b16 %v1422, %v1418
        %v1599 = vpack.c.b16 %v1427, %v1423
        %v1600 = vpack.c.b16 %v1428, %v1424
        %v1601 = vpack.c.b16 %v1429, %v1425
        %v1602 = vpack.c.b16 %v1430, %v1426
        %v1603 = vpack.c.b16 %v1435, %v1431
        %v1604 = vpack.c.b16 %v1436, %v1432
        %v1605 = vpack.c.b16 %v1437, %v1433
        %v1606 = vpack.c.b16 %v1438, %v1434
        %v1607 = vpack.c.b16 %v1443, %v1439
        %v1608 = vpack.c.b16 %v1444, %v1440
        %v1609 = vpack.c.b16 %v1445, %v1441
        %v1610 = vpack.c.b16 %v1446, %v1442
        %v1611 = vpack.c.b16 %v1451, %v1447
        %v1612 = vpack.c.b16 %v1452, %v1448
        %v1613 = vpack.c.b16 %v1453, %v1449
        %v1614 = vpack.c.b16 %v1454, %v1450
        %1775 = vmatpush.bf16.msra.mxu0 %v1483
        %1776 = vmatpush.bf16.msra.mxu0 %v1479
        %1777 = vmatpush.bf16.msra.mxu0 %v1475
        %1778 = vmatpush.bf16.msra.mxu0 %v1471
        %1779 = vmatpush.bf16.msra.mxu0 %v1467
        %1780 = vmatpush.bf16.msra.mxu0 %v1463
        %1781 = vmatpush.bf16.msra.mxu0 %v1459
        %1782 = vmatpush.bf16.msra.mxu0 %v1455
        %1783 = vmatmul.bf16.gmra.mxu0 %v935
        %v1784 = vpop.f32.mrf.mxu0
        %v1785 = vadd.f32 %v927, %v1784
        %v1786 = vpop.f32.mrf.mxu0
        %v1787 = vadd.f32 %v927, %v1786
        %1788 = vmatmul.bf16.gmra.mxu0 %v940
        %v1789 = vpop.f32.mrf.mxu0
        %v1790 = vadd.f32 %v927, %v1789
        %v1791 = vpop.f32.mrf.mxu0
        %v1792 = vadd.f32 %v927, %v1791
        %1793 = vmatmul.bf16.gmra.mxu0 %v945
        %v1794 = vpop.f32.mrf.mxu0
        %v1795 = vadd.f32 %v927, %v1794
        %v1796 = vpop.f32.mrf.mxu0
        %v1797 = vadd.f32 %v927, %v1796
        %1798 = vmatmul.bf16.gmra.mxu0 %v950
        %v1799 = vpop.f32.mrf.mxu0
        %v1800 = vadd.f32 %v927, %v1799
        %v1801 = vpop.f32.mrf.mxu0
        %v1802 = vadd.f32 %v927, %v1801
        %1803 = vdwg.mxu0
        %1804 = vmatpush.bf16.msra.mxu0 %v1515
        %1805 = vmatpush.bf16.msra.mxu0 %v1511
        %1806 = vmatpush.bf16.msra.mxu0 %v1507
        %1807 = vmatpush.bf16.msra.mxu0 %v1503
        %1808 = vmatpush.bf16.msra.mxu0 %v1499
        %1809 = vmatpush.bf16.msra.mxu0 %v1495
        %1810 = vmatpush.bf16.msra.mxu0 %v1491
        %1811 = vmatpush.bf16.msra.mxu0 %v1487
        %1812 = vmatmul.bf16.gmra.mxu0 %v936
        %v1813 = vpop.f32.mrf.mxu0
        %v1814 = vadd.f32 %v1785, %v1813
        %v1815 = vpop.f32.mrf.mxu0
        %v1816 = vadd.f32 %v1787, %v1815
        %1817 = vmatmul.bf16.gmra.mxu0 %v941
        %v1818 = vpop.f32.mrf.mxu0
        %v1819 = vadd.f32 %v1790, %v1818
        %v1820 = vpop.f32.mrf.mxu0
        %v1821 = vadd.f32 %v1792, %v1820
        %1822 = vmatmul.bf16.gmra.mxu0 %v946
        %v1823 = vpop.f32.mrf.mxu0
        %v1824 = vadd.f32 %v1795, %v1823
        %v1825 = vpop.f32.mrf.mxu0
        %v1826 = vadd.f32 %v1797, %v1825
        %1827 = vmatmul.bf16.gmra.mxu0 %v951
        %v1828 = vpop.f32.mrf.mxu0
        %v1829 = vadd.f32 %v1800, %v1828
        %v1830 = vpop.f32.mrf.mxu0
        %v1831 = vadd.f32 %v1802, %v1830
        %1832 = vdwg.mxu0
        %1833 = vmatpush.bf16.msra.mxu0 %v1547
        %1834 = vmatpush.bf16.msra.mxu0 %v1543
        %1835 = vmatpush.bf16.msra.mxu0 %v1539
        %1836 = vmatpush.bf16.msra.mxu0 %v1535
        %1837 = vmatpush.bf16.msra.mxu0 %v1531
        %1838 = vmatpush.bf16.msra.mxu0 %v1527
        %1839 = vmatpush.bf16.msra.mxu0 %v1523
        %1840 = vmatpush.bf16.msra.mxu0 %v1519
        %1841 = vmatmul.bf16.gmra.mxu0 %v937
        %v1842 = vpop.f32.mrf.mxu0
        %v1843 = vadd.f32 %v1814, %v1842
        %v1844 = vpop.f32.mrf.mxu0
        %v1845 = vadd.f32 %v1816, %v1844
        %1846 = vmatmul.bf16.gmra.mxu0 %v942
        %v1847 = vpop.f32.mrf.mxu0
        %v1848 = vadd.f32 %v1819, %v1847
        %v1849 = vpop.f32.mrf.mxu0
        %v1850 = vadd.f32 %v1821, %v1849
        %1851 = vmatmul.bf16.gmra.mxu0 %v947
        %v1852 = vpop.f32.mrf.mxu0
        %v1853 = vadd.f32 %v1824, %v1852
        %v1854 = vpop.f32.mrf.mxu0
        %v1855 = vadd.f32 %v1826, %v1854
        %1856 = vmatmul.bf16.gmra.mxu0 %v952
        %v1857 = vpop.f32.mrf.mxu0
        %v1858 = vadd.f32 %v1829, %v1857
        %v1859 = vpop.f32.mrf.mxu0
        %v1860 = vadd.f32 %v1831, %v1859
        %1861 = vdwg.mxu0
        %1862 = vmatpush.bf16.msra.mxu0 %v1579
        %1863 = vmatpush.bf16.msra.mxu0 %v1575
        %1864 = vmatpush.bf16.msra.mxu0 %v1571
        %1865 = vmatpush.bf16.msra.mxu0 %v1567
        %1866 = vmatpush.bf16.msra.mxu0 %v1563
        %1867 = vmatpush.bf16.msra.mxu0 %v1559
        %1868 = vmatpush.bf16.msra.mxu0 %v1555
        %1869 = vmatpush.bf16.msra.mxu0 %v1551
        %1870 = vmatmul.bf16.gmra.mxu0 %v938
        %v1871 = vpop.f32.mrf.mxu0
        %v1872 = vadd.f32 %v1843, %v1871
        %v1873 = vpop.f32.mrf.mxu0
        %v1874 = vadd.f32 %v1845, %v1873
        %1875 = vmatmul.bf16.gmra.mxu0 %v943
        %v1876 = vpop.f32.mrf.mxu0
        %v1877 = vadd.f32 %v1848, %v1876
        %v1878 = vpop.f32.mrf.mxu0
        %v1879 = vadd.f32 %v1850, %v1878
        %1880 = vmatmul.bf16.gmra.mxu0 %v948
        %v1881 = vpop.f32.mrf.mxu0
        %v1882 = vadd.f32 %v1853, %v1881
        %v1883 = vpop.f32.mrf.mxu0
        %v1884 = vadd.f32 %v1855, %v1883
        %1885 = vmatmul.bf16.gmra.mxu0 %v953
        %v1886 = vpop.f32.mrf.mxu0
        %v1887 = vadd.f32 %v1858, %v1886
        %v1888 = vpop.f32.mrf.mxu0
        %v1889 = vadd.f32 %v1860, %v1888
        %1890 = vdwg.mxu0
        %1891 = vmatpush.bf16.msra.mxu0 %v1611
        %1892 = vmatpush.bf16.msra.mxu0 %v1607
        %1893 = vmatpush.bf16.msra.mxu0 %v1603
        %1894 = vmatpush.bf16.msra.mxu0 %v1599
        %1895 = vmatpush.bf16.msra.mxu0 %v1595
        %1896 = vmatpush.bf16.msra.mxu0 %v1591
        %1897 = vmatpush.bf16.msra.mxu0 %v1587
        %1898 = vmatpush.bf16.msra.mxu0 %v1583
        %1899 = vmatmul.bf16.gmra.mxu0 %v939
        %v1900 = vpop.f32.mrf.mxu0
        %v1901 = vadd.f32 %v1872, %v1900
        %v1902 = vpop.f32.mrf.mxu0
        %v1903 = vadd.f32 %v1874, %v1902
        %1904 = vmatmul.bf16.gmra.mxu0 %v944
        %v1905 = vpop.f32.mrf.mxu0
        %v1906 = vadd.f32 %v1877, %v1905
        %v1907 = vpop.f32.mrf.mxu0
        %v1908 = vadd.f32 %v1879, %v1907
        %1909 = vmatmul.bf16.gmra.mxu0 %v949
        %v1910 = vpop.f32.mrf.mxu0
        %v1911 = vadd.f32 %v1882, %v1910
        %v1912 = vpop.f32.mrf.mxu0
        %v1913 = vadd.f32 %v1884, %v1912
        %1914 = vmatmul.bf16.gmra.mxu0 %v954
        %v1915 = vpop.f32.mrf.mxu0
        %v1916 = vadd.f32 %v1887, %v1915
        %v1917 = vpop.f32.mrf.mxu0
        %v1918 = vadd.f32 %v1889, %v1917
        %1919 = vdwg.mxu0
        %1920 = vmatpush.bf16.msra.mxu0 %v1484
        %1921 = vmatpush.bf16.msra.mxu0 %v1480
        %1922 = vmatpush.bf16.msra.mxu0 %v1476
        %1923 = vmatpush.bf16.msra.mxu0 %v1472
        %1924 = vmatpush.bf16.msra.mxu0 %v1468
        %1925 = vmatpush.bf16.msra.mxu0 %v1464
        %1926 = vmatpush.bf16.msra.mxu0 %v1460
        %1927 = vmatpush.bf16.msra.mxu0 %v1456
        %1928 = vmatmul.bf16.gmra.mxu0 %v935
        %v1929 = vpop.f32.mrf.mxu0
        %v1930 = vadd.f32 %v928, %v1929
        %v1931 = vpop.f32.mrf.mxu0
        %v1932 = vadd.f32 %v928, %v1931
        %1933 = vmatmul.bf16.gmra.mxu0 %v940
        %v1934 = vpop.f32.mrf.mxu0
        %v1935 = vadd.f32 %v928, %v1934
        %v1936 = vpop.f32.mrf.mxu0
        %v1937 = vadd.f32 %v928, %v1936
        %1938 = vmatmul.bf16.gmra.mxu0 %v945
        %v1939 = vpop.f32.mrf.mxu0
        %v1940 = vadd.f32 %v928, %v1939
        %v1941 = vpop.f32.mrf.mxu0
        %v1942 = vadd.f32 %v928, %v1941
        %1943 = vmatmul.bf16.gmra.mxu0 %v950
        %v1944 = vpop.f32.mrf.mxu0
        %v1945 = vadd.f32 %v928, %v1944
        %v1946 = vpop.f32.mrf.mxu0
        %v1947 = vadd.f32 %v928, %v1946
        %1948 = vdwg.mxu0
        %1949 = vmatpush.bf16.msra.mxu0 %v1516
        %1950 = vmatpush.bf16.msra.mxu0 %v1512
        %1951 = vmatpush.bf16.msra.mxu0 %v1508
        %1952 = vmatpush.bf16.msra.mxu0 %v1504
        %1953 = vmatpush.bf16.msra.mxu0 %v1500
        %1954 = vmatpush.bf16.msra.mxu0 %v1496
        %1955 = vmatpush.bf16.msra.mxu0 %v1492
        %1956 = vmatpush.bf16.msra.mxu0 %v1488
        %1957 = vmatmul.bf16.gmra.mxu0 %v936
        %v1958 = vpop.f32.mrf.mxu0
        %v1959 = vadd.f32 %v1930, %v1958
        %v1960 = vpop.f32.mrf.mxu0
        %v1961 = vadd.f32 %v1932, %v1960
        %1962 = vmatmul.bf16.gmra.mxu0 %v941
        %v1963 = vpop.f32.mrf.mxu0
        %v1964 = vadd.f32 %v1935, %v1963
        %v1965 = vpop.f32.mrf.mxu0
        %v1966 = vadd.f32 %v1937, %v1965
        %1967 = vmatmul.bf16.gmra.mxu0 %v946
        %v1968 = vpop.f32.mrf.mxu0
        %v1969 = vadd.f32 %v1940, %v1968
        %v1970 = vpop.f32.mrf.mxu0
        %v1971 = vadd.f32 %v1942, %v1970
        %1972 = vmatmul.bf16.gmra.mxu0 %v951
        %v1973 = vpop.f32.mrf.mxu0
        %v1974 = vadd.f32 %v1945, %v1973
        %v1975 = vpop.f32.mrf.mxu0
        %v1976 = vadd.f32 %v1947, %v1975
        %1977 = vdwg.mxu0
        %1978 = vmatpush.bf16.msra.mxu0 %v1548
        %1979 = vmatpush.bf16.msra.mxu0 %v1544
        %1980 = vmatpush.bf16.msra.mxu0 %v1540
        %1981 = vmatpush.bf16.msra.mxu0 %v1536
        %1982 = vmatpush.bf16.msra.mxu0 %v1532
        %1983 = vmatpush.bf16.msra.mxu0 %v1528
        %1984 = vmatpush.bf16.msra.mxu0 %v1524
        %1985 = vmatpush.bf16.msra.mxu0 %v1520
        %1986 = vmatmul.bf16.gmra.mxu0 %v937
        %v1987 = vpop.f32.mrf.mxu0
        %v1988 = vadd.f32 %v1959, %v1987
        %v1989 = vpop.f32.mrf.mxu0
        %v1990 = vadd.f32 %v1961, %v1989
        %1991 = vmatmul.bf16.gmra.mxu0 %v942
        %v1992 = vpop.f32.mrf.mxu0
        %v1993 = vadd.f32 %v1964, %v1992
        %v1994 = vpop.f32.mrf.mxu0
        %v1995 = vadd.f32 %v1966, %v1994
        %1996 = vmatmul.bf16.gmra.mxu0 %v947
        %v1997 = vpop.f32.mrf.mxu0
        %v1998 = vadd.f32 %v1969, %v1997
        %v1999 = vpop.f32.mrf.mxu0
        %v2000 = vadd.f32 %v1971, %v1999
        %2001 = vmatmul.bf16.gmra.mxu0 %v952
        %v2002 = vpop.f32.mrf.mxu0
        %v2003 = vadd.f32 %v1974, %v2002
        %v2004 = vpop.f32.mrf.mxu0
        %v2005 = vadd.f32 %v1976, %v2004
        %2006 = vdwg.mxu0
        %2007 = vmatpush.bf16.msra.mxu0 %v1580
        %2008 = vmatpush.bf16.msra.mxu0 %v1576
        %2009 = vmatpush.bf16.msra.mxu0 %v1572
        %2010 = vmatpush.bf16.msra.mxu0 %v1568
        %2011 = vmatpush.bf16.msra.mxu0 %v1564
        %2012 = vmatpush.bf16.msra.mxu0 %v1560
        %2013 = vmatpush.bf16.msra.mxu0 %v1556
        %2014 = vmatpush.bf16.msra.mxu0 %v1552
        %2015 = vmatmul.bf16.gmra.mxu0 %v938
        %v2016 = vpop.f32.mrf.mxu0
        %v2017 = vadd.f32 %v1988, %v2016
        %v2018 = vpop.f32.mrf.mxu0
        %v2019 = vadd.f32 %v1990, %v2018
        %2020 = vmatmul.bf16.gmra.mxu0 %v943
        %v2021 = vpop.f32.mrf.mxu0
        %v2022 = vadd.f32 %v1993, %v2021
        %v2023 = vpop.f32.mrf.mxu0
        %v2024 = vadd.f32 %v1995, %v2023
        %2025 = vmatmul.bf16.gmra.mxu0 %v948
        %v2026 = vpop.f32.mrf.mxu0
        %v2027 = vadd.f32 %v1998, %v2026
        %v2028 = vpop.f32.mrf.mxu0
        %v2029 = vadd.f32 %v2000, %v2028
        %2030 = vmatmul.bf16.gmra.mxu0 %v953
        %v2031 = vpop.f32.mrf.mxu0
        %v2032 = vadd.f32 %v2003, %v2031
        %v2033 = vpop.f32.mrf.mxu0
        %v2034 = vadd.f32 %v2005, %v2033
        %2035 = vdwg.mxu0
        %2036 = vmatpush.bf16.msra.mxu0 %v1612
        %2037 = vmatpush.bf16.msra.mxu0 %v1608
        %2038 = vmatpush.bf16.msra.mxu0 %v1604
        %2039 = vmatpush.bf16.msra.mxu0 %v1600
        %2040 = vmatpush.bf16.msra.mxu0 %v1596
        %2041 = vmatpush.bf16.msra.mxu0 %v1592
        %2042 = vmatpush.bf16.msra.mxu0 %v1588
        %2043 = vmatpush.bf16.msra.mxu0 %v1584
        %2044 = vmatmul.bf16.gmra.mxu0 %v939
        %v2045 = vpop.f32.mrf.mxu0
        %v2046 = vadd.f32 %v2017, %v2045
        %v2047 = vpop.f32.mrf.mxu0
        %v2048 = vadd.f32 %v2019, %v2047
        %2049 = vmatmul.bf16.gmra.mxu0 %v944
        %v2050 = vpop.f32.mrf.mxu0
        %v2051 = vadd.f32 %v2022, %v2050
        %v2052 = vpop.f32.mrf.mxu0
        %v2053 = vadd.f32 %v2024, %v2052
        %2054 = vmatmul.bf16.gmra.mxu0 %v949
        %v2055 = vpop.f32.mrf.mxu0
        %v2056 = vadd.f32 %v2027, %v2055
        %v2057 = vpop.f32.mrf.mxu0
        %v2058 = vadd.f32 %v2029, %v2057
        %2059 = vmatmul.bf16.gmra.mxu0 %v954
        %v2060 = vpop.f32.mrf.mxu0
        %v2061 = vadd.f32 %v2032, %v2060
        %v2062 = vpop.f32.mrf.mxu0
        %v2063 = vadd.f32 %v2034, %v2062
        %2064 = vdwg.mxu0
        %2065 = vmatpush.bf16.msra.mxu0 %v1485
        %2066 = vmatpush.bf16.msra.mxu0 %v1481
        %2067 = vmatpush.bf16.msra.mxu0 %v1477
        %2068 = vmatpush.bf16.msra.mxu0 %v1473
        %2069 = vmatpush.bf16.msra.mxu0 %v1469
        %2070 = vmatpush.bf16.msra.mxu0 %v1465
        %2071 = vmatpush.bf16.msra.mxu0 %v1461
        %2072 = vmatpush.bf16.msra.mxu0 %v1457
        %2073 = vmatmul.bf16.gmra.mxu0 %v935
        %v2074 = vpop.f32.mrf.mxu0
        %v2075 = vadd.f32 %v929, %v2074
        %v2076 = vpop.f32.mrf.mxu0
        %v2077 = vadd.f32 %v929, %v2076
        %2078 = vmatmul.bf16.gmra.mxu0 %v940
        %v2079 = vpop.f32.mrf.mxu0
        %v2080 = vadd.f32 %v929, %v2079
        %v2081 = vpop.f32.mrf.mxu0
        %v2082 = vadd.f32 %v929, %v2081
        %2083 = vmatmul.bf16.gmra.mxu0 %v945
        %v2084 = vpop.f32.mrf.mxu0
        %v2085 = vadd.f32 %v929, %v2084
        %v2086 = vpop.f32.mrf.mxu0
        %v2087 = vadd.f32 %v929, %v2086
        %2088 = vmatmul.bf16.gmra.mxu0 %v950
        %v2089 = vpop.f32.mrf.mxu0
        %v2090 = vadd.f32 %v929, %v2089
        %v2091 = vpop.f32.mrf.mxu0
        %v2092 = vadd.f32 %v929, %v2091
        %2093 = vdwg.mxu0
        %2094 = vmatpush.bf16.msra.mxu0 %v1517
        %2095 = vmatpush.bf16.msra.mxu0 %v1513
        %2096 = vmatpush.bf16.msra.mxu0 %v1509
        %2097 = vmatpush.bf16.msra.mxu0 %v1505
        %2098 = vmatpush.bf16.msra.mxu0 %v1501
        %2099 = vmatpush.bf16.msra.mxu0 %v1497
        %2100 = vmatpush.bf16.msra.mxu0 %v1493
        %2101 = vmatpush.bf16.msra.mxu0 %v1489
        %2102 = vmatmul.bf16.gmra.mxu0 %v936
        %v2103 = vpop.f32.mrf.mxu0
        %v2104 = vadd.f32 %v2075, %v2103
        %v2105 = vpop.f32.mrf.mxu0
        %v2106 = vadd.f32 %v2077, %v2105
        %2107 = vmatmul.bf16.gmra.mxu0 %v941
        %v2108 = vpop.f32.mrf.mxu0
        %v2109 = vadd.f32 %v2080, %v2108
        %v2110 = vpop.f32.mrf.mxu0
        %v2111 = vadd.f32 %v2082, %v2110
        %2112 = vmatmul.bf16.gmra.mxu0 %v946
        %v2113 = vpop.f32.mrf.mxu0
        %v2114 = vadd.f32 %v2085, %v2113
        %v2115 = vpop.f32.mrf.mxu0
        %v2116 = vadd.f32 %v2087, %v2115
        %2117 = vmatmul.bf16.gmra.mxu0 %v951
        %v2118 = vpop.f32.mrf.mxu0
        %v2119 = vadd.f32 %v2090, %v2118
        %v2120 = vpop.f32.mrf.mxu0
        %v2121 = vadd.f32 %v2092, %v2120
        %2122 = vdwg.mxu0
        %2123 = vmatpush.bf16.msra.mxu0 %v1549
        %2124 = vmatpush.bf16.msra.mxu0 %v1545
        %2125 = vmatpush.bf16.msra.mxu0 %v1541
        %2126 = vmatpush.bf16.msra.mxu0 %v1537
        %2127 = vmatpush.bf16.msra.mxu0 %v1533
        %2128 = vmatpush.bf16.msra.mxu0 %v1529
        %2129 = vmatpush.bf16.msra.mxu0 %v1525
        %2130 = vmatpush.bf16.msra.mxu0 %v1521
        %2131 = vmatmul.bf16.gmra.mxu0 %v937
        %v2132 = vpop.f32.mrf.mxu0
        %v2133 = vadd.f32 %v2104, %v2132
        %v2134 = vpop.f32.mrf.mxu0
        %v2135 = vadd.f32 %v2106, %v2134
        %2136 = vmatmul.bf16.gmra.mxu0 %v942
        %v2137 = vpop.f32.mrf.mxu0
        %v2138 = vadd.f32 %v2109, %v2137
        %v2139 = vpop.f32.mrf.mxu0
        %v2140 = vadd.f32 %v2111, %v2139
        %2141 = vmatmul.bf16.gmra.mxu0 %v947
        %v2142 = vpop.f32.mrf.mxu0
        %v2143 = vadd.f32 %v2114, %v2142
        %v2144 = vpop.f32.mrf.mxu0
        %v2145 = vadd.f32 %v2116, %v2144
        %2146 = vmatmul.bf16.gmra.mxu0 %v952
        %v2147 = vpop.f32.mrf.mxu0
        %v2148 = vadd.f32 %v2119, %v2147
        %v2149 = vpop.f32.mrf.mxu0
        %v2150 = vadd.f32 %v2121, %v2149
        %2151 = vdwg.mxu0
        %2152 = vmatpush.bf16.msra.mxu0 %v1581
        %2153 = vmatpush.bf16.msra.mxu0 %v1577
        %2154 = vmatpush.bf16.msra.mxu0 %v1573
        %2155 = vmatpush.bf16.msra.mxu0 %v1569
        %2156 = vmatpush.bf16.msra.mxu0 %v1565
        %2157 = vmatpush.bf16.msra.mxu0 %v1561
        %2158 = vmatpush.bf16.msra.mxu0 %v1557
        %2159 = vmatpush.bf16.msra.mxu0 %v1553
        %2160 = vmatmul.bf16.gmra.mxu0 %v938
        %v2161 = vpop.f32.mrf.mxu0
        %v2162 = vadd.f32 %v2133, %v2161
        %v2163 = vpop.f32.mrf.mxu0
        %v2164 = vadd.f32 %v2135, %v2163
        %2165 = vmatmul.bf16.gmra.mxu0 %v943
        %v2166 = vpop.f32.mrf.mxu0
        %v2167 = vadd.f32 %v2138, %v2166
        %v2168 = vpop.f32.mrf.mxu0
        %v2169 = vadd.f32 %v2140, %v2168
        %2170 = vmatmul.bf16.gmra.mxu0 %v948
        %v2171 = vpop.f32.mrf.mxu0
        %v2172 = vadd.f32 %v2143, %v2171
        %v2173 = vpop.f32.mrf.mxu0
        %v2174 = vadd.f32 %v2145, %v2173
        %2175 = vmatmul.bf16.gmra.mxu0 %v953
        %v2176 = vpop.f32.mrf.mxu0
        %v2177 = vadd.f32 %v2148, %v2176
        %v2178 = vpop.f32.mrf.mxu0
        %v2179 = vadd.f32 %v2150, %v2178
        %2180 = vdwg.mxu0
        %2181 = vmatpush.bf16.msra.mxu0 %v1613
        %2182 = vmatpush.bf16.msra.mxu0 %v1609
        %2183 = vmatpush.bf16.msra.mxu0 %v1605
        %2184 = vmatpush.bf16.msra.mxu0 %v1601
        %2185 = vmatpush.bf16.msra.mxu0 %v1597
        %2186 = vmatpush.bf16.msra.mxu0 %v1593
        %2187 = vmatpush.bf16.msra.mxu0 %v1589
        %2188 = vmatpush.bf16.msra.mxu0 %v1585
        %2189 = vmatmul.bf16.gmra.mxu0 %v939
        %v2190 = vpop.f32.mrf.mxu0
        %v2191 = vadd.f32 %v2162, %v2190
        %v2192 = vpop.f32.mrf.mxu0
        %v2193 = vadd.f32 %v2164, %v2192
        %2194 = vmatmul.bf16.gmra.mxu0 %v944
        %v2195 = vpop.f32.mrf.mxu0
        %v2196 = vadd.f32 %v2167, %v2195
        %v2197 = vpop.f32.mrf.mxu0
        %v2198 = vadd.f32 %v2169, %v2197
        %2199 = vmatmul.bf16.gmra.mxu0 %v949
        %v2200 = vpop.f32.mrf.mxu0
        %v2201 = vadd.f32 %v2172, %v2200
        %v2202 = vpop.f32.mrf.mxu0
        %v2203 = vadd.f32 %v2174, %v2202
        %2204 = vmatmul.bf16.gmra.mxu0 %v954
        %v2205 = vpop.f32.mrf.mxu0
        %v2206 = vadd.f32 %v2177, %v2205
        %v2207 = vpop.f32.mrf.mxu0
        %v2208 = vadd.f32 %v2179, %v2207
        %2209 = vdwg.mxu0
        %2210 = vmatpush.bf16.msra.mxu0 %v1486
        %2211 = vmatpush.bf16.msra.mxu0 %v1482
        %2212 = vmatpush.bf16.msra.mxu0 %v1478
        %2213 = vmatpush.bf16.msra.mxu0 %v1474
        %2214 = vmatpush.bf16.msra.mxu0 %v1470
        %2215 = vmatpush.bf16.msra.mxu0 %v1466
        %2216 = vmatpush.bf16.msra.mxu0 %v1462
        %2217 = vmatpush.bf16.msra.mxu0 %v1458
        %2218 = vmatmul.bf16.gmra.mxu0 %v935
        %v2219 = vpop.f32.mrf.mxu0
        %v2220 = vadd.f32 %v930, %v2219
        %v2221 = vpop.f32.mrf.mxu0
        %v2222 = vadd.f32 %v930, %v2221
        %2223 = vmatmul.bf16.gmra.mxu0 %v940
        %v2224 = vpop.f32.mrf.mxu0
        %v2225 = vadd.f32 %v930, %v2224
        %v2226 = vpop.f32.mrf.mxu0
        %v2227 = vadd.f32 %v930, %v2226
        %2228 = vmatmul.bf16.gmra.mxu0 %v945
        %v2229 = vpop.f32.mrf.mxu0
        %v2230 = vadd.f32 %v930, %v2229
        %v2231 = vpop.f32.mrf.mxu0
        %v2232 = vadd.f32 %v930, %v2231
        %2233 = vmatmul.bf16.gmra.mxu0 %v950
        %v2234 = vpop.f32.mrf.mxu0
        %v2235 = vadd.f32 %v930, %v2234
        %v2236 = vpop.f32.mrf.mxu0
        %v2237 = vadd.f32 %v930, %v2236
        %2238 = vdwg.mxu0
        %2239 = vmatpush.bf16.msra.mxu0 %v1518
        %2240 = vmatpush.bf16.msra.mxu0 %v1514
        %2241 = vmatpush.bf16.msra.mxu0 %v1510
        %2242 = vmatpush.bf16.msra.mxu0 %v1506
        %2243 = vmatpush.bf16.msra.mxu0 %v1502
        %2244 = vmatpush.bf16.msra.mxu0 %v1498
        %2245 = vmatpush.bf16.msra.mxu0 %v1494
        %2246 = vmatpush.bf16.msra.mxu0 %v1490
        %2247 = vmatmul.bf16.gmra.mxu0 %v936
        %v2248 = vpop.f32.mrf.mxu0
        %v2249 = vadd.f32 %v2220, %v2248
        %v2250 = vpop.f32.mrf.mxu0
        %v2251 = vadd.f32 %v2222, %v2250
        %2252 = vmatmul.bf16.gmra.mxu0 %v941
        %v2253 = vpop.f32.mrf.mxu0
        %v2254 = vadd.f32 %v2225, %v2253
        %v2255 = vpop.f32.mrf.mxu0
        %v2256 = vadd.f32 %v2227, %v2255
        %2257 = vmatmul.bf16.gmra.mxu0 %v946
        %v2258 = vpop.f32.mrf.mxu0
        %v2259 = vadd.f32 %v2230, %v2258
        %v2260 = vpop.f32.mrf.mxu0
        %v2261 = vadd.f32 %v2232, %v2260
        %2262 = vmatmul.bf16.gmra.mxu0 %v951
        %v2263 = vpop.f32.mrf.mxu0
        %v2264 = vadd.f32 %v2235, %v2263
        %v2265 = vpop.f32.mrf.mxu0
        %v2266 = vadd.f32 %v2237, %v2265
        %2267 = vdwg.mxu0
        %2268 = vmatpush.bf16.msra.mxu0 %v1550
        %2269 = vmatpush.bf16.msra.mxu0 %v1546
        %2270 = vmatpush.bf16.msra.mxu0 %v1542
        %2271 = vmatpush.bf16.msra.mxu0 %v1538
        %2272 = vmatpush.bf16.msra.mxu0 %v1534
        %2273 = vmatpush.bf16.msra.mxu0 %v1530
        %2274 = vmatpush.bf16.msra.mxu0 %v1526
        %2275 = vmatpush.bf16.msra.mxu0 %v1522
        %2276 = vmatmul.bf16.gmra.mxu0 %v937
        %v2277 = vpop.f32.mrf.mxu0
        %v2278 = vadd.f32 %v2249, %v2277
        %v2279 = vpop.f32.mrf.mxu0
        %v2280 = vadd.f32 %v2251, %v2279
        %2281 = vmatmul.bf16.gmra.mxu0 %v942
        %v2282 = vpop.f32.mrf.mxu0
        %v2283 = vadd.f32 %v2254, %v2282
        %v2284 = vpop.f32.mrf.mxu0
        %v2285 = vadd.f32 %v2256, %v2284
        %2286 = vmatmul.bf16.gmra.mxu0 %v947
        %v2287 = vpop.f32.mrf.mxu0
        %v2288 = vadd.f32 %v2259, %v2287
        %v2289 = vpop.f32.mrf.mxu0
        %v2290 = vadd.f32 %v2261, %v2289
        %2291 = vmatmul.bf16.gmra.mxu0 %v952
        %v2292 = vpop.f32.mrf.mxu0
        %v2293 = vadd.f32 %v2264, %v2292
        %v2294 = vpop.f32.mrf.mxu0
        %v2295 = vadd.f32 %v2266, %v2294
        %2296 = vdwg.mxu0
        %2297 = vmatpush.bf16.msra.mxu0 %v1582
        %2298 = vmatpush.bf16.msra.mxu0 %v1578
        %2299 = vmatpush.bf16.msra.mxu0 %v1574
        %2300 = vmatpush.bf16.msra.mxu0 %v1570
        %2301 = vmatpush.bf16.msra.mxu0 %v1566
        %2302 = vmatpush.bf16.msra.mxu0 %v1562
        %2303 = vmatpush.bf16.msra.mxu0 %v1558
        %2304 = vmatpush.bf16.msra.mxu0 %v1554
        %2305 = vmatmul.bf16.gmra.mxu0 %v938
        %v2306 = vpop.f32.mrf.mxu0
        %v2307 = vadd.f32 %v2278, %v2306
        %v2308 = vpop.f32.mrf.mxu0
        %v2309 = vadd.f32 %v2280, %v2308
        %2310 = vmatmul.bf16.gmra.mxu0 %v943
        %v2311 = vpop.f32.mrf.mxu0
        %v2312 = vadd.f32 %v2283, %v2311
        %v2313 = vpop.f32.mrf.mxu0
        %v2314 = vadd.f32 %v2285, %v2313
        %2315 = vmatmul.bf16.gmra.mxu0 %v948
        %v2316 = vpop.f32.mrf.mxu0
        %v2317 = vadd.f32 %v2288, %v2316
        %v2318 = vpop.f32.mrf.mxu0
        %v2319 = vadd.f32 %v2290, %v2318
        %2320 = vmatmul.bf16.gmra.mxu0 %v953
        %v2321 = vpop.f32.mrf.mxu0
        %v2322 = vadd.f32 %v2293, %v2321
        %v2323 = vpop.f32.mrf.mxu0
        %v2324 = vadd.f32 %v2295, %v2323
        %2325 = vdwg.mxu0
        %2326 = vmatpush.bf16.msra.mxu0 %v1614
        %2327 = vmatpush.bf16.msra.mxu0 %v1610
        %2328 = vmatpush.bf16.msra.mxu0 %v1606
        %2329 = vmatpush.bf16.msra.mxu0 %v1602
        %2330 = vmatpush.bf16.msra.mxu0 %v1598
        %2331 = vmatpush.bf16.msra.mxu0 %v1594
        %2332 = vmatpush.bf16.msra.mxu0 %v1590
        %2333 = vmatpush.bf16.msra.mxu0 %v1586
        %2334 = vmatmul.bf16.gmra.mxu0 %v939
        %v2335 = vpop.f32.mrf.mxu0
        %v2336 = vadd.f32 %v2307, %v2335
        %v2337 = vpop.f32.mrf.mxu0
        %v2338 = vadd.f32 %v2309, %v2337
        %2339 = vmatmul.bf16.gmra.mxu0 %v944
        %v2340 = vpop.f32.mrf.mxu0
        %v2341 = vadd.f32 %v2312, %v2340
        %v2342 = vpop.f32.mrf.mxu0
        %v2343 = vadd.f32 %v2314, %v2342
        %2344 = vmatmul.bf16.gmra.mxu0 %v949
        %v2345 = vpop.f32.mrf.mxu0
        %v2346 = vadd.f32 %v2317, %v2345
        %v2347 = vpop.f32.mrf.mxu0
        %v2348 = vadd.f32 %v2319, %v2347
        %2349 = vmatmul.bf16.gmra.mxu0 %v954
        %v2350 = vpop.f32.mrf.mxu0
        %v2351 = vadd.f32 %v2322, %v2350
        %v2352 = vpop.f32.mrf.mxu0
        %v2353 = vadd.f32 %v2324, %v2352
        %2354 = vdwg.mxu0
        %v2355 = vmax.f32 %v1901, 0.0
        %v2356 = vmax.f32 %v2046, 0.0
        %v2357 = vmax.f32 %v2191, 0.0
        %v2358 = vmax.f32 %v2336, 0.0
        %v2359 = vmax.f32 %v1903, 0.0
        %v2360 = vmax.f32 %v2048, 0.0
        %v2361 = vmax.f32 %v2193, 0.0
        %v2362 = vmax.f32 %v2338, 0.0
        %v2363 = vmax.f32 %v1906, 0.0
        %v2364 = vmax.f32 %v2051, 0.0
        %v2365 = vmax.f32 %v2196, 0.0
        %v2366 = vmax.f32 %v2341, 0.0
        %v2367 = vmax.f32 %v1908, 0.0
        %v2368 = vmax.f32 %v2053, 0.0
        %v2369 = vmax.f32 %v2198, 0.0
        %v2370 = vmax.f32 %v2343, 0.0
        %v2371 = vmax.f32 %v1911, 0.0
        %v2372 = vmax.f32 %v2056, 0.0
        %v2373 = vmax.f32 %v2201, 0.0
        %v2374 = vmax.f32 %v2346, 0.0
        %v2375 = vmax.f32 %v1913, 0.0
        %v2376 = vmax.f32 %v2058, 0.0
        %v2377 = vmax.f32 %v2203, 0.0
        %v2378 = vmax.f32 %v2348, 0.0
        %v2379 = vmax.f32 %v1916, 0.0
        %v2380 = vmax.f32 %v2061, 0.0
        %v2381 = vmax.f32 %v2206, 0.0
        %v2382 = vmax.f32 %v2351, 0.0
        %v2383 = vmax.f32 %v1918, 0.0
        %v2384 = vmax.f32 %v2063, 0.0
        %v2385 = vmax.f32 %v2208, 0.0
        %v2386 = vmax.f32 %v2353, 0.0
        %v2387 = vmax.f32 %v2355, %v2357
        %v2388 = vmax.f32 %v2356, %v2358
        %v2389 = vmax.f32 %v2359, %v2361
        %v2390 = vmax.f32 %v2360, %v2362
        %v2391 = vmax.f32 %v2363, %v2365
        %v2392 = vmax.f32 %v2364, %v2366
        %v2393 = vmax.f32 %v2367, %v2369
        %v2394 = vmax.f32 %v2368, %v2370
        %v2395 = vmax.f32 %v2371, %v2373
        %v2396 = vmax.f32 %v2372, %v2374
        %v2397 = vmax.f32 %v2375, %v2377
        %v2398 = vmax.f32 %v2376, %v2378
        %v2399 = vmax.f32 %v2379, %v2381
        %v2400 = vmax.f32 %v2380, %v2382
        %v2401 = vmax.f32 %v2383, %v2385
        %v2402 = vmax.f32 %v2384, %v2386
        %v2404 = vshrl.u32 %v613, 16
        %v2406 = vrot.slane %v2404, 7
        %v2407 = vshll.u32 %v613, 16
        %v2409 = vor.u32 %v2406, %v2407
        %v2411 = vshrl.u32 %v614, 16
        %v2413 = vrot.slane %v2411, 7
        %v2414 = vshll.u32 %v614, 16
        %v2416 = vor.u32 %v2413, %v2414
        %v2418 = vshrl.u32 %v615, 16
        %v2420 = vrot.slane %v2418, 7
        %v2421 = vshll.u32 %v615, 16
        %v2423 = vor.u32 %v2420, %v2421
        %v2425 = vshrl.u32 %v616, 16
        %v2427 = vrot.slane %v2425, 7
        %v2428 = vshll.u32 %v616, 16
        %v2430 = vor.u32 %v2427, %v2428
        %v2432 = vshrl.u32 %v617, 16
        %v2434 = vrot.slane %v2432, 7
        %v2435 = vshll.u32 %v617, 16
        %v2437 = vor.u32 %v2434, %v2435
        %v2439 = vshrl.u32 %v618, 16
        %v2441 = vrot.slane %v2439, 7
        %v2442 = vshll.u32 %v618, 16
        %v2444 = vor.u32 %v2441, %v2442
        %v2446 = vshrl.u32 %v619, 16
        %v2448 = vrot.slane %v2446, 7
        %v2449 = vshll.u32 %v619, 16
        %v2451 = vor.u32 %v2448, %v2449
        %v2453 = vshrl.u32 %v620, 16
        %v2455 = vrot.slane %v2453, 7
        %v2456 = vshll.u32 %v620, 16
        %v2458 = vor.u32 %v2455, %v2456
        %v2459 = vrot.slane %v645, 7
        %v2460 = vrot.slane %v646, 7
        %v2461 = vrot.slane %v647, 7
        %v2462 = vrot.slane %v648, 7
        %v2463 = vrot.slane %v649, 7
        %v2464 = vrot.slane %v650, 7
        %v2465 = vrot.slane %v651, 7
        %v2466 = vrot.slane %v652, 7
        %v2467 = vrot.slane %v525, 5
        %v2468 = vrot.slane %v526, 5
        %v2469 = vrot.slane %v527, 5
        %v2470 = vrot.slane %v528, 5
        %v2471 = vrot.slane %v529, 5
        %v2472 = vrot.slane %v530, 5
        %v2473 = vrot.slane %v531, 5
        %v2474 = vrot.slane %v532, 5
        %v2475 = vpack.c.b16 %v510, %v510
        %v2476 = vpack.c.b16 %v512, %v512
        %v2477 = vpack.c.b16 %v514, %v514
        %v2478 = vpack.c.b16 %v516, %v516
        %v2479 = vpack.c.b16 %v518, %v518
        %v2480 = vpack.c.b16 %v520, %v520
        %v2481 = vpack.c.b16 %v522, %v522
        %v2482 = vpack.c.b16 %v524, %v524
        %v2484 = vshrl.u32 %v2475, 16
        %v2486 = vrot.slane %v2484, 4
        %v2487 = vshll.u32 %v2475, 16
        %v2489 = vrot.slane %v2487, 5
        %v2490 = vor.u32 %v2486, %v2489
        %v2492 = vshrl.u32 %v2476, 16
        %v2494 = vrot.slane %v2492, 4
        %v2495 = vshll.u32 %v2476, 16
        %v2497 = vrot.slane %v2495, 5
        %v2498 = vor.u32 %v2494, %v2497
        %v2500 = vshrl.u32 %v2477, 16
        %v2502 = vrot.slane %v2500, 4
        %v2503 = vshll.u32 %v2477, 16
        %v2505 = vrot.slane %v2503, 5
        %v2506 = vor.u32 %v2502, %v2505
        %v2508 = vshrl.u32 %v2478, 16
        %v2510 = vrot.slane %v2508, 4
        %v2511 = vshll.u32 %v2478, 16
        %v2513 = vrot.slane %v2511, 5
        %v2514 = vor.u32 %v2510, %v2513
        %v2516 = vshrl.u32 %v2479, 16
        %v2518 = vrot.slane %v2516, 4
        %v2519 = vshll.u32 %v2479, 16
        %v2521 = vrot.slane %v2519, 5
        %v2522 = vor.u32 %v2518, %v2521
        %v2524 = vshrl.u32 %v2480, 16
        %v2526 = vrot.slane %v2524, 4
        %v2527 = vshll.u32 %v2480, 16
        %v2529 = vrot.slane %v2527, 5
        %v2530 = vor.u32 %v2526, %v2529
        %v2532 = vshrl.u32 %v2481, 16
        %v2534 = vrot.slane %v2532, 4
        %v2535 = vshll.u32 %v2481, 16
        %v2537 = vrot.slane %v2535, 5
        %v2538 = vor.u32 %v2534, %v2537
        %v2540 = vshrl.u32 %v2482, 16
        %v2542 = vrot.slane %v2540, 4
        %v2543 = vshll.u32 %v2482, 16
        %v2545 = vrot.slane %v2543, 5
        %v2546 = vor.u32 %v2542, %v2545
        %v2547 = vunpack.c.l.b16 %v2409
        %v2548 = vunpack.c.l.b16 %v2459
        %v2549 = vunpack.c.l.b16 %v2467
        %v2550 = vunpack.c.l.b16 %v2490
        %v2551 = vunpack.c.h.b16 %v2409
        %v2552 = vunpack.c.h.b16 %v2459
        %v2553 = vunpack.c.h.b16 %v2467
        %v2554 = vunpack.c.h.b16 %v2490
        %v2555 = vunpack.c.l.b16 %v2416
        %v2556 = vunpack.c.l.b16 %v2460
        %v2557 = vunpack.c.l.b16 %v2468
        %v2558 = vunpack.c.l.b16 %v2498
        %v2559 = vunpack.c.h.b16 %v2416
        %v2560 = vunpack.c.h.b16 %v2460
        %v2561 = vunpack.c.h.b16 %v2468
        %v2562 = vunpack.c.h.b16 %v2498
        %v2563 = vunpack.c.l.b16 %v2423
        %v2564 = vunpack.c.l.b16 %v2461
        %v2565 = vunpack.c.l.b16 %v2469
        %v2566 = vunpack.c.l.b16 %v2506
        %v2567 = vunpack.c.h.b16 %v2423
        %v2568 = vunpack.c.h.b16 %v2461
        %v2569 = vunpack.c.h.b16 %v2469
        %v2570 = vunpack.c.h.b16 %v2506
        %v2571 = vunpack.c.l.b16 %v2430
        %v2572 = vunpack.c.l.b16 %v2462
        %v2573 = vunpack.c.l.b16 %v2470
        %v2574 = vunpack.c.l.b16 %v2514
        %v2575 = vunpack.c.h.b16 %v2430
        %v2576 = vunpack.c.h.b16 %v2462
        %v2577 = vunpack.c.h.b16 %v2470
        %v2578 = vunpack.c.h.b16 %v2514
        %v2579 = vunpack.c.l.b16 %v2437
        %v2580 = vunpack.c.l.b16 %v2463
        %v2581 = vunpack.c.l.b16 %v2471
        %v2582 = vunpack.c.l.b16 %v2522
        %v2583 = vunpack.c.h.b16 %v2437
        %v2584 = vunpack.c.h.b16 %v2463
        %v2585 = vunpack.c.h.b16 %v2471
        %v2586 = vunpack.c.h.b16 %v2522
        %v2587 = vunpack.c.l.b16 %v2444
        %v2588 = vunpack.c.l.b16 %v2464
        %v2589 = vunpack.c.l.b16 %v2472
        %v2590 = vunpack.c.l.b16 %v2530
        %v2591 = vunpack.c.h.b16 %v2444
        %v2592 = vunpack.c.h.b16 %v2464
        %v2593 = vunpack.c.h.b16 %v2472
        %v2594 = vunpack.c.h.b16 %v2530
        %v2595 = vunpack.c.l.b16 %v2451
        %v2596 = vunpack.c.l.b16 %v2465
        %v2597 = vunpack.c.l.b16 %v2473
        %v2598 = vunpack.c.l.b16 %v2538
        %v2599 = vunpack.c.h.b16 %v2451
        %v2600 = vunpack.c.h.b16 %v2465
        %v2601 = vunpack.c.h.b16 %v2473
        %v2602 = vunpack.c.h.b16 %v2538
        %v2603 = vunpack.c.l.b16 %v2458
        %v2604 = vunpack.c.l.b16 %v2466
        %v2605 = vunpack.c.l.b16 %v2474
        %v2606 = vunpack.c.l.b16 %v2546
        %v2607 = vunpack.c.h.b16 %v2458
        %v2608 = vunpack.c.h.b16 %v2466
        %v2609 = vunpack.c.h.b16 %v2474
        %v2610 = vunpack.c.h.b16 %v2546
        %v2611 = vpack.c.b16 %v2547, %v509
        %v2612 = vpack.c.b16 %v2549, %v2548
        %v2613 = vpack.c.b16 %v2550, %v2550
        %v2614 = vpack.c.b16 %v2551, %v510
        %v2615 = vpack.c.b16 %v2553, %v2552
        %v2616 = vpack.c.b16 %v2554, %v2554
        %v2617 = vpack.c.b16 %v2555, %v511
        %v2618 = vpack.c.b16 %v2557, %v2556
        %v2619 = vpack.c.b16 %v2558, %v2558
        %v2620 = vpack.c.b16 %v2559, %v512
        %v2621 = vpack.c.b16 %v2561, %v2560
        %v2622 = vpack.c.b16 %v2562, %v2562
        %v2623 = vpack.c.b16 %v2563, %v513
        %v2624 = vpack.c.b16 %v2565, %v2564
        %v2625 = vpack.c.b16 %v2566, %v2566
        %v2626 = vpack.c.b16 %v2567, %v514
        %v2627 = vpack.c.b16 %v2569, %v2568
        %v2628 = vpack.c.b16 %v2570, %v2570
        %v2629 = vpack.c.b16 %v2571, %v515
        %v2630 = vpack.c.b16 %v2573, %v2572
        %v2631 = vpack.c.b16 %v2574, %v2574
        %v2632 = vpack.c.b16 %v2575, %v516
        %v2633 = vpack.c.b16 %v2577, %v2576
        %v2634 = vpack.c.b16 %v2578, %v2578
        %v2635 = vpack.c.b16 %v2579, %v517
        %v2636 = vpack.c.b16 %v2581, %v2580
        %v2637 = vpack.c.b16 %v2582, %v2582
        %v2638 = vpack.c.b16 %v2583, %v518
        %v2639 = vpack.c.b16 %v2585, %v2584
        %v2640 = vpack.c.b16 %v2586, %v2586
        %v2641 = vpack.c.b16 %v2587, %v519
        %v2642 = vpack.c.b16 %v2589, %v2588
        %v2643 = vpack.c.b16 %v2590, %v2590
        %v2644 = vpack.c.b16 %v2591, %v520
        %v2645 = vpack.c.b16 %v2593, %v2592
        %v2646 = vpack.c.b16 %v2594, %v2594
        %v2647 = vpack.c.b16 %v2595, %v521
        %v2648 = vpack.c.b16 %v2597, %v2596
        %v2649 = vpack.c.b16 %v2598, %v2598
        %v2650 = vpack.c.b16 %v2599, %v522
        %v2651 = vpack.c.b16 %v2601, %v2600
        %v2652 = vpack.c.b16 %v2602, %v2602
        %v2653 = vpack.c.b16 %v2603, %v523
        %v2654 = vpack.c.b16 %v2605, %v2604
        %v2655 = vpack.c.b16 %v2606, %v2606
        %v2656 = vpack.c.b16 %v2607, %v524
        %v2657 = vpack.c.b16 %v2609, %v2608
        %v2658 = vpack.c.b16 %v2610, %v2610
        %vm2659 = vsmask.f32 256
        %vm2660 = vsmask.f32 4368
        %vm2661 = vmor %vm2659, %vm2660
        %v2663 = vshrl.u32 %v2611, 16
        %v2665 = vrot.slane %v2663, 7
        %v2666 = vrot.slane %v2665, 4
        %v2668 = vshrl.u32 %v2614, 16
        %v2670 = vrot.slane %v2668, 7
        %v2671 = vshll.u32 %v2614, 16
        %v2673 = vor.u32 %v2670, %v2671
        %v2674 = vsel %vm2661, %v2666, %v2673
        %v2676 = vshrl.u32 %v2612, 16
        %v2678 = vrot.slane %v2676, 7
        %v2679 = vrot.slane %v2678, 4
        %v2681 = vshrl.u32 %v2615, 16
        %v2683 = vrot.slane %v2681, 7
        %v2684 = vshll.u32 %v2615, 16
        %v2686 = vor.u32 %v2683, %v2684
        %v2687 = vsel %vm2661, %v2679, %v2686
        %v2689 = vshrl.u32 %v2613, 16
        %v2691 = vrot.slane %v2689, 7
        %v2692 = vrot.slane %v2691, 4
        %v2694 = vshrl.u32 %v2616, 16
        %v2696 = vrot.slane %v2694, 7
        %v2697 = vshll.u32 %v2616, 16
        %v2699 = vor.u32 %v2696, %v2697
        %v2700 = vsel %vm2661, %v2692, %v2699
        %v2702 = vshrl.u32 %v2617, 16
        %v2704 = vrot.slane %v2702, 7
        %v2705 = vrot.slane %v2704, 4
        %v2707 = vshrl.u32 %v2620, 16
        %v2709 = vrot.slane %v2707, 7
        %v2710 = vshll.u32 %v2620, 16
        %v2712 = vor.u32 %v2709, %v2710
        %v2713 = vsel %vm2661, %v2705, %v2712
        %v2715 = vshrl.u32 %v2618, 16
        %v2717 = vrot.slane %v2715, 7
        %v2718 = vrot.slane %v2717, 4
        %v2720 = vshrl.u32 %v2621, 16
        %v2722 = vrot.slane %v2720, 7
        %v2723 = vshll.u32 %v2621, 16
        %v2725 = vor.u32 %v2722, %v2723
        %v2726 = vsel %vm2661, %v2718, %v2725
        %v2728 = vshrl.u32 %v2619, 16
        %v2730 = vrot.slane %v2728, 7
        %v2731 = vrot.slane %v2730, 4
        %v2733 = vshrl.u32 %v2622, 16
        %v2735 = vrot.slane %v2733, 7
        %v2736 = vshll.u32 %v2622, 16
        %v2738 = vor.u32 %v2735, %v2736
        %v2739 = vsel %vm2661, %v2731, %v2738
        %v2741 = vshrl.u32 %v2623, 16
        %v2743 = vrot.slane %v2741, 7
        %v2744 = vrot.slane %v2743, 4
        %v2746 = vshrl.u32 %v2626, 16
        %v2748 = vrot.slane %v2746, 7
        %v2749 = vshll.u32 %v2626, 16
        %v2751 = vor.u32 %v2748, %v2749
        %v2752 = vsel %vm2661, %v2744, %v2751
        %v2754 = vshrl.u32 %v2624, 16
        %v2756 = vrot.slane %v2754, 7
        %v2757 = vrot.slane %v2756, 4
        %v2759 = vshrl.u32 %v2627, 16
        %v2761 = vrot.slane %v2759, 7
        %v2762 = vshll.u32 %v2627, 16
        %v2764 = vor.u32 %v2761, %v2762
        %v2765 = vsel %vm2661, %v2757, %v2764
        %v2767 = vshrl.u32 %v2625, 16
        %v2769 = vrot.slane %v2767, 7
        %v2770 = vrot.slane %v2769, 4
        %v2772 = vshrl.u32 %v2628, 16
        %v2774 = vrot.slane %v2772, 7
        %v2775 = vshll.u32 %v2628, 16
        %v2777 = vor.u32 %v2774, %v2775
        %v2778 = vsel %vm2661, %v2770, %v2777
        %v2780 = vshrl.u32 %v2629, 16
        %v2782 = vrot.slane %v2780, 7
        %v2783 = vrot.slane %v2782, 4
        %v2785 = vshrl.u32 %v2632, 16
        %v2787 = vrot.slane %v2785, 7
        %v2788 = vshll.u32 %v2632, 16
        %v2790 = vor.u32 %v2787, %v2788
        %v2791 = vsel %vm2661, %v2783, %v2790
        %v2793 = vshrl.u32 %v2630, 16
        %v2795 = vrot.slane %v2793, 7
        %v2796 = vrot.slane %v2795, 4
        %v2798 = vshrl.u32 %v2633, 16
        %v2800 = vrot.slane %v2798, 7
        %v2801 = vshll.u32 %v2633, 16
        %v2803 = vor.u32 %v2800, %v2801
        %v2804 = vsel %vm2661, %v2796, %v2803
        %v2806 = vshrl.u32 %v2631, 16
        %v2808 = vrot.slane %v2806, 7
        %v2809 = vrot.slane %v2808, 4
        %v2811 = vshrl.u32 %v2634, 16
        %v2813 = vrot.slane %v2811, 7
        %v2814 = vshll.u32 %v2634, 16
        %v2816 = vor.u32 %v2813, %v2814
        %v2817 = vsel %vm2661, %v2809, %v2816
        %v2819 = vshrl.u32 %v2635, 16
        %v2821 = vrot.slane %v2819, 7
        %v2822 = vrot.slane %v2821, 4
        %v2824 = vshrl.u32 %v2638, 16
        %v2826 = vrot.slane %v2824, 7
        %v2827 = vshll.u32 %v2638, 16
        %v2829 = vor.u32 %v2826, %v2827
        %v2830 = vsel %vm2661, %v2822, %v2829
        %v2832 = vshrl.u32 %v2636, 16
        %v2834 = vrot.slane %v2832, 7
        %v2835 = vrot.slane %v2834, 4
        %v2837 = vshrl.u32 %v2639, 16
        %v2839 = vrot.slane %v2837, 7
        %v2840 = vshll.u32 %v2639, 16
        %v2842 = vor.u32 %v2839, %v2840
        %v2843 = vsel %vm2661, %v2835, %v2842
        %v2845 = vshrl.u32 %v2637, 16
        %v2847 = vrot.slane %v2845, 7
        %v2848 = vrot.slane %v2847, 4
        %v2850 = vshrl.u32 %v2640, 16
        %v2852 = vrot.slane %v2850, 7
        %v2853 = vshll.u32 %v2640, 16
        %v2855 = vor.u32 %v2852, %v2853
        %v2856 = vsel %vm2661, %v2848, %v2855
        %v2858 = vshrl.u32 %v2641, 16
        %v2860 = vrot.slane %v2858, 7
        %v2861 = vrot.slane %v2860, 4
        %v2863 = vshrl.u32 %v2644, 16
        %v2865 = vrot.slane %v2863, 7
        %v2866 = vshll.u32 %v2644, 16
        %v2868 = vor.u32 %v2865, %v2866
        %v2869 = vsel %vm2661, %v2861, %v2868
        %v2871 = vshrl.u32 %v2642, 16
        %v2873 = vrot.slane %v2871, 7
        %v2874 = vrot.slane %v2873, 4
        %v2876 = vshrl.u32 %v2645, 16
        %v2878 = vrot.slane %v2876, 7
        %v2879 = vshll.u32 %v2645, 16
        %v2881 = vor.u32 %v2878, %v2879
        %v2882 = vsel %vm2661, %v2874, %v2881
        %v2884 = vshrl.u32 %v2643, 16
        %v2886 = vrot.slane %v2884, 7
        %v2887 = vrot.slane %v2886, 4
        %v2889 = vshrl.u32 %v2646, 16
        %v2891 = vrot.slane %v2889, 7
        %v2892 = vshll.u32 %v2646, 16
        %v2894 = vor.u32 %v2891, %v2892
        %v2895 = vsel %vm2661, %v2887, %v2894
        %v2897 = vshrl.u32 %v2647, 16
        %v2899 = vrot.slane %v2897, 7
        %v2900 = vrot.slane %v2899, 4
        %v2902 = vshrl.u32 %v2650, 16
        %v2904 = vrot.slane %v2902, 7
        %v2905 = vshll.u32 %v2650, 16
        %v2907 = vor.u32 %v2904, %v2905
        %v2908 = vsel %vm2661, %v2900, %v2907
        %v2910 = vshrl.u32 %v2648, 16
        %v2912 = vrot.slane %v2910, 7
        %v2913 = vrot.slane %v2912, 4
        %v2915 = vshrl.u32 %v2651, 16
        %v2917 = vrot.slane %v2915, 7
        %v2918 = vshll.u32 %v2651, 16
        %v2920 = vor.u32 %v2917, %v2918
        %v2921 = vsel %vm2661, %v2913, %v2920
        %v2923 = vshrl.u32 %v2649, 16
        %v2925 = vrot.slane %v2923, 7
        %v2926 = vrot.slane %v2925, 4
        %v2928 = vshrl.u32 %v2652, 16
        %v2930 = vrot.slane %v2928, 7
        %v2931 = vshll.u32 %v2652, 16
        %v2933 = vor.u32 %v2930, %v2931
        %v2934 = vsel %vm2661, %v2926, %v2933
        %v2936 = vshrl.u32 %v2653, 16
        %v2938 = vrot.slane %v2936, 7
        %v2939 = vrot.slane %v2938, 4
        %v2941 = vshrl.u32 %v2656, 16
        %v2943 = vrot.slane %v2941, 7
        %v2944 = vshll.u32 %v2656, 16
        %v2946 = vor.u32 %v2943, %v2944
        %v2947 = vsel %vm2661, %v2939, %v2946
        %v2949 = vshrl.u32 %v2654, 16
        %v2951 = vrot.slane %v2949, 7
        %v2952 = vrot.slane %v2951, 4
        %v2954 = vshrl.u32 %v2657, 16
        %v2956 = vrot.slane %v2954, 7
        %v2957 = vshll.u32 %v2657, 16
        %v2959 = vor.u32 %v2956, %v2957
        %v2960 = vsel %vm2661, %v2952, %v2959
        %v2962 = vshrl.u32 %v2655, 16
        %v2964 = vrot.slane %v2962, 7
        %v2965 = vrot.slane %v2964, 4
        %v2967 = vshrl.u32 %v2658, 16
        %v2969 = vrot.slane %v2967, 7
        %v2970 = vshll.u32 %v2658, 16
        %v2972 = vor.u32 %v2969, %v2970
        %v2973 = vsel %vm2661, %v2965, %v2972
        %v2974 = vunpack.c.l.b16 %v2674
        %v2975 = vunpack.c.h.b16 %v2674
        %v2976 = vunpack.c.l.b16 %v2687
        %v2977 = vunpack.c.h.b16 %v2687
        %v2978 = vunpack.c.l.b16 %v2700
        %v2979 = vunpack.c.l.b16 %v2713
        %v2980 = vunpack.c.h.b16 %v2713
        %v2981 = vunpack.c.l.b16 %v2726
        %v2982 = vunpack.c.h.b16 %v2726
        %v2983 = vunpack.c.l.b16 %v2739
        %v2984 = vunpack.c.l.b16 %v2752
        %v2985 = vunpack.c.h.b16 %v2752
        %v2986 = vunpack.c.l.b16 %v2765
        %v2987 = vunpack.c.h.b16 %v2765
        %v2988 = vunpack.c.l.b16 %v2778
        %v2989 = vunpack.c.l.b16 %v2791
        %v2990 = vunpack.c.h.b16 %v2791
        %v2991 = vunpack.c.l.b16 %v2804
        %v2992 = vunpack.c.h.b16 %v2804
        %v2993 = vunpack.c.l.b16 %v2817
        %v2994 = vunpack.c.l.b16 %v2830
        %v2995 = vunpack.c.h.b16 %v2830
        %v2996 = vunpack.c.l.b16 %v2843
        %v2997 = vunpack.c.h.b16 %v2843
        %v2998 = vunpack.c.l.b16 %v2856
        %v2999 = vunpack.c.l.b16 %v2869
        %v3000 = vunpack.c.h.b16 %v2869
        %v3001 = vunpack.c.l.b16 %v2882
        %v3002 = vunpack.c.h.b16 %v2882
        %v3003 = vunpack.c.l.b16 %v2895
        %v3004 = vunpack.c.l.b16 %v2908
        %v3005 = vunpack.c.h.b16 %v2908
        %v3006 = vunpack.c.l.b16 %v2921
        %v3007 = vunpack.c.h.b16 %v2921
        %v3008 = vunpack.c.l.b16 %v2934
        %v3009 = vunpack.c.l.b16 %v2947
        %v3010 = vunpack.c.h.b16 %v2947
        %v3011 = vunpack.c.l.b16 %v2960
        %v3012 = vunpack.c.h.b16 %v2960
        %v3013 = vunpack.c.l.b16 %v2973
        %v3014 = vpack.c.b16 %v2979, %v2974
        %v3015 = vpack.c.b16 %v2980, %v2975
        %v3016 = vpack.c.b16 %v2981, %v2976
        %v3017 = vpack.c.b16 %v2982, %v2977
        %v3018 = vpack.c.b16 %v2983, %v2978
        %v3019 = vpack.c.b16 %v2989, %v2984
        %v3020 = vpack.c.b16 %v2990, %v2985
        %v3021 = vpack.c.b16 %v2991, %v2986
        %v3022 = vpack.c.b16 %v2992, %v2987
        %v3023 = vpack.c.b16 %v2993, %v2988
        %v3024 = vpack.c.b16 %v2999, %v2994
        %v3025 = vpack.c.b16 %v3000, %v2995
        %v3026 = vpack.c.b16 %v3001, %v2996
        %v3027 = vpack.c.b16 %v3002, %v2997
        %v3028 = vpack.c.b16 %v3003, %v2998
        %v3029 = vpack.c.b16 %v3009, %v3004
        %v3030 = vpack.c.b16 %v3010, %v3005
        %v3031 = vpack.c.b16 %v3011, %v3006
        %v3032 = vpack.c.b16 %v3012, %v3007
        %v3033 = vpack.c.b16 %v3013, %v3008
        %3054 = vmatpush.bf16.msra.mxu0 %v1483
        %3055 = vmatpush.bf16.msra.mxu0 %v1479
        %3056 = vmatpush.bf16.msra.mxu0 %v1475
        %3057 = vmatpush.bf16.msra.mxu0 %v1471
        %3058 = vmatpush.bf16.msra.mxu0 %v1467
        %3059 = vmatpush.bf16.msra.mxu0 %v1463
        %3060 = vmatpush.bf16.msra.mxu0 %v1459
        %3061 = vmatpush.bf16.msra.mxu0 %v1455
        %3062 = vmatmul.bf16.gmra.mxu0 %v3014
        %v3063 = vpop.f32.mrf.mxu0
        %v3064 = vadd.f32 %v927, %v3063
        %v3065 = vpop.f32.mrf.mxu0
        %v3066 = vadd.f32 %v927, %v3065
        %3067 = vmatmul.bf16.gmra.mxu0 %v3019
        %v3068 = vpop.f32.mrf.mxu0
        %v3069 = vadd.f32 %v927, %v3068
        %v3070 = vpop.f32.mrf.mxu0
        %v3071 = vadd.f32 %v927, %v3070
        %3072 = vmatmul.bf16.gmra.mxu0 %v3024
        %v3073 = vpop.f32.mrf.mxu0
        %v3074 = vadd.f32 %v927, %v3073
        %v3075 = vpop.f32.mrf.mxu0
        %v3076 = vadd.f32 %v927, %v3075
        %3077 = vmatmul.bf16.gmra.mxu0 %v3029
        %v3078 = vpop.f32.mrf.mxu0
        %v3079 = vadd.f32 %v927, %v3078
        %v3080 = vpop.f32.mrf.mxu0
        %v3081 = vadd.f32 %v927, %v3080
        %3082 = vdwg.mxu0
        %3083 = vmatpush.bf16.msra.mxu0 %v1515
        %3084 = vmatpush.bf16.msra.mxu0 %v1511
        %3085 = vmatpush.bf16.msra.mxu0 %v1507
        %3086 = vmatpush.bf16.msra.mxu0 %v1503
        %3087 = vmatpush.bf16.msra.mxu0 %v1499
        %3088 = vmatpush.bf16.msra.mxu0 %v1495
        %3089 = vmatpush.bf16.msra.mxu0 %v1491
        %3090 = vmatpush.bf16.msra.mxu0 %v1487
        %3091 = vmatmul.bf16.gmra.mxu0 %v3015
        %v3092 = vpop.f32.mrf.mxu0
        %v3093 = vadd.f32 %v3064, %v3092
        %v3094 = vpop.f32.mrf.mxu0
        %v3095 = vadd.f32 %v3066, %v3094
        %3096 = vmatmul.bf16.gmra.mxu0 %v3020
        %v3097 = vpop.f32.mrf.mxu0
        %v3098 = vadd.f32 %v3069, %v3097
        %v3099 = vpop.f32.mrf.mxu0
        %v3100 = vadd.f32 %v3071, %v3099
        %3101 = vmatmul.bf16.gmra.mxu0 %v3025
        %v3102 = vpop.f32.mrf.mxu0
        %v3103 = vadd.f32 %v3074, %v3102
        %v3104 = vpop.f32.mrf.mxu0
        %v3105 = vadd.f32 %v3076, %v3104
        %3106 = vmatmul.bf16.gmra.mxu0 %v3030
        %v3107 = vpop.f32.mrf.mxu0
        %v3108 = vadd.f32 %v3079, %v3107
        %v3109 = vpop.f32.mrf.mxu0
        %v3110 = vadd.f32 %v3081, %v3109
        %3111 = vdwg.mxu0
        %3112 = vmatpush.bf16.msra.mxu0 %v1547
        %3113 = vmatpush.bf16.msra.mxu0 %v1543
        %3114 = vmatpush.bf16.msra.mxu0 %v1539
        %3115 = vmatpush.bf16.msra.mxu0 %v1535
        %3116 = vmatpush.bf16.msra.mxu0 %v1531
        %3117 = vmatpush.bf16.msra.mxu0 %v1527
        %3118 = vmatpush.bf16.msra.mxu0 %v1523
        %3119 = vmatpush.bf16.msra.mxu0 %v1519
        %3120 = vmatmul.bf16.gmra.mxu0 %v3016
        %v3121 = vpop.f32.mrf.mxu0
        %v3122 = vadd.f32 %v3093, %v3121
        %v3123 = vpop.f32.mrf.mxu0
        %v3124 = vadd.f32 %v3095, %v3123
        %3125 = vmatmul.bf16.gmra.mxu0 %v3021
        %v3126 = vpop.f32.mrf.mxu0
        %v3127 = vadd.f32 %v3098, %v3126
        %v3128 = vpop.f32.mrf.mxu0
        %v3129 = vadd.f32 %v3100, %v3128
        %3130 = vmatmul.bf16.gmra.mxu0 %v3026
        %v3131 = vpop.f32.mrf.mxu0
        %v3132 = vadd.f32 %v3103, %v3131
        %v3133 = vpop.f32.mrf.mxu0
        %v3134 = vadd.f32 %v3105, %v3133
        %3135 = vmatmul.bf16.gmra.mxu0 %v3031
        %v3136 = vpop.f32.mrf.mxu0
        %v3137 = vadd.f32 %v3108, %v3136
        %v3138 = vpop.f32.mrf.mxu0
        %v3139 = vadd.f32 %v3110, %v3138
        %3140 = vdwg.mxu0
        %3141 = vmatpush.bf16.msra.mxu0 %v1579
        %3142 = vmatpush.bf16.msra.mxu0 %v1575
        %3143 = vmatpush.bf16.msra.mxu0 %v1571
        %3144 = vmatpush.bf16.msra.mxu0 %v1567
        %3145 = vmatpush.bf16.msra.mxu0 %v1563
        %3146 = vmatpush.bf16.msra.mxu0 %v1559
        %3147 = vmatpush.bf16.msra.mxu0 %v1555
        %3148 = vmatpush.bf16.msra.mxu0 %v1551
        %3149 = vmatmul.bf16.gmra.mxu0 %v3017
        %v3150 = vpop.f32.mrf.mxu0
        %v3151 = vadd.f32 %v3122, %v3150
        %v3152 = vpop.f32.mrf.mxu0
        %v3153 = vadd.f32 %v3124, %v3152
        %3154 = vmatmul.bf16.gmra.mxu0 %v3022
        %v3155 = vpop.f32.mrf.mxu0
        %v3156 = vadd.f32 %v3127, %v3155
        %v3157 = vpop.f32.mrf.mxu0
        %v3158 = vadd.f32 %v3129, %v3157
        %3159 = vmatmul.bf16.gmra.mxu0 %v3027
        %v3160 = vpop.f32.mrf.mxu0
        %v3161 = vadd.f32 %v3132, %v3160
        %v3162 = vpop.f32.mrf.mxu0
        %v3163 = vadd.f32 %v3134, %v3162
        %3164 = vmatmul.bf16.gmra.mxu0 %v3032
        %v3165 = vpop.f32.mrf.mxu0
        %v3166 = vadd.f32 %v3137, %v3165
        %v3167 = vpop.f32.mrf.mxu0
        %v3168 = vadd.f32 %v3139, %v3167
        %3169 = vdwg.mxu0
        %3170 = vmatpush.bf16.msra.mxu0 %v1611
        %3171 = vmatpush.bf16.msra.mxu0 %v1607
        %3172 = vmatpush.bf16.msra.mxu0 %v1603
        %3173 = vmatpush.bf16.msra.mxu0 %v1599
        %3174 = vmatpush.bf16.msra.mxu0 %v1595
        %3175 = vmatpush.bf16.msra.mxu0 %v1591
        %3176 = vmatpush.bf16.msra.mxu0 %v1587
        %3177 = vmatpush.bf16.msra.mxu0 %v1583
        %3178 = vmatmul.bf16.gmra.mxu0 %v3018
        %v3179 = vpop.f32.mrf.mxu0
        %v3180 = vadd.f32 %v3151, %v3179
        %v3181 = vpop.f32.mrf.mxu0
        %v3182 = vadd.f32 %v3153, %v3181
        %3183 = vmatmul.bf16.gmra.mxu0 %v3023
        %v3184 = vpop.f32.mrf.mxu0
        %v3185 = vadd.f32 %v3156, %v3184
        %v3186 = vpop.f32.mrf.mxu0
        %v3187 = vadd.f32 %v3158, %v3186
        %3188 = vmatmul.bf16.gmra.mxu0 %v3028
        %v3189 = vpop.f32.mrf.mxu0
        %v3190 = vadd.f32 %v3161, %v3189
        %v3191 = vpop.f32.mrf.mxu0
        %v3192 = vadd.f32 %v3163, %v3191
        %3193 = vmatmul.bf16.gmra.mxu0 %v3033
        %v3194 = vpop.f32.mrf.mxu0
        %v3195 = vadd.f32 %v3166, %v3194
        %v3196 = vpop.f32.mrf.mxu0
        %v3197 = vadd.f32 %v3168, %v3196
        %3198 = vdwg.mxu0
        %3199 = vmatpush.bf16.msra.mxu0 %v1484
        %3200 = vmatpush.bf16.msra.mxu0 %v1480
        %3201 = vmatpush.bf16.msra.mxu0 %v1476
        %3202 = vmatpush.bf16.msra.mxu0 %v1472
        %3203 = vmatpush.bf16.msra.mxu0 %v1468
        %3204 = vmatpush.bf16.msra.mxu0 %v1464
        %3205 = vmatpush.bf16.msra.mxu0 %v1460
        %3206 = vmatpush.bf16.msra.mxu0 %v1456
        %3207 = vmatmul.bf16.gmra.mxu0 %v3014
        %v3208 = vpop.f32.mrf.mxu0
        %v3209 = vadd.f32 %v928, %v3208
        %v3210 = vpop.f32.mrf.mxu0
        %v3211 = vadd.f32 %v928, %v3210
        %3212 = vmatmul.bf16.gmra.mxu0 %v3019
        %v3213 = vpop.f32.mrf.mxu0
        %v3214 = vadd.f32 %v928, %v3213
        %v3215 = vpop.f32.mrf.mxu0
        %v3216 = vadd.f32 %v928, %v3215
        %3217 = vmatmul.bf16.gmra.mxu0 %v3024
        %v3218 = vpop.f32.mrf.mxu0
        %v3219 = vadd.f32 %v928, %v3218
        %v3220 = vpop.f32.mrf.mxu0
        %v3221 = vadd.f32 %v928, %v3220
        %3222 = vmatmul.bf16.gmra.mxu0 %v3029
        %v3223 = vpop.f32.mrf.mxu0
        %v3224 = vadd.f32 %v928, %v3223
        %v3225 = vpop.f32.mrf.mxu0
        %v3226 = vadd.f32 %v928, %v3225
        %3227 = vdwg.mxu0
        %3228 = vmatpush.bf16.msra.mxu0 %v1516
        %3229 = vmatpush.bf16.msra.mxu0 %v1512
        %3230 = vmatpush.bf16.msra.mxu0 %v1508
        %3231 = vmatpush.bf16.msra.mxu0 %v1504
        %3232 = vmatpush.bf16.msra.mxu0 %v1500
        %3233 = vmatpush.bf16.msra.mxu0 %v1496
        %3234 = vmatpush.bf16.msra.mxu0 %v1492
        %3235 = vmatpush.bf16.msra.mxu0 %v1488
        %3236 = vmatmul.bf16.gmra.mxu0 %v3015
        %v3237 = vpop.f32.mrf.mxu0
        %v3238 = vadd.f32 %v3209, %v3237
        %v3239 = vpop.f32.mrf.mxu0
        %v3240 = vadd.f32 %v3211, %v3239
        %3241 = vmatmul.bf16.gmra.mxu0 %v3020
        %v3242 = vpop.f32.mrf.mxu0
        %v3243 = vadd.f32 %v3214, %v3242
        %v3244 = vpop.f32.mrf.mxu0
        %v3245 = vadd.f32 %v3216, %v3244
        %3246 = vmatmul.bf16.gmra.mxu0 %v3025
        %v3247 = vpop.f32.mrf.mxu0
        %v3248 = vadd.f32 %v3219, %v3247
        %v3249 = vpop.f32.mrf.mxu0
        %v3250 = vadd.f32 %v3221, %v3249
        %3251 = vmatmul.bf16.gmra.mxu0 %v3030
        %v3252 = vpop.f32.mrf.mxu0
        %v3253 = vadd.f32 %v3224, %v3252
        %v3254 = vpop.f32.mrf.mxu0
        %v3255 = vadd.f32 %v3226, %v3254
        %3256 = vdwg.mxu0
        %3257 = vmatpush.bf16.msra.mxu0 %v1548
        %3258 = vmatpush.bf16.msra.mxu0 %v1544
        %3259 = vmatpush.bf16.msra.mxu0 %v1540
        %3260 = vmatpush.bf16.msra.mxu0 %v1536
        %3261 = vmatpush.bf16.msra.mxu0 %v1532
        %3262 = vmatpush.bf16.msra.mxu0 %v1528
        %3263 = vmatpush.bf16.msra.mxu0 %v1524
        %3264 = vmatpush.bf16.msra.mxu0 %v1520
        %3265 = vmatmul.bf16.gmra.mxu0 %v3016
        %v3266 = vpop.f32.mrf.mxu0
        %v3267 = vadd.f32 %v3238, %v3266
        %v3268 = vpop.f32.mrf.mxu0
        %v3269 = vadd.f32 %v3240, %v3268
        %3270 = vmatmul.bf16.gmra.mxu0 %v3021
        %v3271 = vpop.f32.mrf.mxu0
        %v3272 = vadd.f32 %v3243, %v3271
        %v3273 = vpop.f32.mrf.mxu0
        %v3274 = vadd.f32 %v3245, %v3273
        %3275 = vmatmul.bf16.gmra.mxu0 %v3026
        %v3276 = vpop.f32.mrf.mxu0
        %v3277 = vadd.f32 %v3248, %v3276
        %v3278 = vpop.f32.mrf.mxu0
        %v3279 = vadd.f32 %v3250, %v3278
        %3280 = vmatmul.bf16.gmra.mxu0 %v3031
        %v3281 = vpop.f32.mrf.mxu0
        %v3282 = vadd.f32 %v3253, %v3281
        %v3283 = vpop.f32.mrf.mxu0
        %v3284 = vadd.f32 %v3255, %v3283
        %3285 = vdwg.mxu0
        %3286 = vmatpush.bf16.msra.mxu0 %v1580
        %3287 = vmatpush.bf16.msra.mxu0 %v1576
        %3288 = vmatpush.bf16.msra.mxu0 %v1572
        %3289 = vmatpush.bf16.msra.mxu0 %v1568
        %3290 = vmatpush.bf16.msra.mxu0 %v1564
        %3291 = vmatpush.bf16.msra.mxu0 %v1560
        %3292 = vmatpush.bf16.msra.mxu0 %v1556
        %3293 = vmatpush.bf16.msra.mxu0 %v1552
        %3294 = vmatmul.bf16.gmra.mxu0 %v3017
        %v3295 = vpop.f32.mrf.mxu0
        %v3296 = vadd.f32 %v3267, %v3295
        %v3297 = vpop.f32.mrf.mxu0
        %v3298 = vadd.f32 %v3269, %v3297
        %3299 = vmatmul.bf16.gmra.mxu0 %v3022
        %v3300 = vpop.f32.mrf.mxu0
        %v3301 = vadd.f32 %v3272, %v3300
        %v3302 = vpop.f32.mrf.mxu0
        %v3303 = vadd.f32 %v3274, %v3302
        %3304 = vmatmul.bf16.gmra.mxu0 %v3027
        %v3305 = vpop.f32.mrf.mxu0
        %v3306 = vadd.f32 %v3277, %v3305
        %v3307 = vpop.f32.mrf.mxu0
        %v3308 = vadd.f32 %v3279, %v3307
        %3309 = vmatmul.bf16.gmra.mxu0 %v3032
        %v3310 = vpop.f32.mrf.mxu0
        %v3311 = vadd.f32 %v3282, %v3310
        %v3312 = vpop.f32.mrf.mxu0
        %v3313 = vadd.f32 %v3284, %v3312
        %3314 = vdwg.mxu0
        %3315 = vmatpush.bf16.msra.mxu0 %v1612
        %3316 = vmatpush.bf16.msra.mxu0 %v1608
        %3317 = vmatpush.bf16.msra.mxu0 %v1604
        %3318 = vmatpush.bf16.msra.mxu0 %v1600
        %3319 = vmatpush.bf16.msra.mxu0 %v1596
        %3320 = vmatpush.bf16.msra.mxu0 %v1592
        %3321 = vmatpush.bf16.msra.mxu0 %v1588
        %3322 = vmatpush.bf16.msra.mxu0 %v1584
        %3323 = vmatmul.bf16.gmra.mxu0 %v3018
        %v3324 = vpop.f32.mrf.mxu0
        %v3325 = vadd.f32 %v3296, %v3324
        %v3326 = vpop.f32.mrf.mxu0
        %v3327 = vadd.f32 %v3298, %v3326
        %3328 = vmatmul.bf16.gmra.mxu0 %v3023
        %v3329 = vpop.f32.mrf.mxu0
        %v3330 = vadd.f32 %v3301, %v3329
        %v3331 = vpop.f32.mrf.mxu0
        %v3332 = vadd.f32 %v3303, %v3331
        %3333 = vmatmul.bf16.gmra.mxu0 %v3028
        %v3334 = vpop.f32.mrf.mxu0
        %v3335 = vadd.f32 %v3306, %v3334
        %v3336 = vpop.f32.mrf.mxu0
        %v3337 = vadd.f32 %v3308, %v3336
        %3338 = vmatmul.bf16.gmra.mxu0 %v3033
        %v3339 = vpop.f32.mrf.mxu0
        %v3340 = vadd.f32 %v3311, %v3339
        %v3341 = vpop.f32.mrf.mxu0
        %v3342 = vadd.f32 %v3313, %v3341
        %3343 = vdwg.mxu0
        %3344 = vmatpush.bf16.msra.mxu0 %v1485
        %3345 = vmatpush.bf16.msra.mxu0 %v1481
        %3346 = vmatpush.bf16.msra.mxu0 %v1477
        %3347 = vmatpush.bf16.msra.mxu0 %v1473
        %3348 = vmatpush.bf16.msra.mxu0 %v1469
        %3349 = vmatpush.bf16.msra.mxu0 %v1465
        %3350 = vmatpush.bf16.msra.mxu0 %v1461
        %3351 = vmatpush.bf16.msra.mxu0 %v1457
        %3352 = vmatmul.bf16.gmra.mxu0 %v3014
        %v3353 = vpop.f32.mrf.mxu0
        %v3354 = vadd.f32 %v929, %v3353
        %v3355 = vpop.f32.mrf.mxu0
        %v3356 = vadd.f32 %v929, %v3355
        %3357 = vmatmul.bf16.gmra.mxu0 %v3019
        %v3358 = vpop.f32.mrf.mxu0
        %v3359 = vadd.f32 %v929, %v3358
        %v3360 = vpop.f32.mrf.mxu0
        %v3361 = vadd.f32 %v929, %v3360
        %3362 = vmatmul.bf16.gmra.mxu0 %v3024
        %v3363 = vpop.f32.mrf.mxu0
        %v3364 = vadd.f32 %v929, %v3363
        %v3365 = vpop.f32.mrf.mxu0
        %v3366 = vadd.f32 %v929, %v3365
        %3367 = vmatmul.bf16.gmra.mxu0 %v3029
        %v3368 = vpop.f32.mrf.mxu0
        %v3369 = vadd.f32 %v929, %v3368
        %v3370 = vpop.f32.mrf.mxu0
        %v3371 = vadd.f32 %v929, %v3370
        %3372 = vdwg.mxu0
        %3373 = vmatpush.bf16.msra.mxu0 %v1517
        %3374 = vmatpush.bf16.msra.mxu0 %v1513
        %3375 = vmatpush.bf16.msra.mxu0 %v1509
        %3376 = vmatpush.bf16.msra.mxu0 %v1505
        %3377 = vmatpush.bf16.msra.mxu0 %v1501
        %3378 = vmatpush.bf16.msra.mxu0 %v1497
        %3379 = vmatpush.bf16.msra.mxu0 %v1493
        %3380 = vmatpush.bf16.msra.mxu0 %v1489
        %3381 = vmatmul.bf16.gmra.mxu0 %v3015
        %v3382 = vpop.f32.mrf.mxu0
        %v3383 = vadd.f32 %v3354, %v3382
        %v3384 = vpop.f32.mrf.mxu0
        %v3385 = vadd.f32 %v3356, %v3384
        %3386 = vmatmul.bf16.gmra.mxu0 %v3020
        %v3387 = vpop.f32.mrf.mxu0
        %v3388 = vadd.f32 %v3359, %v3387
        %v3389 = vpop.f32.mrf.mxu0
        %v3390 = vadd.f32 %v3361, %v3389
        %3391 = vmatmul.bf16.gmra.mxu0 %v3025
        %v3392 = vpop.f32.mrf.mxu0
        %v3393 = vadd.f32 %v3364, %v3392
        %v3394 = vpop.f32.mrf.mxu0
        %v3395 = vadd.f32 %v3366, %v3394
        %3396 = vmatmul.bf16.gmra.mxu0 %v3030
        %v3397 = vpop.f32.mrf.mxu0
        %v3398 = vadd.f32 %v3369, %v3397
        %v3399 = vpop.f32.mrf.mxu0
        %v3400 = vadd.f32 %v3371, %v3399
        %3401 = vdwg.mxu0
        %3402 = vmatpush.bf16.msra.mxu0 %v1549
        %3403 = vmatpush.bf16.msra.mxu0 %v1545
        %3404 = vmatpush.bf16.msra.mxu0 %v1541
        %3405 = vmatpush.bf16.msra.mxu0 %v1537
        %3406 = vmatpush.bf16.msra.mxu0 %v1533
        %3407 = vmatpush.bf16.msra.mxu0 %v1529
        %3408 = vmatpush.bf16.msra.mxu0 %v1525
        %3409 = vmatpush.bf16.msra.mxu0 %v1521
        %3410 = vmatmul.bf16.gmra.mxu0 %v3016
        %v3411 = vpop.f32.mrf.mxu0
        %v3412 = vadd.f32 %v3383, %v3411
        %v3413 = vpop.f32.mrf.mxu0
        %v3414 = vadd.f32 %v3385, %v3413
        %3415 = vmatmul.bf16.gmra.mxu0 %v3021
        %v3416 = vpop.f32.mrf.mxu0
        %v3417 = vadd.f32 %v3388, %v3416
        %v3418 = vpop.f32.mrf.mxu0
        %v3419 = vadd.f32 %v3390, %v3418
        %3420 = vmatmul.bf16.gmra.mxu0 %v3026
        %v3421 = vpop.f32.mrf.mxu0
        %v3422 = vadd.f32 %v3393, %v3421
        %v3423 = vpop.f32.mrf.mxu0
        %v3424 = vadd.f32 %v3395, %v3423
        %3425 = vmatmul.bf16.gmra.mxu0 %v3031
        %v3426 = vpop.f32.mrf.mxu0
        %v3427 = vadd.f32 %v3398, %v3426
        %v3428 = vpop.f32.mrf.mxu0
        %v3429 = vadd.f32 %v3400, %v3428
        %3430 = vdwg.mxu0
        %3431 = vmatpush.bf16.msra.mxu0 %v1581
        %3432 = vmatpush.bf16.msra.mxu0 %v1577
        %3433 = vmatpush.bf16.msra.mxu0 %v1573
        %3434 = vmatpush.bf16.msra.mxu0 %v1569
        %3435 = vmatpush.bf16.msra.mxu0 %v1565
        %3436 = vmatpush.bf16.msra.mxu0 %v1561
        %3437 = vmatpush.bf16.msra.mxu0 %v1557
        %3438 = vmatpush.bf16.msra.mxu0 %v1553
        %3439 = vmatmul.bf16.gmra.mxu0 %v3017
        %v3440 = vpop.f32.mrf.mxu0
        %v3441 = vadd.f32 %v3412, %v3440
        %v3442 = vpop.f32.mrf.mxu0
        %v3443 = vadd.f32 %v3414, %v3442
        %3444 = vmatmul.bf16.gmra.mxu0 %v3022
        %v3445 = vpop.f32.mrf.mxu0
        %v3446 = vadd.f32 %v3417, %v3445
        %v3447 = vpop.f32.mrf.mxu0
        %v3448 = vadd.f32 %v3419, %v3447
        %3449 = vmatmul.bf16.gmra.mxu0 %v3027
        %v3450 = vpop.f32.mrf.mxu0
        %v3451 = vadd.f32 %v3422, %v3450
        %v3452 = vpop.f32.mrf.mxu0
        %v3453 = vadd.f32 %v3424, %v3452
        %3454 = vmatmul.bf16.gmra.mxu0 %v3032
        %v3455 = vpop.f32.mrf.mxu0
        %v3456 = vadd.f32 %v3427, %v3455
        %v3457 = vpop.f32.mrf.mxu0
        %v3458 = vadd.f32 %v3429, %v3457
        %3459 = vdwg.mxu0
        %3460 = vmatpush.bf16.msra.mxu0 %v1613
        %3461 = vmatpush.bf16.msra.mxu0 %v1609
        %3462 = vmatpush.bf16.msra.mxu0 %v1605
        %3463 = vmatpush.bf16.msra.mxu0 %v1601
        %3464 = vmatpush.bf16.msra.mxu0 %v1597
        %3465 = vmatpush.bf16.msra.mxu0 %v1593
        %3466 = vmatpush.bf16.msra.mxu0 %v1589
        %3467 = vmatpush.bf16.msra.mxu0 %v1585
        %3468 = vmatmul.bf16.gmra.mxu0 %v3018
        %v3469 = vpop.f32.mrf.mxu0
        %v3470 = vadd.f32 %v3441, %v3469
        %v3471 = vpop.f32.mrf.mxu0
        %v3472 = vadd.f32 %v3443, %v3471
        %3473 = vmatmul.bf16.gmra.mxu0 %v3023
        %v3474 = vpop.f32.mrf.mxu0
        %v3475 = vadd.f32 %v3446, %v3474
        %v3476 = vpop.f32.mrf.mxu0
        %v3477 = vadd.f32 %v3448, %v3476
        %3478 = vmatmul.bf16.gmra.mxu0 %v3028
        %v3479 = vpop.f32.mrf.mxu0
        %v3480 = vadd.f32 %v3451, %v3479
        %v3481 = vpop.f32.mrf.mxu0
        %v3482 = vadd.f32 %v3453, %v3481
        %3483 = vmatmul.bf16.gmra.mxu0 %v3033
        %v3484 = vpop.f32.mrf.mxu0
        %v3485 = vadd.f32 %v3456, %v3484
        %v3486 = vpop.f32.mrf.mxu0
        %v3487 = vadd.f32 %v3458, %v3486
        %3488 = vdwg.mxu0
        %3489 = vmatpush.bf16.msra.mxu0 %v1486
        %3490 = vmatpush.bf16.msra.mxu0 %v1482
        %3491 = vmatpush.bf16.msra.mxu0 %v1478
        %3492 = vmatpush.bf16.msra.mxu0 %v1474
        %3493 = vmatpush.bf16.msra.mxu0 %v1470
        %3494 = vmatpush.bf16.msra.mxu0 %v1466
        %3495 = vmatpush.bf16.msra.mxu0 %v1462
        %3496 = vmatpush.bf16.msra.mxu0 %v1458
        %3497 = vmatmul.bf16.gmra.mxu0 %v3014
        %v3498 = vpop.f32.mrf.mxu0
        %v3499 = vadd.f32 %v930, %v3498
        %v3500 = vpop.f32.mrf.mxu0
        %v3501 = vadd.f32 %v930, %v3500
        %3502 = vmatmul.bf16.gmra.mxu0 %v3019
        %v3503 = vpop.f32.mrf.mxu0
        %v3504 = vadd.f32 %v930, %v3503
        %v3505 = vpop.f32.mrf.mxu0
        %v3506 = vadd.f32 %v930, %v3505
        %3507 = vmatmul.bf16.gmra.mxu0 %v3024
        %v3508 = vpop.f32.mrf.mxu0
        %v3509 = vadd.f32 %v930, %v3508
        %v3510 = vpop.f32.mrf.mxu0
        %v3511 = vadd.f32 %v930, %v3510
        %3512 = vmatmul.bf16.gmra.mxu0 %v3029
        %v3513 = vpop.f32.mrf.mxu0
        %v3514 = vadd.f32 %v930, %v3513
        %v3515 = vpop.f32.mrf.mxu0
        %v3516 = vadd.f32 %v930, %v3515
        %3517 = vdwg.mxu0
        %3518 = vmatpush.bf16.msra.mxu0 %v1518
        %3519 = vmatpush.bf16.msra.mxu0 %v1514
        %3520 = vmatpush.bf16.msra.mxu0 %v1510
        %3521 = vmatpush.bf16.msra.mxu0 %v1506
        %3522 = vmatpush.bf16.msra.mxu0 %v1502
        %3523 = vmatpush.bf16.msra.mxu0 %v1498
        %3524 = vmatpush.bf16.msra.mxu0 %v1494
        %3525 = vmatpush.bf16.msra.mxu0 %v1490
        %3526 = vmatmul.bf16.gmra.mxu0 %v3015
        %v3527 = vpop.f32.mrf.mxu0
        %v3528 = vadd.f32 %v3499, %v3527
        %v3529 = vpop.f32.mrf.mxu0
        %v3530 = vadd.f32 %v3501, %v3529
        %3531 = vmatmul.bf16.gmra.mxu0 %v3020
        %v3532 = vpop.f32.mrf.mxu0
        %v3533 = vadd.f32 %v3504, %v3532
        %v3534 = vpop.f32.mrf.mxu0
        %v3535 = vadd.f32 %v3506, %v3534
        %3536 = vmatmul.bf16.gmra.mxu0 %v3025
        %v3537 = vpop.f32.mrf.mxu0
        %v3538 = vadd.f32 %v3509, %v3537
        %v3539 = vpop.f32.mrf.mxu0
        %v3540 = vadd.f32 %v3511, %v3539
        %3541 = vmatmul.bf16.gmra.mxu0 %v3030
        %v3542 = vpop.f32.mrf.mxu0
        %v3543 = vadd.f32 %v3514, %v3542
        %v3544 = vpop.f32.mrf.mxu0
        %v3545 = vadd.f32 %v3516, %v3544
        %3546 = vdwg.mxu0
        %3547 = vmatpush.bf16.msra.mxu0 %v1550
        %3548 = vmatpush.bf16.msra.mxu0 %v1546
        %3549 = vmatpush.bf16.msra.mxu0 %v1542
        %3550 = vmatpush.bf16.msra.mxu0 %v1538
        %3551 = vmatpush.bf16.msra.mxu0 %v1534
        %3552 = vmatpush.bf16.msra.mxu0 %v1530
        %3553 = vmatpush.bf16.msra.mxu0 %v1526
        %3554 = vmatpush.bf16.msra.mxu0 %v1522
        %3555 = vmatmul.bf16.gmra.mxu0 %v3016
        %v3556 = vpop.f32.mrf.mxu0
        %v3557 = vadd.f32 %v3528, %v3556
        %v3558 = vpop.f32.mrf.mxu0
        %v3559 = vadd.f32 %v3530, %v3558
        %3560 = vmatmul.bf16.gmra.mxu0 %v3021
        %v3561 = vpop.f32.mrf.mxu0
        %v3562 = vadd.f32 %v3533, %v3561
        %v3563 = vpop.f32.mrf.mxu0
        %v3564 = vadd.f32 %v3535, %v3563
        %3565 = vmatmul.bf16.gmra.mxu0 %v3026
        %v3566 = vpop.f32.mrf.mxu0
        %v3567 = vadd.f32 %v3538, %v3566
        %v3568 = vpop.f32.mrf.mxu0
        %v3569 = vadd.f32 %v3540, %v3568
        %3570 = vmatmul.bf16.gmra.mxu0 %v3031
        %v3571 = vpop.f32.mrf.mxu0
        %v3572 = vadd.f32 %v3543, %v3571
        %v3573 = vpop.f32.mrf.mxu0
        %v3574 = vadd.f32 %v3545, %v3573
        %3575 = vdwg.mxu0
        %3576 = vmatpush.bf16.msra.mxu0 %v1582
        %3577 = vmatpush.bf16.msra.mxu0 %v1578
        %3578 = vmatpush.bf16.msra.mxu0 %v1574
        %3579 = vmatpush.bf16.msra.mxu0 %v1570
        %3580 = vmatpush.bf16.msra.mxu0 %v1566
        %3581 = vmatpush.bf16.msra.mxu0 %v1562
        %3582 = vmatpush.bf16.msra.mxu0 %v1558
        %3583 = vmatpush.bf16.msra.mxu0 %v1554
        %3584 = vmatmul.bf16.gmra.mxu0 %v3017
        %v3585 = vpop.f32.mrf.mxu0
        %v3586 = vadd.f32 %v3557, %v3585
        %v3587 = vpop.f32.mrf.mxu0
        %v3588 = vadd.f32 %v3559, %v3587
        %3589 = vmatmul.bf16.gmra.mxu0 %v3022
        %v3590 = vpop.f32.mrf.mxu0
        %v3591 = vadd.f32 %v3562, %v3590
        %v3592 = vpop.f32.mrf.mxu0
        %v3593 = vadd.f32 %v3564, %v3592
        %3594 = vmatmul.bf16.gmra.mxu0 %v3027
        %v3595 = vpop.f32.mrf.mxu0
        %v3596 = vadd.f32 %v3567, %v3595
        %v3597 = vpop.f32.mrf.mxu0
        %v3598 = vadd.f32 %v3569, %v3597
        %3599 = vmatmul.bf16.gmra.mxu0 %v3032
        %v3600 = vpop.f32.mrf.mxu0
        %v3601 = vadd.f32 %v3572, %v3600
        %v3602 = vpop.f32.mrf.mxu0
        %v3603 = vadd.f32 %v3574, %v3602
        %3604 = vdwg.mxu0
        %3605 = vmatpush.bf16.msra.mxu0 %v1614
        %3606 = vmatpush.bf16.msra.mxu0 %v1610
        %3607 = vmatpush.bf16.msra.mxu0 %v1606
        %3608 = vmatpush.bf16.msra.mxu0 %v1602
        %3609 = vmatpush.bf16.msra.mxu0 %v1598
        %3610 = vmatpush.bf16.msra.mxu0 %v1594
        %3611 = vmatpush.bf16.msra.mxu0 %v1590
        %3612 = vmatpush.bf16.msra.mxu0 %v1586
        %3613 = vmatmul.bf16.gmra.mxu0 %v3018
        %v3614 = vpop.f32.mrf.mxu0
        %v3615 = vadd.f32 %v3586, %v3614
        %v3616 = vpop.f32.mrf.mxu0
        %v3617 = vadd.f32 %v3588, %v3616
        %3618 = vmatmul.bf16.gmra.mxu0 %v3023
        %v3619 = vpop.f32.mrf.mxu0
        %v3620 = vadd.f32 %v3591, %v3619
        %v3621 = vpop.f32.mrf.mxu0
        %v3622 = vadd.f32 %v3593, %v3621
        %3623 = vmatmul.bf16.gmra.mxu0 %v3028
        %v3624 = vpop.f32.mrf.mxu0
        %v3625 = vadd.f32 %v3596, %v3624
        %v3626 = vpop.f32.mrf.mxu0
        %v3627 = vadd.f32 %v3598, %v3626
        %3628 = vmatmul.bf16.gmra.mxu0 %v3033
        %v3629 = vpop.f32.mrf.mxu0
        %v3630 = vadd.f32 %v3601, %v3629
        %v3631 = vpop.f32.mrf.mxu0
        %v3632 = vadd.f32 %v3603, %v3631
        %3633 = vdwg.mxu0
        %v3634 = vmax.f32 %v3180, 0.0
        %v3635 = vmax.f32 %v3325, 0.0
        %v3636 = vmax.f32 %v3470, 0.0
        %v3637 = vmax.f32 %v3615, 0.0
        %v3638 = vmax.f32 %v3182, 0.0
        %v3639 = vmax.f32 %v3327, 0.0
        %v3640 = vmax.f32 %v3472, 0.0
        %v3641 = vmax.f32 %v3617, 0.0
        %v3642 = vmax.f32 %v3185, 0.0
        %v3643 = vmax.f32 %v3330, 0.0
        %v3644 = vmax.f32 %v3475, 0.0
        %v3645 = vmax.f32 %v3620, 0.0
        %v3646 = vmax.f32 %v3187, 0.0
        %v3647 = vmax.f32 %v3332, 0.0
        %v3648 = vmax.f32 %v3477, 0.0
        %v3649 = vmax.f32 %v3622, 0.0
        %v3650 = vmax.f32 %v3190, 0.0
        %v3651 = vmax.f32 %v3335, 0.0
        %v3652 = vmax.f32 %v3480, 0.0
        %v3653 = vmax.f32 %v3625, 0.0
        %v3654 = vmax.f32 %v3192, 0.0
        %v3655 = vmax.f32 %v3337, 0.0
        %v3656 = vmax.f32 %v3482, 0.0
        %v3657 = vmax.f32 %v3627, 0.0
        %v3658 = vmax.f32 %v3195, 0.0
        %v3659 = vmax.f32 %v3340, 0.0
        %v3660 = vmax.f32 %v3485, 0.0
        %v3661 = vmax.f32 %v3630, 0.0
        %v3662 = vmax.f32 %v3197, 0.0
        %v3663 = vmax.f32 %v3342, 0.0
        %v3664 = vmax.f32 %v3487, 0.0
        %v3665 = vmax.f32 %v3632, 0.0
        %v3666 = vmax.f32 %v3634, %v3636
        %v3667 = vmax.f32 %v3635, %v3637
        %v3668 = vmax.f32 %v3638, %v3640
        %v3669 = vmax.f32 %v3639, %v3641
        %v3670 = vmax.f32 %v3642, %v3644
        %v3671 = vmax.f32 %v3643, %v3645
        %v3672 = vmax.f32 %v3646, %v3648
        %v3673 = vmax.f32 %v3647, %v3649
        %v3674 = vmax.f32 %v3650, %v3652
        %v3675 = vmax.f32 %v3651, %v3653
        %v3676 = vmax.f32 %v3654, %v3656
        %v3677 = vmax.f32 %v3655, %v3657
        %v3678 = vmax.f32 %v3658, %v3660
        %v3679 = vmax.f32 %v3659, %v3661
        %v3680 = vmax.f32 %v3662, %v3664
        %v3681 = vmax.f32 %v3663, %v3665
        %v3682 = vrot.slane %v654, 7
        %v3683 = vor.u32 %v3682, %v657
        %v3684 = vrot.slane %v662, 7
        %v3685 = vor.u32 %v3684, %v665
        %v3686 = vrot.slane %v670, 7
        %v3687 = vor.u32 %v3686, %v673
        %v3688 = vrot.slane %v678, 7
        %v3689 = vor.u32 %v3688, %v681
        %v3690 = vrot.slane %v686, 7
        %v3691 = vor.u32 %v3690, %v689
        %v3692 = vrot.slane %v694, 7
        %v3693 = vor.u32 %v3692, %v697
        %v3694 = vrot.slane %v702, 7
        %v3695 = vor.u32 %v3694, %v705
        %v3696 = vrot.slane %v710, 7
        %v3697 = vor.u32 %v3696, %v713
        %v3698 = vrot.slane %v534, 5
        %v3699 = vrot.slane %v537, 6
        %v3700 = vor.u32 %v3698, %v3699
        %v3701 = vrot.slane %v542, 5
        %v3702 = vrot.slane %v545, 6
        %v3703 = vor.u32 %v3701, %v3702
        %v3704 = vrot.slane %v550, 5
        %v3705 = vrot.slane %v553, 6
        %v3706 = vor.u32 %v3704, %v3705
        %v3707 = vrot.slane %v558, 5
        %v3708 = vrot.slane %v561, 6
        %v3709 = vor.u32 %v3707, %v3708
        %v3710 = vrot.slane %v566, 5
        %v3711 = vrot.slane %v569, 6
        %v3712 = vor.u32 %v3710, %v3711
        %v3713 = vrot.slane %v574, 5
        %v3714 = vrot.slane %v577, 6
        %v3715 = vor.u32 %v3713, %v3714
        %v3716 = vrot.slane %v582, 5
        %v3717 = vrot.slane %v585, 6
        %v3718 = vor.u32 %v3716, %v3717
        %v3719 = vrot.slane %v590, 5
        %v3720 = vrot.slane %v593, 6
        %v3721 = vor.u32 %v3719, %v3720
        %v3722 = vrot.slane %v2475, 5
        %v3723 = vrot.slane %v2476, 5
        %v3724 = vrot.slane %v2477, 5
        %v3725 = vrot.slane %v2478, 5
        %v3726 = vrot.slane %v2479, 5
        %v3727 = vrot.slane %v2480, 5
        %v3728 = vrot.slane %v2481, 5
        %v3729 = vrot.slane %v2482, 5
        %v3730 = vrot.slane %v2407, 1
        %v3731 = vor.u32 %v2404, %v3730
        %v3732 = vrot.slane %v2414, 1
        %v3733 = vor.u32 %v2411, %v3732
        %v3734 = vrot.slane %v2421, 1
        %v3735 = vor.u32 %v2418, %v3734
        %v3736 = vrot.slane %v2428, 1
        %v3737 = vor.u32 %v2425, %v3736
        %v3738 = vrot.slane %v2435, 1
        %v3739 = vor.u32 %v2432, %v3738
        %v3740 = vrot.slane %v2442, 1
        %v3741 = vor.u32 %v2439, %v3740
        %v3742 = vrot.slane %v2449, 1
        %v3743 = vor.u32 %v2446, %v3742
        %v3744 = vrot.slane %v2456, 1
        %v3745 = vor.u32 %v2453, %v3744
        %v3746 = vunpack.c.l.b16 %v3683
        %v3747 = vunpack.c.l.b16 %v3700
        %v3748 = vunpack.c.l.b16 %v3722
        %v3749 = vunpack.c.l.b16 %v3731
        %v3750 = vunpack.c.h.b16 %v3683
        %v3751 = vunpack.c.h.b16 %v3700
        %v3752 = vunpack.c.h.b16 %v3722
        %v3753 = vunpack.c.h.b16 %v3731
        %v3754 = vunpack.c.l.b16 %v3685
        %v3755 = vunpack.c.l.b16 %v3703
        %v3756 = vunpack.c.l.b16 %v3723
        %v3757 = vunpack.c.l.b16 %v3733
        %v3758 = vunpack.c.h.b16 %v3685
        %v3759 = vunpack.c.h.b16 %v3703
        %v3760 = vunpack.c.h.b16 %v3723
        %v3761 = vunpack.c.h.b16 %v3733
        %v3762 = vunpack.c.l.b16 %v3687
        %v3763 = vunpack.c.l.b16 %v3706
        %v3764 = vunpack.c.l.b16 %v3724
        %v3765 = vunpack.c.l.b16 %v3735
        %v3766 = vunpack.c.h.b16 %v3687
        %v3767 = vunpack.c.h.b16 %v3706
        %v3768 = vunpack.c.h.b16 %v3724
        %v3769 = vunpack.c.h.b16 %v3735
        %v3770 = vunpack.c.l.b16 %v3689
        %v3771 = vunpack.c.l.b16 %v3709
        %v3772 = vunpack.c.l.b16 %v3725
        %v3773 = vunpack.c.l.b16 %v3737
        %v3774 = vunpack.c.h.b16 %v3689
        %v3775 = vunpack.c.h.b16 %v3709
        %v3776 = vunpack.c.h.b16 %v3725
        %v3777 = vunpack.c.h.b16 %v3737
        %v3778 = vunpack.c.l.b16 %v3691
        %v3779 = vunpack.c.l.b16 %v3712
        %v3780 = vunpack.c.l.b16 %v3726
        %v3781 = vunpack.c.l.b16 %v3739
        %v3782 = vunpack.c.h.b16 %v3691
        %v3783 = vunpack.c.h.b16 %v3712
        %v3784 = vunpack.c.h.b16 %v3726
        %v3785 = vunpack.c.h.b16 %v3739
        %v3786 = vunpack.c.l.b16 %v3693
        %v3787 = vunpack.c.l.b16 %v3715
        %v3788 = vunpack.c.l.b16 %v3727
        %v3789 = vunpack.c.l.b16 %v3741
        %v3790 = vunpack.c.h.b16 %v3693
        %v3791 = vunpack.c.h.b16 %v3715
        %v3792 = vunpack.c.h.b16 %v3727
        %v3793 = vunpack.c.h.b16 %v3741
        %v3794 = vunpack.c.l.b16 %v3695
        %v3795 = vunpack.c.l.b16 %v3718
        %v3796 = vunpack.c.l.b16 %v3728
        %v3797 = vunpack.c.l.b16 %v3743
        %v3798 = vunpack.c.h.b16 %v3695
        %v3799 = vunpack.c.h.b16 %v3718
        %v3800 = vunpack.c.h.b16 %v3728
        %v3801 = vunpack.c.h.b16 %v3743
        %v3802 = vunpack.c.l.b16 %v3697
        %v3803 = vunpack.c.l.b16 %v3721
        %v3804 = vunpack.c.l.b16 %v3729
        %v3805 = vunpack.c.l.b16 %v3745
        %v3806 = vunpack.c.h.b16 %v3697
        %v3807 = vunpack.c.h.b16 %v3721
        %v3808 = vunpack.c.h.b16 %v3729
        %v3809 = vunpack.c.h.b16 %v3745
        %v3810 = vpack.c.b16 %v3746, %v510
        %v3811 = vpack.c.b16 %v3748, %v3747
        %v3812 = vpack.c.b16 %v3749, %v3749
        %v3813 = vpack.c.b16 %v3750, %v605
        %v3814 = vpack.c.b16 %v3752, %v3751
        %v3815 = vpack.c.b16 %v3753, %v3753
        %v3816 = vpack.c.b16 %v3754, %v512
        %v3817 = vpack.c.b16 %v3756, %v3755
        %v3818 = vpack.c.b16 %v3757, %v3757
        %v3819 = vpack.c.b16 %v3758, %v606
        %v3820 = vpack.c.b16 %v3760, %v3759
        %v3821 = vpack.c.b16 %v3761, %v3761
        %v3822 = vpack.c.b16 %v3762, %v514
        %v3823 = vpack.c.b16 %v3764, %v3763
        %v3824 = vpack.c.b16 %v3765, %v3765
        %v3825 = vpack.c.b16 %v3766, %v607
        %v3826 = vpack.c.b16 %v3768, %v3767
        %v3827 = vpack.c.b16 %v3769, %v3769
        %v3828 = vpack.c.b16 %v3770, %v516
        %v3829 = vpack.c.b16 %v3772, %v3771
        %v3830 = vpack.c.b16 %v3773, %v3773
        %v3831 = vpack.c.b16 %v3774, %v608
        %v3832 = vpack.c.b16 %v3776, %v3775
        %v3833 = vpack.c.b16 %v3777, %v3777
        %v3834 = vpack.c.b16 %v3778, %v518
        %v3835 = vpack.c.b16 %v3780, %v3779
        %v3836 = vpack.c.b16 %v3781, %v3781
        %v3837 = vpack.c.b16 %v3782, %v609
        %v3838 = vpack.c.b16 %v3784, %v3783
        %v3839 = vpack.c.b16 %v3785, %v3785
        %v3840 = vpack.c.b16 %v3786, %v520
        %v3841 = vpack.c.b16 %v3788, %v3787
        %v3842 = vpack.c.b16 %v3789, %v3789
        %v3843 = vpack.c.b16 %v3790, %v610
        %v3844 = vpack.c.b16 %v3792, %v3791
        %v3845 = vpack.c.b16 %v3793, %v3793
        %v3846 = vpack.c.b16 %v3794, %v522
        %v3847 = vpack.c.b16 %v3796, %v3795
        %v3848 = vpack.c.b16 %v3797, %v3797
        %v3849 = vpack.c.b16 %v3798, %v611
        %v3850 = vpack.c.b16 %v3800, %v3799
        %v3851 = vpack.c.b16 %v3801, %v3801
        %v3852 = vpack.c.b16 %v3802, %v524
        %v3853 = vpack.c.b16 %v3804, %v3803
        %v3854 = vpack.c.b16 %v3805, %v3805
        %v3855 = vpack.c.b16 %v3806, %v612
        %v3856 = vpack.c.b16 %v3808, %v3807
        %v3857 = vpack.c.b16 %v3809, %v3809
        %vm3858 = vcmask 1040384
        %vm3859 = vcmask 1044484
        %vm3860 = vmor %vm3858, %vm3859
        %v3861 = vrot.slane %v3810, 7
        %v3862 = vrot.slane %v3861, 4
        %v3863 = vrot.slane %v3813, 7
        %v3864 = vsel %vm3860, %v3862, %v3863
        %v3865 = vrot.slane %v3811, 7
        %v3866 = vrot.slane %v3865, 4
        %v3867 = vrot.slane %v3814, 7
        %v3868 = vsel %vm3860, %v3866, %v3867
        %v3869 = vrot.slane %v3812, 7
        %v3870 = vrot.slane %v3869, 4
        %v3871 = vrot.slane %v3815, 7
        %v3872 = vsel %vm3860, %v3870, %v3871
        %v3873 = vrot.slane %v3816, 7
        %v3874 = vrot.slane %v3873, 4
        %v3875 = vrot.slane %v3819, 7
        %v3876 = vsel %vm3860, %v3874, %v3875
        %v3877 = vrot.slane %v3817, 7
        %v3878 = vrot.slane %v3877, 4
        %v3879 = vrot.slane %v3820, 7
        %v3880 = vsel %vm3860, %v3878, %v3879
        %v3881 = vrot.slane %v3818, 7
        %v3882 = vrot.slane %v3881, 4
        %v3883 = vrot.slane %v3821, 7
        %v3884 = vsel %vm3860, %v3882, %v3883
        %v3885 = vrot.slane %v3822, 7
        %v3886 = vrot.slane %v3885, 4
        %v3887 = vrot.slane %v3825, 7
        %v3888 = vsel %vm3860, %v3886, %v3887
        %v3889 = vrot.slane %v3823, 7
        %v3890 = vrot.slane %v3889, 4
        %v3891 = vrot.slane %v3826, 7
        %v3892 = vsel %vm3860, %v3890, %v3891
        %v3893 = vrot.slane %v3824, 7
        %v3894 = vrot.slane %v3893, 4
        %v3895 = vrot.slane %v3827, 7
        %v3896 = vsel %vm3860, %v3894, %v3895
        %v3897 = vrot.slane %v3828, 7
        %v3898 = vrot.slane %v3897, 4
        %v3899 = vrot.slane %v3831, 7
        %v3900 = vsel %vm3860, %v3898, %v3899
        %v3901 = vrot.slane %v3829, 7
        %v3902 = vrot.slane %v3901, 4
        %v3903 = vrot.slane %v3832, 7
        %v3904 = vsel %vm3860, %v3902, %v3903
        %v3905 = vrot.slane %v3830, 7
        %v3906 = vrot.slane %v3905, 4
        %v3907 = vrot.slane %v3833, 7
        %v3908 = vsel %vm3860, %v3906, %v3907
        %v3909 = vrot.slane %v3834, 7
        %v3910 = vrot.slane %v3909, 4
        %v3911 = vrot.slane %v3837, 7
        %v3912 = vsel %vm3860, %v3910, %v3911
        %v3913 = vrot.slane %v3835, 7
        %v3914 = vrot.slane %v3913, 4
        %v3915 = vrot.slane %v3838, 7
        %v3916 = vsel %vm3860, %v3914, %v3915
        %v3917 = vrot.slane %v3836, 7
        %v3918 = vrot.slane %v3917, 4
        %v3919 = vrot.slane %v3839, 7
        %v3920 = vsel %vm3860, %v3918, %v3919
        %v3921 = vrot.slane %v3840, 7
        %v3922 = vrot.slane %v3921, 4
        %v3923 = vrot.slane %v3843, 7
        %v3924 = vsel %vm3860, %v3922, %v3923
        %v3925 = vrot.slane %v3841, 7
        %v3926 = vrot.slane %v3925, 4
        %v3927 = vrot.slane %v3844, 7
        %v3928 = vsel %vm3860, %v3926, %v3927
        %v3929 = vrot.slane %v3842, 7
        %v3930 = vrot.slane %v3929, 4
        %v3931 = vrot.slane %v3845, 7
        %v3932 = vsel %vm3860, %v3930, %v3931
        %v3933 = vrot.slane %v3846, 7
        %v3934 = vrot.slane %v3933, 4
        %v3935 = vrot.slane %v3849, 7
        %v3936 = vsel %vm3860, %v3934, %v3935
        %v3937 = vrot.slane %v3847, 7
        %v3938 = vrot.slane %v3937, 4
        %v3939 = vrot.slane %v3850, 7
        %v3940 = vsel %vm3860, %v3938, %v3939
        %v3941 = vrot.slane %v3848, 7
        %v3942 = vrot.slane %v3941, 4
        %v3943 = vrot.slane %v3851, 7
        %v3944 = vsel %vm3860, %v3942, %v3943
        %v3945 = vrot.slane %v3852, 7
        %v3946 = vrot.slane %v3945, 4
        %v3947 = vrot.slane %v3855, 7
        %v3948 = vsel %vm3860, %v3946, %v3947
        %v3949 = vrot.slane %v3853, 7
        %v3950 = vrot.slane %v3949, 4
        %v3951 = vrot.slane %v3856, 7
        %v3952 = vsel %vm3860, %v3950, %v3951
        %v3953 = vrot.slane %v3854, 7
        %v3954 = vrot.slane %v3953, 4
        %v3955 = vrot.slane %v3857, 7
        %v3956 = vsel %vm3860, %v3954, %v3955
        %v3957 = vunpack.c.l.b16 %v3864
        %v3958 = vunpack.c.h.b16 %v3864
        %v3959 = vunpack.c.l.b16 %v3868
        %v3960 = vunpack.c.h.b16 %v3868
        %v3961 = vunpack.c.l.b16 %v3872
        %v3962 = vunpack.c.l.b16 %v3876
        %v3963 = vunpack.c.h.b16 %v3876
        %v3964 = vunpack.c.l.b16 %v3880
        %v3965 = vunpack.c.h.b16 %v3880
        %v3966 = vunpack.c.l.b16 %v3884
        %v3967 = vunpack.c.l.b16 %v3888
        %v3968 = vunpack.c.h.b16 %v3888
        %v3969 = vunpack.c.l.b16 %v3892
        %v3970 = vunpack.c.h.b16 %v3892
        %v3971 = vunpack.c.l.b16 %v3896
        %v3972 = vunpack.c.l.b16 %v3900
        %v3973 = vunpack.c.h.b16 %v3900
        %v3974 = vunpack.c.l.b16 %v3904
        %v3975 = vunpack.c.h.b16 %v3904
        %v3976 = vunpack.c.l.b16 %v3908
        %v3977 = vunpack.c.l.b16 %v3912
        %v3978 = vunpack.c.h.b16 %v3912
        %v3979 = vunpack.c.l.b16 %v3916
        %v3980 = vunpack.c.h.b16 %v3916
        %v3981 = vunpack.c.l.b16 %v3920
        %v3982 = vunpack.c.l.b16 %v3924
        %v3983 = vunpack.c.h.b16 %v3924
        %v3984 = vunpack.c.l.b16 %v3928
        %v3985 = vunpack.c.h.b16 %v3928
        %v3986 = vunpack.c.l.b16 %v3932
        %v3987 = vunpack.c.l.b16 %v3936
        %v3988 = vunpack.c.h.b16 %v3936
        %v3989 = vunpack.c.l.b16 %v3940
        %v3990 = vunpack.c.h.b16 %v3940
        %v3991 = vunpack.c.l.b16 %v3944
        %v3992 = vunpack.c.l.b16 %v3948
        %v3993 = vunpack.c.h.b16 %v3948
        %v3994 = vunpack.c.l.b16 %v3952
        %v3995 = vunpack.c.h.b16 %v3952
        %v3996 = vunpack.c.l.b16 %v3956
        %v3997 = vpack.c.b16 %v3962, %v3957
        %v3998 = vpack.c.b16 %v3963, %v3958
        %v3999 = vpack.c.b16 %v3964, %v3959
        %v4000 = vpack.c.b16 %v3965, %v3960
        %v4001 = vpack.c.b16 %v3966, %v3961
        %v4002 = vpack.c.b16 %v3972, %v3967
        %v4003 = vpack.c.b16 %v3973, %v3968
        %v4004 = vpack.c.b16 %v3974, %v3969
        %v4005 = vpack.c.b16 %v3975, %v3970
        %v4006 = vpack.c.b16 %v3976, %v3971
        %v4007 = vpack.c.b16 %v3982, %v3977
        %v4008 = vpack.c.b16 %v3983, %v3978
        %v4009 = vpack.c.b16 %v3984, %v3979
        %v4010 = vpack.c.b16 %v3985, %v3980
        %v4011 = vpack.c.b16 %v3986, %v3981
        %v4012 = vpack.c.b16 %v3992, %v3987
        %v4013 = vpack.c.b16 %v3993, %v3988
        %v4014 = vpack.c.b16 %v3994, %v3989
        %v4015 = vpack.c.b16 %v3995, %v3990
        %v4016 = vpack.c.b16 %v3996, %v3991
        %4037 = vmatpush.bf16.msra.mxu0 %v1483
        %4038 = vmatpush.bf16.msra.mxu0 %v1479
        %4039 = vmatpush.bf16.msra.mxu0 %v1475
        %4040 = vmatpush.bf16.msra.mxu0 %v1471
        %4041 = vmatpush.bf16.msra.mxu0 %v1467
        %4042 = vmatpush.bf16.msra.mxu0 %v1463
        %4043 = vmatpush.bf16.msra.mxu0 %v1459
        %4044 = vmatpush.bf16.msra.mxu0 %v1455
        %4045 = vmatmul.bf16.gmra.mxu0 %v3997
        %v4046 = vpop.f32.mrf.mxu0
        %v4047 = vadd.f32 %v927, %v4046
        %v4048 = vpop.f32.mrf.mxu0
        %v4049 = vadd.f32 %v927, %v4048
        %4050 = vmatmul.bf16.gmra.mxu0 %v4002
        %v4051 = vpop.f32.mrf.mxu0
        %v4052 = vadd.f32 %v927, %v4051
        %v4053 = vpop.f32.mrf.mxu0
        %v4054 = vadd.f32 %v927, %v4053
        %4055 = vmatmul.bf16.gmra.mxu0 %v4007
        %v4056 = vpop.f32.mrf.mxu0
        %v4057 = vadd.f32 %v927, %v4056
        %v4058 = vpop.f32.mrf.mxu0
        %v4059 = vadd.f32 %v927, %v4058
        %4060 = vmatmul.bf16.gmra.mxu0 %v4012
        %v4061 = vpop.f32.mrf.mxu0
        %v4062 = vadd.f32 %v927, %v4061
        %v4063 = vpop.f32.mrf.mxu0
        %v4064 = vadd.f32 %v927, %v4063
        %4065 = vdwg.mxu0
        %4066 = vmatpush.bf16.msra.mxu0 %v1515
        %4067 = vmatpush.bf16.msra.mxu0 %v1511
        %4068 = vmatpush.bf16.msra.mxu0 %v1507
        %4069 = vmatpush.bf16.msra.mxu0 %v1503
        %4070 = vmatpush.bf16.msra.mxu0 %v1499
        %4071 = vmatpush.bf16.msra.mxu0 %v1495
        %4072 = vmatpush.bf16.msra.mxu0 %v1491
        %4073 = vmatpush.bf16.msra.mxu0 %v1487
        %4074 = vmatmul.bf16.gmra.mxu0 %v3998
        %v4075 = vpop.f32.mrf.mxu0
        %v4076 = vadd.f32 %v4047, %v4075
        %v4077 = vpop.f32.mrf.mxu0
        %v4078 = vadd.f32 %v4049, %v4077
        %4079 = vmatmul.bf16.gmra.mxu0 %v4003
        %v4080 = vpop.f32.mrf.mxu0
        %v4081 = vadd.f32 %v4052, %v4080
        %v4082 = vpop.f32.mrf.mxu0
        %v4083 = vadd.f32 %v4054, %v4082
        %4084 = vmatmul.bf16.gmra.mxu0 %v4008
        %v4085 = vpop.f32.mrf.mxu0
        %v4086 = vadd.f32 %v4057, %v4085
        %v4087 = vpop.f32.mrf.mxu0
        %v4088 = vadd.f32 %v4059, %v4087
        %4089 = vmatmul.bf16.gmra.mxu0 %v4013
        %v4090 = vpop.f32.mrf.mxu0
        %v4091 = vadd.f32 %v4062, %v4090
        %v4092 = vpop.f32.mrf.mxu0
        %v4093 = vadd.f32 %v4064, %v4092
        %4094 = vdwg.mxu0
        %4095 = vmatpush.bf16.msra.mxu0 %v1547
        %4096 = vmatpush.bf16.msra.mxu0 %v1543
        %4097 = vmatpush.bf16.msra.mxu0 %v1539
        %4098 = vmatpush.bf16.msra.mxu0 %v1535
        %4099 = vmatpush.bf16.msra.mxu0 %v1531
        %4100 = vmatpush.bf16.msra.mxu0 %v1527
        %4101 = vmatpush.bf16.msra.mxu0 %v1523
        %4102 = vmatpush.bf16.msra.mxu0 %v1519
        %4103 = vmatmul.bf16.gmra.mxu0 %v3999
        %v4104 = vpop.f32.mrf.mxu0
        %v4105 = vadd.f32 %v4076, %v4104
        %v4106 = vpop.f32.mrf.mxu0
        %v4107 = vadd.f32 %v4078, %v4106
        %4108 = vmatmul.bf16.gmra.mxu0 %v4004
        %v4109 = vpop.f32.mrf.mxu0
        %v4110 = vadd.f32 %v4081, %v4109
        %v4111 = vpop.f32.mrf.mxu0
        %v4112 = vadd.f32 %v4083, %v4111
        %4113 = vmatmul.bf16.gmra.mxu0 %v4009
        %v4114 = vpop.f32.mrf.mxu0
        %v4115 = vadd.f32 %v4086, %v4114
        %v4116 = vpop.f32.mrf.mxu0
        %v4117 = vadd.f32 %v4088, %v4116
        %4118 = vmatmul.bf16.gmra.mxu0 %v4014
        %v4119 = vpop.f32.mrf.mxu0
        %v4120 = vadd.f32 %v4091, %v4119
        %v4121 = vpop.f32.mrf.mxu0
        %v4122 = vadd.f32 %v4093, %v4121
        %4123 = vdwg.mxu0
        %4124 = vmatpush.bf16.msra.mxu0 %v1579
        %4125 = vmatpush.bf16.msra.mxu0 %v1575
        %4126 = vmatpush.bf16.msra.mxu0 %v1571
        %4127 = vmatpush.bf16.msra.mxu0 %v1567
        %4128 = vmatpush.bf16.msra.mxu0 %v1563
        %4129 = vmatpush.bf16.msra.mxu0 %v1559
        %4130 = vmatpush.bf16.msra.mxu0 %v1555
        %4131 = vmatpush.bf16.msra.mxu0 %v1551
        %4132 = vmatmul.bf16.gmra.mxu0 %v4000
        %v4133 = vpop.f32.mrf.mxu0
        %v4134 = vadd.f32 %v4105, %v4133
        %v4135 = vpop.f32.mrf.mxu0
        %v4136 = vadd.f32 %v4107, %v4135
        %4137 = vmatmul.bf16.gmra.mxu0 %v4005
        %v4138 = vpop.f32.mrf.mxu0
        %v4139 = vadd.f32 %v4110, %v4138
        %v4140 = vpop.f32.mrf.mxu0
        %v4141 = vadd.f32 %v4112, %v4140
        %4142 = vmatmul.bf16.gmra.mxu0 %v4010
        %v4143 = vpop.f32.mrf.mxu0
        %v4144 = vadd.f32 %v4115, %v4143
        %v4145 = vpop.f32.mrf.mxu0
        %v4146 = vadd.f32 %v4117, %v4145
        %4147 = vmatmul.bf16.gmra.mxu0 %v4015
        %v4148 = vpop.f32.mrf.mxu0
        %v4149 = vadd.f32 %v4120, %v4148
        %v4150 = vpop.f32.mrf.mxu0
        %v4151 = vadd.f32 %v4122, %v4150
        %4152 = vdwg.mxu0
        %4153 = vmatpush.bf16.msra.mxu0 %v1611
        %4154 = vmatpush.bf16.msra.mxu0 %v1607
        %4155 = vmatpush.bf16.msra.mxu0 %v1603
        %4156 = vmatpush.bf16.msra.mxu0 %v1599
        %4157 = vmatpush.bf16.msra.mxu0 %v1595
        %4158 = vmatpush.bf16.msra.mxu0 %v1591
        %4159 = vmatpush.bf16.msra.mxu0 %v1587
        %4160 = vmatpush.bf16.msra.mxu0 %v1583
        %4161 = vmatmul.bf16.gmra.mxu0 %v4001
        %v4162 = vpop.f32.mrf.mxu0
        %v4163 = vadd.f32 %v4134, %v4162
        %v4164 = vpop.f32.mrf.mxu0
        %v4165 = vadd.f32 %v4136, %v4164
        %4166 = vmatmul.bf16.gmra.mxu0 %v4006
        %v4167 = vpop.f32.mrf.mxu0
        %v4168 = vadd.f32 %v4139, %v4167
        %v4169 = vpop.f32.mrf.mxu0
        %v4170 = vadd.f32 %v4141, %v4169
        %4171 = vmatmul.bf16.gmra.mxu0 %v4011
        %v4172 = vpop.f32.mrf.mxu0
        %v4173 = vadd.f32 %v4144, %v4172
        %v4174 = vpop.f32.mrf.mxu0
        %v4175 = vadd.f32 %v4146, %v4174
        %4176 = vmatmul.bf16.gmra.mxu0 %v4016
        %v4177 = vpop.f32.mrf.mxu0
        %v4178 = vadd.f32 %v4149, %v4177
        %v4179 = vpop.f32.mrf.mxu0
        %v4180 = vadd.f32 %v4151, %v4179
        %4181 = vdwg.mxu0
        %4182 = vmatpush.bf16.msra.mxu0 %v1484
        %4183 = vmatpush.bf16.msra.mxu0 %v1480
        %4184 = vmatpush.bf16.msra.mxu0 %v1476
        %4185 = vmatpush.bf16.msra.mxu0 %v1472
        %4186 = vmatpush.bf16.msra.mxu0 %v1468
        %4187 = vmatpush.bf16.msra.mxu0 %v1464
        %4188 = vmatpush.bf16.msra.mxu0 %v1460
        %4189 = vmatpush.bf16.msra.mxu0 %v1456
        %4190 = vmatmul.bf16.gmra.mxu0 %v3997
        %v4191 = vpop.f32.mrf.mxu0
        %v4192 = vadd.f32 %v928, %v4191
        %v4193 = vpop.f32.mrf.mxu0
        %v4194 = vadd.f32 %v928, %v4193
        %4195 = vmatmul.bf16.gmra.mxu0 %v4002
        %v4196 = vpop.f32.mrf.mxu0
        %v4197 = vadd.f32 %v928, %v4196
        %v4198 = vpop.f32.mrf.mxu0
        %v4199 = vadd.f32 %v928, %v4198
        %4200 = vmatmul.bf16.gmra.mxu0 %v4007
        %v4201 = vpop.f32.mrf.mxu0
        %v4202 = vadd.f32 %v928, %v4201
        %v4203 = vpop.f32.mrf.mxu0
        %v4204 = vadd.f32 %v928, %v4203
        %4205 = vmatmul.bf16.gmra.mxu0 %v4012
        %v4206 = vpop.f32.mrf.mxu0
        %v4207 = vadd.f32 %v928, %v4206
        %v4208 = vpop.f32.mrf.mxu0
        %v4209 = vadd.f32 %v928, %v4208
        %4210 = vdwg.mxu0
        %4211 = vmatpush.bf16.msra.mxu0 %v1516
        %4212 = vmatpush.bf16.msra.mxu0 %v1512
        %4213 = vmatpush.bf16.msra.mxu0 %v1508
        %4214 = vmatpush.bf16.msra.mxu0 %v1504
        %4215 = vmatpush.bf16.msra.mxu0 %v1500
        %4216 = vmatpush.bf16.msra.mxu0 %v1496
        %4217 = vmatpush.bf16.msra.mxu0 %v1492
        %4218 = vmatpush.bf16.msra.mxu0 %v1488
        %4219 = vmatmul.bf16.gmra.mxu0 %v3998
        %v4220 = vpop.f32.mrf.mxu0
        %v4221 = vadd.f32 %v4192, %v4220
        %v4222 = vpop.f32.mrf.mxu0
        %v4223 = vadd.f32 %v4194, %v4222
        %4224 = vmatmul.bf16.gmra.mxu0 %v4003
        %v4225 = vpop.f32.mrf.mxu0
        %v4226 = vadd.f32 %v4197, %v4225
        %v4227 = vpop.f32.mrf.mxu0
        %v4228 = vadd.f32 %v4199, %v4227
        %4229 = vmatmul.bf16.gmra.mxu0 %v4008
        %v4230 = vpop.f32.mrf.mxu0
        %v4231 = vadd.f32 %v4202, %v4230
        %v4232 = vpop.f32.mrf.mxu0
        %v4233 = vadd.f32 %v4204, %v4232
        %4234 = vmatmul.bf16.gmra.mxu0 %v4013
        %v4235 = vpop.f32.mrf.mxu0
        %v4236 = vadd.f32 %v4207, %v4235
        %v4237 = vpop.f32.mrf.mxu0
        %v4238 = vadd.f32 %v4209, %v4237
        %4239 = vdwg.mxu0
        %4240 = vmatpush.bf16.msra.mxu0 %v1548
        %4241 = vmatpush.bf16.msra.mxu0 %v1544
        %4242 = vmatpush.bf16.msra.mxu0 %v1540
        %4243 = vmatpush.bf16.msra.mxu0 %v1536
        %4244 = vmatpush.bf16.msra.mxu0 %v1532
        %4245 = vmatpush.bf16.msra.mxu0 %v1528
        %4246 = vmatpush.bf16.msra.mxu0 %v1524
        %4247 = vmatpush.bf16.msra.mxu0 %v1520
        %4248 = vmatmul.bf16.gmra.mxu0 %v3999
        %v4249 = vpop.f32.mrf.mxu0
        %v4250 = vadd.f32 %v4221, %v4249
        %v4251 = vpop.f32.mrf.mxu0
        %v4252 = vadd.f32 %v4223, %v4251
        %4253 = vmatmul.bf16.gmra.mxu0 %v4004
        %v4254 = vpop.f32.mrf.mxu0
        %v4255 = vadd.f32 %v4226, %v4254
        %v4256 = vpop.f32.mrf.mxu0
        %v4257 = vadd.f32 %v4228, %v4256
        %4258 = vmatmul.bf16.gmra.mxu0 %v4009
        %v4259 = vpop.f32.mrf.mxu0
        %v4260 = vadd.f32 %v4231, %v4259
        %v4261 = vpop.f32.mrf.mxu0
        %v4262 = vadd.f32 %v4233, %v4261
        %4263 = vmatmul.bf16.gmra.mxu0 %v4014
        %v4264 = vpop.f32.mrf.mxu0
        %v4265 = vadd.f32 %v4236, %v4264
        %v4266 = vpop.f32.mrf.mxu0
        %v4267 = vadd.f32 %v4238, %v4266
        %4268 = vdwg.mxu0
        %4269 = vmatpush.bf16.msra.mxu0 %v1580
        %4270 = vmatpush.bf16.msra.mxu0 %v1576
        %4271 = vmatpush.bf16.msra.mxu0 %v1572
        %4272 = vmatpush.bf16.msra.mxu0 %v1568
        %4273 = vmatpush.bf16.msra.mxu0 %v1564
        %4274 = vmatpush.bf16.msra.mxu0 %v1560
        %4275 = vmatpush.bf16.msra.mxu0 %v1556
        %4276 = vmatpush.bf16.msra.mxu0 %v1552
        %4277 = vmatmul.bf16.gmra.mxu0 %v4000
        %v4278 = vpop.f32.mrf.mxu0
        %v4279 = vadd.f32 %v4250, %v4278
        %v4280 = vpop.f32.mrf.mxu0
        %v4281 = vadd.f32 %v4252, %v4280
        %4282 = vmatmul.bf16.gmra.mxu0 %v4005
        %v4283 = vpop.f32.mrf.mxu0
        %v4284 = vadd.f32 %v4255, %v4283
        %v4285 = vpop.f32.mrf.mxu0
        %v4286 = vadd.f32 %v4257, %v4285
        %4287 = vmatmul.bf16.gmra.mxu0 %v4010
        %v4288 = vpop.f32.mrf.mxu0
        %v4289 = vadd.f32 %v4260, %v4288
        %v4290 = vpop.f32.mrf.mxu0
        %v4291 = vadd.f32 %v4262, %v4290
        %4292 = vmatmul.bf16.gmra.mxu0 %v4015
        %v4293 = vpop.f32.mrf.mxu0
        %v4294 = vadd.f32 %v4265, %v4293
        %v4295 = vpop.f32.mrf.mxu0
        %v4296 = vadd.f32 %v4267, %v4295
        %4297 = vdwg.mxu0
        %4298 = vmatpush.bf16.msra.mxu0 %v1612
        %4299 = vmatpush.bf16.msra.mxu0 %v1608
        %4300 = vmatpush.bf16.msra.mxu0 %v1604
        %4301 = vmatpush.bf16.msra.mxu0 %v1600
        %4302 = vmatpush.bf16.msra.mxu0 %v1596
        %4303 = vmatpush.bf16.msra.mxu0 %v1592
        %4304 = vmatpush.bf16.msra.mxu0 %v1588
        %4305 = vmatpush.bf16.msra.mxu0 %v1584
        %4306 = vmatmul.bf16.gmra.mxu0 %v4001
        %v4307 = vpop.f32.mrf.mxu0
        %v4308 = vadd.f32 %v4279, %v4307
        %v4309 = vpop.f32.mrf.mxu0
        %v4310 = vadd.f32 %v4281, %v4309
        %4311 = vmatmul.bf16.gmra.mxu0 %v4006
        %v4312 = vpop.f32.mrf.mxu0
        %v4313 = vadd.f32 %v4284, %v4312
        %v4314 = vpop.f32.mrf.mxu0
        %v4315 = vadd.f32 %v4286, %v4314
        %4316 = vmatmul.bf16.gmra.mxu0 %v4011
        %v4317 = vpop.f32.mrf.mxu0
        %v4318 = vadd.f32 %v4289, %v4317
        %v4319 = vpop.f32.mrf.mxu0
        %v4320 = vadd.f32 %v4291, %v4319
        %4321 = vmatmul.bf16.gmra.mxu0 %v4016
        %v4322 = vpop.f32.mrf.mxu0
        %v4323 = vadd.f32 %v4294, %v4322
        %v4324 = vpop.f32.mrf.mxu0
        %v4325 = vadd.f32 %v4296, %v4324
        %4326 = vdwg.mxu0
        %4327 = vmatpush.bf16.msra.mxu0 %v1485
        %4328 = vmatpush.bf16.msra.mxu0 %v1481
        %4329 = vmatpush.bf16.msra.mxu0 %v1477
        %4330 = vmatpush.bf16.msra.mxu0 %v1473
        %4331 = vmatpush.bf16.msra.mxu0 %v1469
        %4332 = vmatpush.bf16.msra.mxu0 %v1465
        %4333 = vmatpush.bf16.msra.mxu0 %v1461
        %4334 = vmatpush.bf16.msra.mxu0 %v1457
        %4335 = vmatmul.bf16.gmra.mxu0 %v3997
        %v4336 = vpop.f32.mrf.mxu0
        %v4337 = vadd.f32 %v929, %v4336
        %v4338 = vpop.f32.mrf.mxu0
        %v4339 = vadd.f32 %v929, %v4338
        %4340 = vmatmul.bf16.gmra.mxu0 %v4002
        %v4341 = vpop.f32.mrf.mxu0
        %v4342 = vadd.f32 %v929, %v4341
        %v4343 = vpop.f32.mrf.mxu0
        %v4344 = vadd.f32 %v929, %v4343
        %4345 = vmatmul.bf16.gmra.mxu0 %v4007
        %v4346 = vpop.f32.mrf.mxu0
        %v4347 = vadd.f32 %v929, %v4346
        %v4348 = vpop.f32.mrf.mxu0
        %v4349 = vadd.f32 %v929, %v4348
        %4350 = vmatmul.bf16.gmra.mxu0 %v4012
        %v4351 = vpop.f32.mrf.mxu0
        %v4352 = vadd.f32 %v929, %v4351
        %v4353 = vpop.f32.mrf.mxu0
        %v4354 = vadd.f32 %v929, %v4353
        %4355 = vdwg.mxu0
        %4356 = vmatpush.bf16.msra.mxu0 %v1517
        %4357 = vmatpush.bf16.msra.mxu0 %v1513
        %4358 = vmatpush.bf16.msra.mxu0 %v1509
        %4359 = vmatpush.bf16.msra.mxu0 %v1505
        %4360 = vmatpush.bf16.msra.mxu0 %v1501
        %4361 = vmatpush.bf16.msra.mxu0 %v1497
        %4362 = vmatpush.bf16.msra.mxu0 %v1493
        %4363 = vmatpush.bf16.msra.mxu0 %v1489
        %4364 = vmatmul.bf16.gmra.mxu0 %v3998
        %v4365 = vpop.f32.mrf.mxu0
        %v4366 = vadd.f32 %v4337, %v4365
        %v4367 = vpop.f32.mrf.mxu0
        %v4368 = vadd.f32 %v4339, %v4367
        %4369 = vmatmul.bf16.gmra.mxu0 %v4003
        %v4370 = vpop.f32.mrf.mxu0
        %v4371 = vadd.f32 %v4342, %v4370
        %v4372 = vpop.f32.mrf.mxu0
        %v4373 = vadd.f32 %v4344, %v4372
        %4374 = vmatmul.bf16.gmra.mxu0 %v4008
        %v4375 = vpop.f32.mrf.mxu0
        %v4376 = vadd.f32 %v4347, %v4375
        %v4377 = vpop.f32.mrf.mxu0
        %v4378 = vadd.f32 %v4349, %v4377
        %4379 = vmatmul.bf16.gmra.mxu0 %v4013
        %v4380 = vpop.f32.mrf.mxu0
        %v4381 = vadd.f32 %v4352, %v4380
        %v4382 = vpop.f32.mrf.mxu0
        %v4383 = vadd.f32 %v4354, %v4382
        %4384 = vdwg.mxu0
        %4385 = vmatpush.bf16.msra.mxu0 %v1549
        %4386 = vmatpush.bf16.msra.mxu0 %v1545
        %4387 = vmatpush.bf16.msra.mxu0 %v1541
        %4388 = vmatpush.bf16.msra.mxu0 %v1537
        %4389 = vmatpush.bf16.msra.mxu0 %v1533
        %4390 = vmatpush.bf16.msra.mxu0 %v1529
        %4391 = vmatpush.bf16.msra.mxu0 %v1525
        %4392 = vmatpush.bf16.msra.mxu0 %v1521
        %4393 = vmatmul.bf16.gmra.mxu0 %v3999
        %v4394 = vpop.f32.mrf.mxu0
        %v4395 = vadd.f32 %v4366, %v4394
        %v4396 = vpop.f32.mrf.mxu0
        %v4397 = vadd.f32 %v4368, %v4396
        %4398 = vmatmul.bf16.gmra.mxu0 %v4004
        %v4399 = vpop.f32.mrf.mxu0
        %v4400 = vadd.f32 %v4371, %v4399
        %v4401 = vpop.f32.mrf.mxu0
        %v4402 = vadd.f32 %v4373, %v4401
        %4403 = vmatmul.bf16.gmra.mxu0 %v4009
        %v4404 = vpop.f32.mrf.mxu0
        %v4405 = vadd.f32 %v4376, %v4404
        %v4406 = vpop.f32.mrf.mxu0
        %v4407 = vadd.f32 %v4378, %v4406
        %4408 = vmatmul.bf16.gmra.mxu0 %v4014
        %v4409 = vpop.f32.mrf.mxu0
        %v4410 = vadd.f32 %v4381, %v4409
        %v4411 = vpop.f32.mrf.mxu0
        %v4412 = vadd.f32 %v4383, %v4411
        %4413 = vdwg.mxu0
        %4414 = vmatpush.bf16.msra.mxu0 %v1581
        %4415 = vmatpush.bf16.msra.mxu0 %v1577
        %4416 = vmatpush.bf16.msra.mxu0 %v1573
        %4417 = vmatpush.bf16.msra.mxu0 %v1569
        %4418 = vmatpush.bf16.msra.mxu0 %v1565
        %4419 = vmatpush.bf16.msra.mxu0 %v1561
        %4420 = vmatpush.bf16.msra.mxu0 %v1557
        %4421 = vmatpush.bf16.msra.mxu0 %v1553
        %4422 = vmatmul.bf16.gmra.mxu0 %v4000
        %v4423 = vpop.f32.mrf.mxu0
        %v4424 = vadd.f32 %v4395, %v4423
        %v4425 = vpop.f32.mrf.mxu0
        %v4426 = vadd.f32 %v4397, %v4425
        %4427 = vmatmul.bf16.gmra.mxu0 %v4005
        %v4428 = vpop.f32.mrf.mxu0
        %v4429 = vadd.f32 %v4400, %v4428
        %v4430 = vpop.f32.mrf.mxu0
        %v4431 = vadd.f32 %v4402, %v4430
        %4432 = vmatmul.bf16.gmra.mxu0 %v4010
        %v4433 = vpop.f32.mrf.mxu0
        %v4434 = vadd.f32 %v4405, %v4433
        %v4435 = vpop.f32.mrf.mxu0
        %v4436 = vadd.f32 %v4407, %v4435
        %4437 = vmatmul.bf16.gmra.mxu0 %v4015
        %v4438 = vpop.f32.mrf.mxu0
        %v4439 = vadd.f32 %v4410, %v4438
        %v4440 = vpop.f32.mrf.mxu0
        %v4441 = vadd.f32 %v4412, %v4440
        %4442 = vdwg.mxu0
        %4443 = vmatpush.bf16.msra.mxu0 %v1613
        %4444 = vmatpush.bf16.msra.mxu0 %v1609
        %4445 = vmatpush.bf16.msra.mxu0 %v1605
        %4446 = vmatpush.bf16.msra.mxu0 %v1601
        %4447 = vmatpush.bf16.msra.mxu0 %v1597
        %4448 = vmatpush.bf16.msra.mxu0 %v1593
        %4449 = vmatpush.bf16.msra.mxu0 %v1589
        %4450 = vmatpush.bf16.msra.mxu0 %v1585
        %4451 = vmatmul.bf16.gmra.mxu0 %v4001
        %v4452 = vpop.f32.mrf.mxu0
        %v4453 = vadd.f32 %v4424, %v4452
        %v4454 = vpop.f32.mrf.mxu0
        %v4455 = vadd.f32 %v4426, %v4454
        %4456 = vmatmul.bf16.gmra.mxu0 %v4006
        %v4457 = vpop.f32.mrf.mxu0
        %v4458 = vadd.f32 %v4429, %v4457
        %v4459 = vpop.f32.mrf.mxu0
        %v4460 = vadd.f32 %v4431, %v4459
        %4461 = vmatmul.bf16.gmra.mxu0 %v4011
        %v4462 = vpop.f32.mrf.mxu0
        %v4463 = vadd.f32 %v4434, %v4462
        %v4464 = vpop.f32.mrf.mxu0
        %v4465 = vadd.f32 %v4436, %v4464
        %4466 = vmatmul.bf16.gmra.mxu0 %v4016
        %v4467 = vpop.f32.mrf.mxu0
        %v4468 = vadd.f32 %v4439, %v4467
        %v4469 = vpop.f32.mrf.mxu0
        %v4470 = vadd.f32 %v4441, %v4469
        %4471 = vdwg.mxu0
        %4472 = vmatpush.bf16.msra.mxu0 %v1486
        %4473 = vmatpush.bf16.msra.mxu0 %v1482
        %4474 = vmatpush.bf16.msra.mxu0 %v1478
        %4475 = vmatpush.bf16.msra.mxu0 %v1474
        %4476 = vmatpush.bf16.msra.mxu0 %v1470
        %4477 = vmatpush.bf16.msra.mxu0 %v1466
        %4478 = vmatpush.bf16.msra.mxu0 %v1462
        %4479 = vmatpush.bf16.msra.mxu0 %v1458
        %4480 = vmatmul.bf16.gmra.mxu0 %v3997
        %v4481 = vpop.f32.mrf.mxu0
        %v4482 = vadd.f32 %v930, %v4481
        %v4483 = vpop.f32.mrf.mxu0
        %v4484 = vadd.f32 %v930, %v4483
        %4485 = vmatmul.bf16.gmra.mxu0 %v4002
        %v4486 = vpop.f32.mrf.mxu0
        %v4487 = vadd.f32 %v930, %v4486
        %v4488 = vpop.f32.mrf.mxu0
        %v4489 = vadd.f32 %v930, %v4488
        %4490 = vmatmul.bf16.gmra.mxu0 %v4007
        %v4491 = vpop.f32.mrf.mxu0
        %v4492 = vadd.f32 %v930, %v4491
        %v4493 = vpop.f32.mrf.mxu0
        %v4494 = vadd.f32 %v930, %v4493
        %4495 = vmatmul.bf16.gmra.mxu0 %v4012
        %v4496 = vpop.f32.mrf.mxu0
        %v4497 = vadd.f32 %v930, %v4496
        %v4498 = vpop.f32.mrf.mxu0
        %v4499 = vadd.f32 %v930, %v4498
        %4500 = vdwg.mxu0
        %4501 = vmatpush.bf16.msra.mxu0 %v1518
        %4502 = vmatpush.bf16.msra.mxu0 %v1514
        %4503 = vmatpush.bf16.msra.mxu0 %v1510
        %4504 = vmatpush.bf16.msra.mxu0 %v1506
        %4505 = vmatpush.bf16.msra.mxu0 %v1502
        %4506 = vmatpush.bf16.msra.mxu0 %v1498
        %4507 = vmatpush.bf16.msra.mxu0 %v1494
        %4508 = vmatpush.bf16.msra.mxu0 %v1490
        %4509 = vmatmul.bf16.gmra.mxu0 %v3998
        %v4510 = vpop.f32.mrf.mxu0
        %v4511 = vadd.f32 %v4482, %v4510
        %v4512 = vpop.f32.mrf.mxu0
        %v4513 = vadd.f32 %v4484, %v4512
        %4514 = vmatmul.bf16.gmra.mxu0 %v4003
        %v4515 = vpop.f32.mrf.mxu0
        %v4516 = vadd.f32 %v4487, %v4515
        %v4517 = vpop.f32.mrf.mxu0
        %v4518 = vadd.f32 %v4489, %v4517
        %4519 = vmatmul.bf16.gmra.mxu0 %v4008
        %v4520 = vpop.f32.mrf.mxu0
        %v4521 = vadd.f32 %v4492, %v4520
        %v4522 = vpop.f32.mrf.mxu0
        %v4523 = vadd.f32 %v4494, %v4522
        %4524 = vmatmul.bf16.gmra.mxu0 %v4013
        %v4525 = vpop.f32.mrf.mxu0
        %v4526 = vadd.f32 %v4497, %v4525
        %v4527 = vpop.f32.mrf.mxu0
        %v4528 = vadd.f32 %v4499, %v4527
        %4529 = vdwg.mxu0
        %4530 = vmatpush.bf16.msra.mxu0 %v1550
        %4531 = vmatpush.bf16.msra.mxu0 %v1546
        %4532 = vmatpush.bf16.msra.mxu0 %v1542
        %4533 = vmatpush.bf16.msra.mxu0 %v1538
        %4534 = vmatpush.bf16.msra.mxu0 %v1534
        %4535 = vmatpush.bf16.msra.mxu0 %v1530
        %4536 = vmatpush.bf16.msra.mxu0 %v1526
        %4537 = vmatpush.bf16.msra.mxu0 %v1522
        %4538 = vmatmul.bf16.gmra.mxu0 %v3999
        %v4539 = vpop.f32.mrf.mxu0
        %v4540 = vadd.f32 %v4511, %v4539
        %v4541 = vpop.f32.mrf.mxu0
        %v4542 = vadd.f32 %v4513, %v4541
        %4543 = vmatmul.bf16.gmra.mxu0 %v4004
        %v4544 = vpop.f32.mrf.mxu0
        %v4545 = vadd.f32 %v4516, %v4544
        %v4546 = vpop.f32.mrf.mxu0
        %v4547 = vadd.f32 %v4518, %v4546
        %4548 = vmatmul.bf16.gmra.mxu0 %v4009
        %v4549 = vpop.f32.mrf.mxu0
        %v4550 = vadd.f32 %v4521, %v4549
        %v4551 = vpop.f32.mrf.mxu0
        %v4552 = vadd.f32 %v4523, %v4551
        %4553 = vmatmul.bf16.gmra.mxu0 %v4014
        %v4554 = vpop.f32.mrf.mxu0
        %v4555 = vadd.f32 %v4526, %v4554
        %v4556 = vpop.f32.mrf.mxu0
        %v4557 = vadd.f32 %v4528, %v4556
        %4558 = vdwg.mxu0
        %4559 = vmatpush.bf16.msra.mxu0 %v1582
        %4560 = vmatpush.bf16.msra.mxu0 %v1578
        %4561 = vmatpush.bf16.msra.mxu0 %v1574
        %4562 = vmatpush.bf16.msra.mxu0 %v1570
        %4563 = vmatpush.bf16.msra.mxu0 %v1566
        %4564 = vmatpush.bf16.msra.mxu0 %v1562
        %4565 = vmatpush.bf16.msra.mxu0 %v1558
        %4566 = vmatpush.bf16.msra.mxu0 %v1554
        %4567 = vmatmul.bf16.gmra.mxu0 %v4000
        %v4568 = vpop.f32.mrf.mxu0
        %v4569 = vadd.f32 %v4540, %v4568
        %v4570 = vpop.f32.mrf.mxu0
        %v4571 = vadd.f32 %v4542, %v4570
        %4572 = vmatmul.bf16.gmra.mxu0 %v4005
        %v4573 = vpop.f32.mrf.mxu0
        %v4574 = vadd.f32 %v4545, %v4573
        %v4575 = vpop.f32.mrf.mxu0
        %v4576 = vadd.f32 %v4547, %v4575
        %4577 = vmatmul.bf16.gmra.mxu0 %v4010
        %v4578 = vpop.f32.mrf.mxu0
        %v4579 = vadd.f32 %v4550, %v4578
        %v4580 = vpop.f32.mrf.mxu0
        %v4581 = vadd.f32 %v4552, %v4580
        %4582 = vmatmul.bf16.gmra.mxu0 %v4015
        %v4583 = vpop.f32.mrf.mxu0
        %v4584 = vadd.f32 %v4555, %v4583
        %v4585 = vpop.f32.mrf.mxu0
        %v4586 = vadd.f32 %v4557, %v4585
        %4587 = vdwg.mxu0
        %4588 = vmatpush.bf16.msra.mxu0 %v1614
        %4589 = vmatpush.bf16.msra.mxu0 %v1610
        %4590 = vmatpush.bf16.msra.mxu0 %v1606
        %4591 = vmatpush.bf16.msra.mxu0 %v1602
        %4592 = vmatpush.bf16.msra.mxu0 %v1598
        %4593 = vmatpush.bf16.msra.mxu0 %v1594
        %4594 = vmatpush.bf16.msra.mxu0 %v1590
        %4595 = vmatpush.bf16.msra.mxu0 %v1586
        %4596 = vmatmul.bf16.gmra.mxu0 %v4001
        %v4597 = vpop.f32.mrf.mxu0
        %v4598 = vadd.f32 %v4569, %v4597
        %v4599 = vpop.f32.mrf.mxu0
        %v4600 = vadd.f32 %v4571, %v4599
        %4601 = vmatmul.bf16.gmra.mxu0 %v4006
        %v4602 = vpop.f32.mrf.mxu0
        %v4603 = vadd.f32 %v4574, %v4602
        %v4604 = vpop.f32.mrf.mxu0
        %v4605 = vadd.f32 %v4576, %v4604
        %4606 = vmatmul.bf16.gmra.mxu0 %v4011
        %v4607 = vpop.f32.mrf.mxu0
        %v4608 = vadd.f32 %v4579, %v4607
        %v4609 = vpop.f32.mrf.mxu0
        %v4610 = vadd.f32 %v4581, %v4609
        %4611 = vmatmul.bf16.gmra.mxu0 %v4016
        %v4612 = vpop.f32.mrf.mxu0
        %v4613 = vadd.f32 %v4584, %v4612
        %v4614 = vpop.f32.mrf.mxu0
        %v4615 = vadd.f32 %v4586, %v4614
        %4616 = vdwg.mxu0
        %v4617 = vmax.f32 %v4163, 0.0
        %v4618 = vmax.f32 %v4308, 0.0
        %v4619 = vmax.f32 %v4453, 0.0
        %v4620 = vmax.f32 %v4598, 0.0
        %v4621 = vmax.f32 %v4165, 0.0
        %v4622 = vmax.f32 %v4310, 0.0
        %v4623 = vmax.f32 %v4455, 0.0
        %v4624 = vmax.f32 %v4600, 0.0
        %v4625 = vmax.f32 %v4168, 0.0
        %v4626 = vmax.f32 %v4313, 0.0
        %v4627 = vmax.f32 %v4458, 0.0
        %v4628 = vmax.f32 %v4603, 0.0
        %v4629 = vmax.f32 %v4170, 0.0
        %v4630 = vmax.f32 %v4315, 0.0
        %v4631 = vmax.f32 %v4460, 0.0
        %v4632 = vmax.f32 %v4605, 0.0
        %v4633 = vmax.f32 %v4173, 0.0
        %v4634 = vmax.f32 %v4318, 0.0
        %v4635 = vmax.f32 %v4463, 0.0
        %v4636 = vmax.f32 %v4608, 0.0
        %v4637 = vmax.f32 %v4175, 0.0
        %v4638 = vmax.f32 %v4320, 0.0
        %v4639 = vmax.f32 %v4465, 0.0
        %v4640 = vmax.f32 %v4610, 0.0
        %v4641 = vmax.f32 %v4178, 0.0
        %v4642 = vmax.f32 %v4323, 0.0
        %v4643 = vmax.f32 %v4468, 0.0
        %v4644 = vmax.f32 %v4613, 0.0
        %v4645 = vmax.f32 %v4180, 0.0
        %v4646 = vmax.f32 %v4325, 0.0
        %v4647 = vmax.f32 %v4470, 0.0
        %v4648 = vmax.f32 %v4615, 0.0
        %v4649 = vmax.f32 %v4617, %v4619
        %v4650 = vmax.f32 %v4618, %v4620
        %v4651 = vmax.f32 %v4621, %v4623
        %v4652 = vmax.f32 %v4622, %v4624
        %v4653 = vmax.f32 %v4625, %v4627
        %v4654 = vmax.f32 %v4626, %v4628
        %v4655 = vmax.f32 %v4629, %v4631
        %v4656 = vmax.f32 %v4630, %v4632
        %v4657 = vmax.f32 %v4633, %v4635
        %v4658 = vmax.f32 %v4634, %v4636
        %v4659 = vmax.f32 %v4637, %v4639
        %v4660 = vmax.f32 %v4638, %v4640
        %v4661 = vmax.f32 %v4641, %v4643
        %v4662 = vmax.f32 %v4642, %v4644
        %v4663 = vmax.f32 %v4645, %v4647
        %v4664 = vmax.f32 %v4646, %v4648
        %v4665 = vrot.slane %v525, 6
        %v4666 = vrot.slane %v526, 6
        %v4667 = vrot.slane %v527, 6
        %v4668 = vrot.slane %v528, 6
        %v4669 = vrot.slane %v529, 6
        %v4670 = vrot.slane %v530, 6
        %v4671 = vrot.slane %v531, 6
        %v4672 = vrot.slane %v532, 6
        %v4673 = vrot.slane %v2484, 5
        %v4674 = vrot.slane %v2487, 6
        %v4675 = vor.u32 %v4673, %v4674
        %v4676 = vrot.slane %v2492, 5
        %v4677 = vrot.slane %v2495, 6
        %v4678 = vor.u32 %v4676, %v4677
        %v4679 = vrot.slane %v2500, 5
        %v4680 = vrot.slane %v2503, 6
        %v4681 = vor.u32 %v4679, %v4680
        %v4682 = vrot.slane %v2508, 5
        %v4683 = vrot.slane %v2511, 6
        %v4684 = vor.u32 %v4682, %v4683
        %v4685 = vrot.slane %v2516, 5
        %v4686 = vrot.slane %v2519, 6
        %v4687 = vor.u32 %v4685, %v4686
        %v4688 = vrot.slane %v2524, 5
        %v4689 = vrot.slane %v2527, 6
        %v4690 = vor.u32 %v4688, %v4689
        %v4691 = vrot.slane %v2532, 5
        %v4692 = vrot.slane %v2535, 6
        %v4693 = vor.u32 %v4691, %v4692
        %v4694 = vrot.slane %v2540, 5
        %v4695 = vrot.slane %v2543, 6
        %v4696 = vor.u32 %v4694, %v4695
        %v4697 = vrot.slane %v613, 1
        %v4698 = vrot.slane %v614, 1
        %v4699 = vrot.slane %v615, 1
        %v4700 = vrot.slane %v616, 1
        %v4701 = vrot.slane %v617, 1
        %v4702 = vrot.slane %v618, 1
        %v4703 = vrot.slane %v619, 1
        %v4704 = vrot.slane %v620, 1
        %v4705 = vrot.slane %v657, 1
        %v4706 = vor.u32 %v654, %v4705
        %v4707 = vrot.slane %v665, 1
        %v4708 = vor.u32 %v662, %v4707
        %v4709 = vrot.slane %v673, 1
        %v4710 = vor.u32 %v670, %v4709
        %v4711 = vrot.slane %v681, 1
        %v4712 = vor.u32 %v678, %v4711
        %v4713 = vrot.slane %v689, 1
        %v4714 = vor.u32 %v686, %v4713
        %v4715 = vrot.slane %v697, 1
        %v4716 = vor.u32 %v694, %v4715
        %v4717 = vrot.slane %v705, 1
        %v4718 = vor.u32 %v702, %v4717
        %v4719 = vrot.slane %v713, 1
        %v4720 = vor.u32 %v710, %v4719
        %v4721 = vunpack.c.l.b16 %v4665
        %v4722 = vunpack.c.l.b16 %v4675
        %v4723 = vunpack.c.l.b16 %v4697
        %v4724 = vunpack.c.l.b16 %v4706
        %v4725 = vunpack.c.h.b16 %v4665
        %v4726 = vunpack.c.h.b16 %v4675
        %v4727 = vunpack.c.h.b16 %v4697
        %v4728 = vunpack.c.h.b16 %v4706
        %v4729 = vunpack.c.l.b16 %v4666
        %v4730 = vunpack.c.l.b16 %v4678
        %v4731 = vunpack.c.l.b16 %v4698
        %v4732 = vunpack.c.l.b16 %v4708
        %v4733 = vunpack.c.h.b16 %v4666
        %v4734 = vunpack.c.h.b16 %v4678
        %v4735 = vunpack.c.h.b16 %v4698
        %v4736 = vunpack.c.h.b16 %v4708
        %v4737 = vunpack.c.l.b16 %v4667
        %v4738 = vunpack.c.l.b16 %v4681
        %v4739 = vunpack.c.l.b16 %v4699
        %v4740 = vunpack.c.l.b16 %v4710
        %v4741 = vunpack.c.h.b16 %v4667
        %v4742 = vunpack.c.h.b16 %v4681
        %v4743 = vunpack.c.h.b16 %v4699
        %v4744 = vunpack.c.h.b16 %v4710
        %v4745 = vunpack.c.l.b16 %v4668
        %v4746 = vunpack.c.l.b16 %v4684
        %v4747 = vunpack.c.l.b16 %v4700
        %v4748 = vunpack.c.l.b16 %v4712
        %v4749 = vunpack.c.h.b16 %v4668
        %v4750 = vunpack.c.h.b16 %v4684
        %v4751 = vunpack.c.h.b16 %v4700
        %v4752 = vunpack.c.h.b16 %v4712
        %v4753 = vunpack.c.l.b16 %v4669
        %v4754 = vunpack.c.l.b16 %v4687
        %v4755 = vunpack.c.l.b16 %v4701
        %v4756 = vunpack.c.l.b16 %v4714
        %v4757 = vunpack.c.h.b16 %v4669
        %v4758 = vunpack.c.h.b16 %v4687
        %v4759 = vunpack.c.h.b16 %v4701
        %v4760 = vunpack.c.h.b16 %v4714
        %v4761 = vunpack.c.l.b16 %v4670
        %v4762 = vunpack.c.l.b16 %v4690
        %v4763 = vunpack.c.l.b16 %v4702
        %v4764 = vunpack.c.l.b16 %v4716
        %v4765 = vunpack.c.h.b16 %v4670
        %v4766 = vunpack.c.h.b16 %v4690
        %v4767 = vunpack.c.h.b16 %v4702
        %v4768 = vunpack.c.h.b16 %v4716
        %v4769 = vunpack.c.l.b16 %v4671
        %v4770 = vunpack.c.l.b16 %v4693
        %v4771 = vunpack.c.l.b16 %v4703
        %v4772 = vunpack.c.l.b16 %v4718
        %v4773 = vunpack.c.h.b16 %v4671
        %v4774 = vunpack.c.h.b16 %v4693
        %v4775 = vunpack.c.h.b16 %v4703
        %v4776 = vunpack.c.h.b16 %v4718
        %v4777 = vunpack.c.l.b16 %v4672
        %v4778 = vunpack.c.l.b16 %v4696
        %v4779 = vunpack.c.l.b16 %v4704
        %v4780 = vunpack.c.l.b16 %v4720
        %v4781 = vunpack.c.h.b16 %v4672
        %v4782 = vunpack.c.h.b16 %v4696
        %v4783 = vunpack.c.h.b16 %v4704
        %v4784 = vunpack.c.h.b16 %v4720
        %v4785 = vpack.c.b16 %v4721, %v605
        %v4786 = vpack.c.b16 %v4723, %v4722
        %v4787 = vpack.c.b16 %v4724, %v4724
        %v4788 = vpack.c.b16 %v4725, %v637
        %v4789 = vpack.c.b16 %v4727, %v4726
        %v4790 = vpack.c.b16 %v4728, %v4728
        %v4791 = vpack.c.b16 %v4729, %v606
        %v4792 = vpack.c.b16 %v4731, %v4730
        %v4793 = vpack.c.b16 %v4732, %v4732
        %v4794 = vpack.c.b16 %v4733, %v638
        %v4795 = vpack.c.b16 %v4735, %v4734
        %v4796 = vpack.c.b16 %v4736, %v4736
        %v4797 = vpack.c.b16 %v4737, %v607
        %v4798 = vpack.c.b16 %v4739, %v4738
        %v4799 = vpack.c.b16 %v4740, %v4740
        %v4800 = vpack.c.b16 %v4741, %v639
        %v4801 = vpack.c.b16 %v4743, %v4742
        %v4802 = vpack.c.b16 %v4744, %v4744
        %v4803 = vpack.c.b16 %v4745, %v608
        %v4804 = vpack.c.b16 %v4747, %v4746
        %v4805 = vpack.c.b16 %v4748, %v4748
        %v4806 = vpack.c.b16 %v4749, %v640
        %v4807 = vpack.c.b16 %v4751, %v4750
        %v4808 = vpack.c.b16 %v4752, %v4752
        %v4809 = vpack.c.b16 %v4753, %v609
        %v4810 = vpack.c.b16 %v4755, %v4754
        %v4811 = vpack.c.b16 %v4756, %v4756
        %v4812 = vpack.c.b16 %v4757, %v641
        %v4813 = vpack.c.b16 %v4759, %v4758
        %v4814 = vpack.c.b16 %v4760, %v4760
        %v4815 = vpack.c.b16 %v4761, %v610
        %v4816 = vpack.c.b16 %v4763, %v4762
        %v4817 = vpack.c.b16 %v4764, %v4764
        %v4818 = vpack.c.b16 %v4765, %v642
        %v4819 = vpack.c.b16 %v4767, %v4766
        %v4820 = vpack.c.b16 %v4768, %v4768
        %v4821 = vpack.c.b16 %v4769, %v611
        %v4822 = vpack.c.b16 %v4771, %v4770
        %v4823 = vpack.c.b16 %v4772, %v4772
        %v4824 = vpack.c.b16 %v4773, %v643
        %v4825 = vpack.c.b16 %v4775, %v4774
        %v4826 = vpack.c.b16 %v4776, %v4776
        %v4827 = vpack.c.b16 %v4777, %v612
        %v4828 = vpack.c.b16 %v4779, %v4778
        %v4829 = vpack.c.b16 %v4780, %v4780
        %v4830 = vpack.c.b16 %v4781, %v644
        %v4831 = vpack.c.b16 %v4783, %v4782
        %v4832 = vpack.c.b16 %v4784, %v4784
        %vm4833 = vsmask.f32 1280
        %vm4834 = vsmask.f32 5392
        %vm4835 = vmor %vm4833, %vm4834
        %v4837 = vshrl.u32 %v4785, 16
        %v4839 = vrot.slane %v4837, 6
        %v4840 = vshll.u32 %v4785, 16
        %v4842 = vrot.slane %v4840, 7
        %v4843 = vor.u32 %v4839, %v4842
        %v4844 = vrot.slane %v4843, 4
        %v4846 = vshrl.u32 %v4788, 16
        %v4848 = vrot.slane %v4846, 6
        %v4849 = vshll.u32 %v4788, 16
        %v4851 = vrot.slane %v4849, 7
        %v4852 = vor.u32 %v4848, %v4851
        %v4853 = vsel %vm4835, %v4844, %v4852
        %v4855 = vshrl.u32 %v4786, 16
        %v4857 = vrot.slane %v4855, 6
        %v4858 = vshll.u32 %v4786, 16
        %v4860 = vrot.slane %v4858, 7
        %v4861 = vor.u32 %v4857, %v4860
        %v4862 = vrot.slane %v4861, 4
        %v4864 = vshrl.u32 %v4789, 16
        %v4866 = vrot.slane %v4864, 6
        %v4867 = vshll.u32 %v4789, 16
        %v4869 = vrot.slane %v4867, 7
        %v4870 = vor.u32 %v4866, %v4869
        %v4871 = vsel %vm4835, %v4862, %v4870
        %v4873 = vshrl.u32 %v4787, 16
        %v4875 = vrot.slane %v4873, 6
        %v4876 = vshll.u32 %v4787, 16
        %v4878 = vrot.slane %v4876, 7
        %v4879 = vor.u32 %v4875, %v4878
        %v4880 = vrot.slane %v4879, 4
        %v4882 = vshrl.u32 %v4790, 16
        %v4884 = vrot.slane %v4882, 6
        %v4885 = vshll.u32 %v4790, 16
        %v4887 = vrot.slane %v4885, 7
        %v4888 = vor.u32 %v4884, %v4887
        %v4889 = vsel %vm4835, %v4880, %v4888
        %v4891 = vshrl.u32 %v4791, 16
        %v4893 = vrot.slane %v4891, 6
        %v4894 = vshll.u32 %v4791, 16
        %v4896 = vrot.slane %v4894, 7
        %v4897 = vor.u32 %v4893, %v4896
        %v4898 = vrot.slane %v4897, 4
        %v4900 = vshrl.u32 %v4794, 16
        %v4902 = vrot.slane %v4900, 6
        %v4903 = vshll.u32 %v4794, 16
        %v4905 = vrot.slane %v4903, 7
        %v4906 = vor.u32 %v4902, %v4905
        %v4907 = vsel %vm4835, %v4898, %v4906
        %v4909 = vshrl.u32 %v4792, 16
        %v4911 = vrot.slane %v4909, 6
        %v4912 = vshll.u32 %v4792, 16
        %v4914 = vrot.slane %v4912, 7
        %v4915 = vor.u32 %v4911, %v4914
        %v4916 = vrot.slane %v4915, 4
        %v4918 = vshrl.u32 %v4795, 16
        %v4920 = vrot.slane %v4918, 6
        %v4921 = vshll.u32 %v4795, 16
        %v4923 = vrot.slane %v4921, 7
        %v4924 = vor.u32 %v4920, %v4923
        %v4925 = vsel %vm4835, %v4916, %v4924
        %v4927 = vshrl.u32 %v4793, 16
        %v4929 = vrot.slane %v4927, 6
        %v4930 = vshll.u32 %v4793, 16
        %v4932 = vrot.slane %v4930, 7
        %v4933 = vor.u32 %v4929, %v4932
        %v4934 = vrot.slane %v4933, 4
        %v4936 = vshrl.u32 %v4796, 16
        %v4938 = vrot.slane %v4936, 6
        %v4939 = vshll.u32 %v4796, 16
        %v4941 = vrot.slane %v4939, 7
        %v4942 = vor.u32 %v4938, %v4941
        %v4943 = vsel %vm4835, %v4934, %v4942
        %v4945 = vshrl.u32 %v4797, 16
        %v4947 = vrot.slane %v4945, 6
        %v4948 = vshll.u32 %v4797, 16
        %v4950 = vrot.slane %v4948, 7
        %v4951 = vor.u32 %v4947, %v4950
        %v4952 = vrot.slane %v4951, 4
        %v4954 = vshrl.u32 %v4800, 16
        %v4956 = vrot.slane %v4954, 6
        %v4957 = vshll.u32 %v4800, 16
        %v4959 = vrot.slane %v4957, 7
        %v4960 = vor.u32 %v4956, %v4959
        %v4961 = vsel %vm4835, %v4952, %v4960
        %v4963 = vshrl.u32 %v4798, 16
        %v4965 = vrot.slane %v4963, 6
        %v4966 = vshll.u32 %v4798, 16
        %v4968 = vrot.slane %v4966, 7
        %v4969 = vor.u32 %v4965, %v4968
        %v4970 = vrot.slane %v4969, 4
        %v4972 = vshrl.u32 %v4801, 16
        %v4974 = vrot.slane %v4972, 6
        %v4975 = vshll.u32 %v4801, 16
        %v4977 = vrot.slane %v4975, 7
        %v4978 = vor.u32 %v4974, %v4977
        %v4979 = vsel %vm4835, %v4970, %v4978
        %v4981 = vshrl.u32 %v4799, 16
        %v4983 = vrot.slane %v4981, 6
        %v4984 = vshll.u32 %v4799, 16
        %v4986 = vrot.slane %v4984, 7
        %v4987 = vor.u32 %v4983, %v4986
        %v4988 = vrot.slane %v4987, 4
        %v4990 = vshrl.u32 %v4802, 16
        %v4992 = vrot.slane %v4990, 6
        %v4993 = vshll.u32 %v4802, 16
        %v4995 = vrot.slane %v4993, 7
        %v4996 = vor.u32 %v4992, %v4995
        %v4997 = vsel %vm4835, %v4988, %v4996
        %v4999 = vshrl.u32 %v4803, 16
        %v5001 = vrot.slane %v4999, 6
        %v5002 = vshll.u32 %v4803, 16
        %v5004 = vrot.slane %v5002, 7
        %v5005 = vor.u32 %v5001, %v5004
        %v5006 = vrot.slane %v5005, 4
        %v5008 = vshrl.u32 %v4806, 16
        %v5010 = vrot.slane %v5008, 6
        %v5011 = vshll.u32 %v4806, 16
        %v5013 = vrot.slane %v5011, 7
        %v5014 = vor.u32 %v5010, %v5013
        %v5015 = vsel %vm4835, %v5006, %v5014
        %v5017 = vshrl.u32 %v4804, 16
        %v5019 = vrot.slane %v5017, 6
        %v5020 = vshll.u32 %v4804, 16
        %v5022 = vrot.slane %v5020, 7
        %v5023 = vor.u32 %v5019, %v5022
        %v5024 = vrot.slane %v5023, 4
        %v5026 = vshrl.u32 %v4807, 16
        %v5028 = vrot.slane %v5026, 6
        %v5029 = vshll.u32 %v4807, 16
        %v5031 = vrot.slane %v5029, 7
        %v5032 = vor.u32 %v5028, %v5031
        %v5033 = vsel %vm4835, %v5024, %v5032
        %v5035 = vshrl.u32 %v4805, 16
        %v5037 = vrot.slane %v5035, 6
        %v5038 = vshll.u32 %v4805, 16
        %v5040 = vrot.slane %v5038, 7
        %v5041 = vor.u32 %v5037, %v5040
        %v5042 = vrot.slane %v5041, 4
        %v5044 = vshrl.u32 %v4808, 16
        %v5046 = vrot.slane %v5044, 6
        %v5047 = vshll.u32 %v4808, 16
        %v5049 = vrot.slane %v5047, 7
        %v5050 = vor.u32 %v5046, %v5049
        %v5051 = vsel %vm4835, %v5042, %v5050
        %v5053 = vshrl.u32 %v4809, 16
        %v5055 = vrot.slane %v5053, 6
        %v5056 = vshll.u32 %v4809, 16
        %v5058 = vrot.slane %v5056, 7
        %v5059 = vor.u32 %v5055, %v5058
        %v5060 = vrot.slane %v5059, 4
        %v5062 = vshrl.u32 %v4812, 16
        %v5064 = vrot.slane %v5062, 6
        %v5065 = vshll.u32 %v4812, 16
        %v5067 = vrot.slane %v5065, 7
        %v5068 = vor.u32 %v5064, %v5067
        %v5069 = vsel %vm4835, %v5060, %v5068
        %v5071 = vshrl.u32 %v4810, 16
        %v5073 = vrot.slane %v5071, 6
        %v5074 = vshll.u32 %v4810, 16
        %v5076 = vrot.slane %v5074, 7
        %v5077 = vor.u32 %v5073, %v5076
        %v5078 = vrot.slane %v5077, 4
        %v5080 = vshrl.u32 %v4813, 16
        %v5082 = vrot.slane %v5080, 6
        %v5083 = vshll.u32 %v4813, 16
        %v5085 = vrot.slane %v5083, 7
        %v5086 = vor.u32 %v5082, %v5085
        %v5087 = vsel %vm4835, %v5078, %v5086
        %v5089 = vshrl.u32 %v4811, 16
        %v5091 = vrot.slane %v5089, 6
        %v5092 = vshll.u32 %v4811, 16
        %v5094 = vrot.slane %v5092, 7
        %v5095 = vor.u32 %v5091, %v5094
        %v5096 = vrot.slane %v5095, 4
        %v5098 = vshrl.u32 %v4814, 16
        %v5100 = vrot.slane %v5098, 6
        %v5101 = vshll.u32 %v4814, 16
        %v5103 = vrot.slane %v5101, 7
        %v5104 = vor.u32 %v5100, %v5103
        %v5105 = vsel %vm4835, %v5096, %v5104
        %v5107 = vshrl.u32 %v4815, 16
        %v5109 = vrot.slane %v5107, 6
        %v5110 = vshll.u32 %v4815, 16
        %v5112 = vrot.slane %v5110, 7
        %v5113 = vor.u32 %v5109, %v5112
        %v5114 = vrot.slane %v5113, 4
        %v5116 = vshrl.u32 %v4818, 16
        %v5118 = vrot.slane %v5116, 6
        %v5119 = vshll.u32 %v4818, 16
        %v5121 = vrot.slane %v5119, 7
        %v5122 = vor.u32 %v5118, %v5121
        %v5123 = vsel %vm4835, %v5114, %v5122
        %v5125 = vshrl.u32 %v4816, 16
        %v5127 = vrot.slane %v5125, 6
        %v5128 = vshll.u32 %v4816, 16
        %v5130 = vrot.slane %v5128, 7
        %v5131 = vor.u32 %v5127, %v5130
        %v5132 = vrot.slane %v5131, 4
        %v5134 = vshrl.u32 %v4819, 16
        %v5136 = vrot.slane %v5134, 6
        %v5137 = vshll.u32 %v4819, 16
        %v5139 = vrot.slane %v5137, 7
        %v5140 = vor.u32 %v5136, %v5139
        %v5141 = vsel %vm4835, %v5132, %v5140
        %v5143 = vshrl.u32 %v4817, 16
        %v5145 = vrot.slane %v5143, 6
        %v5146 = vshll.u32 %v4817, 16
        %v5148 = vrot.slane %v5146, 7
        %v5149 = vor.u32 %v5145, %v5148
        %v5150 = vrot.slane %v5149, 4
        %v5152 = vshrl.u32 %v4820, 16
        %v5154 = vrot.slane %v5152, 6
        %v5155 = vshll.u32 %v4820, 16
        %v5157 = vrot.slane %v5155, 7
        %v5158 = vor.u32 %v5154, %v5157
        %v5159 = vsel %vm4835, %v5150, %v5158
        %v5161 = vshrl.u32 %v4821, 16
        %v5163 = vrot.slane %v5161, 6
        %v5164 = vshll.u32 %v4821, 16
        %v5166 = vrot.slane %v5164, 7
        %v5167 = vor.u32 %v5163, %v5166
        %v5168 = vrot.slane %v5167, 4
        %v5170 = vshrl.u32 %v4824, 16
        %v5172 = vrot.slane %v5170, 6
        %v5173 = vshll.u32 %v4824, 16
        %v5175 = vrot.slane %v5173, 7
        %v5176 = vor.u32 %v5172, %v5175
        %v5177 = vsel %vm4835, %v5168, %v5176
        %v5179 = vshrl.u32 %v4822, 16
        %v5181 = vrot.slane %v5179, 6
        %v5182 = vshll.u32 %v4822, 16
        %v5184 = vrot.slane %v5182, 7
        %v5185 = vor.u32 %v5181, %v5184
        %v5186 = vrot.slane %v5185, 4
        %v5188 = vshrl.u32 %v4825, 16
        %v5190 = vrot.slane %v5188, 6
        %v5191 = vshll.u32 %v4825, 16
        %v5193 = vrot.slane %v5191, 7
        %v5194 = vor.u32 %v5190, %v5193
        %v5195 = vsel %vm4835, %v5186, %v5194
        %v5197 = vshrl.u32 %v4823, 16
        %v5199 = vrot.slane %v5197, 6
        %v5200 = vshll.u32 %v4823, 16
        %v5202 = vrot.slane %v5200, 7
        %v5203 = vor.u32 %v5199, %v5202
        %v5204 = vrot.slane %v5203, 4
        %v5206 = vshrl.u32 %v4826, 16
        %v5208 = vrot.slane %v5206, 6
        %v5209 = vshll.u32 %v4826, 16
        %v5211 = vrot.slane %v5209, 7
        %v5212 = vor.u32 %v5208, %v5211
        %v5213 = vsel %vm4835, %v5204, %v5212
        %v5215 = vshrl.u32 %v4827, 16
        %v5217 = vrot.slane %v5215, 6
        %v5218 = vshll.u32 %v4827, 16
        %v5220 = vrot.slane %v5218, 7
        %v5221 = vor.u32 %v5217, %v5220
        %v5222 = vrot.slane %v5221, 4
        %v5224 = vshrl.u32 %v4830, 16
        %v5226 = vrot.slane %v5224, 6
        %v5227 = vshll.u32 %v4830, 16
        %v5229 = vrot.slane %v5227, 7
        %v5230 = vor.u32 %v5226, %v5229
        %v5231 = vsel %vm4835, %v5222, %v5230
        %v5233 = vshrl.u32 %v4828, 16
        %v5235 = vrot.slane %v5233, 6
        %v5236 = vshll.u32 %v4828, 16
        %v5238 = vrot.slane %v5236, 7
        %v5239 = vor.u32 %v5235, %v5238
        %v5240 = vrot.slane %v5239, 4
        %v5242 = vshrl.u32 %v4831, 16
        %v5244 = vrot.slane %v5242, 6
        %v5245 = vshll.u32 %v4831, 16
        %v5247 = vrot.slane %v5245, 7
        %v5248 = vor.u32 %v5244, %v5247
        %v5249 = vsel %vm4835, %v5240, %v5248
        %v5251 = vshrl.u32 %v4829, 16
        %v5253 = vrot.slane %v5251, 6
        %v5254 = vshll.u32 %v4829, 16
        %v5256 = vrot.slane %v5254, 7
        %v5257 = vor.u32 %v5253, %v5256
        %v5258 = vrot.slane %v5257, 4
        %v5260 = vshrl.u32 %v4832, 16
        %v5262 = vrot.slane %v5260, 6
        %v5263 = vshll.u32 %v4832, 16
        %v5265 = vrot.slane %v5263, 7
        %v5266 = vor.u32 %v5262, %v5265
        %v5267 = vsel %vm4835, %v5258, %v5266
        %v5268 = vunpack.c.l.b16 %v4853
        %v5269 = vunpack.c.h.b16 %v4853
        %v5270 = vunpack.c.l.b16 %v4871
        %v5271 = vunpack.c.h.b16 %v4871
        %v5272 = vunpack.c.l.b16 %v4889
        %v5273 = vunpack.c.l.b16 %v4907
        %v5274 = vunpack.c.h.b16 %v4907
        %v5275 = vunpack.c.l.b16 %v4925
        %v5276 = vunpack.c.h.b16 %v4925
        %v5277 = vunpack.c.l.b16 %v4943
        %v5278 = vunpack.c.l.b16 %v4961
        %v5279 = vunpack.c.h.b16 %v4961
        %v5280 = vunpack.c.l.b16 %v4979
        %v5281 = vunpack.c.h.b16 %v4979
        %v5282 = vunpack.c.l.b16 %v4997
        %v5283 = vunpack.c.l.b16 %v5015
        %v5284 = vunpack.c.h.b16 %v5015
        %v5285 = vunpack.c.l.b16 %v5033
        %v5286 = vunpack.c.h.b16 %v5033
        %v5287 = vunpack.c.l.b16 %v5051
        %v5288 = vunpack.c.l.b16 %v5069
        %v5289 = vunpack.c.h.b16 %v5069
        %v5290 = vunpack.c.l.b16 %v5087
        %v5291 = vunpack.c.h.b16 %v5087
        %v5292 = vunpack.c.l.b16 %v5105
        %v5293 = vunpack.c.l.b16 %v5123
        %v5294 = vunpack.c.h.b16 %v5123
        %v5295 = vunpack.c.l.b16 %v5141
        %v5296 = vunpack.c.h.b16 %v5141
        %v5297 = vunpack.c.l.b16 %v5159
        %v5298 = vunpack.c.l.b16 %v5177
        %v5299 = vunpack.c.h.b16 %v5177
        %v5300 = vunpack.c.l.b16 %v5195
        %v5301 = vunpack.c.h.b16 %v5195
        %v5302 = vunpack.c.l.b16 %v5213
        %v5303 = vunpack.c.l.b16 %v5231
        %v5304 = vunpack.c.h.b16 %v5231
        %v5305 = vunpack.c.l.b16 %v5249
        %v5306 = vunpack.c.h.b16 %v5249
        %v5307 = vunpack.c.l.b16 %v5267
        %v5308 = vpack.c.b16 %v5273, %v5268
        %v5309 = vpack.c.b16 %v5274, %v5269
        %v5310 = vpack.c.b16 %v5275, %v5270
        %v5311 = vpack.c.b16 %v5276, %v5271
        %v5312 = vpack.c.b16 %v5277, %v5272
        %v5313 = vpack.c.b16 %v5283, %v5278
        %v5314 = vpack.c.b16 %v5284, %v5279
        %v5315 = vpack.c.b16 %v5285, %v5280
        %v5316 = vpack.c.b16 %v5286, %v5281
        %v5317 = vpack.c.b16 %v5287, %v5282
        %v5318 = vpack.c.b16 %v5293, %v5288
        %v5319 = vpack.c.b16 %v5294, %v5289
        %v5320 = vpack.c.b16 %v5295, %v5290
        %v5321 = vpack.c.b16 %v5296, %v5291
        %v5322 = vpack.c.b16 %v5297, %v5292
        %v5323 = vpack.c.b16 %v5303, %v5298
        %v5324 = vpack.c.b16 %v5304, %v5299
        %v5325 = vpack.c.b16 %v5305, %v5300
        %v5326 = vpack.c.b16 %v5306, %v5301
        %v5327 = vpack.c.b16 %v5307, %v5302
        %5348 = vmatpush.bf16.msra.mxu0 %v1483
        %5349 = vmatpush.bf16.msra.mxu0 %v1479
        %5350 = vmatpush.bf16.msra.mxu0 %v1475
        %5351 = vmatpush.bf16.msra.mxu0 %v1471
        %5352 = vmatpush.bf16.msra.mxu0 %v1467
        %5353 = vmatpush.bf16.msra.mxu0 %v1463
        %5354 = vmatpush.bf16.msra.mxu0 %v1459
        %5355 = vmatpush.bf16.msra.mxu0 %v1455
        %5356 = vmatmul.bf16.gmra.mxu0 %v5308
        %v5357 = vpop.f32.mrf.mxu0
        %v5358 = vadd.f32 %v927, %v5357
        %v5359 = vpop.f32.mrf.mxu0
        %v5360 = vadd.f32 %v927, %v5359
        %5361 = vmatmul.bf16.gmra.mxu0 %v5313
        %v5362 = vpop.f32.mrf.mxu0
        %v5363 = vadd.f32 %v927, %v5362
        %v5364 = vpop.f32.mrf.mxu0
        %v5365 = vadd.f32 %v927, %v5364
        %5366 = vmatmul.bf16.gmra.mxu0 %v5318
        %v5367 = vpop.f32.mrf.mxu0
        %v5368 = vadd.f32 %v927, %v5367
        %v5369 = vpop.f32.mrf.mxu0
        %v5370 = vadd.f32 %v927, %v5369
        %5371 = vmatmul.bf16.gmra.mxu0 %v5323
        %v5372 = vpop.f32.mrf.mxu0
        %v5373 = vadd.f32 %v927, %v5372
        %v5374 = vpop.f32.mrf.mxu0
        %v5375 = vadd.f32 %v927, %v5374
        %5376 = vdwg.mxu0
        %5377 = vmatpush.bf16.msra.mxu0 %v1515
        %5378 = vmatpush.bf16.msra.mxu0 %v1511
        %5379 = vmatpush.bf16.msra.mxu0 %v1507
        %5380 = vmatpush.bf16.msra.mxu0 %v1503
        %5381 = vmatpush.bf16.msra.mxu0 %v1499
        %5382 = vmatpush.bf16.msra.mxu0 %v1495
        %5383 = vmatpush.bf16.msra.mxu0 %v1491
        %5384 = vmatpush.bf16.msra.mxu0 %v1487
        %5385 = vmatmul.bf16.gmra.mxu0 %v5309
        %v5386 = vpop.f32.mrf.mxu0
        %v5387 = vadd.f32 %v5358, %v5386
        %v5388 = vpop.f32.mrf.mxu0
        %v5389 = vadd.f32 %v5360, %v5388
        %5390 = vmatmul.bf16.gmra.mxu0 %v5314
        %v5391 = vpop.f32.mrf.mxu0
        %v5392 = vadd.f32 %v5363, %v5391
        %v5393 = vpop.f32.mrf.mxu0
        %v5394 = vadd.f32 %v5365, %v5393
        %5395 = vmatmul.bf16.gmra.mxu0 %v5319
        %v5396 = vpop.f32.mrf.mxu0
        %v5397 = vadd.f32 %v5368, %v5396
        %v5398 = vpop.f32.mrf.mxu0
        %v5399 = vadd.f32 %v5370, %v5398
        %5400 = vmatmul.bf16.gmra.mxu0 %v5324
        %v5401 = vpop.f32.mrf.mxu0
        %v5402 = vadd.f32 %v5373, %v5401
        %v5403 = vpop.f32.mrf.mxu0
        %v5404 = vadd.f32 %v5375, %v5403
        %5405 = vdwg.mxu0
        %5406 = vmatpush.bf16.msra.mxu0 %v1547
        %5407 = vmatpush.bf16.msra.mxu0 %v1543
        %5408 = vmatpush.bf16.msra.mxu0 %v1539
        %5409 = vmatpush.bf16.msra.mxu0 %v1535
        %5410 = vmatpush.bf16.msra.mxu0 %v1531
        %5411 = vmatpush.bf16.msra.mxu0 %v1527
        %5412 = vmatpush.bf16.msra.mxu0 %v1523
        %5413 = vmatpush.bf16.msra.mxu0 %v1519
        %5414 = vmatmul.bf16.gmra.mxu0 %v5310
        %v5415 = vpop.f32.mrf.mxu0
        %v5416 = vadd.f32 %v5387, %v5415
        %v5417 = vpop.f32.mrf.mxu0
        %v5418 = vadd.f32 %v5389, %v5417
        %5419 = vmatmul.bf16.gmra.mxu0 %v5315
        %v5420 = vpop.f32.mrf.mxu0
        %v5421 = vadd.f32 %v5392, %v5420
        %v5422 = vpop.f32.mrf.mxu0
        %v5423 = vadd.f32 %v5394, %v5422
        %5424 = vmatmul.bf16.gmra.mxu0 %v5320
        %v5425 = vpop.f32.mrf.mxu0
        %v5426 = vadd.f32 %v5397, %v5425
        %v5427 = vpop.f32.mrf.mxu0
        %v5428 = vadd.f32 %v5399, %v5427
        %5429 = vmatmul.bf16.gmra.mxu0 %v5325
        %v5430 = vpop.f32.mrf.mxu0
        %v5431 = vadd.f32 %v5402, %v5430
        %v5432 = vpop.f32.mrf.mxu0
        %v5433 = vadd.f32 %v5404, %v5432
        %5434 = vdwg.mxu0
        %5435 = vmatpush.bf16.msra.mxu0 %v1579
        %5436 = vmatpush.bf16.msra.mxu0 %v1575
        %5437 = vmatpush.bf16.msra.mxu0 %v1571
        %5438 = vmatpush.bf16.msra.mxu0 %v1567
        %5439 = vmatpush.bf16.msra.mxu0 %v1563
        %5440 = vmatpush.bf16.msra.mxu0 %v1559
        %5441 = vmatpush.bf16.msra.mxu0 %v1555
        %5442 = vmatpush.bf16.msra.mxu0 %v1551
        %5443 = vmatmul.bf16.gmra.mxu0 %v5311
        %v5444 = vpop.f32.mrf.mxu0
        %v5445 = vadd.f32 %v5416, %v5444
        %v5446 = vpop.f32.mrf.mxu0
        %v5447 = vadd.f32 %v5418, %v5446
        %5448 = vmatmul.bf16.gmra.mxu0 %v5316
        %v5449 = vpop.f32.mrf.mxu0
        %v5450 = vadd.f32 %v5421, %v5449
        %v5451 = vpop.f32.mrf.mxu0
        %v5452 = vadd.f32 %v5423, %v5451
        %5453 = vmatmul.bf16.gmra.mxu0 %v5321
        %v5454 = vpop.f32.mrf.mxu0
        %v5455 = vadd.f32 %v5426, %v5454
        %v5456 = vpop.f32.mrf.mxu0
        %v5457 = vadd.f32 %v5428, %v5456
        %5458 = vmatmul.bf16.gmra.mxu0 %v5326
        %v5459 = vpop.f32.mrf.mxu0
        %v5460 = vadd.f32 %v5431, %v5459
        %v5461 = vpop.f32.mrf.mxu0
        %v5462 = vadd.f32 %v5433, %v5461
        %5463 = vdwg.mxu0
        %5464 = vmatpush.bf16.msra.mxu0 %v1611
        %5465 = vmatpush.bf16.msra.mxu0 %v1607
        %5466 = vmatpush.bf16.msra.mxu0 %v1603
        %5467 = vmatpush.bf16.msra.mxu0 %v1599
        %5468 = vmatpush.bf16.msra.mxu0 %v1595
        %5469 = vmatpush.bf16.msra.mxu0 %v1591
        %5470 = vmatpush.bf16.msra.mxu0 %v1587
        %5471 = vmatpush.bf16.msra.mxu0 %v1583
        %5472 = vmatmul.bf16.gmra.mxu0 %v5312
        %v5473 = vpop.f32.mrf.mxu0
        %v5474 = vadd.f32 %v5445, %v5473
        %v5475 = vpop.f32.mrf.mxu0
        %v5476 = vadd.f32 %v5447, %v5475
        %5477 = vmatmul.bf16.gmra.mxu0 %v5317
        %v5478 = vpop.f32.mrf.mxu0
        %v5479 = vadd.f32 %v5450, %v5478
        %v5480 = vpop.f32.mrf.mxu0
        %v5481 = vadd.f32 %v5452, %v5480
        %5482 = vmatmul.bf16.gmra.mxu0 %v5322
        %v5483 = vpop.f32.mrf.mxu0
        %v5484 = vadd.f32 %v5455, %v5483
        %v5485 = vpop.f32.mrf.mxu0
        %v5486 = vadd.f32 %v5457, %v5485
        %5487 = vmatmul.bf16.gmra.mxu0 %v5327
        %v5488 = vpop.f32.mrf.mxu0
        %v5489 = vadd.f32 %v5460, %v5488
        %v5490 = vpop.f32.mrf.mxu0
        %v5491 = vadd.f32 %v5462, %v5490
        %5492 = vdwg.mxu0
        %5493 = vmatpush.bf16.msra.mxu0 %v1484
        %5494 = vmatpush.bf16.msra.mxu0 %v1480
        %5495 = vmatpush.bf16.msra.mxu0 %v1476
        %5496 = vmatpush.bf16.msra.mxu0 %v1472
        %5497 = vmatpush.bf16.msra.mxu0 %v1468
        %5498 = vmatpush.bf16.msra.mxu0 %v1464
        %5499 = vmatpush.bf16.msra.mxu0 %v1460
        %5500 = vmatpush.bf16.msra.mxu0 %v1456
        %5501 = vmatmul.bf16.gmra.mxu0 %v5308
        %v5502 = vpop.f32.mrf.mxu0
        %v5503 = vadd.f32 %v928, %v5502
        %v5504 = vpop.f32.mrf.mxu0
        %v5505 = vadd.f32 %v928, %v5504
        %5506 = vmatmul.bf16.gmra.mxu0 %v5313
        %v5507 = vpop.f32.mrf.mxu0
        %v5508 = vadd.f32 %v928, %v5507
        %v5509 = vpop.f32.mrf.mxu0
        %v5510 = vadd.f32 %v928, %v5509
        %5511 = vmatmul.bf16.gmra.mxu0 %v5318
        %v5512 = vpop.f32.mrf.mxu0
        %v5513 = vadd.f32 %v928, %v5512
        %v5514 = vpop.f32.mrf.mxu0
        %v5515 = vadd.f32 %v928, %v5514
        %5516 = vmatmul.bf16.gmra.mxu0 %v5323
        %v5517 = vpop.f32.mrf.mxu0
        %v5518 = vadd.f32 %v928, %v5517
        %v5519 = vpop.f32.mrf.mxu0
        %v5520 = vadd.f32 %v928, %v5519
        %5521 = vdwg.mxu0
        %5522 = vmatpush.bf16.msra.mxu0 %v1516
        %5523 = vmatpush.bf16.msra.mxu0 %v1512
        %5524 = vmatpush.bf16.msra.mxu0 %v1508
        %5525 = vmatpush.bf16.msra.mxu0 %v1504
        %5526 = vmatpush.bf16.msra.mxu0 %v1500
        %5527 = vmatpush.bf16.msra.mxu0 %v1496
        %5528 = vmatpush.bf16.msra.mxu0 %v1492
        %5529 = vmatpush.bf16.msra.mxu0 %v1488
        %5530 = vmatmul.bf16.gmra.mxu0 %v5309
        %v5531 = vpop.f32.mrf.mxu0
        %v5532 = vadd.f32 %v5503, %v5531
        %v5533 = vpop.f32.mrf.mxu0
        %v5534 = vadd.f32 %v5505, %v5533
        %5535 = vmatmul.bf16.gmra.mxu0 %v5314
        %v5536 = vpop.f32.mrf.mxu0
        %v5537 = vadd.f32 %v5508, %v5536
        %v5538 = vpop.f32.mrf.mxu0
        %v5539 = vadd.f32 %v5510, %v5538
        %5540 = vmatmul.bf16.gmra.mxu0 %v5319
        %v5541 = vpop.f32.mrf.mxu0
        %v5542 = vadd.f32 %v5513, %v5541
        %v5543 = vpop.f32.mrf.mxu0
        %v5544 = vadd.f32 %v5515, %v5543
        %5545 = vmatmul.bf16.gmra.mxu0 %v5324
        %v5546 = vpop.f32.mrf.mxu0
        %v5547 = vadd.f32 %v5518, %v5546
        %v5548 = vpop.f32.mrf.mxu0
        %v5549 = vadd.f32 %v5520, %v5548
        %5550 = vdwg.mxu0
        %5551 = vmatpush.bf16.msra.mxu0 %v1548
        %5552 = vmatpush.bf16.msra.mxu0 %v1544
        %5553 = vmatpush.bf16.msra.mxu0 %v1540
        %5554 = vmatpush.bf16.msra.mxu0 %v1536
        %5555 = vmatpush.bf16.msra.mxu0 %v1532
        %5556 = vmatpush.bf16.msra.mxu0 %v1528
        %5557 = vmatpush.bf16.msra.mxu0 %v1524
        %5558 = vmatpush.bf16.msra.mxu0 %v1520
        %5559 = vmatmul.bf16.gmra.mxu0 %v5310
        %v5560 = vpop.f32.mrf.mxu0
        %v5561 = vadd.f32 %v5532, %v5560
        %v5562 = vpop.f32.mrf.mxu0
        %v5563 = vadd.f32 %v5534, %v5562
        %5564 = vmatmul.bf16.gmra.mxu0 %v5315
        %v5565 = vpop.f32.mrf.mxu0
        %v5566 = vadd.f32 %v5537, %v5565
        %v5567 = vpop.f32.mrf.mxu0
        %v5568 = vadd.f32 %v5539, %v5567
        %5569 = vmatmul.bf16.gmra.mxu0 %v5320
        %v5570 = vpop.f32.mrf.mxu0
        %v5571 = vadd.f32 %v5542, %v5570
        %v5572 = vpop.f32.mrf.mxu0
        %v5573 = vadd.f32 %v5544, %v5572
        %5574 = vmatmul.bf16.gmra.mxu0 %v5325
        %v5575 = vpop.f32.mrf.mxu0
        %v5576 = vadd.f32 %v5547, %v5575
        %v5577 = vpop.f32.mrf.mxu0
        %v5578 = vadd.f32 %v5549, %v5577
        %5579 = vdwg.mxu0
        %5580 = vmatpush.bf16.msra.mxu0 %v1580
        %5581 = vmatpush.bf16.msra.mxu0 %v1576
        %5582 = vmatpush.bf16.msra.mxu0 %v1572
        %5583 = vmatpush.bf16.msra.mxu0 %v1568
        %5584 = vmatpush.bf16.msra.mxu0 %v1564
        %5585 = vmatpush.bf16.msra.mxu0 %v1560
        %5586 = vmatpush.bf16.msra.mxu0 %v1556
        %5587 = vmatpush.bf16.msra.mxu0 %v1552
        %5588 = vmatmul.bf16.gmra.mxu0 %v5311
        %v5589 = vpop.f32.mrf.mxu0
        %v5590 = vadd.f32 %v5561, %v5589
        %v5591 = vpop.f32.mrf.mxu0
        %v5592 = vadd.f32 %v5563, %v5591
        %5593 = vmatmul.bf16.gmra.mxu0 %v5316
        %v5594 = vpop.f32.mrf.mxu0
        %v5595 = vadd.f32 %v5566, %v5594
        %v5596 = vpop.f32.mrf.mxu0
        %v5597 = vadd.f32 %v5568, %v5596
        %5598 = vmatmul.bf16.gmra.mxu0 %v5321
        %v5599 = vpop.f32.mrf.mxu0
        %v5600 = vadd.f32 %v5571, %v5599
        %v5601 = vpop.f32.mrf.mxu0
        %v5602 = vadd.f32 %v5573, %v5601
        %5603 = vmatmul.bf16.gmra.mxu0 %v5326
        %v5604 = vpop.f32.mrf.mxu0
        %v5605 = vadd.f32 %v5576, %v5604
        %v5606 = vpop.f32.mrf.mxu0
        %v5607 = vadd.f32 %v5578, %v5606
        %5608 = vdwg.mxu0
        %5609 = vmatpush.bf16.msra.mxu0 %v1612
        %5610 = vmatpush.bf16.msra.mxu0 %v1608
        %5611 = vmatpush.bf16.msra.mxu0 %v1604
        %5612 = vmatpush.bf16.msra.mxu0 %v1600
        %5613 = vmatpush.bf16.msra.mxu0 %v1596
        %5614 = vmatpush.bf16.msra.mxu0 %v1592
        %5615 = vmatpush.bf16.msra.mxu0 %v1588
        %5616 = vmatpush.bf16.msra.mxu0 %v1584
        %5617 = vmatmul.bf16.gmra.mxu0 %v5312
        %v5618 = vpop.f32.mrf.mxu0
        %v5619 = vadd.f32 %v5590, %v5618
        %v5620 = vpop.f32.mrf.mxu0
        %v5621 = vadd.f32 %v5592, %v5620
        %5622 = vmatmul.bf16.gmra.mxu0 %v5317
        %v5623 = vpop.f32.mrf.mxu0
        %v5624 = vadd.f32 %v5595, %v5623
        %v5625 = vpop.f32.mrf.mxu0
        %v5626 = vadd.f32 %v5597, %v5625
        %5627 = vmatmul.bf16.gmra.mxu0 %v5322
        %v5628 = vpop.f32.mrf.mxu0
        %v5629 = vadd.f32 %v5600, %v5628
        %v5630 = vpop.f32.mrf.mxu0
        %v5631 = vadd.f32 %v5602, %v5630
        %5632 = vmatmul.bf16.gmra.mxu0 %v5327
        %v5633 = vpop.f32.mrf.mxu0
        %v5634 = vadd.f32 %v5605, %v5633
        %v5635 = vpop.f32.mrf.mxu0
        %v5636 = vadd.f32 %v5607, %v5635
        %5637 = vdwg.mxu0
        %5638 = vmatpush.bf16.msra.mxu0 %v1485
        %5639 = vmatpush.bf16.msra.mxu0 %v1481
        %5640 = vmatpush.bf16.msra.mxu0 %v1477
        %5641 = vmatpush.bf16.msra.mxu0 %v1473
        %5642 = vmatpush.bf16.msra.mxu0 %v1469
        %5643 = vmatpush.bf16.msra.mxu0 %v1465
        %5644 = vmatpush.bf16.msra.mxu0 %v1461
        %5645 = vmatpush.bf16.msra.mxu0 %v1457
        %5646 = vmatmul.bf16.gmra.mxu0 %v5308
        %v5647 = vpop.f32.mrf.mxu0
        %v5648 = vadd.f32 %v929, %v5647
        %v5649 = vpop.f32.mrf.mxu0
        %v5650 = vadd.f32 %v929, %v5649
        %5651 = vmatmul.bf16.gmra.mxu0 %v5313
        %v5652 = vpop.f32.mrf.mxu0
        %v5653 = vadd.f32 %v929, %v5652
        %v5654 = vpop.f32.mrf.mxu0
        %v5655 = vadd.f32 %v929, %v5654
        %5656 = vmatmul.bf16.gmra.mxu0 %v5318
        %v5657 = vpop.f32.mrf.mxu0
        %v5658 = vadd.f32 %v929, %v5657
        %v5659 = vpop.f32.mrf.mxu0
        %v5660 = vadd.f32 %v929, %v5659
        %5661 = vmatmul.bf16.gmra.mxu0 %v5323
        %v5662 = vpop.f32.mrf.mxu0
        %v5663 = vadd.f32 %v929, %v5662
        %v5664 = vpop.f32.mrf.mxu0
        %v5665 = vadd.f32 %v929, %v5664
        %5666 = vdwg.mxu0
        %5667 = vmatpush.bf16.msra.mxu0 %v1517
        %5668 = vmatpush.bf16.msra.mxu0 %v1513
        %5669 = vmatpush.bf16.msra.mxu0 %v1509
        %5670 = vmatpush.bf16.msra.mxu0 %v1505
        %5671 = vmatpush.bf16.msra.mxu0 %v1501
        %5672 = vmatpush.bf16.msra.mxu0 %v1497
        %5673 = vmatpush.bf16.msra.mxu0 %v1493
        %5674 = vmatpush.bf16.msra.mxu0 %v1489
        %5675 = vmatmul.bf16.gmra.mxu0 %v5309
        %v5676 = vpop.f32.mrf.mxu0
        %v5677 = vadd.f32 %v5648, %v5676
        %v5678 = vpop.f32.mrf.mxu0
        %v5679 = vadd.f32 %v5650, %v5678
        %5680 = vmatmul.bf16.gmra.mxu0 %v5314
        %v5681 = vpop.f32.mrf.mxu0
        %v5682 = vadd.f32 %v5653, %v5681
        %v5683 = vpop.f32.mrf.mxu0
        %v5684 = vadd.f32 %v5655, %v5683
        %5685 = vmatmul.bf16.gmra.mxu0 %v5319
        %v5686 = vpop.f32.mrf.mxu0
        %v5687 = vadd.f32 %v5658, %v5686
        %v5688 = vpop.f32.mrf.mxu0
        %v5689 = vadd.f32 %v5660, %v5688
        %5690 = vmatmul.bf16.gmra.mxu0 %v5324
        %v5691 = vpop.f32.mrf.mxu0
        %v5692 = vadd.f32 %v5663, %v5691
        %v5693 = vpop.f32.mrf.mxu0
        %v5694 = vadd.f32 %v5665, %v5693
        %5695 = vdwg.mxu0
        %5696 = vmatpush.bf16.msra.mxu0 %v1549
        %5697 = vmatpush.bf16.msra.mxu0 %v1545
        %5698 = vmatpush.bf16.msra.mxu0 %v1541
        %5699 = vmatpush.bf16.msra.mxu0 %v1537
        %5700 = vmatpush.bf16.msra.mxu0 %v1533
        %5701 = vmatpush.bf16.msra.mxu0 %v1529
        %5702 = vmatpush.bf16.msra.mxu0 %v1525
        %5703 = vmatpush.bf16.msra.mxu0 %v1521
        %5704 = vmatmul.bf16.gmra.mxu0 %v5310
        %v5705 = vpop.f32.mrf.mxu0
        %v5706 = vadd.f32 %v5677, %v5705
        %v5707 = vpop.f32.mrf.mxu0
        %v5708 = vadd.f32 %v5679, %v5707
        %5709 = vmatmul.bf16.gmra.mxu0 %v5315
        %v5710 = vpop.f32.mrf.mxu0
        %v5711 = vadd.f32 %v5682, %v5710
        %v5712 = vpop.f32.mrf.mxu0
        %v5713 = vadd.f32 %v5684, %v5712
        %5714 = vmatmul.bf16.gmra.mxu0 %v5320
        %v5715 = vpop.f32.mrf.mxu0
        %v5716 = vadd.f32 %v5687, %v5715
        %v5717 = vpop.f32.mrf.mxu0
        %v5718 = vadd.f32 %v5689, %v5717
        %5719 = vmatmul.bf16.gmra.mxu0 %v5325
        %v5720 = vpop.f32.mrf.mxu0
        %v5721 = vadd.f32 %v5692, %v5720
        %v5722 = vpop.f32.mrf.mxu0
        %v5723 = vadd.f32 %v5694, %v5722
        %5724 = vdwg.mxu0
        %5725 = vmatpush.bf16.msra.mxu0 %v1581
        %5726 = vmatpush.bf16.msra.mxu0 %v1577
        %5727 = vmatpush.bf16.msra.mxu0 %v1573
        %5728 = vmatpush.bf16.msra.mxu0 %v1569
        %5729 = vmatpush.bf16.msra.mxu0 %v1565
        %5730 = vmatpush.bf16.msra.mxu0 %v1561
        %5731 = vmatpush.bf16.msra.mxu0 %v1557
        %5732 = vmatpush.bf16.msra.mxu0 %v1553
        %5733 = vmatmul.bf16.gmra.mxu0 %v5311
        %v5734 = vpop.f32.mrf.mxu0
        %v5735 = vadd.f32 %v5706, %v5734
        %v5736 = vpop.f32.mrf.mxu0
        %v5737 = vadd.f32 %v5708, %v5736
        %5738 = vmatmul.bf16.gmra.mxu0 %v5316
        %v5739 = vpop.f32.mrf.mxu0
        %v5740 = vadd.f32 %v5711, %v5739
        %v5741 = vpop.f32.mrf.mxu0
        %v5742 = vadd.f32 %v5713, %v5741
        %5743 = vmatmul.bf16.gmra.mxu0 %v5321
        %v5744 = vpop.f32.mrf.mxu0
        %v5745 = vadd.f32 %v5716, %v5744
        %v5746 = vpop.f32.mrf.mxu0
        %v5747 = vadd.f32 %v5718, %v5746
        %5748 = vmatmul.bf16.gmra.mxu0 %v5326
        %v5749 = vpop.f32.mrf.mxu0
        %v5750 = vadd.f32 %v5721, %v5749
        %v5751 = vpop.f32.mrf.mxu0
        %v5752 = vadd.f32 %v5723, %v5751
        %5753 = vdwg.mxu0
        %5754 = vmatpush.bf16.msra.mxu0 %v1613
        %5755 = vmatpush.bf16.msra.mxu0 %v1609
        %5756 = vmatpush.bf16.msra.mxu0 %v1605
        %5757 = vmatpush.bf16.msra.mxu0 %v1601
        %5758 = vmatpush.bf16.msra.mxu0 %v1597
        %5759 = vmatpush.bf16.msra.mxu0 %v1593
        %5760 = vmatpush.bf16.msra.mxu0 %v1589
        %5761 = vmatpush.bf16.msra.mxu0 %v1585
        %5762 = vmatmul.bf16.gmra.mxu0 %v5312
        %v5763 = vpop.f32.mrf.mxu0
        %v5764 = vadd.f32 %v5735, %v5763
        %v5765 = vpop.f32.mrf.mxu0
        %v5766 = vadd.f32 %v5737, %v5765
        %5767 = vmatmul.bf16.gmra.mxu0 %v5317
        %v5768 = vpop.f32.mrf.mxu0
        %v5769 = vadd.f32 %v5740, %v5768
        %v5770 = vpop.f32.mrf.mxu0
        %v5771 = vadd.f32 %v5742, %v5770
        %5772 = vmatmul.bf16.gmra.mxu0 %v5322
        %v5773 = vpop.f32.mrf.mxu0
        %v5774 = vadd.f32 %v5745, %v5773
        %v5775 = vpop.f32.mrf.mxu0
        %v5776 = vadd.f32 %v5747, %v5775
        %5777 = vmatmul.bf16.gmra.mxu0 %v5327
        %v5778 = vpop.f32.mrf.mxu0
        %v5779 = vadd.f32 %v5750, %v5778
        %v5780 = vpop.f32.mrf.mxu0
        %v5781 = vadd.f32 %v5752, %v5780
        %5782 = vdwg.mxu0
        %5783 = vmatpush.bf16.msra.mxu0 %v1486
        %5784 = vmatpush.bf16.msra.mxu0 %v1482
        %5785 = vmatpush.bf16.msra.mxu0 %v1478
        %5786 = vmatpush.bf16.msra.mxu0 %v1474
        %5787 = vmatpush.bf16.msra.mxu0 %v1470
        %5788 = vmatpush.bf16.msra.mxu0 %v1466
        %5789 = vmatpush.bf16.msra.mxu0 %v1462
        %5790 = vmatpush.bf16.msra.mxu0 %v1458
        %5791 = vmatmul.bf16.gmra.mxu0 %v5308
        %v5792 = vpop.f32.mrf.mxu0
        %v5793 = vadd.f32 %v930, %v5792
        %v5794 = vpop.f32.mrf.mxu0
        %v5795 = vadd.f32 %v930, %v5794
        %5796 = vmatmul.bf16.gmra.mxu0 %v5313
        %v5797 = vpop.f32.mrf.mxu0
        %v5798 = vadd.f32 %v930, %v5797
        %v5799 = vpop.f32.mrf.mxu0
        %v5800 = vadd.f32 %v930, %v5799
        %5801 = vmatmul.bf16.gmra.mxu0 %v5318
        %v5802 = vpop.f32.mrf.mxu0
        %v5803 = vadd.f32 %v930, %v5802
        %v5804 = vpop.f32.mrf.mxu0
        %v5805 = vadd.f32 %v930, %v5804
        %5806 = vmatmul.bf16.gmra.mxu0 %v5323
        %v5807 = vpop.f32.mrf.mxu0
        %v5808 = vadd.f32 %v930, %v5807
        %v5809 = vpop.f32.mrf.mxu0
        %v5810 = vadd.f32 %v930, %v5809
        %5811 = vdwg.mxu0
        %5812 = vmatpush.bf16.msra.mxu0 %v1518
        %5813 = vmatpush.bf16.msra.mxu0 %v1514
        %5814 = vmatpush.bf16.msra.mxu0 %v1510
        %5815 = vmatpush.bf16.msra.mxu0 %v1506
        %5816 = vmatpush.bf16.msra.mxu0 %v1502
        %5817 = vmatpush.bf16.msra.mxu0 %v1498
        %5818 = vmatpush.bf16.msra.mxu0 %v1494
        %5819 = vmatpush.bf16.msra.mxu0 %v1490
        %5820 = vmatmul.bf16.gmra.mxu0 %v5309
        %v5821 = vpop.f32.mrf.mxu0
        %v5822 = vadd.f32 %v5793, %v5821
        %v5823 = vpop.f32.mrf.mxu0
        %v5824 = vadd.f32 %v5795, %v5823
        %5825 = vmatmul.bf16.gmra.mxu0 %v5314
        %v5826 = vpop.f32.mrf.mxu0
        %v5827 = vadd.f32 %v5798, %v5826
        %v5828 = vpop.f32.mrf.mxu0
        %v5829 = vadd.f32 %v5800, %v5828
        %5830 = vmatmul.bf16.gmra.mxu0 %v5319
        %v5831 = vpop.f32.mrf.mxu0
        %v5832 = vadd.f32 %v5803, %v5831
        %v5833 = vpop.f32.mrf.mxu0
        %v5834 = vadd.f32 %v5805, %v5833
        %5835 = vmatmul.bf16.gmra.mxu0 %v5324
        %v5836 = vpop.f32.mrf.mxu0
        %v5837 = vadd.f32 %v5808, %v5836
        %v5838 = vpop.f32.mrf.mxu0
        %v5839 = vadd.f32 %v5810, %v5838
        %5840 = vdwg.mxu0
        %5841 = vmatpush.bf16.msra.mxu0 %v1550
        %5842 = vmatpush.bf16.msra.mxu0 %v1546
        %5843 = vmatpush.bf16.msra.mxu0 %v1542
        %5844 = vmatpush.bf16.msra.mxu0 %v1538
        %5845 = vmatpush.bf16.msra.mxu0 %v1534
        %5846 = vmatpush.bf16.msra.mxu0 %v1530
        %5847 = vmatpush.bf16.msra.mxu0 %v1526
        %5848 = vmatpush.bf16.msra.mxu0 %v1522
        %5849 = vmatmul.bf16.gmra.mxu0 %v5310
        %v5850 = vpop.f32.mrf.mxu0
        %v5851 = vadd.f32 %v5822, %v5850
        %v5852 = vpop.f32.mrf.mxu0
        %v5853 = vadd.f32 %v5824, %v5852
        %5854 = vmatmul.bf16.gmra.mxu0 %v5315
        %v5855 = vpop.f32.mrf.mxu0
        %v5856 = vadd.f32 %v5827, %v5855
        %v5857 = vpop.f32.mrf.mxu0
        %v5858 = vadd.f32 %v5829, %v5857
        %5859 = vmatmul.bf16.gmra.mxu0 %v5320
        %v5860 = vpop.f32.mrf.mxu0
        %v5861 = vadd.f32 %v5832, %v5860
        %v5862 = vpop.f32.mrf.mxu0
        %v5863 = vadd.f32 %v5834, %v5862
        %5864 = vmatmul.bf16.gmra.mxu0 %v5325
        %v5865 = vpop.f32.mrf.mxu0
        %v5866 = vadd.f32 %v5837, %v5865
        %v5867 = vpop.f32.mrf.mxu0
        %v5868 = vadd.f32 %v5839, %v5867
        %5869 = vdwg.mxu0
        %5870 = vmatpush.bf16.msra.mxu0 %v1582
        %5871 = vmatpush.bf16.msra.mxu0 %v1578
        %5872 = vmatpush.bf16.msra.mxu0 %v1574
        %5873 = vmatpush.bf16.msra.mxu0 %v1570
        %5874 = vmatpush.bf16.msra.mxu0 %v1566
        %5875 = vmatpush.bf16.msra.mxu0 %v1562
        %5876 = vmatpush.bf16.msra.mxu0 %v1558
        %5877 = vmatpush.bf16.msra.mxu0 %v1554
        %5878 = vmatmul.bf16.gmra.mxu0 %v5311
        %v5879 = vpop.f32.mrf.mxu0
        %v5880 = vadd.f32 %v5851, %v5879
        %v5881 = vpop.f32.mrf.mxu0
        %v5882 = vadd.f32 %v5853, %v5881
        %5883 = vmatmul.bf16.gmra.mxu0 %v5316
        %v5884 = vpop.f32.mrf.mxu0
        %v5885 = vadd.f32 %v5856, %v5884
        %v5886 = vpop.f32.mrf.mxu0
        %v5887 = vadd.f32 %v5858, %v5886
        %5888 = vmatmul.bf16.gmra.mxu0 %v5321
        %v5889 = vpop.f32.mrf.mxu0
        %v5890 = vadd.f32 %v5861, %v5889
        %v5891 = vpop.f32.mrf.mxu0
        %v5892 = vadd.f32 %v5863, %v5891
        %5893 = vmatmul.bf16.gmra.mxu0 %v5326
        %v5894 = vpop.f32.mrf.mxu0
        %v5895 = vadd.f32 %v5866, %v5894
        %v5896 = vpop.f32.mrf.mxu0
        %v5897 = vadd.f32 %v5868, %v5896
        %5898 = vdwg.mxu0
        %5899 = vmatpush.bf16.msra.mxu0 %v1614
        %5900 = vmatpush.bf16.msra.mxu0 %v1610
        %5901 = vmatpush.bf16.msra.mxu0 %v1606
        %5902 = vmatpush.bf16.msra.mxu0 %v1602
        %5903 = vmatpush.bf16.msra.mxu0 %v1598
        %5904 = vmatpush.bf16.msra.mxu0 %v1594
        %5905 = vmatpush.bf16.msra.mxu0 %v1590
        %5906 = vmatpush.bf16.msra.mxu0 %v1586
        %5907 = vmatmul.bf16.gmra.mxu0 %v5312
        %v5908 = vpop.f32.mrf.mxu0
        %v5909 = vadd.f32 %v5880, %v5908
        %v5910 = vpop.f32.mrf.mxu0
        %v5911 = vadd.f32 %v5882, %v5910
        %5912 = vmatmul.bf16.gmra.mxu0 %v5317
        %v5913 = vpop.f32.mrf.mxu0
        %v5914 = vadd.f32 %v5885, %v5913
        %v5915 = vpop.f32.mrf.mxu0
        %v5916 = vadd.f32 %v5887, %v5915
        %5917 = vmatmul.bf16.gmra.mxu0 %v5322
        %v5918 = vpop.f32.mrf.mxu0
        %v5919 = vadd.f32 %v5890, %v5918
        %v5920 = vpop.f32.mrf.mxu0
        %v5921 = vadd.f32 %v5892, %v5920
        %5922 = vmatmul.bf16.gmra.mxu0 %v5327
        %v5923 = vpop.f32.mrf.mxu0
        %v5924 = vadd.f32 %v5895, %v5923
        %v5925 = vpop.f32.mrf.mxu0
        %v5926 = vadd.f32 %v5897, %v5925
        %5927 = vdwg.mxu0
        %v5928 = vmax.f32 %v5474, 0.0
        %v5929 = vmax.f32 %v5619, 0.0
        %v5930 = vmax.f32 %v5764, 0.0
        %v5931 = vmax.f32 %v5909, 0.0
        %v5932 = vmax.f32 %v5476, 0.0
        %v5933 = vmax.f32 %v5621, 0.0
        %v5934 = vmax.f32 %v5766, 0.0
        %v5935 = vmax.f32 %v5911, 0.0
        %v5936 = vmax.f32 %v5479, 0.0
        %v5937 = vmax.f32 %v5624, 0.0
        %v5938 = vmax.f32 %v5769, 0.0
        %v5939 = vmax.f32 %v5914, 0.0
        %v5940 = vmax.f32 %v5481, 0.0
        %v5941 = vmax.f32 %v5626, 0.0
        %v5942 = vmax.f32 %v5771, 0.0
        %v5943 = vmax.f32 %v5916, 0.0
        %v5944 = vmax.f32 %v5484, 0.0
        %v5945 = vmax.f32 %v5629, 0.0
        %v5946 = vmax.f32 %v5774, 0.0
        %v5947 = vmax.f32 %v5919, 0.0
        %v5948 = vmax.f32 %v5486, 0.0
        %v5949 = vmax.f32 %v5631, 0.0
        %v5950 = vmax.f32 %v5776, 0.0
        %v5951 = vmax.f32 %v5921, 0.0
        %v5952 = vmax.f32 %v5489, 0.0
        %v5953 = vmax.f32 %v5634, 0.0
        %v5954 = vmax.f32 %v5779, 0.0
        %v5955 = vmax.f32 %v5924, 0.0
        %v5956 = vmax.f32 %v5491, 0.0
        %v5957 = vmax.f32 %v5636, 0.0
        %v5958 = vmax.f32 %v5781, 0.0
        %v5959 = vmax.f32 %v5926, 0.0
        %v5960 = vmax.f32 %v5928, %v5930
        %v5961 = vmax.f32 %v5929, %v5931
        %v5962 = vmax.f32 %v5932, %v5934
        %v5963 = vmax.f32 %v5933, %v5935
        %v5964 = vmax.f32 %v5936, %v5938
        %v5965 = vmax.f32 %v5937, %v5939
        %v5966 = vmax.f32 %v5940, %v5942
        %v5967 = vmax.f32 %v5941, %v5943
        %v5968 = vmax.f32 %v5944, %v5946
        %v5969 = vmax.f32 %v5945, %v5947
        %v5970 = vmax.f32 %v5948, %v5950
        %v5971 = vmax.f32 %v5949, %v5951
        %v5972 = vmax.f32 %v5952, %v5954
        %v5973 = vmax.f32 %v5953, %v5955
        %v5974 = vmax.f32 %v5956, %v5958
        %v5975 = vmax.f32 %v5957, %v5959
        %v5976 = vmax.f32 %v2387, %v3666
        %v5977 = vmax.f32 %v2388, %v3667
        %v5978 = vmax.f32 %v2389, %v3668
        %v5979 = vmax.f32 %v2390, %v3669
        %v5980 = vmax.f32 %v2391, %v3670
        %v5981 = vmax.f32 %v2392, %v3671
        %v5982 = vmax.f32 %v2393, %v3672
        %v5983 = vmax.f32 %v2394, %v3673
        %v5984 = vmax.f32 %v2395, %v3674
        %v5985 = vmax.f32 %v2396, %v3675
        %v5986 = vmax.f32 %v2397, %v3676
        %v5987 = vmax.f32 %v2398, %v3677
        %v5988 = vmax.f32 %v2399, %v3678
        %v5989 = vmax.f32 %v2400, %v3679
        %v5990 = vmax.f32 %v2401, %v3680
        %v5991 = vmax.f32 %v2402, %v3681
        %v5992 = vmax.f32 %v4649, %v5960
        %v5993 = vmax.f32 %v4650, %v5961
        %v5994 = vmax.f32 %v4651, %v5962
        %v5995 = vmax.f32 %v4652, %v5963
        %v5996 = vmax.f32 %v4653, %v5964
        %v5997 = vmax.f32 %v4654, %v5965
        %v5998 = vmax.f32 %v4655, %v5966
        %v5999 = vmax.f32 %v4656, %v5967
        %v6000 = vmax.f32 %v4657, %v5968
        %v6001 = vmax.f32 %v4658, %v5969
        %v6002 = vmax.f32 %v4659, %v5970
        %v6003 = vmax.f32 %v4660, %v5971
        %v6004 = vmax.f32 %v4661, %v5972
        %v6005 = vmax.f32 %v4662, %v5973
        %v6006 = vmax.f32 %v4663, %v5974
        %v6007 = vmax.f32 %v4664, %v5975
        %v6024 = vrot.slane %v5992, 4
        %v6025 = vrot.slane %v5993, 4
        %v6026 = vrot.slane %v5994, 4
        %v6027 = vrot.slane %v5995, 4
        %v6028 = vrot.slane %v5996, 4
        %v6029 = vrot.slane %v5997, 4
        %v6030 = vrot.slane %v5998, 4
        %v6031 = vrot.slane %v5999, 4
        %v6032 = vrot.slane %v6000, 4
        %v6033 = vrot.slane %v6001, 4
        %v6034 = vrot.slane %v6002, 4
        %v6035 = vrot.slane %v6003, 4
        %v6036 = vrot.slane %v6004, 4
        %v6037 = vrot.slane %v6005, 4
        %v6038 = vrot.slane %v6006, 4
        %v6039 = vrot.slane %v6007, 4
        %vm6056 = vcmask 1043456
        %v6057 = vsel %vm6056, %v5976, %v6024
        %v6058 = vsel %vm6056, %v5977, %v6025
        %v6059 = vsel %vm6056, %v5978, %v6026
        %v6060 = vsel %vm6056, %v5979, %v6027
        %v6061 = vsel %vm6056, %v5980, %v6028
        %v6062 = vsel %vm6056, %v5981, %v6029
        %v6063 = vsel %vm6056, %v5982, %v6030
        %v6064 = vsel %vm6056, %v5983, %v6031
        %v6065 = vsel %vm6056, %v5984, %v6032
        %v6066 = vsel %vm6056, %v5985, %v6033
        %v6067 = vsel %vm6056, %v5986, %v6034
        %v6068 = vsel %vm6056, %v5987, %v6035
        %v6069 = vsel %vm6056, %v5988, %v6036
        %v6070 = vsel %vm6056, %v5989, %v6037
        %v6071 = vsel %vm6056, %v5990, %v6038
        %v6072 = vsel %vm6056, %v5991, %v6039
        %v6089 = vrot.slane %v5976, 5
        %v6090 = vrot.slane %v5977, 5
        %v6091 = vrot.slane %v5978, 5
        %v6092 = vrot.slane %v5979, 5
        %v6093 = vrot.slane %v5980, 5
        %v6094 = vrot.slane %v5981, 5
        %v6095 = vrot.slane %v5982, 5
        %v6096 = vrot.slane %v5983, 5
        %v6097 = vrot.slane %v5984, 5
        %v6098 = vrot.slane %v5985, 5
        %v6099 = vrot.slane %v5986, 5
        %v6100 = vrot.slane %v5987, 5
        %v6101 = vrot.slane %v5988, 5
        %v6102 = vrot.slane %v5989, 5
        %v6103 = vrot.slane %v5990, 5
        %v6104 = vrot.slane %v5991, 5
        %v6121 = vsel %vm6056, %v5992, %v6089
        %v6122 = vsel %vm6056, %v5993, %v6090
        %v6123 = vsel %vm6056, %v5994, %v6091
        %v6124 = vsel %vm6056, %v5995, %v6092
        %v6125 = vsel %vm6056, %v5996, %v6093
        %v6126 = vsel %vm6056, %v5997, %v6094
        %v6127 = vsel %vm6056, %v5998, %v6095
        %v6128 = vsel %vm6056, %v5999, %v6096
        %v6129 = vsel %vm6056, %v6000, %v6097
        %v6130 = vsel %vm6056, %v6001, %v6098
        %v6131 = vsel %vm6056, %v6002, %v6099
        %v6132 = vsel %vm6056, %v6003, %v6100
        %v6133 = vsel %vm6056, %v6004, %v6101
        %v6134 = vsel %vm6056, %v6005, %v6102
        %v6135 = vsel %vm6056, %v6006, %v6103
        %v6136 = vsel %vm6056, %v6007, %v6104
        %v6137 = vrot.slane %v5976, 1
        %v6138 = vrot.slane %v5977, 1
        %v6139 = vrot.slane %v5978, 1
        %v6140 = vrot.slane %v5979, 1
        %v6141 = vrot.slane %v5980, 1
        %v6142 = vrot.slane %v5981, 1
        %v6143 = vrot.slane %v5982, 1
        %v6144 = vrot.slane %v5983, 1
        %v6145 = vrot.slane %v5984, 1
        %v6146 = vrot.slane %v5985, 1
        %v6147 = vrot.slane %v5986, 1
        %v6148 = vrot.slane %v5987, 1
        %v6149 = vrot.slane %v5988, 1
        %v6150 = vrot.slane %v5989, 1
        %v6151 = vrot.slane %v5990, 1
        %v6152 = vrot.slane %v5991, 1
        %v6169 = vrot.slane %v5992, 5
        %v6170 = vrot.slane %v5993, 5
        %v6171 = vrot.slane %v5994, 5
        %v6172 = vrot.slane %v5995, 5
        %v6173 = vrot.slane %v5996, 5
        %v6174 = vrot.slane %v5997, 5
        %v6175 = vrot.slane %v5998, 5
        %v6176 = vrot.slane %v5999, 5
        %v6177 = vrot.slane %v6000, 5
        %v6178 = vrot.slane %v6001, 5
        %v6179 = vrot.slane %v6002, 5
        %v6180 = vrot.slane %v6003, 5
        %v6181 = vrot.slane %v6004, 5
        %v6182 = vrot.slane %v6005, 5
        %v6183 = vrot.slane %v6006, 5
        %v6184 = vrot.slane %v6007, 5
        %v6201 = vsel %vm6056, %v6137, %v6169
        %v6202 = vsel %vm6056, %v6138, %v6170
        %v6203 = vsel %vm6056, %v6139, %v6171
        %v6204 = vsel %vm6056, %v6140, %v6172
        %v6205 = vsel %vm6056, %v6141, %v6173
        %v6206 = vsel %vm6056, %v6142, %v6174
        %v6207 = vsel %vm6056, %v6143, %v6175
        %v6208 = vsel %vm6056, %v6144, %v6176
        %v6209 = vsel %vm6056, %v6145, %v6177
        %v6210 = vsel %vm6056, %v6146, %v6178
        %v6211 = vsel %vm6056, %v6147, %v6179
        %v6212 = vsel %vm6056, %v6148, %v6180
        %v6213 = vsel %vm6056, %v6149, %v6181
        %v6214 = vsel %vm6056, %v6150, %v6182
        %v6215 = vsel %vm6056, %v6151, %v6183
        %v6216 = vsel %vm6056, %v6152, %v6184
        %v6217 = vrot.slane %v5992, 1
        %v6218 = vrot.slane %v5993, 1
        %v6219 = vrot.slane %v5994, 1
        %v6220 = vrot.slane %v5995, 1
        %v6221 = vrot.slane %v5996, 1
        %v6222 = vrot.slane %v5997, 1
        %v6223 = vrot.slane %v5998, 1
        %v6224 = vrot.slane %v5999, 1
        %v6225 = vrot.slane %v6000, 1
        %v6226 = vrot.slane %v6001, 1
        %v6227 = vrot.slane %v6002, 1
        %v6228 = vrot.slane %v6003, 1
        %v6229 = vrot.slane %v6004, 1
        %v6230 = vrot.slane %v6005, 1
        %v6231 = vrot.slane %v6006, 1
        %v6232 = vrot.slane %v6007, 1
        %v6249 = vrot.slane %v5976, 6
        %v6250 = vrot.slane %v5977, 6
        %v6251 = vrot.slane %v5978, 6
        %v6252 = vrot.slane %v5979, 6
        %v6253 = vrot.slane %v5980, 6
        %v6254 = vrot.slane %v5981, 6
        %v6255 = vrot.slane %v5982, 6
        %v6256 = vrot.slane %v5983, 6
        %v6257 = vrot.slane %v5984, 6
        %v6258 = vrot.slane %v5985, 6
        %v6259 = vrot.slane %v5986, 6
        %v6260 = vrot.slane %v5987, 6
        %v6261 = vrot.slane %v5988, 6
        %v6262 = vrot.slane %v5989, 6
        %v6263 = vrot.slane %v5990, 6
        %v6264 = vrot.slane %v5991, 6
        %v6281 = vsel %vm6056, %v6217, %v6249
        %v6282 = vsel %vm6056, %v6218, %v6250
        %v6283 = vsel %vm6056, %v6219, %v6251
        %v6284 = vsel %vm6056, %v6220, %v6252
        %v6285 = vsel %vm6056, %v6221, %v6253
        %v6286 = vsel %vm6056, %v6222, %v6254
        %v6287 = vsel %vm6056, %v6223, %v6255
        %v6288 = vsel %vm6056, %v6224, %v6256
        %v6289 = vsel %vm6056, %v6225, %v6257
        %v6290 = vsel %vm6056, %v6226, %v6258
        %v6291 = vsel %vm6056, %v6227, %v6259
        %v6292 = vsel %vm6056, %v6228, %v6260
        %v6293 = vsel %vm6056, %v6229, %v6261
        %v6294 = vsel %vm6056, %v6230, %v6262
        %v6295 = vsel %vm6056, %v6231, %v6263
        %v6296 = vsel %vm6056, %v6232, %v6264
        %v6297 = vrot.slane %v5976, 2
        %v6298 = vrot.slane %v5977, 2
        %v6299 = vrot.slane %v5978, 2
        %v6300 = vrot.slane %v5979, 2
        %v6301 = vrot.slane %v5980, 2
        %v6302 = vrot.slane %v5981, 2
        %v6303 = vrot.slane %v5982, 2
        %v6304 = vrot.slane %v5983, 2
        %v6305 = vrot.slane %v5984, 2
        %v6306 = vrot.slane %v5985, 2
        %v6307 = vrot.slane %v5986, 2
        %v6308 = vrot.slane %v5987, 2
        %v6309 = vrot.slane %v5988, 2
        %v6310 = vrot.slane %v5989, 2
        %v6311 = vrot.slane %v5990, 2
        %v6312 = vrot.slane %v5991, 2
        %v6329 = vrot.slane %v5992, 6
        %v6330 = vrot.slane %v5993, 6
        %v6331 = vrot.slane %v5994, 6
        %v6332 = vrot.slane %v5995, 6
        %v6333 = vrot.slane %v5996, 6
        %v6334 = vrot.slane %v5997, 6
        %v6335 = vrot.slane %v5998, 6
        %v6336 = vrot.slane %v5999, 6
        %v6337 = vrot.slane %v6000, 6
        %v6338 = vrot.slane %v6001, 6
        %v6339 = vrot.slane %v6002, 6
        %v6340 = vrot.slane %v6003, 6
        %v6341 = vrot.slane %v6004, 6
        %v6342 = vrot.slane %v6005, 6
        %v6343 = vrot.slane %v6006, 6
        %v6344 = vrot.slane %v6007, 6
        %v6361 = vsel %vm6056, %v6297, %v6329
        %v6362 = vsel %vm6056, %v6298, %v6330
        %v6363 = vsel %vm6056, %v6299, %v6331
        %v6364 = vsel %vm6056, %v6300, %v6332
        %v6365 = vsel %vm6056, %v6301, %v6333
        %v6366 = vsel %vm6056, %v6302, %v6334
        %v6367 = vsel %vm6056, %v6303, %v6335
        %v6368 = vsel %vm6056, %v6304, %v6336
        %v6369 = vsel %vm6056, %v6305, %v6337
        %v6370 = vsel %vm6056, %v6306, %v6338
        %v6371 = vsel %vm6056, %v6307, %v6339
        %v6372 = vsel %vm6056, %v6308, %v6340
        %v6373 = vsel %vm6056, %v6309, %v6341
        %v6374 = vsel %vm6056, %v6310, %v6342
        %v6375 = vsel %vm6056, %v6311, %v6343
        %v6376 = vsel %vm6056, %v6312, %v6344
        %v6377 = vpack.c.bf16 %v6059, %v6057
        %v6378 = vpack.c.bf16 %v6060, %v6058
        %v6379 = vpack.c.bf16 %v6123, %v6121
        %v6380 = vpack.c.bf16 %v6124, %v6122
        %v6381 = vpack.c.bf16 %v6203, %v6201
        %v6382 = vpack.c.bf16 %v6204, %v6202
        %v6383 = vpack.c.bf16 %v6283, %v6281
        %v6384 = vpack.c.bf16 %v6284, %v6282
        %v6385 = vpack.c.bf16 %v6363, %v6361
        %v6386 = vpack.c.bf16 %v6364, %v6362
        %v6387 = vpack.c.bf16 %v6063, %v6061
        %v6388 = vpack.c.bf16 %v6064, %v6062
        %v6389 = vpack.c.bf16 %v6127, %v6125
        %v6390 = vpack.c.bf16 %v6128, %v6126
        %v6391 = vpack.c.bf16 %v6207, %v6205
        %v6392 = vpack.c.bf16 %v6208, %v6206
        %v6393 = vpack.c.bf16 %v6287, %v6285
        %v6394 = vpack.c.bf16 %v6288, %v6286
        %v6395 = vpack.c.bf16 %v6367, %v6365
        %v6396 = vpack.c.bf16 %v6368, %v6366
        %v6397 = vpack.c.bf16 %v6067, %v6065
        %v6398 = vpack.c.bf16 %v6068, %v6066
        %v6399 = vpack.c.bf16 %v6131, %v6129
        %v6400 = vpack.c.bf16 %v6132, %v6130
        %v6401 = vpack.c.bf16 %v6211, %v6209
        %v6402 = vpack.c.bf16 %v6212, %v6210
        %v6403 = vpack.c.bf16 %v6291, %v6289
        %v6404 = vpack.c.bf16 %v6292, %v6290
        %v6405 = vpack.c.bf16 %v6371, %v6369
        %v6406 = vpack.c.bf16 %v6372, %v6370
        %v6407 = vpack.c.bf16 %v6071, %v6069
        %v6408 = vpack.c.bf16 %v6072, %v6070
        %v6409 = vpack.c.bf16 %v6135, %v6133
        %v6410 = vpack.c.bf16 %v6136, %v6134
        %v6411 = vpack.c.bf16 %v6215, %v6213
        %v6412 = vpack.c.bf16 %v6216, %v6214
        %v6413 = vpack.c.bf16 %v6295, %v6293
        %v6414 = vpack.c.bf16 %v6296, %v6294
        %v6415 = vpack.c.bf16 %v6375, %v6373
        %v6416 = vpack.c.bf16 %v6376, %v6374
        %v6417 = vld [vmem:[#allocation7] sm:$0xff]
        %v6418 = vld [vmem:[#allocation7 + $0x8] sm:$0xff]
        %v6419 = vld [vmem:[#allocation7 + $0x10] sm:$0xff]
        %v6420 = vld [vmem:[#allocation7 + $0x18] sm:$0xff]
        %v6421 = vld [vmem:[#allocation7 + $0x20] sm:$0xff]
        %v6422 = vld [vmem:[#allocation7 + $0x28] sm:$0xff]
        %v6423 = vld [vmem:[#allocation7 + $0x30] sm:$0xff]
        %v6424 = vld [vmem:[#allocation7 + $0x38] sm:$0xff]
        %v6425 = vld [vmem:[#allocation7 + $0x40] sm:$0xff]
        %v6426 = vld [vmem:[#allocation7 + $0x48] sm:$0xff]
        %v6427 = vld [vmem:[#allocation7 + $0x50] sm:$0xff]
        %v6428 = vld [vmem:[#allocation7 + $0x58] sm:$0xff]
        %v6429 = vld [vmem:[#allocation7 + $0x60] sm:$0xff]
        %v6430 = vld [vmem:[#allocation7 + $0x68] sm:$0xff]
        %v6431 = vld [vmem:[#allocation7 + $0x70] sm:$0xff]
        %v6432 = vld [vmem:[#allocation7 + $0x78] sm:$0xff]
        %v6433 = vld [vmem:[#allocation7 + $0x80] sm:$0xff]
        %v6434 = vld [vmem:[#allocation7 + $0x88] sm:$0xff]
        %v6435 = vld [vmem:[#allocation7 + $0x90] sm:$0xff]
        %v6436 = vld [vmem:[#allocation7 + $0x98] sm:$0xff]
        %v6437 = vld [vmem:[#allocation7 + $0xa0] sm:$0xff]
        %v6438 = vld [vmem:[#allocation7 + $0xa8] sm:$0xff]
        %v6439 = vld [vmem:[#allocation7 + $0xb0] sm:$0xff]
        %v6440 = vld [vmem:[#allocation7 + $0xb8] sm:$0xff]
        %v6441 = vld [vmem:[#allocation7 + $0xc0] sm:$0xff]
        %v6442 = vld [vmem:[#allocation7 + $0xc8] sm:$0xff]
        %v6443 = vld [vmem:[#allocation7 + $0xd0] sm:$0xff]
        %v6444 = vld [vmem:[#allocation7 + $0xd8] sm:$0xff]
        %v6445 = vld [vmem:[#allocation7 + $0xe0] sm:$0xff]
        %v6446 = vld [vmem:[#allocation7 + $0xe8] sm:$0xff]
        %v6447 = vld [vmem:[#allocation7 + $0xf0] sm:$0xff]
        %v6448 = vld [vmem:[#allocation7 + $0xf8] sm:$0xff]
        %v6449 = vld [vmem:[#allocation7 + $0x100] sm:$0xff]
        %v6450 = vld [vmem:[#allocation7 + $0x108] sm:$0xff]
        %v6451 = vld [vmem:[#allocation7 + $0x110] sm:$0xff]
        %v6452 = vld [vmem:[#allocation7 + $0x118] sm:$0xff]
        %v6453 = vld [vmem:[#allocation7 + $0x120] sm:$0xff]
        %v6454 = vld [vmem:[#allocation7 + $0x128] sm:$0xff]
        %v6455 = vld [vmem:[#allocation7 + $0x130] sm:$0xff]
        %v6456 = vld [vmem:[#allocation7 + $0x138] sm:$0xff]
        %v6457 = vld [vmem:[#allocation7 + $0x140] sm:$0xff]
        %v6458 = vld [vmem:[#allocation7 + $0x148] sm:$0xff]
        %v6459 = vld [vmem:[#allocation7 + $0x150] sm:$0xff]
        %v6460 = vld [vmem:[#allocation7 + $0x158] sm:$0xff]
        %v6461 = vld [vmem:[#allocation7 + $0x160] sm:$0xff]
        %v6462 = vld [vmem:[#allocation7 + $0x168] sm:$0xff]
        %v6463 = vld [vmem:[#allocation7 + $0x170] sm:$0xff]
        %v6464 = vld [vmem:[#allocation7 + $0x178] sm:$0xff]
        %v6465 = vld [vmem:[#allocation7 + $0x180] sm:$0xff]
        %v6466 = vld [vmem:[#allocation7 + $0x188] sm:$0xff]
        %v6467 = vld [vmem:[#allocation7 + $0x190] sm:$0xff]
        %v6468 = vld [vmem:[#allocation7 + $0x198] sm:$0xff]
        %v6469 = vld [vmem:[#allocation7 + $0x1a0] sm:$0xff]
        %v6470 = vld [vmem:[#allocation7 + $0x1a8] sm:$0xff]
        %v6471 = vld [vmem:[#allocation7 + $0x1b0] sm:$0xff]
        %v6472 = vld [vmem:[#allocation7 + $0x1b8] sm:$0xff]
        %v6473 = vld [vmem:[#allocation7 + $0x1c0] sm:$0xff]
        %v6474 = vld [vmem:[#allocation7 + $0x1c8] sm:$0xff]
        %v6475 = vld [vmem:[#allocation7 + $0x1d0] sm:$0xff]
        %v6476 = vld [vmem:[#allocation7 + $0x1d8] sm:$0xff]
        %v6477 = vld [vmem:[#allocation7 + $0x1e0] sm:$0xff]
        %v6478 = vld [vmem:[#allocation7 + $0x1e8] sm:$0xff]
        %v6479 = vld [vmem:[#allocation7 + $0x1f0] sm:$0xff]
        %v6480 = vld [vmem:[#allocation7 + $0x1f8] sm:$0xff]
        %v6481 = vld [vmem:[#allocation7 + $0x200] sm:$0xff]
        %v6482 = vld [vmem:[#allocation7 + $0x208] sm:$0xff]
        %v6483 = vld [vmem:[#allocation7 + $0x210] sm:$0xff]
        %v6484 = vld [vmem:[#allocation7 + $0x218] sm:$0xff]
        %v6485 = vld [vmem:[#allocation7 + $0x220] sm:$0xff]
        %v6486 = vld [vmem:[#allocation7 + $0x228] sm:$0xff]
        %v6487 = vld [vmem:[#allocation7 + $0x230] sm:$0xff]
        %v6488 = vld [vmem:[#allocation7 + $0x238] sm:$0xff]
        %v6489 = vld [vmem:[#allocation7 + $0x240] sm:$0xff]
        %v6490 = vld [vmem:[#allocation7 + $0x248] sm:$0xff]
        %v6491 = vld [vmem:[#allocation7 + $0x250] sm:$0xff]
        %v6492 = vld [vmem:[#allocation7 + $0x258] sm:$0xff]
        %v6493 = vld [vmem:[#allocation7 + $0x260] sm:$0xff]
        %v6494 = vld [vmem:[#allocation7 + $0x268] sm:$0xff]
        %v6495 = vld [vmem:[#allocation7 + $0x270] sm:$0xff]
        %v6496 = vld [vmem:[#allocation7 + $0x278] sm:$0xff]
        %v6497 = vld [vmem:[#allocation7 + $0x280] sm:$0xff]
        %v6498 = vld [vmem:[#allocation7 + $0x288] sm:$0xff]
        %v6499 = vld [vmem:[#allocation7 + $0x290] sm:$0xff]
        %v6500 = vld [vmem:[#allocation7 + $0x298] sm:$0xff]
        %v6501 = vld [vmem:[#allocation7 + $0x2a0] sm:$0xff]
        %v6502 = vld [vmem:[#allocation7 + $0x2a8] sm:$0xff]
        %v6503 = vld [vmem:[#allocation7 + $0x2b0] sm:$0xff]
        %v6504 = vld [vmem:[#allocation7 + $0x2b8] sm:$0xff]
        %v6505 = vld [vmem:[#allocation7 + $0x2c0] sm:$0xff]
        %v6506 = vld [vmem:[#allocation7 + $0x2c8] sm:$0xff]
        %v6507 = vld [vmem:[#allocation7 + $0x2d0] sm:$0xff]
        %v6508 = vld [vmem:[#allocation7 + $0x2d8] sm:$0xff]
        %v6509 = vld [vmem:[#allocation7 + $0x2e0] sm:$0xff]
        %v6510 = vld [vmem:[#allocation7 + $0x2e8] sm:$0xff]
        %v6511 = vld [vmem:[#allocation7 + $0x2f0] sm:$0xff]
        %v6512 = vld [vmem:[#allocation7 + $0x2f8] sm:$0xff]
        %v6513 = vld [vmem:[#allocation7 + $0x300] sm:$0xff]
        %v6514 = vld [vmem:[#allocation7 + $0x308] sm:$0xff]
        %v6515 = vld [vmem:[#allocation7 + $0x310] sm:$0xff]
        %v6516 = vld [vmem:[#allocation7 + $0x318] sm:$0xff]
        %v6517 = vld [vmem:[#allocation7 + $0x320] sm:$0xff]
        %v6518 = vld [vmem:[#allocation7 + $0x328] sm:$0xff]
        %v6519 = vld [vmem:[#allocation7 + $0x330] sm:$0xff]
        %v6520 = vld [vmem:[#allocation7 + $0x338] sm:$0xff]
        %v6521 = vld [vmem:[#allocation7 + $0x340] sm:$0xff]
        %v6522 = vld [vmem:[#allocation7 + $0x348] sm:$0xff]
        %v6523 = vld [vmem:[#allocation7 + $0x350] sm:$0xff]
        %v6524 = vld [vmem:[#allocation7 + $0x358] sm:$0xff]
        %v6525 = vld [vmem:[#allocation7 + $0x360] sm:$0xff]
        %v6526 = vld [vmem:[#allocation7 + $0x368] sm:$0xff]
        %v6527 = vld [vmem:[#allocation7 + $0x370] sm:$0xff]
        %v6528 = vld [vmem:[#allocation7 + $0x378] sm:$0xff]
        %v6529 = vld [vmem:[#allocation7 + $0x380] sm:$0xff]
        %v6530 = vld [vmem:[#allocation7 + $0x388] sm:$0xff]
        %v6531 = vld [vmem:[#allocation7 + $0x390] sm:$0xff]
        %v6532 = vld [vmem:[#allocation7 + $0x398] sm:$0xff]
        %v6533 = vld [vmem:[#allocation7 + $0x3a0] sm:$0xff]
        %v6534 = vld [vmem:[#allocation7 + $0x3a8] sm:$0xff]
        %v6535 = vld [vmem:[#allocation7 + $0x3b0] sm:$0xff]
        %v6536 = vld [vmem:[#allocation7 + $0x3b8] sm:$0xff]
        %v6537 = vld [vmem:[#allocation7 + $0x3c0] sm:$0xff]
        %v6538 = vld [vmem:[#allocation7 + $0x3c8] sm:$0xff]
        %v6539 = vld [vmem:[#allocation7 + $0x3d0] sm:$0xff]
        %v6540 = vld [vmem:[#allocation7 + $0x3d8] sm:$0xff]
        %v6541 = vld [vmem:[#allocation7 + $0x3e0] sm:$0xff]
        %v6542 = vld [vmem:[#allocation7 + $0x3e8] sm:$0xff]
        %v6543 = vld [vmem:[#allocation7 + $0x3f0] sm:$0xff]
        %v6544 = vld [vmem:[#allocation7 + $0x3f8] sm:$0xff]
        %v6545 = vld [vmem:[#allocation7 + $0x400] sm:$0xff]
        %v6546 = vld [vmem:[#allocation7 + $0x408] sm:$0xff]
        %v6547 = vld [vmem:[#allocation7 + $0x410] sm:$0xff]
        %v6548 = vld [vmem:[#allocation7 + $0x418] sm:$0xff]
        %v6549 = vld [vmem:[#allocation7 + $0x420] sm:$0xff]
        %v6550 = vld [vmem:[#allocation7 + $0x428] sm:$0xff]
        %v6551 = vld [vmem:[#allocation7 + $0x430] sm:$0xff]
        %v6552 = vld [vmem:[#allocation7 + $0x438] sm:$0xff]
        %v6553 = vld [vmem:[#allocation7 + $0x440] sm:$0xff]
        %v6554 = vld [vmem:[#allocation7 + $0x448] sm:$0xff]
        %v6555 = vld [vmem:[#allocation7 + $0x450] sm:$0xff]
        %v6556 = vld [vmem:[#allocation7 + $0x458] sm:$0xff]
        %v6557 = vld [vmem:[#allocation7 + $0x460] sm:$0xff]
        %v6558 = vld [vmem:[#allocation7 + $0x468] sm:$0xff]
        %v6559 = vld [vmem:[#allocation7 + $0x470] sm:$0xff]
        %v6560 = vld [vmem:[#allocation7 + $0x478] sm:$0xff]
        %v6561 = vld [vmem:[#allocation7 + $0x480] sm:$0xff]
        %v6562 = vld [vmem:[#allocation7 + $0x488] sm:$0xff]
        %v6563 = vld [vmem:[#allocation7 + $0x490] sm:$0xff]
        %v6564 = vld [vmem:[#allocation7 + $0x498] sm:$0xff]
        %v6565 = vld [vmem:[#allocation7 + $0x4a0] sm:$0xff]
        %v6566 = vld [vmem:[#allocation7 + $0x4a8] sm:$0xff]
        %v6567 = vld [vmem:[#allocation7 + $0x4b0] sm:$0xff]
        %v6568 = vld [vmem:[#allocation7 + $0x4b8] sm:$0xff]
        %v6569 = vld [vmem:[#allocation7 + $0x4c0] sm:$0xff]
        %v6570 = vld [vmem:[#allocation7 + $0x4c8] sm:$0xff]
        %v6571 = vld [vmem:[#allocation7 + $0x4d0] sm:$0xff]
        %v6572 = vld [vmem:[#allocation7 + $0x4d8] sm:$0xff]
        %v6573 = vld [vmem:[#allocation7 + $0x4e0] sm:$0xff]
        %v6574 = vld [vmem:[#allocation7 + $0x4e8] sm:$0xff]
        %v6575 = vld [vmem:[#allocation7 + $0x4f0] sm:$0xff]
        %v6576 = vld [vmem:[#allocation7 + $0x4f8] sm:$0xff]
        %v6577 = vld [vmem:[#allocation7 + $0x500] sm:$0xff]
        %v6578 = vld [vmem:[#allocation7 + $0x508] sm:$0xff]
        %v6579 = vld [vmem:[#allocation7 + $0x510] sm:$0xff]
        %v6580 = vld [vmem:[#allocation7 + $0x518] sm:$0xff]
        %v6581 = vld [vmem:[#allocation7 + $0x520] sm:$0xff]
        %v6582 = vld [vmem:[#allocation7 + $0x528] sm:$0xff]
        %v6583 = vld [vmem:[#allocation7 + $0x530] sm:$0xff]
        %v6584 = vld [vmem:[#allocation7 + $0x538] sm:$0xff]
        %v6585 = vld [vmem:[#allocation7 + $0x540] sm:$0xff]
        %v6586 = vld [vmem:[#allocation7 + $0x548] sm:$0xff]
        %v6587 = vld [vmem:[#allocation7 + $0x550] sm:$0xff]
        %v6588 = vld [vmem:[#allocation7 + $0x558] sm:$0xff]
        %v6589 = vld [vmem:[#allocation7 + $0x560] sm:$0xff]
        %v6590 = vld [vmem:[#allocation7 + $0x568] sm:$0xff]
        %v6591 = vld [vmem:[#allocation7 + $0x570] sm:$0xff]
        %v6592 = vld [vmem:[#allocation7 + $0x578] sm:$0xff]
        %v6593 = vld [vmem:[#allocation7 + $0x580] sm:$0xff]
        %v6594 = vld [vmem:[#allocation7 + $0x588] sm:$0xff]
        %v6595 = vld [vmem:[#allocation7 + $0x590] sm:$0xff]
        %v6596 = vld [vmem:[#allocation7 + $0x598] sm:$0xff]
        %v6597 = vld [vmem:[#allocation7 + $0x5a0] sm:$0xff]
        %v6598 = vld [vmem:[#allocation7 + $0x5a8] sm:$0xff]
        %v6599 = vld [vmem:[#allocation7 + $0x5b0] sm:$0xff]
        %v6600 = vld [vmem:[#allocation7 + $0x5b8] sm:$0xff]
        %v6601 = vld [vmem:[#allocation7 + $0x5c0] sm:$0xff]
        %v6602 = vld [vmem:[#allocation7 + $0x5c8] sm:$0xff]
        %v6603 = vld [vmem:[#allocation7 + $0x5d0] sm:$0xff]
        %v6604 = vld [vmem:[#allocation7 + $0x5d8] sm:$0xff]
        %v6605 = vld [vmem:[#allocation7 + $0x5e0] sm:$0xff]
        %v6606 = vld [vmem:[#allocation7 + $0x5e8] sm:$0xff]
        %v6607 = vld [vmem:[#allocation7 + $0x5f0] sm:$0xff]
        %v6608 = vld [vmem:[#allocation7 + $0x5f8] sm:$0xff]
        %v6609 = vld [vmem:[#allocation7 + $0x600] sm:$0xff]
        %v6610 = vld [vmem:[#allocation7 + $0x608] sm:$0xff]
        %v6611 = vld [vmem:[#allocation7 + $0x610] sm:$0xff]
        %v6612 = vld [vmem:[#allocation7 + $0x618] sm:$0xff]
        %v6613 = vld [vmem:[#allocation7 + $0x620] sm:$0xff]
        %v6614 = vld [vmem:[#allocation7 + $0x628] sm:$0xff]
        %v6615 = vld [vmem:[#allocation7 + $0x630] sm:$0xff]
        %v6616 = vld [vmem:[#allocation7 + $0x638] sm:$0xff]
        %v6617 = vld [vmem:[#allocation7 + $0x640] sm:$0xff]
        %v6618 = vld [vmem:[#allocation7 + $0x648] sm:$0xff]
        %v6619 = vld [vmem:[#allocation7 + $0x650] sm:$0xff]
        %v6620 = vld [vmem:[#allocation7 + $0x658] sm:$0xff]
        %v6621 = vld [vmem:[#allocation7 + $0x660] sm:$0xff]
        %v6622 = vld [vmem:[#allocation7 + $0x668] sm:$0xff]
        %v6623 = vld [vmem:[#allocation7 + $0x670] sm:$0xff]
        %v6624 = vld [vmem:[#allocation7 + $0x678] sm:$0xff]
        %v6625 = vld [vmem:[#allocation7 + $0x680] sm:$0xff]
        %v6626 = vld [vmem:[#allocation7 + $0x688] sm:$0xff]
        %v6627 = vld [vmem:[#allocation7 + $0x690] sm:$0xff]
        %v6628 = vld [vmem:[#allocation7 + $0x698] sm:$0xff]
        %v6629 = vld [vmem:[#allocation7 + $0x6a0] sm:$0xff]
        %v6630 = vld [vmem:[#allocation7 + $0x6a8] sm:$0xff]
        %v6631 = vld [vmem:[#allocation7 + $0x6b0] sm:$0xff]
        %v6632 = vld [vmem:[#allocation7 + $0x6b8] sm:$0xff]
        %v6633 = vld [vmem:[#allocation7 + $0x6c0] sm:$0xff]
        %v6634 = vld [vmem:[#allocation7 + $0x6c8] sm:$0xff]
        %v6635 = vld [vmem:[#allocation7 + $0x6d0] sm:$0xff]
        %v6636 = vld [vmem:[#allocation7 + $0x6d8] sm:$0xff]
        %v6637 = vld [vmem:[#allocation7 + $0x6e0] sm:$0xff]
        %v6638 = vld [vmem:[#allocation7 + $0x6e8] sm:$0xff]
        %v6639 = vld [vmem:[#allocation7 + $0x6f0] sm:$0xff]
        %v6640 = vld [vmem:[#allocation7 + $0x6f8] sm:$0xff]
        %v6641 = vld [vmem:[#allocation7 + $0x700] sm:$0xff]
        %v6642 = vld [vmem:[#allocation7 + $0x708] sm:$0xff]
        %v6643 = vld [vmem:[#allocation7 + $0x710] sm:$0xff]
        %v6644 = vld [vmem:[#allocation7 + $0x718] sm:$0xff]
        %v6645 = vld [vmem:[#allocation7 + $0x720] sm:$0xff]
        %v6646 = vld [vmem:[#allocation7 + $0x728] sm:$0xff]
        %v6647 = vld [vmem:[#allocation7 + $0x730] sm:$0xff]
        %v6648 = vld [vmem:[#allocation7 + $0x738] sm:$0xff]
        %v6649 = vld [vmem:[#allocation7 + $0x740] sm:$0xff]
        %v6650 = vld [vmem:[#allocation7 + $0x748] sm:$0xff]
        %v6651 = vld [vmem:[#allocation7 + $0x750] sm:$0xff]
        %v6652 = vld [vmem:[#allocation7 + $0x758] sm:$0xff]
        %v6653 = vld [vmem:[#allocation7 + $0x760] sm:$0xff]
        %v6654 = vld [vmem:[#allocation7 + $0x768] sm:$0xff]
        %v6655 = vld [vmem:[#allocation7 + $0x770] sm:$0xff]
        %v6656 = vld [vmem:[#allocation7 + $0x778] sm:$0xff]
        %v6657 = vld [vmem:[#allocation7 + $0x780] sm:$0xff]
        %v6658 = vld [vmem:[#allocation7 + $0x788] sm:$0xff]
        %v6659 = vld [vmem:[#allocation7 + $0x790] sm:$0xff]
        %v6660 = vld [vmem:[#allocation7 + $0x798] sm:$0xff]
        %v6661 = vld [vmem:[#allocation7 + $0x7a0] sm:$0xff]
        %v6662 = vld [vmem:[#allocation7 + $0x7a8] sm:$0xff]
        %v6663 = vld [vmem:[#allocation7 + $0x7b0] sm:$0xff]
        %v6664 = vld [vmem:[#allocation7 + $0x7b8] sm:$0xff]
        %v6665 = vld [vmem:[#allocation7 + $0x7c0] sm:$0xff]
        %v6666 = vld [vmem:[#allocation7 + $0x7c8] sm:$0xff]
        %v6667 = vld [vmem:[#allocation7 + $0x7d0] sm:$0xff]
        %v6668 = vld [vmem:[#allocation7 + $0x7d8] sm:$0xff]
        %v6669 = vld [vmem:[#allocation7 + $0x7e0] sm:$0xff]
        %v6670 = vld [vmem:[#allocation7 + $0x7e8] sm:$0xff]
        %v6671 = vld [vmem:[#allocation7 + $0x7f0] sm:$0xff]
        %v6672 = vld [vmem:[#allocation7 + $0x7f8] sm:$0xff]
        %v6673 = vld [vmem:[#allocation7 + $0x800] sm:$0xff]
        %v6674 = vld [vmem:[#allocation7 + $0x808] sm:$0xff]
        %v6675 = vld [vmem:[#allocation7 + $0x810] sm:$0xff]
        %v6676 = vld [vmem:[#allocation7 + $0x818] sm:$0xff]
        %v6677 = vld [vmem:[#allocation7 + $0x820] sm:$0xff]
        %v6678 = vld [vmem:[#allocation7 + $0x828] sm:$0xff]
        %v6679 = vld [vmem:[#allocation7 + $0x830] sm:$0xff]
        %v6680 = vld [vmem:[#allocation7 + $0x838] sm:$0xff]
        %v6681 = vld [vmem:[#allocation7 + $0x840] sm:$0xff]
        %v6682 = vld [vmem:[#allocation7 + $0x848] sm:$0xff]
        %v6683 = vld [vmem:[#allocation7 + $0x850] sm:$0xff]
        %v6684 = vld [vmem:[#allocation7 + $0x858] sm:$0xff]
        %v6685 = vld [vmem:[#allocation7 + $0x860] sm:$0xff]
        %v6686 = vld [vmem:[#allocation7 + $0x868] sm:$0xff]
        %v6687 = vld [vmem:[#allocation7 + $0x870] sm:$0xff]
        %v6688 = vld [vmem:[#allocation7 + $0x878] sm:$0xff]
        %v6689 = vld [vmem:[#allocation7 + $0x880] sm:$0xff]
        %v6690 = vld [vmem:[#allocation7 + $0x888] sm:$0xff]
        %v6691 = vld [vmem:[#allocation7 + $0x890] sm:$0xff]
        %v6692 = vld [vmem:[#allocation7 + $0x898] sm:$0xff]
        %v6693 = vld [vmem:[#allocation7 + $0x8a0] sm:$0xff]
        %v6694 = vld [vmem:[#allocation7 + $0x8a8] sm:$0xff]
        %v6695 = vld [vmem:[#allocation7 + $0x8b0] sm:$0xff]
        %v6696 = vld [vmem:[#allocation7 + $0x8b8] sm:$0xff]
        %v6697 = vld [vmem:[#allocation7 + $0x8c0] sm:$0xff]
        %v6698 = vld [vmem:[#allocation7 + $0x8c8] sm:$0xff]
        %v6699 = vld [vmem:[#allocation7 + $0x8d0] sm:$0xff]
        %v6700 = vld [vmem:[#allocation7 + $0x8d8] sm:$0xff]
        %v6701 = vld [vmem:[#allocation7 + $0x8e0] sm:$0xff]
        %v6702 = vld [vmem:[#allocation7 + $0x8e8] sm:$0xff]
        %v6703 = vld [vmem:[#allocation7 + $0x8f0] sm:$0xff]
        %v6704 = vld [vmem:[#allocation7 + $0x8f8] sm:$0xff]
        %v6705 = vld [vmem:[#allocation7 + $0x900] sm:$0xff]
        %v6706 = vld [vmem:[#allocation7 + $0x908] sm:$0xff]
        %v6707 = vld [vmem:[#allocation7 + $0x910] sm:$0xff]
        %v6708 = vld [vmem:[#allocation7 + $0x918] sm:$0xff]
        %v6709 = vld [vmem:[#allocation7 + $0x920] sm:$0xff]
        %v6710 = vld [vmem:[#allocation7 + $0x928] sm:$0xff]
        %v6711 = vld [vmem:[#allocation7 + $0x930] sm:$0xff]
        %v6712 = vld [vmem:[#allocation7 + $0x938] sm:$0xff]
        %v6713 = vld [vmem:[#allocation7 + $0x940] sm:$0xff]
        %v6714 = vld [vmem:[#allocation7 + $0x948] sm:$0xff]
        %v6715 = vld [vmem:[#allocation7 + $0x950] sm:$0xff]
        %v6716 = vld [vmem:[#allocation7 + $0x958] sm:$0xff]
        %v6717 = vld [vmem:[#allocation7 + $0x960] sm:$0xff]
        %v6718 = vld [vmem:[#allocation7 + $0x968] sm:$0xff]
        %v6719 = vld [vmem:[#allocation7 + $0x970] sm:$0xff]
        %v6720 = vld [vmem:[#allocation7 + $0x978] sm:$0xff]
        %v6721 = vld [vmem:[#allocation7 + $0x980] sm:$0xff]
        %v6722 = vld [vmem:[#allocation7 + $0x988] sm:$0xff]
        %v6723 = vld [vmem:[#allocation7 + $0x990] sm:$0xff]
        %v6724 = vld [vmem:[#allocation7 + $0x998] sm:$0xff]
        %v6725 = vld [vmem:[#allocation7 + $0x9a0] sm:$0xff]
        %v6726 = vld [vmem:[#allocation7 + $0x9a8] sm:$0xff]
        %v6727 = vld [vmem:[#allocation7 + $0x9b0] sm:$0xff]
        %v6728 = vld [vmem:[#allocation7 + $0x9b8] sm:$0xff]
        %v6729 = vld [vmem:[#allocation7 + $0x9c0] sm:$0xff]
        %v6730 = vld [vmem:[#allocation7 + $0x9c8] sm:$0xff]
        %v6731 = vld [vmem:[#allocation7 + $0x9d0] sm:$0xff]
        %v6732 = vld [vmem:[#allocation7 + $0x9d8] sm:$0xff]
        %v6733 = vld [vmem:[#allocation7 + $0x9e0] sm:$0xff]
        %v6734 = vld [vmem:[#allocation7 + $0x9e8] sm:$0xff]
        %v6735 = vld [vmem:[#allocation7 + $0x9f0] sm:$0xff]
        %v6736 = vld [vmem:[#allocation7 + $0x9f8] sm:$0xff]
        %v6737 = vld [vmem:[#allocation8] sm:$0xf]
        %v6739 = vperm.slane %v6737, 0
        %v6740 = vperm.slane %v6737, 1
        %v6741 = vperm.slane %v6737, 2
        %v6742 = vperm.slane %v6737, 3
        %v7067 = vunpack.c.l.b16 %v6417
        %v7068 = vunpack.c.h.b16 %v6417
        %v7069 = vunpack.c.l.b16 %v6418
        %v7070 = vunpack.c.h.b16 %v6418
        %v7071 = vunpack.c.l.b16 %v6419
        %v7072 = vunpack.c.h.b16 %v6419
        %v7073 = vunpack.c.l.b16 %v6420
        %v7074 = vunpack.c.h.b16 %v6420
        %v7075 = vunpack.c.l.b16 %v6421
        %v7076 = vunpack.c.h.b16 %v6421
        %v7077 = vunpack.c.l.b16 %v6422
        %v7078 = vunpack.c.h.b16 %v6422
        %v7079 = vunpack.c.l.b16 %v6423
        %v7080 = vunpack.c.h.b16 %v6423
        %v7081 = vunpack.c.l.b16 %v6424
        %v7082 = vunpack.c.h.b16 %v6424
        %v7083 = vunpack.c.l.b16 %v6425
        %v7084 = vunpack.c.h.b16 %v6425
        %v7085 = vunpack.c.l.b16 %v6426
        %v7086 = vunpack.c.h.b16 %v6426
        %v7087 = vunpack.c.l.b16 %v6427
        %v7088 = vunpack.c.h.b16 %v6427
        %v7089 = vunpack.c.l.b16 %v6428
        %v7090 = vunpack.c.h.b16 %v6428
        %v7091 = vunpack.c.l.b16 %v6429
        %v7092 = vunpack.c.h.b16 %v6429
        %v7093 = vunpack.c.l.b16 %v6430
        %v7094 = vunpack.c.h.b16 %v6430
        %v7095 = vunpack.c.l.b16 %v6431
        %v7096 = vunpack.c.h.b16 %v6431
        %v7097 = vunpack.c.l.b16 %v6432
        %v7098 = vunpack.c.h.b16 %v6432
        %v7099 = vunpack.c.l.b16 %v6433
        %v7100 = vunpack.c.h.b16 %v6433
        %v7101 = vunpack.c.l.b16 %v6434
        %v7102 = vunpack.c.h.b16 %v6434
        %v7103 = vunpack.c.l.b16 %v6435
        %v7104 = vunpack.c.h.b16 %v6435
        %v7105 = vunpack.c.l.b16 %v6436
        %v7106 = vunpack.c.h.b16 %v6436
        %v7107 = vunpack.c.l.b16 %v6437
        %v7108 = vunpack.c.h.b16 %v6437
        %v7109 = vunpack.c.l.b16 %v6438
        %v7110 = vunpack.c.h.b16 %v6438
        %v7111 = vunpack.c.l.b16 %v6439
        %v7112 = vunpack.c.h.b16 %v6439
        %v7113 = vunpack.c.l.b16 %v6440
        %v7114 = vunpack.c.h.b16 %v6440
        %v7115 = vunpack.c.l.b16 %v6441
        %v7116 = vunpack.c.h.b16 %v6441
        %v7117 = vunpack.c.l.b16 %v6442
        %v7118 = vunpack.c.h.b16 %v6442
        %v7119 = vunpack.c.l.b16 %v6443
        %v7120 = vunpack.c.h.b16 %v6443
        %v7121 = vunpack.c.l.b16 %v6444
        %v7122 = vunpack.c.h.b16 %v6444
        %v7123 = vunpack.c.l.b16 %v6445
        %v7124 = vunpack.c.h.b16 %v6445
        %v7125 = vunpack.c.l.b16 %v6446
        %v7126 = vunpack.c.h.b16 %v6446
        %v7127 = vunpack.c.l.b16 %v6447
        %v7128 = vunpack.c.h.b16 %v6447
        %v7129 = vunpack.c.l.b16 %v6448
        %v7130 = vunpack.c.h.b16 %v6448
        %v7131 = vunpack.c.l.b16 %v6449
        %v7132 = vunpack.c.h.b16 %v6449
        %v7133 = vunpack.c.l.b16 %v6450
        %v7134 = vunpack.c.h.b16 %v6450
        %v7135 = vunpack.c.l.b16 %v6451
        %v7136 = vunpack.c.h.b16 %v6451
        %v7137 = vunpack.c.l.b16 %v6452
        %v7138 = vunpack.c.h.b16 %v6452
        %v7139 = vunpack.c.l.b16 %v6453
        %v7140 = vunpack.c.h.b16 %v6453
        %v7141 = vunpack.c.l.b16 %v6454
        %v7142 = vunpack.c.h.b16 %v6454
        %v7143 = vunpack.c.l.b16 %v6455
        %v7144 = vunpack.c.h.b16 %v6455
        %v7145 = vunpack.c.l.b16 %v6456
        %v7146 = vunpack.c.h.b16 %v6456
        %v7147 = vunpack.c.l.b16 %v6457
        %v7148 = vunpack.c.h.b16 %v6457
        %v7149 = vunpack.c.l.b16 %v6458
        %v7150 = vunpack.c.h.b16 %v6458
        %v7151 = vunpack.c.l.b16 %v6459
        %v7152 = vunpack.c.h.b16 %v6459
        %v7153 = vunpack.c.l.b16 %v6460
        %v7154 = vunpack.c.h.b16 %v6460
        %v7155 = vunpack.c.l.b16 %v6461
        %v7156 = vunpack.c.h.b16 %v6461
        %v7157 = vunpack.c.l.b16 %v6462
        %v7158 = vunpack.c.h.b16 %v6462
        %v7159 = vunpack.c.l.b16 %v6463
        %v7160 = vunpack.c.h.b16 %v6463
        %v7161 = vunpack.c.l.b16 %v6464
        %v7162 = vunpack.c.h.b16 %v6464
        %v7163 = vunpack.c.l.b16 %v6465
        %v7164 = vunpack.c.h.b16 %v6465
        %v7165 = vunpack.c.l.b16 %v6466
        %v7166 = vunpack.c.h.b16 %v6466
        %v7167 = vunpack.c.l.b16 %v6467
        %v7168 = vunpack.c.h.b16 %v6467
        %v7169 = vunpack.c.l.b16 %v6468
        %v7170 = vunpack.c.h.b16 %v6468
        %v7171 = vunpack.c.l.b16 %v6469
        %v7172 = vunpack.c.h.b16 %v6469
        %v7173 = vunpack.c.l.b16 %v6470
        %v7174 = vunpack.c.h.b16 %v6470
        %v7175 = vunpack.c.l.b16 %v6471
        %v7176 = vunpack.c.h.b16 %v6471
        %v7177 = vunpack.c.l.b16 %v6472
        %v7178 = vunpack.c.h.b16 %v6472
        %v7179 = vunpack.c.l.b16 %v6473
        %v7180 = vunpack.c.h.b16 %v6473
        %v7181 = vunpack.c.l.b16 %v6474
        %v7182 = vunpack.c.h.b16 %v6474
        %v7183 = vunpack.c.l.b16 %v6475
        %v7184 = vunpack.c.h.b16 %v6475
        %v7185 = vunpack.c.l.b16 %v6476
        %v7186 = vunpack.c.h.b16 %v6476
        %v7187 = vunpack.c.l.b16 %v6477
        %v7188 = vunpack.c.h.b16 %v6477
        %v7189 = vunpack.c.l.b16 %v6478
        %v7190 = vunpack.c.h.b16 %v6478
        %v7191 = vunpack.c.l.b16 %v6479
        %v7192 = vunpack.c.h.b16 %v6479
        %v7193 = vunpack.c.l.b16 %v6480
        %v7194 = vunpack.c.h.b16 %v6480
        %v7195 = vunpack.c.l.b16 %v6481
        %v7196 = vunpack.c.h.b16 %v6481
        %v7197 = vunpack.c.l.b16 %v6482
        %v7198 = vunpack.c.h.b16 %v6482
        %v7199 = vunpack.c.l.b16 %v6483
        %v7200 = vunpack.c.h.b16 %v6483
        %v7201 = vunpack.c.l.b16 %v6484
        %v7202 = vunpack.c.h.b16 %v6484
        %v7203 = vunpack.c.l.b16 %v6485
        %v7204 = vunpack.c.h.b16 %v6485
        %v7205 = vunpack.c.l.b16 %v6486
        %v7206 = vunpack.c.h.b16 %v6486
        %v7207 = vunpack.c.l.b16 %v6487
        %v7208 = vunpack.c.h.b16 %v6487
        %v7209 = vunpack.c.l.b16 %v6488
        %v7210 = vunpack.c.h.b16 %v6488
        %v7211 = vunpack.c.l.b16 %v6489
        %v7212 = vunpack.c.h.b16 %v6489
        %v7213 = vunpack.c.l.b16 %v6490
        %v7214 = vunpack.c.h.b16 %v6490
        %v7215 = vunpack.c.l.b16 %v6491
        %v7216 = vunpack.c.h.b16 %v6491
        %v7217 = vunpack.c.l.b16 %v6492
        %v7218 = vunpack.c.h.b16 %v6492
        %v7219 = vunpack.c.l.b16 %v6493
        %v7220 = vunpack.c.h.b16 %v6493
        %v7221 = vunpack.c.l.b16 %v6494
        %v7222 = vunpack.c.h.b16 %v6494
        %v7223 = vunpack.c.l.b16 %v6495
        %v7224 = vunpack.c.h.b16 %v6495
        %v7225 = vunpack.c.l.b16 %v6496
        %v7226 = vunpack.c.h.b16 %v6496
        %v7227 = vunpack.c.l.b16 %v6497
        %v7228 = vunpack.c.h.b16 %v6497
        %v7229 = vunpack.c.l.b16 %v6498
        %v7230 = vunpack.c.h.b16 %v6498
        %v7231 = vunpack.c.l.b16 %v6499
        %v7232 = vunpack.c.h.b16 %v6499
        %v7233 = vunpack.c.l.b16 %v6500
        %v7234 = vunpack.c.h.b16 %v6500
        %v7235 = vunpack.c.l.b16 %v6501
        %v7236 = vunpack.c.h.b16 %v6501
        %v7237 = vunpack.c.l.b16 %v6502
        %v7238 = vunpack.c.h.b16 %v6502
        %v7239 = vunpack.c.l.b16 %v6503
        %v7240 = vunpack.c.h.b16 %v6503
        %v7241 = vunpack.c.l.b16 %v6504
        %v7242 = vunpack.c.h.b16 %v6504
        %v7243 = vunpack.c.l.b16 %v6505
        %v7244 = vunpack.c.h.b16 %v6505
        %v7245 = vunpack.c.l.b16 %v6506
        %v7246 = vunpack.c.h.b16 %v6506
        %v7247 = vunpack.c.l.b16 %v6507
        %v7248 = vunpack.c.h.b16 %v6507
        %v7249 = vunpack.c.l.b16 %v6508
        %v7250 = vunpack.c.h.b16 %v6508
        %v7251 = vunpack.c.l.b16 %v6509
        %v7252 = vunpack.c.h.b16 %v6509
        %v7253 = vunpack.c.l.b16 %v6510
        %v7254 = vunpack.c.h.b16 %v6510
        %v7255 = vunpack.c.l.b16 %v6511
        %v7256 = vunpack.c.h.b16 %v6511
        %v7257 = vunpack.c.l.b16 %v6512
        %v7258 = vunpack.c.h.b16 %v6512
        %v7259 = vunpack.c.l.b16 %v6513
        %v7260 = vunpack.c.h.b16 %v6513
        %v7261 = vunpack.c.l.b16 %v6514
        %v7262 = vunpack.c.h.b16 %v6514
        %v7263 = vunpack.c.l.b16 %v6515
        %v7264 = vunpack.c.h.b16 %v6515
        %v7265 = vunpack.c.l.b16 %v6516
        %v7266 = vunpack.c.h.b16 %v6516
        %v7267 = vunpack.c.l.b16 %v6517
        %v7268 = vunpack.c.h.b16 %v6517
        %v7269 = vunpack.c.l.b16 %v6518
        %v7270 = vunpack.c.h.b16 %v6518
        %v7271 = vunpack.c.l.b16 %v6519
        %v7272 = vunpack.c.h.b16 %v6519
        %v7273 = vunpack.c.l.b16 %v6520
        %v7274 = vunpack.c.h.b16 %v6520
        %v7275 = vunpack.c.l.b16 %v6521
        %v7276 = vunpack.c.h.b16 %v6521
        %v7277 = vunpack.c.l.b16 %v6522
        %v7278 = vunpack.c.h.b16 %v6522
        %v7279 = vunpack.c.l.b16 %v6523
        %v7280 = vunpack.c.h.b16 %v6523
        %v7281 = vunpack.c.l.b16 %v6524
        %v7282 = vunpack.c.h.b16 %v6524
        %v7283 = vunpack.c.l.b16 %v6525
        %v7284 = vunpack.c.h.b16 %v6525
        %v7285 = vunpack.c.l.b16 %v6526
        %v7286 = vunpack.c.h.b16 %v6526
        %v7287 = vunpack.c.l.b16 %v6527
        %v7288 = vunpack.c.h.b16 %v6527
        %v7289 = vunpack.c.l.b16 %v6528
        %v7290 = vunpack.c.h.b16 %v6528
        %v7291 = vunpack.c.l.b16 %v6529
        %v7292 = vunpack.c.h.b16 %v6529
        %v7293 = vunpack.c.l.b16 %v6530
        %v7294 = vunpack.c.h.b16 %v6530
        %v7295 = vunpack.c.l.b16 %v6531
        %v7296 = vunpack.c.h.b16 %v6531
        %v7297 = vunpack.c.l.b16 %v6532
        %v7298 = vunpack.c.h.b16 %v6532
        %v7299 = vunpack.c.l.b16 %v6533
        %v7300 = vunpack.c.h.b16 %v6533
        %v7301 = vunpack.c.l.b16 %v6534
        %v7302 = vunpack.c.h.b16 %v6534
        %v7303 = vunpack.c.l.b16 %v6535
        %v7304 = vunpack.c.h.b16 %v6535
        %v7305 = vunpack.c.l.b16 %v6536
        %v7306 = vunpack.c.h.b16 %v6536
        %v7307 = vunpack.c.l.b16 %v6537
        %v7308 = vunpack.c.h.b16 %v6537
        %v7309 = vunpack.c.l.b16 %v6538
        %v7310 = vunpack.c.h.b16 %v6538
        %v7311 = vunpack.c.l.b16 %v6539
        %v7312 = vunpack.c.h.b16 %v6539
        %v7313 = vunpack.c.l.b16 %v6540
        %v7314 = vunpack.c.h.b16 %v6540
        %v7315 = vunpack.c.l.b16 %v6541
        %v7316 = vunpack.c.h.b16 %v6541
        %v7317 = vunpack.c.l.b16 %v6542
        %v7318 = vunpack.c.h.b16 %v6542
        %v7319 = vunpack.c.l.b16 %v6543
        %v7320 = vunpack.c.h.b16 %v6543
        %v7321 = vunpack.c.l.b16 %v6544
        %v7322 = vunpack.c.h.b16 %v6544
        %v7323 = vunpack.c.l.b16 %v6545
        %v7324 = vunpack.c.h.b16 %v6545
        %v7325 = vunpack.c.l.b16 %v6546
        %v7326 = vunpack.c.h.b16 %v6546
        %v7327 = vunpack.c.l.b16 %v6547
        %v7328 = vunpack.c.h.b16 %v6547
        %v7329 = vunpack.c.l.b16 %v6548
        %v7330 = vunpack.c.h.b16 %v6548
        %v7331 = vunpack.c.l.b16 %v6549
        %v7332 = vunpack.c.h.b16 %v6549
        %v7333 = vunpack.c.l.b16 %v6550
        %v7334 = vunpack.c.h.b16 %v6550
        %v7335 = vunpack.c.l.b16 %v6551
        %v7336 = vunpack.c.h.b16 %v6551
        %v7337 = vunpack.c.l.b16 %v6552
        %v7338 = vunpack.c.h.b16 %v6552
        %v7339 = vunpack.c.l.b16 %v6553
        %v7340 = vunpack.c.h.b16 %v6553
        %v7341 = vunpack.c.l.b16 %v6554
        %v7342 = vunpack.c.h.b16 %v6554
        %v7343 = vunpack.c.l.b16 %v6555
        %v7344 = vunpack.c.h.b16 %v6555
        %v7345 = vunpack.c.l.b16 %v6556
        %v7346 = vunpack.c.h.b16 %v6556
        %v7347 = vunpack.c.l.b16 %v6557
        %v7348 = vunpack.c.h.b16 %v6557
        %v7349 = vunpack.c.l.b16 %v6558
        %v7350 = vunpack.c.h.b16 %v6558
        %v7351 = vunpack.c.l.b16 %v6559
        %v7352 = vunpack.c.h.b16 %v6559
        %v7353 = vunpack.c.l.b16 %v6560
        %v7354 = vunpack.c.h.b16 %v6560
        %v7355 = vunpack.c.l.b16 %v6561
        %v7356 = vunpack.c.h.b16 %v6561
        %v7357 = vunpack.c.l.b16 %v6562
        %v7358 = vunpack.c.h.b16 %v6562
        %v7359 = vunpack.c.l.b16 %v6563
        %v7360 = vunpack.c.h.b16 %v6563
        %v7361 = vunpack.c.l.b16 %v6564
        %v7362 = vunpack.c.h.b16 %v6564
        %v7363 = vunpack.c.l.b16 %v6565
        %v7364 = vunpack.c.h.b16 %v6565
        %v7365 = vunpack.c.l.b16 %v6566
        %v7366 = vunpack.c.h.b16 %v6566
        %v7367 = vunpack.c.l.b16 %v6567
        %v7368 = vunpack.c.h.b16 %v6567
        %v7369 = vunpack.c.l.b16 %v6568
        %v7370 = vunpack.c.h.b16 %v6568
        %v7371 = vunpack.c.l.b16 %v6569
        %v7372 = vunpack.c.h.b16 %v6569
        %v7373 = vunpack.c.l.b16 %v6570
        %v7374 = vunpack.c.h.b16 %v6570
        %v7375 = vunpack.c.l.b16 %v6571
        %v7376 = vunpack.c.h.b16 %v6571
        %v7377 = vunpack.c.l.b16 %v6572
        %v7378 = vunpack.c.h.b16 %v6572
        %v7379 = vunpack.c.l.b16 %v6573
        %v7380 = vunpack.c.h.b16 %v6573
        %v7381 = vunpack.c.l.b16 %v6574
        %v7382 = vunpack.c.h.b16 %v6574
        %v7383 = vunpack.c.l.b16 %v6575
        %v7384 = vunpack.c.h.b16 %v6575
        %v7385 = vunpack.c.l.b16 %v6576
        %v7386 = vunpack.c.h.b16 %v6576
        %v7387 = vunpack.c.l.b16 %v6577
        %v7388 = vunpack.c.h.b16 %v6577
        %v7389 = vunpack.c.l.b16 %v6578
        %v7390 = vunpack.c.h.b16 %v6578
        %v7391 = vunpack.c.l.b16 %v6579
        %v7392 = vunpack.c.h.b16 %v6579
        %v7393 = vunpack.c.l.b16 %v6580
        %v7394 = vunpack.c.h.b16 %v6580
        %v7395 = vunpack.c.l.b16 %v6581
        %v7396 = vunpack.c.h.b16 %v6581
        %v7397 = vunpack.c.l.b16 %v6582
        %v7398 = vunpack.c.h.b16 %v6582
        %v7399 = vunpack.c.l.b16 %v6583
        %v7400 = vunpack.c.h.b16 %v6583
        %v7401 = vunpack.c.l.b16 %v6584
        %v7402 = vunpack.c.h.b16 %v6584
        %v7403 = vunpack.c.l.b16 %v6585
        %v7404 = vunpack.c.h.b16 %v6585
        %v7405 = vunpack.c.l.b16 %v6586
        %v7406 = vunpack.c.h.b16 %v6586
        %v7407 = vunpack.c.l.b16 %v6587
        %v7408 = vunpack.c.h.b16 %v6587
        %v7409 = vunpack.c.l.b16 %v6588
        %v7410 = vunpack.c.h.b16 %v6588
        %v7411 = vunpack.c.l.b16 %v6589
        %v7412 = vunpack.c.h.b16 %v6589
        %v7413 = vunpack.c.l.b16 %v6590
        %v7414 = vunpack.c.h.b16 %v6590
        %v7415 = vunpack.c.l.b16 %v6591
        %v7416 = vunpack.c.h.b16 %v6591
        %v7417 = vunpack.c.l.b16 %v6592
        %v7418 = vunpack.c.h.b16 %v6592
        %v7419 = vunpack.c.l.b16 %v6593
        %v7420 = vunpack.c.h.b16 %v6593
        %v7421 = vunpack.c.l.b16 %v6594
        %v7422 = vunpack.c.h.b16 %v6594
        %v7423 = vunpack.c.l.b16 %v6595
        %v7424 = vunpack.c.h.b16 %v6595
        %v7425 = vunpack.c.l.b16 %v6596
        %v7426 = vunpack.c.h.b16 %v6596
        %v7427 = vunpack.c.l.b16 %v6597
        %v7428 = vunpack.c.h.b16 %v6597
        %v7429 = vunpack.c.l.b16 %v6598
        %v7430 = vunpack.c.h.b16 %v6598
        %v7431 = vunpack.c.l.b16 %v6599
        %v7432 = vunpack.c.h.b16 %v6599
        %v7433 = vunpack.c.l.b16 %v6600
        %v7434 = vunpack.c.h.b16 %v6600
        %v7435 = vunpack.c.l.b16 %v6601
        %v7436 = vunpack.c.h.b16 %v6601
        %v7437 = vunpack.c.l.b16 %v6602
        %v7438 = vunpack.c.h.b16 %v6602
        %v7439 = vunpack.c.l.b16 %v6603
        %v7440 = vunpack.c.h.b16 %v6603
        %v7441 = vunpack.c.l.b16 %v6604
        %v7442 = vunpack.c.h.b16 %v6604
        %v7443 = vunpack.c.l.b16 %v6605
        %v7444 = vunpack.c.h.b16 %v6605
        %v7445 = vunpack.c.l.b16 %v6606
        %v7446 = vunpack.c.h.b16 %v6606
        %v7447 = vunpack.c.l.b16 %v6607
        %v7448 = vunpack.c.h.b16 %v6607
        %v7449 = vunpack.c.l.b16 %v6608
        %v7450 = vunpack.c.h.b16 %v6608
        %v7451 = vunpack.c.l.b16 %v6609
        %v7452 = vunpack.c.h.b16 %v6609
        %v7453 = vunpack.c.l.b16 %v6610
        %v7454 = vunpack.c.h.b16 %v6610
        %v7455 = vunpack.c.l.b16 %v6611
        %v7456 = vunpack.c.h.b16 %v6611
        %v7457 = vunpack.c.l.b16 %v6612
        %v7458 = vunpack.c.h.b16 %v6612
        %v7459 = vunpack.c.l.b16 %v6613
        %v7460 = vunpack.c.h.b16 %v6613
        %v7461 = vunpack.c.l.b16 %v6614
        %v7462 = vunpack.c.h.b16 %v6614
        %v7463 = vunpack.c.l.b16 %v6615
        %v7464 = vunpack.c.h.b16 %v6615
        %v7465 = vunpack.c.l.b16 %v6616
        %v7466 = vunpack.c.h.b16 %v6616
        %v7467 = vunpack.c.l.b16 %v6617
        %v7468 = vunpack.c.h.b16 %v6617
        %v7469 = vunpack.c.l.b16 %v6618
        %v7470 = vunpack.c.h.b16 %v6618
        %v7471 = vunpack.c.l.b16 %v6619
        %v7472 = vunpack.c.h.b16 %v6619
        %v7473 = vunpack.c.l.b16 %v6620
        %v7474 = vunpack.c.h.b16 %v6620
        %v7475 = vunpack.c.l.b16 %v6621
        %v7476 = vunpack.c.h.b16 %v6621
        %v7477 = vunpack.c.l.b16 %v6622
        %v7478 = vunpack.c.h.b16 %v6622
        %v7479 = vunpack.c.l.b16 %v6623
        %v7480 = vunpack.c.h.b16 %v6623
        %v7481 = vunpack.c.l.b16 %v6624
        %v7482 = vunpack.c.h.b16 %v6624
        %v7483 = vunpack.c.l.b16 %v6625
        %v7484 = vunpack.c.h.b16 %v6625
        %v7485 = vunpack.c.l.b16 %v6626
        %v7486 = vunpack.c.h.b16 %v6626
        %v7487 = vunpack.c.l.b16 %v6627
        %v7488 = vunpack.c.h.b16 %v6627
        %v7489 = vunpack.c.l.b16 %v6628
        %v7490 = vunpack.c.h.b16 %v6628
        %v7491 = vunpack.c.l.b16 %v6629
        %v7492 = vunpack.c.h.b16 %v6629
        %v7493 = vunpack.c.l.b16 %v6630
        %v7494 = vunpack.c.h.b16 %v6630
        %v7495 = vunpack.c.l.b16 %v6631
        %v7496 = vunpack.c.h.b16 %v6631
        %v7497 = vunpack.c.l.b16 %v6632
        %v7498 = vunpack.c.h.b16 %v6632
        %v7499 = vunpack.c.l.b16 %v6633
        %v7500 = vunpack.c.h.b16 %v6633
        %v7501 = vunpack.c.l.b16 %v6634
        %v7502 = vunpack.c.h.b16 %v6634
        %v7503 = vunpack.c.l.b16 %v6635
        %v7504 = vunpack.c.h.b16 %v6635
        %v7505 = vunpack.c.l.b16 %v6636
        %v7506 = vunpack.c.h.b16 %v6636
        %v7507 = vunpack.c.l.b16 %v6637
        %v7508 = vunpack.c.h.b16 %v6637
        %v7509 = vunpack.c.l.b16 %v6638
        %v7510 = vunpack.c.h.b16 %v6638
        %v7511 = vunpack.c.l.b16 %v6639
        %v7512 = vunpack.c.h.b16 %v6639
        %v7513 = vunpack.c.l.b16 %v6640
        %v7514 = vunpack.c.h.b16 %v6640
        %v7515 = vunpack.c.l.b16 %v6641
        %v7516 = vunpack.c.h.b16 %v6641
        %v7517 = vunpack.c.l.b16 %v6642
        %v7518 = vunpack.c.h.b16 %v6642
        %v7519 = vunpack.c.l.b16 %v6643
        %v7520 = vunpack.c.h.b16 %v6643
        %v7521 = vunpack.c.l.b16 %v6644
        %v7522 = vunpack.c.h.b16 %v6644
        %v7523 = vunpack.c.l.b16 %v6645
        %v7524 = vunpack.c.h.b16 %v6645
        %v7525 = vunpack.c.l.b16 %v6646
        %v7526 = vunpack.c.h.b16 %v6646
        %v7527 = vunpack.c.l.b16 %v6647
        %v7528 = vunpack.c.h.b16 %v6647
        %v7529 = vunpack.c.l.b16 %v6648
        %v7530 = vunpack.c.h.b16 %v6648
        %v7531 = vunpack.c.l.b16 %v6649
        %v7532 = vunpack.c.h.b16 %v6649
        %v7533 = vunpack.c.l.b16 %v6650
        %v7534 = vunpack.c.h.b16 %v6650
        %v7535 = vunpack.c.l.b16 %v6651
        %v7536 = vunpack.c.h.b16 %v6651
        %v7537 = vunpack.c.l.b16 %v6652
        %v7538 = vunpack.c.h.b16 %v6652
        %v7539 = vunpack.c.l.b16 %v6653
        %v7540 = vunpack.c.h.b16 %v6653
        %v7541 = vunpack.c.l.b16 %v6654
        %v7542 = vunpack.c.h.b16 %v6654
        %v7543 = vunpack.c.l.b16 %v6655
        %v7544 = vunpack.c.h.b16 %v6655
        %v7545 = vunpack.c.l.b16 %v6656
        %v7546 = vunpack.c.h.b16 %v6656
        %v7547 = vunpack.c.l.b16 %v6657
        %v7548 = vunpack.c.h.b16 %v6657
        %v7549 = vunpack.c.l.b16 %v6658
        %v7550 = vunpack.c.h.b16 %v6658
        %v7551 = vunpack.c.l.b16 %v6659
        %v7552 = vunpack.c.h.b16 %v6659
        %v7553 = vunpack.c.l.b16 %v6660
        %v7554 = vunpack.c.h.b16 %v6660
        %v7555 = vunpack.c.l.b16 %v6661
        %v7556 = vunpack.c.h.b16 %v6661
        %v7557 = vunpack.c.l.b16 %v6662
        %v7558 = vunpack.c.h.b16 %v6662
        %v7559 = vunpack.c.l.b16 %v6663
        %v7560 = vunpack.c.h.b16 %v6663
        %v7561 = vunpack.c.l.b16 %v6664
        %v7562 = vunpack.c.h.b16 %v6664
        %v7563 = vunpack.c.l.b16 %v6665
        %v7564 = vunpack.c.h.b16 %v6665
        %v7565 = vunpack.c.l.b16 %v6666
        %v7566 = vunpack.c.h.b16 %v6666
        %v7567 = vunpack.c.l.b16 %v6667
        %v7568 = vunpack.c.h.b16 %v6667
        %v7569 = vunpack.c.l.b16 %v6668
        %v7570 = vunpack.c.h.b16 %v6668
        %v7571 = vunpack.c.l.b16 %v6669
        %v7572 = vunpack.c.h.b16 %v6669
        %v7573 = vunpack.c.l.b16 %v6670
        %v7574 = vunpack.c.h.b16 %v6670
        %v7575 = vunpack.c.l.b16 %v6671
        %v7576 = vunpack.c.h.b16 %v6671
        %v7577 = vunpack.c.l.b16 %v6672
        %v7578 = vunpack.c.h.b16 %v6672
        %v7579 = vunpack.c.l.b16 %v6673
        %v7580 = vunpack.c.h.b16 %v6673
        %v7581 = vunpack.c.l.b16 %v6674
        %v7582 = vunpack.c.h.b16 %v6674
        %v7583 = vunpack.c.l.b16 %v6675
        %v7584 = vunpack.c.h.b16 %v6675
        %v7585 = vunpack.c.l.b16 %v6676
        %v7586 = vunpack.c.h.b16 %v6676
        %v7587 = vunpack.c.l.b16 %v6677
        %v7588 = vunpack.c.h.b16 %v6677
        %v7589 = vunpack.c.l.b16 %v6678
        %v7590 = vunpack.c.h.b16 %v6678
        %v7591 = vunpack.c.l.b16 %v6679
        %v7592 = vunpack.c.h.b16 %v6679
        %v7593 = vunpack.c.l.b16 %v6680
        %v7594 = vunpack.c.h.b16 %v6680
        %v7595 = vunpack.c.l.b16 %v6681
        %v7596 = vunpack.c.h.b16 %v6681
        %v7597 = vunpack.c.l.b16 %v6682
        %v7598 = vunpack.c.h.b16 %v6682
        %v7599 = vunpack.c.l.b16 %v6683
        %v7600 = vunpack.c.h.b16 %v6683
        %v7601 = vunpack.c.l.b16 %v6684
        %v7602 = vunpack.c.h.b16 %v6684
        %v7603 = vunpack.c.l.b16 %v6685
        %v7604 = vunpack.c.h.b16 %v6685
        %v7605 = vunpack.c.l.b16 %v6686
        %v7606 = vunpack.c.h.b16 %v6686
        %v7607 = vunpack.c.l.b16 %v6687
        %v7608 = vunpack.c.h.b16 %v6687
        %v7609 = vunpack.c.l.b16 %v6688
        %v7610 = vunpack.c.h.b16 %v6688
        %v7611 = vunpack.c.l.b16 %v6689
        %v7612 = vunpack.c.h.b16 %v6689
        %v7613 = vunpack.c.l.b16 %v6690
        %v7614 = vunpack.c.h.b16 %v6690
        %v7615 = vunpack.c.l.b16 %v6691
        %v7616 = vunpack.c.h.b16 %v6691
        %v7617 = vunpack.c.l.b16 %v6692
        %v7618 = vunpack.c.h.b16 %v6692
        %v7619 = vunpack.c.l.b16 %v6693
        %v7620 = vunpack.c.h.b16 %v6693
        %v7621 = vunpack.c.l.b16 %v6694
        %v7622 = vunpack.c.h.b16 %v6694
        %v7623 = vunpack.c.l.b16 %v6695
        %v7624 = vunpack.c.h.b16 %v6695
        %v7625 = vunpack.c.l.b16 %v6696
        %v7626 = vunpack.c.h.b16 %v6696
        %v7627 = vunpack.c.l.b16 %v6697
        %v7628 = vunpack.c.h.b16 %v6697
        %v7629 = vunpack.c.l.b16 %v6698
        %v7630 = vunpack.c.h.b16 %v6698
        %v7631 = vunpack.c.l.b16 %v6699
        %v7632 = vunpack.c.h.b16 %v6699
        %v7633 = vunpack.c.l.b16 %v6700
        %v7634 = vunpack.c.h.b16 %v6700
        %v7635 = vunpack.c.l.b16 %v6701
        %v7636 = vunpack.c.h.b16 %v6701
        %v7637 = vunpack.c.l.b16 %v6702
        %v7638 = vunpack.c.h.b16 %v6702
        %v7639 = vunpack.c.l.b16 %v6703
        %v7640 = vunpack.c.h.b16 %v6703
        %v7641 = vunpack.c.l.b16 %v6704
        %v7642 = vunpack.c.h.b16 %v6704
        %v7643 = vunpack.c.l.b16 %v6705
        %v7644 = vunpack.c.h.b16 %v6705
        %v7645 = vunpack.c.l.b16 %v6706
        %v7646 = vunpack.c.h.b16 %v6706
        %v7647 = vunpack.c.l.b16 %v6707
        %v7648 = vunpack.c.h.b16 %v6707
        %v7649 = vunpack.c.l.b16 %v6708
        %v7650 = vunpack.c.h.b16 %v6708
        %v7651 = vunpack.c.l.b16 %v6709
        %v7652 = vunpack.c.h.b16 %v6709
        %v7653 = vunpack.c.l.b16 %v6710
        %v7654 = vunpack.c.h.b16 %v6710
        %v7655 = vunpack.c.l.b16 %v6711
        %v7656 = vunpack.c.h.b16 %v6711
        %v7657 = vunpack.c.l.b16 %v6712
        %v7658 = vunpack.c.h.b16 %v6712
        %v7659 = vunpack.c.l.b16 %v6713
        %v7660 = vunpack.c.h.b16 %v6713
        %v7661 = vunpack.c.l.b16 %v6714
        %v7662 = vunpack.c.h.b16 %v6714
        %v7663 = vunpack.c.l.b16 %v6715
        %v7664 = vunpack.c.h.b16 %v6715
        %v7665 = vunpack.c.l.b16 %v6716
        %v7666 = vunpack.c.h.b16 %v6716
        %v7667 = vunpack.c.l.b16 %v6717
        %v7668 = vunpack.c.h.b16 %v6717
        %v7669 = vunpack.c.l.b16 %v6718
        %v7670 = vunpack.c.h.b16 %v6718
        %v7671 = vunpack.c.l.b16 %v6719
        %v7672 = vunpack.c.h.b16 %v6719
        %v7673 = vunpack.c.l.b16 %v6720
        %v7674 = vunpack.c.h.b16 %v6720
        %v7675 = vunpack.c.l.b16 %v6721
        %v7676 = vunpack.c.h.b16 %v6721
        %v7677 = vunpack.c.l.b16 %v6722
        %v7678 = vunpack.c.h.b16 %v6722
        %v7679 = vunpack.c.l.b16 %v6723
        %v7680 = vunpack.c.h.b16 %v6723
        %v7681 = vunpack.c.l.b16 %v6724
        %v7682 = vunpack.c.h.b16 %v6724
        %v7683 = vunpack.c.l.b16 %v6725
        %v7684 = vunpack.c.h.b16 %v6725
        %v7685 = vunpack.c.l.b16 %v6726
        %v7686 = vunpack.c.h.b16 %v6726
        %v7687 = vunpack.c.l.b16 %v6727
        %v7688 = vunpack.c.h.b16 %v6727
        %v7689 = vunpack.c.l.b16 %v6728
        %v7690 = vunpack.c.h.b16 %v6728
        %v7691 = vunpack.c.l.b16 %v6729
        %v7692 = vunpack.c.h.b16 %v6729
        %v7693 = vunpack.c.l.b16 %v6730
        %v7694 = vunpack.c.h.b16 %v6730
        %v7695 = vunpack.c.l.b16 %v6731
        %v7696 = vunpack.c.h.b16 %v6731
        %v7697 = vunpack.c.l.b16 %v6732
        %v7698 = vunpack.c.h.b16 %v6732
        %v7699 = vunpack.c.l.b16 %v6733
        %v7700 = vunpack.c.h.b16 %v6733
        %v7701 = vunpack.c.l.b16 %v6734
        %v7702 = vunpack.c.h.b16 %v6734
        %v7703 = vunpack.c.l.b16 %v6735
        %v7704 = vunpack.c.h.b16 %v6735
        %v7705 = vunpack.c.l.b16 %v6736
        %v7706 = vunpack.c.h.b16 %v6736
        %v7707 = vpack.c.b16 %v7071, %v7067
        %v7708 = vpack.c.b16 %v7072, %v7068
        %v7709 = vpack.c.b16 %v7073, %v7069
        %v7710 = vpack.c.b16 %v7074, %v7070
        %v7711 = vpack.c.b16 %v7079, %v7075
        %v7712 = vpack.c.b16 %v7080, %v7076
        %v7713 = vpack.c.b16 %v7081, %v7077
        %v7714 = vpack.c.b16 %v7082, %v7078
        %v7715 = vpack.c.b16 %v7087, %v7083
        %v7716 = vpack.c.b16 %v7088, %v7084
        %v7717 = vpack.c.b16 %v7089, %v7085
        %v7718 = vpack.c.b16 %v7090, %v7086
        %v7719 = vpack.c.b16 %v7095, %v7091
        %v7720 = vpack.c.b16 %v7096, %v7092
        %v7721 = vpack.c.b16 %v7097, %v7093
        %v7722 = vpack.c.b16 %v7098, %v7094
        %v7723 = vpack.c.b16 %v7103, %v7099
        %v7724 = vpack.c.b16 %v7104, %v7100
        %v7725 = vpack.c.b16 %v7105, %v7101
        %v7726 = vpack.c.b16 %v7106, %v7102
        %v7727 = vpack.c.b16 %v7111, %v7107
        %v7728 = vpack.c.b16 %v7112, %v7108
        %v7729 = vpack.c.b16 %v7113, %v7109
        %v7730 = vpack.c.b16 %v7114, %v7110
        %v7731 = vpack.c.b16 %v7119, %v7115
        %v7732 = vpack.c.b16 %v7120, %v7116
        %v7733 = vpack.c.b16 %v7121, %v7117
        %v7734 = vpack.c.b16 %v7122, %v7118
        %v7735 = vpack.c.b16 %v7127, %v7123
        %v7736 = vpack.c.b16 %v7128, %v7124
        %v7737 = vpack.c.b16 %v7129, %v7125
        %v7738 = vpack.c.b16 %v7130, %v7126
        %v7739 = vpack.c.b16 %v7135, %v7131
        %v7740 = vpack.c.b16 %v7136, %v7132
        %v7741 = vpack.c.b16 %v7137, %v7133
        %v7742 = vpack.c.b16 %v7138, %v7134
        %v7743 = vpack.c.b16 %v7143, %v7139
        %v7744 = vpack.c.b16 %v7144, %v7140
        %v7745 = vpack.c.b16 %v7145, %v7141
        %v7746 = vpack.c.b16 %v7146, %v7142
        %v7747 = vpack.c.b16 %v7151, %v7147
        %v7748 = vpack.c.b16 %v7152, %v7148
        %v7749 = vpack.c.b16 %v7153, %v7149
        %v7750 = vpack.c.b16 %v7154, %v7150
        %v7751 = vpack.c.b16 %v7159, %v7155
        %v7752 = vpack.c.b16 %v7160, %v7156
        %v7753 = vpack.c.b16 %v7161, %v7157
        %v7754 = vpack.c.b16 %v7162, %v7158
        %v7755 = vpack.c.b16 %v7167, %v7163
        %v7756 = vpack.c.b16 %v7168, %v7164
        %v7757 = vpack.c.b16 %v7169, %v7165
        %v7758 = vpack.c.b16 %v7170, %v7166
        %v7759 = vpack.c.b16 %v7175, %v7171
        %v7760 = vpack.c.b16 %v7176, %v7172
        %v7761 = vpack.c.b16 %v7177, %v7173
        %v7762 = vpack.c.b16 %v7178, %v7174
        %v7763 = vpack.c.b16 %v7183, %v7179
        %v7764 = vpack.c.b16 %v7184, %v7180
        %v7765 = vpack.c.b16 %v7185, %v7181
        %v7766 = vpack.c.b16 %v7186, %v7182
        %v7767 = vpack.c.b16 %v7191, %v7187
        %v7768 = vpack.c.b16 %v7192, %v7188
        %v7769 = vpack.c.b16 %v7193, %v7189
        %v7770 = vpack.c.b16 %v7194, %v7190
        %v7771 = vpack.c.b16 %v7199, %v7195
        %v7772 = vpack.c.b16 %v7200, %v7196
        %v7773 = vpack.c.b16 %v7201, %v7197
        %v7774 = vpack.c.b16 %v7202, %v7198
        %v7775 = vpack.c.b16 %v7207, %v7203
        %v7776 = vpack.c.b16 %v7208, %v7204
        %v7777 = vpack.c.b16 %v7209, %v7205
        %v7778 = vpack.c.b16 %v7210, %v7206
        %v7779 = vpack.c.b16 %v7215, %v7211
        %v7780 = vpack.c.b16 %v7216, %v7212
        %v7781 = vpack.c.b16 %v7217, %v7213
        %v7782 = vpack.c.b16 %v7218, %v7214
        %v7783 = vpack.c.b16 %v7223, %v7219
        %v7784 = vpack.c.b16 %v7224, %v7220
        %v7785 = vpack.c.b16 %v7225, %v7221
        %v7786 = vpack.c.b16 %v7226, %v7222
        %v7787 = vpack.c.b16 %v7231, %v7227
        %v7788 = vpack.c.b16 %v7232, %v7228
        %v7789 = vpack.c.b16 %v7233, %v7229
        %v7790 = vpack.c.b16 %v7234, %v7230
        %v7791 = vpack.c.b16 %v7239, %v7235
        %v7792 = vpack.c.b16 %v7240, %v7236
        %v7793 = vpack.c.b16 %v7241, %v7237
        %v7794 = vpack.c.b16 %v7242, %v7238
        %v7795 = vpack.c.b16 %v7247, %v7243
        %v7796 = vpack.c.b16 %v7248, %v7244
        %v7797 = vpack.c.b16 %v7249, %v7245
        %v7798 = vpack.c.b16 %v7250, %v7246
        %v7799 = vpack.c.b16 %v7255, %v7251
        %v7800 = vpack.c.b16 %v7256, %v7252
        %v7801 = vpack.c.b16 %v7257, %v7253
        %v7802 = vpack.c.b16 %v7258, %v7254
        %v7803 = vpack.c.b16 %v7263, %v7259
        %v7804 = vpack.c.b16 %v7264, %v7260
        %v7805 = vpack.c.b16 %v7265, %v7261
        %v7806 = vpack.c.b16 %v7266, %v7262
        %v7807 = vpack.c.b16 %v7271, %v7267
        %v7808 = vpack.c.b16 %v7272, %v7268
        %v7809 = vpack.c.b16 %v7273, %v7269
        %v7810 = vpack.c.b16 %v7274, %v7270
        %v7811 = vpack.c.b16 %v7279, %v7275
        %v7812 = vpack.c.b16 %v7280, %v7276
        %v7813 = vpack.c.b16 %v7281, %v7277
        %v7814 = vpack.c.b16 %v7282, %v7278
        %v7815 = vpack.c.b16 %v7287, %v7283
        %v7816 = vpack.c.b16 %v7288, %v7284
        %v7817 = vpack.c.b16 %v7289, %v7285
        %v7818 = vpack.c.b16 %v7290, %v7286
        %v7819 = vpack.c.b16 %v7295, %v7291
        %v7820 = vpack.c.b16 %v7296, %v7292
        %v7821 = vpack.c.b16 %v7297, %v7293
        %v7822 = vpack.c.b16 %v7298, %v7294
        %v7823 = vpack.c.b16 %v7303, %v7299
        %v7824 = vpack.c.b16 %v7304, %v7300
        %v7825 = vpack.c.b16 %v7305, %v7301
        %v7826 = vpack.c.b16 %v7306, %v7302
        %v7827 = vpack.c.b16 %v7311, %v7307
        %v7828 = vpack.c.b16 %v7312, %v7308
        %v7829 = vpack.c.b16 %v7313, %v7309
        %v7830 = vpack.c.b16 %v7314, %v7310
        %v7831 = vpack.c.b16 %v7319, %v7315
        %v7832 = vpack.c.b16 %v7320, %v7316
        %v7833 = vpack.c.b16 %v7321, %v7317
        %v7834 = vpack.c.b16 %v7322, %v7318
        %v7835 = vpack.c.b16 %v7327, %v7323
        %v7836 = vpack.c.b16 %v7328, %v7324
        %v7837 = vpack.c.b16 %v7329, %v7325
        %v7838 = vpack.c.b16 %v7330, %v7326
        %v7839 = vpack.c.b16 %v7335, %v7331
        %v7840 = vpack.c.b16 %v7336, %v7332
        %v7841 = vpack.c.b16 %v7337, %v7333
        %v7842 = vpack.c.b16 %v7338, %v7334
        %v7843 = vpack.c.b16 %v7343, %v7339
        %v7844 = vpack.c.b16 %v7344, %v7340
        %v7845 = vpack.c.b16 %v7345, %v7341
        %v7846 = vpack.c.b16 %v7346, %v7342
        %v7847 = vpack.c.b16 %v7351, %v7347
        %v7848 = vpack.c.b16 %v7352, %v7348
        %v7849 = vpack.c.b16 %v7353, %v7349
        %v7850 = vpack.c.b16 %v7354, %v7350
        %v7851 = vpack.c.b16 %v7359, %v7355
        %v7852 = vpack.c.b16 %v7360, %v7356
        %v7853 = vpack.c.b16 %v7361, %v7357
        %v7854 = vpack.c.b16 %v7362, %v7358
        %v7855 = vpack.c.b16 %v7367, %v7363
        %v7856 = vpack.c.b16 %v7368, %v7364
        %v7857 = vpack.c.b16 %v7369, %v7365
        %v7858 = vpack.c.b16 %v7370, %v7366
        %v7859 = vpack.c.b16 %v7375, %v7371
        %v7860 = vpack.c.b16 %v7376, %v7372
        %v7861 = vpack.c.b16 %v7377, %v7373
        %v7862 = vpack.c.b16 %v7378, %v7374
        %v7863 = vpack.c.b16 %v7383, %v7379
        %v7864 = vpack.c.b16 %v7384, %v7380
        %v7865 = vpack.c.b16 %v7385, %v7381
        %v7866 = vpack.c.b16 %v7386, %v7382
        %v7867 = vpack.c.b16 %v7391, %v7387
        %v7868 = vpack.c.b16 %v7392, %v7388
        %v7869 = vpack.c.b16 %v7393, %v7389
        %v7870 = vpack.c.b16 %v7394, %v7390
        %v7871 = vpack.c.b16 %v7399, %v7395
        %v7872 = vpack.c.b16 %v7400, %v7396
        %v7873 = vpack.c.b16 %v7401, %v7397
        %v7874 = vpack.c.b16 %v7402, %v7398
        %v7875 = vpack.c.b16 %v7407, %v7403
        %v7876 = vpack.c.b16 %v7408, %v7404
        %v7877 = vpack.c.b16 %v7409, %v7405
        %v7878 = vpack.c.b16 %v7410, %v7406
        %v7879 = vpack.c.b16 %v7415, %v7411
        %v7880 = vpack.c.b16 %v7416, %v7412
        %v7881 = vpack.c.b16 %v7417, %v7413
        %v7882 = vpack.c.b16 %v7418, %v7414
        %v7883 = vpack.c.b16 %v7423, %v7419
        %v7884 = vpack.c.b16 %v7424, %v7420
        %v7885 = vpack.c.b16 %v7425, %v7421
        %v7886 = vpack.c.b16 %v7426, %v7422
        %v7887 = vpack.c.b16 %v7431, %v7427
        %v7888 = vpack.c.b16 %v7432, %v7428
        %v7889 = vpack.c.b16 %v7433, %v7429
        %v7890 = vpack.c.b16 %v7434, %v7430
        %v7891 = vpack.c.b16 %v7439, %v7435
        %v7892 = vpack.c.b16 %v7440, %v7436
        %v7893 = vpack.c.b16 %v7441, %v7437
        %v7894 = vpack.c.b16 %v7442, %v7438
        %v7895 = vpack.c.b16 %v7447, %v7443
        %v7896 = vpack.c.b16 %v7448, %v7444
        %v7897 = vpack.c.b16 %v7449, %v7445
        %v7898 = vpack.c.b16 %v7450, %v7446
        %v7899 = vpack.c.b16 %v7455, %v7451
        %v7900 = vpack.c.b16 %v7456, %v7452
        %v7901 = vpack.c.b16 %v7457, %v7453
        %v7902 = vpack.c.b16 %v7458, %v7454
        %v7903 = vpack.c.b16 %v7463, %v7459
        %v7904 = vpack.c.b16 %v7464, %v7460
        %v7905 = vpack.c.b16 %v7465, %v7461
        %v7906 = vpack.c.b16 %v7466, %v7462
        %v7907 = vpack.c.b16 %v7471, %v7467
        %v7908 = vpack.c.b16 %v7472, %v7468
        %v7909 = vpack.c.b16 %v7473, %v7469
        %v7910 = vpack.c.b16 %v7474, %v7470
        %v7911 = vpack.c.b16 %v7479, %v7475
        %v7912 = vpack.c.b16 %v7480, %v7476
        %v7913 = vpack.c.b16 %v7481, %v7477
        %v7914 = vpack.c.b16 %v7482, %v7478
        %v7915 = vpack.c.b16 %v7487, %v7483
        %v7916 = vpack.c.b16 %v7488, %v7484
        %v7917 = vpack.c.b16 %v7489, %v7485
        %v7918 = vpack.c.b16 %v7490, %v7486
        %v7919 = vpack.c.b16 %v7495, %v7491
        %v7920 = vpack.c.b16 %v7496, %v7492
        %v7921 = vpack.c.b16 %v7497, %v7493
        %v7922 = vpack.c.b16 %v7498, %v7494
        %v7923 = vpack.c.b16 %v7503, %v7499
        %v7924 = vpack.c.b16 %v7504, %v7500
        %v7925 = vpack.c.b16 %v7505, %v7501
        %v7926 = vpack.c.b16 %v7506, %v7502
        %v7927 = vpack.c.b16 %v7511, %v7507
        %v7928 = vpack.c.b16 %v7512, %v7508
        %v7929 = vpack.c.b16 %v7513, %v7509
        %v7930 = vpack.c.b16 %v7514, %v7510
        %v7931 = vpack.c.b16 %v7519, %v7515
        %v7932 = vpack.c.b16 %v7520, %v7516
        %v7933 = vpack.c.b16 %v7521, %v7517
        %v7934 = vpack.c.b16 %v7522, %v7518
        %v7935 = vpack.c.b16 %v7527, %v7523
        %v7936 = vpack.c.b16 %v7528, %v7524
        %v7937 = vpack.c.b16 %v7529, %v7525
        %v7938 = vpack.c.b16 %v7530, %v7526
        %v7939 = vpack.c.b16 %v7535, %v7531
        %v7940 = vpack.c.b16 %v7536, %v7532
        %v7941 = vpack.c.b16 %v7537, %v7533
        %v7942 = vpack.c.b16 %v7538, %v7534
        %v7943 = vpack.c.b16 %v7543, %v7539
        %v7944 = vpack.c.b16 %v7544, %v7540
        %v7945 = vpack.c.b16 %v7545, %v7541
        %v7946 = vpack.c.b16 %v7546, %v7542
        %v7947 = vpack.c.b16 %v7551, %v7547
        %v7948 = vpack.c.b16 %v7552, %v7548
        %v7949 = vpack.c.b16 %v7553, %v7549
        %v7950 = vpack.c.b16 %v7554, %v7550
        %v7951 = vpack.c.b16 %v7559, %v7555
        %v7952 = vpack.c.b16 %v7560, %v7556
        %v7953 = vpack.c.b16 %v7561, %v7557
        %v7954 = vpack.c.b16 %v7562, %v7558
        %v7955 = vpack.c.b16 %v7567, %v7563
        %v7956 = vpack.c.b16 %v7568, %v7564
        %v7957 = vpack.c.b16 %v7569, %v7565
        %v7958 = vpack.c.b16 %v7570, %v7566
        %v7959 = vpack.c.b16 %v7575, %v7571
        %v7960 = vpack.c.b16 %v7576, %v7572
        %v7961 = vpack.c.b16 %v7577, %v7573
        %v7962 = vpack.c.b16 %v7578, %v7574
        %v7963 = vpack.c.b16 %v7583, %v7579
        %v7964 = vpack.c.b16 %v7584, %v7580
        %v7965 = vpack.c.b16 %v7585, %v7581
        %v7966 = vpack.c.b16 %v7586, %v7582
        %v7967 = vpack.c.b16 %v7591, %v7587
        %v7968 = vpack.c.b16 %v7592, %v7588
        %v7969 = vpack.c.b16 %v7593, %v7589
        %v7970 = vpack.c.b16 %v7594, %v7590
        %v7971 = vpack.c.b16 %v7599, %v7595
        %v7972 = vpack.c.b16 %v7600, %v7596
        %v7973 = vpack.c.b16 %v7601, %v7597
        %v7974 = vpack.c.b16 %v7602, %v7598
        %v7975 = vpack.c.b16 %v7607, %v7603
        %v7976 = vpack.c.b16 %v7608, %v7604
        %v7977 = vpack.c.b16 %v7609, %v7605
        %v7978 = vpack.c.b16 %v7610, %v7606
        %v7979 = vpack.c.b16 %v7615, %v7611
        %v7980 = vpack.c.b16 %v7616, %v7612
        %v7981 = vpack.c.b16 %v7617, %v7613
        %v7982 = vpack.c.b16 %v7618, %v7614
        %v7983 = vpack.c.b16 %v7623, %v7619
        %v7984 = vpack.c.b16 %v7624, %v7620
        %v7985 = vpack.c.b16 %v7625, %v7621
        %v7986 = vpack.c.b16 %v7626, %v7622
        %v7987 = vpack.c.b16 %v7631, %v7627
        %v7988 = vpack.c.b16 %v7632, %v7628
        %v7989 = vpack.c.b16 %v7633, %v7629
        %v7990 = vpack.c.b16 %v7634, %v7630
        %v7991 = vpack.c.b16 %v7639, %v7635
        %v7992 = vpack.c.b16 %v7640, %v7636
        %v7993 = vpack.c.b16 %v7641, %v7637
        %v7994 = vpack.c.b16 %v7642, %v7638
        %v7995 = vpack.c.b16 %v7647, %v7643
        %v7996 = vpack.c.b16 %v7648, %v7644
        %v7997 = vpack.c.b16 %v7649, %v7645
        %v7998 = vpack.c.b16 %v7650, %v7646
        %v7999 = vpack.c.b16 %v7655, %v7651
        %v8000 = vpack.c.b16 %v7656, %v7652
        %v8001 = vpack.c.b16 %v7657, %v7653
        %v8002 = vpack.c.b16 %v7658, %v7654
        %v8003 = vpack.c.b16 %v7663, %v7659
        %v8004 = vpack.c.b16 %v7664, %v7660
        %v8005 = vpack.c.b16 %v7665, %v7661
        %v8006 = vpack.c.b16 %v7666, %v7662
        %v8007 = vpack.c.b16 %v7671, %v7667
        %v8008 = vpack.c.b16 %v7672, %v7668
        %v8009 = vpack.c.b16 %v7673, %v7669
        %v8010 = vpack.c.b16 %v7674, %v7670
        %v8011 = vpack.c.b16 %v7679, %v7675
        %v8012 = vpack.c.b16 %v7680, %v7676
        %v8013 = vpack.c.b16 %v7681, %v7677
        %v8014 = vpack.c.b16 %v7682, %v7678
        %v8015 = vpack.c.b16 %v7687, %v7683
        %v8016 = vpack.c.b16 %v7688, %v7684
        %v8017 = vpack.c.b16 %v7689, %v7685
        %v8018 = vpack.c.b16 %v7690, %v7686
        %v8019 = vpack.c.b16 %v7695, %v7691
        %v8020 = vpack.c.b16 %v7696, %v7692
        %v8021 = vpack.c.b16 %v7697, %v7693
        %v8022 = vpack.c.b16 %v7698, %v7694
        %v8023 = vpack.c.b16 %v7703, %v7699
        %v8024 = vpack.c.b16 %v7704, %v7700
        %v8025 = vpack.c.b16 %v7705, %v7701
        %v8026 = vpack.c.b16 %v7706, %v7702
        %8347 = vmatpush.bf16.msra.mxu0 %v7735
        %8348 = vmatpush.bf16.msra.mxu0 %v7731
        %8349 = vmatpush.bf16.msra.mxu0 %v7727
        %8350 = vmatpush.bf16.msra.mxu0 %v7723
        %8351 = vmatpush.bf16.msra.mxu0 %v7719
        %8352 = vmatpush.bf16.msra.mxu0 %v7715
        %8353 = vmatpush.bf16.msra.mxu0 %v7711
        %8354 = vmatpush.bf16.msra.mxu0 %v7707
        %8355 = vmatmul.bf16.gmra.mxu0 %v6377
        %v8356 = vpop.f32.mrf.mxu0
        %v8357 = vadd.f32 %v6739, %v8356
        %v8358 = vpop.f32.mrf.mxu0
        %v8359 = vadd.f32 %v6739, %v8358
        %8360 = vmatmul.bf16.gmra.mxu0 %v6387
        %v8361 = vpop.f32.mrf.mxu0
        %v8362 = vadd.f32 %v6739, %v8361
        %v8363 = vpop.f32.mrf.mxu0
        %v8364 = vadd.f32 %v6739, %v8363
        %8365 = vmatmul.bf16.gmra.mxu0 %v6397
        %v8366 = vpop.f32.mrf.mxu0
        %v8367 = vadd.f32 %v6739, %v8366
        %v8368 = vpop.f32.mrf.mxu0
        %v8369 = vadd.f32 %v6739, %v8368
        %8370 = vmatmul.bf16.gmra.mxu0 %v6407
        %v8371 = vpop.f32.mrf.mxu0
        %v8372 = vadd.f32 %v6739, %v8371
        %v8373 = vpop.f32.mrf.mxu0
        %v8374 = vadd.f32 %v6739, %v8373
        %8375 = vdwg.mxu0
        %8376 = vmatpush.bf16.msra.mxu0 %v7767
        %8377 = vmatpush.bf16.msra.mxu0 %v7763
        %8378 = vmatpush.bf16.msra.mxu0 %v7759
        %8379 = vmatpush.bf16.msra.mxu0 %v7755
        %8380 = vmatpush.bf16.msra.mxu0 %v7751
        %8381 = vmatpush.bf16.msra.mxu0 %v7747
        %8382 = vmatpush.bf16.msra.mxu0 %v7743
        %8383 = vmatpush.bf16.msra.mxu0 %v7739
        %8384 = vmatmul.bf16.gmra.mxu0 %v6378
        %v8385 = vpop.f32.mrf.mxu0
        %v8386 = vadd.f32 %v8357, %v8385
        %v8387 = vpop.f32.mrf.mxu0
        %v8388 = vadd.f32 %v8359, %v8387
        %8389 = vmatmul.bf16.gmra.mxu0 %v6388
        %v8390 = vpop.f32.mrf.mxu0
        %v8391 = vadd.f32 %v8362, %v8390
        %v8392 = vpop.f32.mrf.mxu0
        %v8393 = vadd.f32 %v8364, %v8392
        %8394 = vmatmul.bf16.gmra.mxu0 %v6398
        %v8395 = vpop.f32.mrf.mxu0
        %v8396 = vadd.f32 %v8367, %v8395
        %v8397 = vpop.f32.mrf.mxu0
        %v8398 = vadd.f32 %v8369, %v8397
        %8399 = vmatmul.bf16.gmra.mxu0 %v6408
        %v8400 = vpop.f32.mrf.mxu0
        %v8401 = vadd.f32 %v8372, %v8400
        %v8402 = vpop.f32.mrf.mxu0
        %v8403 = vadd.f32 %v8374, %v8402
        %8404 = vdwg.mxu0
        %8405 = vmatpush.bf16.msra.mxu0 %v7799
        %8406 = vmatpush.bf16.msra.mxu0 %v7795
        %8407 = vmatpush.bf16.msra.mxu0 %v7791
        %8408 = vmatpush.bf16.msra.mxu0 %v7787
        %8409 = vmatpush.bf16.msra.mxu0 %v7783
        %8410 = vmatpush.bf16.msra.mxu0 %v7779
        %8411 = vmatpush.bf16.msra.mxu0 %v7775
        %8412 = vmatpush.bf16.msra.mxu0 %v7771
        %8413 = vmatmul.bf16.gmra.mxu0 %v6379
        %v8414 = vpop.f32.mrf.mxu0
        %v8415 = vadd.f32 %v8386, %v8414
        %v8416 = vpop.f32.mrf.mxu0
        %v8417 = vadd.f32 %v8388, %v8416
        %8418 = vmatmul.bf16.gmra.mxu0 %v6389
        %v8419 = vpop.f32.mrf.mxu0
        %v8420 = vadd.f32 %v8391, %v8419
        %v8421 = vpop.f32.mrf.mxu0
        %v8422 = vadd.f32 %v8393, %v8421
        %8423 = vmatmul.bf16.gmra.mxu0 %v6399
        %v8424 = vpop.f32.mrf.mxu0
        %v8425 = vadd.f32 %v8396, %v8424
        %v8426 = vpop.f32.mrf.mxu0
        %v8427 = vadd.f32 %v8398, %v8426
        %8428 = vmatmul.bf16.gmra.mxu0 %v6409
        %v8429 = vpop.f32.mrf.mxu0
        %v8430 = vadd.f32 %v8401, %v8429
        %v8431 = vpop.f32.mrf.mxu0
        %v8432 = vadd.f32 %v8403, %v8431
        %8433 = vdwg.mxu0
        %8434 = vmatpush.bf16.msra.mxu0 %v7831
        %8435 = vmatpush.bf16.msra.mxu0 %v7827
        %8436 = vmatpush.bf16.msra.mxu0 %v7823
        %8437 = vmatpush.bf16.msra.mxu0 %v7819
        %8438 = vmatpush.bf16.msra.mxu0 %v7815
        %8439 = vmatpush.bf16.msra.mxu0 %v7811
        %8440 = vmatpush.bf16.msra.mxu0 %v7807
        %8441 = vmatpush.bf16.msra.mxu0 %v7803
        %8442 = vmatmul.bf16.gmra.mxu0 %v6380
        %v8443 = vpop.f32.mrf.mxu0
        %v8444 = vadd.f32 %v8415, %v8443
        %v8445 = vpop.f32.mrf.mxu0
        %v8446 = vadd.f32 %v8417, %v8445
        %8447 = vmatmul.bf16.gmra.mxu0 %v6390
        %v8448 = vpop.f32.mrf.mxu0
        %v8449 = vadd.f32 %v8420, %v8448
        %v8450 = vpop.f32.mrf.mxu0
        %v8451 = vadd.f32 %v8422, %v8450
        %8452 = vmatmul.bf16.gmra.mxu0 %v6400
        %v8453 = vpop.f32.mrf.mxu0
        %v8454 = vadd.f32 %v8425, %v8453
        %v8455 = vpop.f32.mrf.mxu0
        %v8456 = vadd.f32 %v8427, %v8455
        %8457 = vmatmul.bf16.gmra.mxu0 %v6410
        %v8458 = vpop.f32.mrf.mxu0
        %v8459 = vadd.f32 %v8430, %v8458
        %v8460 = vpop.f32.mrf.mxu0
        %v8461 = vadd.f32 %v8432, %v8460
        %8462 = vdwg.mxu0
        %8463 = vmatpush.bf16.msra.mxu0 %v7863
        %8464 = vmatpush.bf16.msra.mxu0 %v7859
        %8465 = vmatpush.bf16.msra.mxu0 %v7855
        %8466 = vmatpush.bf16.msra.mxu0 %v7851
        %8467 = vmatpush.bf16.msra.mxu0 %v7847
        %8468 = vmatpush.bf16.msra.mxu0 %v7843
        %8469 = vmatpush.bf16.msra.mxu0 %v7839
        %8470 = vmatpush.bf16.msra.mxu0 %v7835
        %8471 = vmatmul.bf16.gmra.mxu0 %v6381
        %v8472 = vpop.f32.mrf.mxu0
        %v8473 = vadd.f32 %v8444, %v8472
        %v8474 = vpop.f32.mrf.mxu0
        %v8475 = vadd.f32 %v8446, %v8474
        %8476 = vmatmul.bf16.gmra.mxu0 %v6391
        %v8477 = vpop.f32.mrf.mxu0
        %v8478 = vadd.f32 %v8449, %v8477
        %v8479 = vpop.f32.mrf.mxu0
        %v8480 = vadd.f32 %v8451, %v8479
        %8481 = vmatmul.bf16.gmra.mxu0 %v6401
        %v8482 = vpop.f32.mrf.mxu0
        %v8483 = vadd.f32 %v8454, %v8482
        %v8484 = vpop.f32.mrf.mxu0
        %v8485 = vadd.f32 %v8456, %v8484
        %8486 = vmatmul.bf16.gmra.mxu0 %v6411
        %v8487 = vpop.f32.mrf.mxu0
        %v8488 = vadd.f32 %v8459, %v8487
        %v8489 = vpop.f32.mrf.mxu0
        %v8490 = vadd.f32 %v8461, %v8489
        %8491 = vdwg.mxu0
        %8492 = vmatpush.bf16.msra.mxu0 %v7895
        %8493 = vmatpush.bf16.msra.mxu0 %v7891
        %8494 = vmatpush.bf16.msra.mxu0 %v7887
        %8495 = vmatpush.bf16.msra.mxu0 %v7883
        %8496 = vmatpush.bf16.msra.mxu0 %v7879
        %8497 = vmatpush.bf16.msra.mxu0 %v7875
        %8498 = vmatpush.bf16.msra.mxu0 %v7871
        %8499 = vmatpush.bf16.msra.mxu0 %v7867
        %8500 = vmatmul.bf16.gmra.mxu0 %v6382
        %v8501 = vpop.f32.mrf.mxu0
        %v8502 = vadd.f32 %v8473, %v8501
        %v8503 = vpop.f32.mrf.mxu0
        %v8504 = vadd.f32 %v8475, %v8503
        %8505 = vmatmul.bf16.gmra.mxu0 %v6392
        %v8506 = vpop.f32.mrf.mxu0
        %v8507 = vadd.f32 %v8478, %v8506
        %v8508 = vpop.f32.mrf.mxu0
        %v8509 = vadd.f32 %v8480, %v8508
        %8510 = vmatmul.bf16.gmra.mxu0 %v6402
        %v8511 = vpop.f32.mrf.mxu0
        %v8512 = vadd.f32 %v8483, %v8511
        %v8513 = vpop.f32.mrf.mxu0
        %v8514 = vadd.f32 %v8485, %v8513
        %8515 = vmatmul.bf16.gmra.mxu0 %v6412
        %v8516 = vpop.f32.mrf.mxu0
        %v8517 = vadd.f32 %v8488, %v8516
        %v8518 = vpop.f32.mrf.mxu0
        %v8519 = vadd.f32 %v8490, %v8518
        %8520 = vdwg.mxu0
        %8521 = vmatpush.bf16.msra.mxu0 %v7927
        %8522 = vmatpush.bf16.msra.mxu0 %v7923
        %8523 = vmatpush.bf16.msra.mxu0 %v7919
        %8524 = vmatpush.bf16.msra.mxu0 %v7915
        %8525 = vmatpush.bf16.msra.mxu0 %v7911
        %8526 = vmatpush.bf16.msra.mxu0 %v7907
        %8527 = vmatpush.bf16.msra.mxu0 %v7903
        %8528 = vmatpush.bf16.msra.mxu0 %v7899
        %8529 = vmatmul.bf16.gmra.mxu0 %v6383
        %v8530 = vpop.f32.mrf.mxu0
        %v8531 = vadd.f32 %v8502, %v8530
        %v8532 = vpop.f32.mrf.mxu0
        %v8533 = vadd.f32 %v8504, %v8532
        %8534 = vmatmul.bf16.gmra.mxu0 %v6393
        %v8535 = vpop.f32.mrf.mxu0
        %v8536 = vadd.f32 %v8507, %v8535
        %v8537 = vpop.f32.mrf.mxu0
        %v8538 = vadd.f32 %v8509, %v8537
        %8539 = vmatmul.bf16.gmra.mxu0 %v6403
        %v8540 = vpop.f32.mrf.mxu0
        %v8541 = vadd.f32 %v8512, %v8540
        %v8542 = vpop.f32.mrf.mxu0
        %v8543 = vadd.f32 %v8514, %v8542
        %8544 = vmatmul.bf16.gmra.mxu0 %v6413
        %v8545 = vpop.f32.mrf.mxu0
        %v8546 = vadd.f32 %v8517, %v8545
        %v8547 = vpop.f32.mrf.mxu0
        %v8548 = vadd.f32 %v8519, %v8547
        %8549 = vdwg.mxu0
        %8550 = vmatpush.bf16.msra.mxu0 %v7959
        %8551 = vmatpush.bf16.msra.mxu0 %v7955
        %8552 = vmatpush.bf16.msra.mxu0 %v7951
        %8553 = vmatpush.bf16.msra.mxu0 %v7947
        %8554 = vmatpush.bf16.msra.mxu0 %v7943
        %8555 = vmatpush.bf16.msra.mxu0 %v7939
        %8556 = vmatpush.bf16.msra.mxu0 %v7935
        %8557 = vmatpush.bf16.msra.mxu0 %v7931
        %8558 = vmatmul.bf16.gmra.mxu0 %v6384
        %v8559 = vpop.f32.mrf.mxu0
        %v8560 = vadd.f32 %v8531, %v8559
        %v8561 = vpop.f32.mrf.mxu0
        %v8562 = vadd.f32 %v8533, %v8561
        %8563 = vmatmul.bf16.gmra.mxu0 %v6394
        %v8564 = vpop.f32.mrf.mxu0
        %v8565 = vadd.f32 %v8536, %v8564
        %v8566 = vpop.f32.mrf.mxu0
        %v8567 = vadd.f32 %v8538, %v8566
        %8568 = vmatmul.bf16.gmra.mxu0 %v6404
        %v8569 = vpop.f32.mrf.mxu0
        %v8570 = vadd.f32 %v8541, %v8569
        %v8571 = vpop.f32.mrf.mxu0
        %v8572 = vadd.f32 %v8543, %v8571
        %8573 = vmatmul.bf16.gmra.mxu0 %v6414
        %v8574 = vpop.f32.mrf.mxu0
        %v8575 = vadd.f32 %v8546, %v8574
        %v8576 = vpop.f32.mrf.mxu0
        %v8577 = vadd.f32 %v8548, %v8576
        %8578 = vdwg.mxu0
        %8579 = vmatpush.bf16.msra.mxu0 %v7991
        %8580 = vmatpush.bf16.msra.mxu0 %v7987
        %8581 = vmatpush.bf16.msra.mxu0 %v7983
        %8582 = vmatpush.bf16.msra.mxu0 %v7979
        %8583 = vmatpush.bf16.msra.mxu0 %v7975
        %8584 = vmatpush.bf16.msra.mxu0 %v7971
        %8585 = vmatpush.bf16.msra.mxu0 %v7967
        %8586 = vmatpush.bf16.msra.mxu0 %v7963
        %8587 = vmatmul.bf16.gmra.mxu0 %v6385
        %v8588 = vpop.f32.mrf.mxu0
        %v8589 = vadd.f32 %v8560, %v8588
        %v8590 = vpop.f32.mrf.mxu0
        %v8591 = vadd.f32 %v8562, %v8590
        %8592 = vmatmul.bf16.gmra.mxu0 %v6395
        %v8593 = vpop.f32.mrf.mxu0
        %v8594 = vadd.f32 %v8565, %v8593
        %v8595 = vpop.f32.mrf.mxu0
        %v8596 = vadd.f32 %v8567, %v8595
        %8597 = vmatmul.bf16.gmra.mxu0 %v6405
        %v8598 = vpop.f32.mrf.mxu0
        %v8599 = vadd.f32 %v8570, %v8598
        %v8600 = vpop.f32.mrf.mxu0
        %v8601 = vadd.f32 %v8572, %v8600
        %8602 = vmatmul.bf16.gmra.mxu0 %v6415
        %v8603 = vpop.f32.mrf.mxu0
        %v8604 = vadd.f32 %v8575, %v8603
        %v8605 = vpop.f32.mrf.mxu0
        %v8606 = vadd.f32 %v8577, %v8605
        %8607 = vdwg.mxu0
        %8608 = vmatpush.bf16.msra.mxu0 %v8023
        %8609 = vmatpush.bf16.msra.mxu0 %v8019
        %8610 = vmatpush.bf16.msra.mxu0 %v8015
        %8611 = vmatpush.bf16.msra.mxu0 %v8011
        %8612 = vmatpush.bf16.msra.mxu0 %v8007
        %8613 = vmatpush.bf16.msra.mxu0 %v8003
        %8614 = vmatpush.bf16.msra.mxu0 %v7999
        %8615 = vmatpush.bf16.msra.mxu0 %v7995
        %8616 = vmatmul.bf16.gmra.mxu0 %v6386
        %v8617 = vpop.f32.mrf.mxu0
        %v8618 = vadd.f32 %v8589, %v8617
        %v8619 = vpop.f32.mrf.mxu0
        %v8620 = vadd.f32 %v8591, %v8619
        %8621 = vmatmul.bf16.gmra.mxu0 %v6396
        %v8622 = vpop.f32.mrf.mxu0
        %v8623 = vadd.f32 %v8594, %v8622
        %v8624 = vpop.f32.mrf.mxu0
        %v8625 = vadd.f32 %v8596, %v8624
        %8626 = vmatmul.bf16.gmra.mxu0 %v6406
        %v8627 = vpop.f32.mrf.mxu0
        %v8628 = vadd.f32 %v8599, %v8627
        %v8629 = vpop.f32.mrf.mxu0
        %v8630 = vadd.f32 %v8601, %v8629
        %8631 = vmatmul.bf16.gmra.mxu0 %v6416
        %v8632 = vpop.f32.mrf.mxu0
        %v8633 = vadd.f32 %v8604, %v8632
        %v8634 = vpop.f32.mrf.mxu0
        %v8635 = vadd.f32 %v8606, %v8634
        %8636 = vdwg.mxu0
        %8637 = vmatpush.bf16.msra.mxu0 %v7736
        %8638 = vmatpush.bf16.msra.mxu0 %v7732
        %8639 = vmatpush.bf16.msra.mxu0 %v7728
        %8640 = vmatpush.bf16.msra.mxu0 %v7724
        %8641 = vmatpush.bf16.msra.mxu0 %v7720
        %8642 = vmatpush.bf16.msra.mxu0 %v7716
        %8643 = vmatpush.bf16.msra.mxu0 %v7712
        %8644 = vmatpush.bf16.msra.mxu0 %v7708
        %8645 = vmatmul.bf16.gmra.mxu0 %v6377
        %v8646 = vpop.f32.mrf.mxu0
        %v8647 = vadd.f32 %v6740, %v8646
        %v8648 = vpop.f32.mrf.mxu0
        %v8649 = vadd.f32 %v6740, %v8648
        %8650 = vmatmul.bf16.gmra.mxu0 %v6387
        %v8651 = vpop.f32.mrf.mxu0
        %v8652 = vadd.f32 %v6740, %v8651
        %v8653 = vpop.f32.mrf.mxu0
        %v8654 = vadd.f32 %v6740, %v8653
        %8655 = vmatmul.bf16.gmra.mxu0 %v6397
        %v8656 = vpop.f32.mrf.mxu0
        %v8657 = vadd.f32 %v6740, %v8656
        %v8658 = vpop.f32.mrf.mxu0
        %v8659 = vadd.f32 %v6740, %v8658
        %8660 = vmatmul.bf16.gmra.mxu0 %v6407
        %v8661 = vpop.f32.mrf.mxu0
        %v8662 = vadd.f32 %v6740, %v8661
        %v8663 = vpop.f32.mrf.mxu0
        %v8664 = vadd.f32 %v6740, %v8663
        %8665 = vdwg.mxu0
        %8666 = vmatpush.bf16.msra.mxu0 %v7768
        %8667 = vmatpush.bf16.msra.mxu0 %v7764
        %8668 = vmatpush.bf16.msra.mxu0 %v7760
        %8669 = vmatpush.bf16.msra.mxu0 %v7756
        %8670 = vmatpush.bf16.msra.mxu0 %v7752
        %8671 = vmatpush.bf16.msra.mxu0 %v7748
        %8672 = vmatpush.bf16.msra.mxu0 %v7744
        %8673 = vmatpush.bf16.msra.mxu0 %v7740
        %8674 = vmatmul.bf16.gmra.mxu0 %v6378
        %v8675 = vpop.f32.mrf.mxu0
        %v8676 = vadd.f32 %v8647, %v8675
        %v8677 = vpop.f32.mrf.mxu0
        %v8678 = vadd.f32 %v8649, %v8677
        %8679 = vmatmul.bf16.gmra.mxu0 %v6388
        %v8680 = vpop.f32.mrf.mxu0
        %v8681 = vadd.f32 %v8652, %v8680
        %v8682 = vpop.f32.mrf.mxu0
        %v8683 = vadd.f32 %v8654, %v8682
        %8684 = vmatmul.bf16.gmra.mxu0 %v6398
        %v8685 = vpop.f32.mrf.mxu0
        %v8686 = vadd.f32 %v8657, %v8685
        %v8687 = vpop.f32.mrf.mxu0
        %v8688 = vadd.f32 %v8659, %v8687
        %8689 = vmatmul.bf16.gmra.mxu0 %v6408
        %v8690 = vpop.f32.mrf.mxu0
        %v8691 = vadd.f32 %v8662, %v8690
        %v8692 = vpop.f32.mrf.mxu0
        %v8693 = vadd.f32 %v8664, %v8692
        %8694 = vdwg.mxu0
        %8695 = vmatpush.bf16.msra.mxu0 %v7800
        %8696 = vmatpush.bf16.msra.mxu0 %v7796
        %8697 = vmatpush.bf16.msra.mxu0 %v7792
        %8698 = vmatpush.bf16.msra.mxu0 %v7788
        %8699 = vmatpush.bf16.msra.mxu0 %v7784
        %8700 = vmatpush.bf16.msra.mxu0 %v7780
        %8701 = vmatpush.bf16.msra.mxu0 %v7776
        %8702 = vmatpush.bf16.msra.mxu0 %v7772
        %8703 = vmatmul.bf16.gmra.mxu0 %v6379
        %v8704 = vpop.f32.mrf.mxu0
        %v8705 = vadd.f32 %v8676, %v8704
        %v8706 = vpop.f32.mrf.mxu0
        %v8707 = vadd.f32 %v8678, %v8706
        %8708 = vmatmul.bf16.gmra.mxu0 %v6389
        %v8709 = vpop.f32.mrf.mxu0
        %v8710 = vadd.f32 %v8681, %v8709
        %v8711 = vpop.f32.mrf.mxu0
        %v8712 = vadd.f32 %v8683, %v8711
        %8713 = vmatmul.bf16.gmra.mxu0 %v6399
        %v8714 = vpop.f32.mrf.mxu0
        %v8715 = vadd.f32 %v8686, %v8714
        %v8716 = vpop.f32.mrf.mxu0
        %v8717 = vadd.f32 %v8688, %v8716
        %8718 = vmatmul.bf16.gmra.mxu0 %v6409
        %v8719 = vpop.f32.mrf.mxu0
        %v8720 = vadd.f32 %v8691, %v8719
        %v8721 = vpop.f32.mrf.mxu0
        %v8722 = vadd.f32 %v8693, %v8721
        %8723 = vdwg.mxu0
        %8724 = vmatpush.bf16.msra.mxu0 %v7832
        %8725 = vmatpush.bf16.msra.mxu0 %v7828
        %8726 = vmatpush.bf16.msra.mxu0 %v7824
        %8727 = vmatpush.bf16.msra.mxu0 %v7820
        %8728 = vmatpush.bf16.msra.mxu0 %v7816
        %8729 = vmatpush.bf16.msra.mxu0 %v7812
        %8730 = vmatpush.bf16.msra.mxu0 %v7808
        %8731 = vmatpush.bf16.msra.mxu0 %v7804
        %8732 = vmatmul.bf16.gmra.mxu0 %v6380
        %v8733 = vpop.f32.mrf.mxu0
        %v8734 = vadd.f32 %v8705, %v8733
        %v8735 = vpop.f32.mrf.mxu0
        %v8736 = vadd.f32 %v8707, %v8735
        %8737 = vmatmul.bf16.gmra.mxu0 %v6390
        %v8738 = vpop.f32.mrf.mxu0
        %v8739 = vadd.f32 %v8710, %v8738
        %v8740 = vpop.f32.mrf.mxu0
        %v8741 = vadd.f32 %v8712, %v8740
        %8742 = vmatmul.bf16.gmra.mxu0 %v6400
        %v8743 = vpop.f32.mrf.mxu0
        %v8744 = vadd.f32 %v8715, %v8743
        %v8745 = vpop.f32.mrf.mxu0
        %v8746 = vadd.f32 %v8717, %v8745
        %8747 = vmatmul.bf16.gmra.mxu0 %v6410
        %v8748 = vpop.f32.mrf.mxu0
        %v8749 = vadd.f32 %v8720, %v8748
        %v8750 = vpop.f32.mrf.mxu0
        %v8751 = vadd.f32 %v8722, %v8750
        %8752 = vdwg.mxu0
        %8753 = vmatpush.bf16.msra.mxu0 %v7864
        %8754 = vmatpush.bf16.msra.mxu0 %v7860
        %8755 = vmatpush.bf16.msra.mxu0 %v7856
        %8756 = vmatpush.bf16.msra.mxu0 %v7852
        %8757 = vmatpush.bf16.msra.mxu0 %v7848
        %8758 = vmatpush.bf16.msra.mxu0 %v7844
        %8759 = vmatpush.bf16.msra.mxu0 %v7840
        %8760 = vmatpush.bf16.msra.mxu0 %v7836
        %8761 = vmatmul.bf16.gmra.mxu0 %v6381
        %v8762 = vpop.f32.mrf.mxu0
        %v8763 = vadd.f32 %v8734, %v8762
        %v8764 = vpop.f32.mrf.mxu0
        %v8765 = vadd.f32 %v8736, %v8764
        %8766 = vmatmul.bf16.gmra.mxu0 %v6391
        %v8767 = vpop.f32.mrf.mxu0
        %v8768 = vadd.f32 %v8739, %v8767
        %v8769 = vpop.f32.mrf.mxu0
        %v8770 = vadd.f32 %v8741, %v8769
        %8771 = vmatmul.bf16.gmra.mxu0 %v6401
        %v8772 = vpop.f32.mrf.mxu0
        %v8773 = vadd.f32 %v8744, %v8772
        %v8774 = vpop.f32.mrf.mxu0
        %v8775 = vadd.f32 %v8746, %v8774
        %8776 = vmatmul.bf16.gmra.mxu0 %v6411
        %v8777 = vpop.f32.mrf.mxu0
        %v8778 = vadd.f32 %v8749, %v8777
        %v8779 = vpop.f32.mrf.mxu0
        %v8780 = vadd.f32 %v8751, %v8779
        %8781 = vdwg.mxu0
        %8782 = vmatpush.bf16.msra.mxu0 %v7896
        %8783 = vmatpush.bf16.msra.mxu0 %v7892
        %8784 = vmatpush.bf16.msra.mxu0 %v7888
        %8785 = vmatpush.bf16.msra.mxu0 %v7884
        %8786 = vmatpush.bf16.msra.mxu0 %v7880
        %8787 = vmatpush.bf16.msra.mxu0 %v7876
        %8788 = vmatpush.bf16.msra.mxu0 %v7872
        %8789 = vmatpush.bf16.msra.mxu0 %v7868
        %8790 = vmatmul.bf16.gmra.mxu0 %v6382
        %v8791 = vpop.f32.mrf.mxu0
        %v8792 = vadd.f32 %v8763, %v8791
        %v8793 = vpop.f32.mrf.mxu0
        %v8794 = vadd.f32 %v8765, %v8793
        %8795 = vmatmul.bf16.gmra.mxu0 %v6392
        %v8796 = vpop.f32.mrf.mxu0
        %v8797 = vadd.f32 %v8768, %v8796
        %v8798 = vpop.f32.mrf.mxu0
        %v8799 = vadd.f32 %v8770, %v8798
        %8800 = vmatmul.bf16.gmra.mxu0 %v6402
        %v8801 = vpop.f32.mrf.mxu0
        %v8802 = vadd.f32 %v8773, %v8801
        %v8803 = vpop.f32.mrf.mxu0
        %v8804 = vadd.f32 %v8775, %v8803
        %8805 = vmatmul.bf16.gmra.mxu0 %v6412
        %v8806 = vpop.f32.mrf.mxu0
        %v8807 = vadd.f32 %v8778, %v8806
        %v8808 = vpop.f32.mrf.mxu0
        %v8809 = vadd.f32 %v8780, %v8808
        %8810 = vdwg.mxu0
        %8811 = vmatpush.bf16.msra.mxu0 %v7928
        %8812 = vmatpush.bf16.msra.mxu0 %v7924
        %8813 = vmatpush.bf16.msra.mxu0 %v7920
        %8814 = vmatpush.bf16.msra.mxu0 %v7916
        %8815 = vmatpush.bf16.msra.mxu0 %v7912
        %8816 = vmatpush.bf16.msra.mxu0 %v7908
        %8817 = vmatpush.bf16.msra.mxu0 %v7904
        %8818 = vmatpush.bf16.msra.mxu0 %v7900
        %8819 = vmatmul.bf16.gmra.mxu0 %v6383
        %v8820 = vpop.f32.mrf.mxu0
        %v8821 = vadd.f32 %v8792, %v8820
        %v8822 = vpop.f32.mrf.mxu0
        %v8823 = vadd.f32 %v8794, %v8822
        %8824 = vmatmul.bf16.gmra.mxu0 %v6393
        %v8825 = vpop.f32.mrf.mxu0
        %v8826 = vadd.f32 %v8797, %v8825
        %v8827 = vpop.f32.mrf.mxu0
        %v8828 = vadd.f32 %v8799, %v8827
        %8829 = vmatmul.bf16.gmra.mxu0 %v6403
        %v8830 = vpop.f32.mrf.mxu0
        %v8831 = vadd.f32 %v8802, %v8830
        %v8832 = vpop.f32.mrf.mxu0
        %v8833 = vadd.f32 %v8804, %v8832
        %8834 = vmatmul.bf16.gmra.mxu0 %v6413
        %v8835 = vpop.f32.mrf.mxu0
        %v8836 = vadd.f32 %v8807, %v8835
        %v8837 = vpop.f32.mrf.mxu0
        %v8838 = vadd.f32 %v8809, %v8837
        %8839 = vdwg.mxu0
        %8840 = vmatpush.bf16.msra.mxu0 %v7960
        %8841 = vmatpush.bf16.msra.mxu0 %v7956
        %8842 = vmatpush.bf16.msra.mxu0 %v7952
        %8843 = vmatpush.bf16.msra.mxu0 %v7948
        %8844 = vmatpush.bf16.msra.mxu0 %v7944
        %8845 = vmatpush.bf16.msra.mxu0 %v7940
        %8846 = vmatpush.bf16.msra.mxu0 %v7936
        %8847 = vmatpush.bf16.msra.mxu0 %v7932
        %8848 = vmatmul.bf16.gmra.mxu0 %v6384
        %v8849 = vpop.f32.mrf.mxu0
        %v8850 = vadd.f32 %v8821, %v8849
        %v8851 = vpop.f32.mrf.mxu0
        %v8852 = vadd.f32 %v8823, %v8851
        %8853 = vmatmul.bf16.gmra.mxu0 %v6394
        %v8854 = vpop.f32.mrf.mxu0
        %v8855 = vadd.f32 %v8826, %v8854
        %v8856 = vpop.f32.mrf.mxu0
        %v8857 = vadd.f32 %v8828, %v8856
        %8858 = vmatmul.bf16.gmra.mxu0 %v6404
        %v8859 = vpop.f32.mrf.mxu0
        %v8860 = vadd.f32 %v8831, %v8859
        %v8861 = vpop.f32.mrf.mxu0
        %v8862 = vadd.f32 %v8833, %v8861
        %8863 = vmatmul.bf16.gmra.mxu0 %v6414
        %v8864 = vpop.f32.mrf.mxu0
        %v8865 = vadd.f32 %v8836, %v8864
        %v8866 = vpop.f32.mrf.mxu0
        %v8867 = vadd.f32 %v8838, %v8866
        %8868 = vdwg.mxu0
        %8869 = vmatpush.bf16.msra.mxu0 %v7992
        %8870 = vmatpush.bf16.msra.mxu0 %v7988
        %8871 = vmatpush.bf16.msra.mxu0 %v7984
        %8872 = vmatpush.bf16.msra.mxu0 %v7980
        %8873 = vmatpush.bf16.msra.mxu0 %v7976
        %8874 = vmatpush.bf16.msra.mxu0 %v7972
        %8875 = vmatpush.bf16.msra.mxu0 %v7968
        %8876 = vmatpush.bf16.msra.mxu0 %v7964
        %8877 = vmatmul.bf16.gmra.mxu0 %v6385
        %v8878 = vpop.f32.mrf.mxu0
        %v8879 = vadd.f32 %v8850, %v8878
        %v8880 = vpop.f32.mrf.mxu0
        %v8881 = vadd.f32 %v8852, %v8880
        %8882 = vmatmul.bf16.gmra.mxu0 %v6395
        %v8883 = vpop.f32.mrf.mxu0
        %v8884 = vadd.f32 %v8855, %v8883
        %v8885 = vpop.f32.mrf.mxu0
        %v8886 = vadd.f32 %v8857, %v8885
        %8887 = vmatmul.bf16.gmra.mxu0 %v6405
        %v8888 = vpop.f32.mrf.mxu0
        %v8889 = vadd.f32 %v8860, %v8888
        %v8890 = vpop.f32.mrf.mxu0
        %v8891 = vadd.f32 %v8862, %v8890
        %8892 = vmatmul.bf16.gmra.mxu0 %v6415
        %v8893 = vpop.f32.mrf.mxu0
        %v8894 = vadd.f32 %v8865, %v8893
        %v8895 = vpop.f32.mrf.mxu0
        %v8896 = vadd.f32 %v8867, %v8895
        %8897 = vdwg.mxu0
        %8898 = vmatpush.bf16.msra.mxu0 %v8024
        %8899 = vmatpush.bf16.msra.mxu0 %v8020
        %8900 = vmatpush.bf16.msra.mxu0 %v8016
        %8901 = vmatpush.bf16.msra.mxu0 %v8012
        %8902 = vmatpush.bf16.msra.mxu0 %v8008
        %8903 = vmatpush.bf16.msra.mxu0 %v8004
        %8904 = vmatpush.bf16.msra.mxu0 %v8000
        %8905 = vmatpush.bf16.msra.mxu0 %v7996
        %8906 = vmatmul.bf16.gmra.mxu0 %v6386
        %v8907 = vpop.f32.mrf.mxu0
        %v8908 = vadd.f32 %v8879, %v8907
        %v8909 = vpop.f32.mrf.mxu0
        %v8910 = vadd.f32 %v8881, %v8909
        %8911 = vmatmul.bf16.gmra.mxu0 %v6396
        %v8912 = vpop.f32.mrf.mxu0
        %v8913 = vadd.f32 %v8884, %v8912
        %v8914 = vpop.f32.mrf.mxu0
        %v8915 = vadd.f32 %v8886, %v8914
        %8916 = vmatmul.bf16.gmra.mxu0 %v6406
        %v8917 = vpop.f32.mrf.mxu0
        %v8918 = vadd.f32 %v8889, %v8917
        %v8919 = vpop.f32.mrf.mxu0
        %v8920 = vadd.f32 %v8891, %v8919
        %8921 = vmatmul.bf16.gmra.mxu0 %v6416
        %v8922 = vpop.f32.mrf.mxu0
        %v8923 = vadd.f32 %v8894, %v8922
        %v8924 = vpop.f32.mrf.mxu0
        %v8925 = vadd.f32 %v8896, %v8924
        %8926 = vdwg.mxu0
        %8927 = vmatpush.bf16.msra.mxu0 %v7737
        %8928 = vmatpush.bf16.msra.mxu0 %v7733
        %8929 = vmatpush.bf16.msra.mxu0 %v7729
        %8930 = vmatpush.bf16.msra.mxu0 %v7725
        %8931 = vmatpush.bf16.msra.mxu0 %v7721
        %8932 = vmatpush.bf16.msra.mxu0 %v7717
        %8933 = vmatpush.bf16.msra.mxu0 %v7713
        %8934 = vmatpush.bf16.msra.mxu0 %v7709
        %8935 = vmatmul.bf16.gmra.mxu0 %v6377
        %v8936 = vpop.f32.mrf.mxu0
        %v8937 = vadd.f32 %v6741, %v8936
        %v8938 = vpop.f32.mrf.mxu0
        %v8939 = vadd.f32 %v6741, %v8938
        %8940 = vmatmul.bf16.gmra.mxu0 %v6387
        %v8941 = vpop.f32.mrf.mxu0
        %v8942 = vadd.f32 %v6741, %v8941
        %v8943 = vpop.f32.mrf.mxu0
        %v8944 = vadd.f32 %v6741, %v8943
        %8945 = vmatmul.bf16.gmra.mxu0 %v6397
        %v8946 = vpop.f32.mrf.mxu0
        %v8947 = vadd.f32 %v6741, %v8946
        %v8948 = vpop.f32.mrf.mxu0
        %v8949 = vadd.f32 %v6741, %v8948
        %8950 = vmatmul.bf16.gmra.mxu0 %v6407
        %v8951 = vpop.f32.mrf.mxu0
        %v8952 = vadd.f32 %v6741, %v8951
        %v8953 = vpop.f32.mrf.mxu0
        %v8954 = vadd.f32 %v6741, %v8953
        %8955 = vdwg.mxu0
        %8956 = vmatpush.bf16.msra.mxu0 %v7769
        %8957 = vmatpush.bf16.msra.mxu0 %v7765
        %8958 = vmatpush.bf16.msra.mxu0 %v7761
        %8959 = vmatpush.bf16.msra.mxu0 %v7757
        %8960 = vmatpush.bf16.msra.mxu0 %v7753
        %8961 = vmatpush.bf16.msra.mxu0 %v7749
        %8962 = vmatpush.bf16.msra.mxu0 %v7745
        %8963 = vmatpush.bf16.msra.mxu0 %v7741
        %8964 = vmatmul.bf16.gmra.mxu0 %v6378
        %v8965 = vpop.f32.mrf.mxu0
        %v8966 = vadd.f32 %v8937, %v8965
        %v8967 = vpop.f32.mrf.mxu0
        %v8968 = vadd.f32 %v8939, %v8967
        %8969 = vmatmul.bf16.gmra.mxu0 %v6388
        %v8970 = vpop.f32.mrf.mxu0
        %v8971 = vadd.f32 %v8942, %v8970
        %v8972 = vpop.f32.mrf.mxu0
        %v8973 = vadd.f32 %v8944, %v8972
        %8974 = vmatmul.bf16.gmra.mxu0 %v6398
        %v8975 = vpop.f32.mrf.mxu0
        %v8976 = vadd.f32 %v8947, %v8975
        %v8977 = vpop.f32.mrf.mxu0
        %v8978 = vadd.f32 %v8949, %v8977
        %8979 = vmatmul.bf16.gmra.mxu0 %v6408
        %v8980 = vpop.f32.mrf.mxu0
        %v8981 = vadd.f32 %v8952, %v8980
        %v8982 = vpop.f32.mrf.mxu0
        %v8983 = vadd.f32 %v8954, %v8982
        %8984 = vdwg.mxu0
        %8985 = vmatpush.bf16.msra.mxu0 %v7801
        %8986 = vmatpush.bf16.msra.mxu0 %v7797
        %8987 = vmatpush.bf16.msra.mxu0 %v7793
        %8988 = vmatpush.bf16.msra.mxu0 %v7789
        %8989 = vmatpush.bf16.msra.mxu0 %v7785
        %8990 = vmatpush.bf16.msra.mxu0 %v7781
        %8991 = vmatpush.bf16.msra.mxu0 %v7777
        %8992 = vmatpush.bf16.msra.mxu0 %v7773
        %8993 = vmatmul.bf16.gmra.mxu0 %v6379
        %v8994 = vpop.f32.mrf.mxu0
        %v8995 = vadd.f32 %v8966, %v8994
        %v8996 = vpop.f32.mrf.mxu0
        %v8997 = vadd.f32 %v8968, %v8996
        %8998 = vmatmul.bf16.gmra.mxu0 %v6389
        %v8999 = vpop.f32.mrf.mxu0
        %v9000 = vadd.f32 %v8971, %v8999
        %v9001 = vpop.f32.mrf.mxu0
        %v9002 = vadd.f32 %v8973, %v9001
        %9003 = vmatmul.bf16.gmra.mxu0 %v6399
        %v9004 = vpop.f32.mrf.mxu0
        %v9005 = vadd.f32 %v8976, %v9004
        %v9006 = vpop.f32.mrf.mxu0
        %v9007 = vadd.f32 %v8978, %v9006
        %9008 = vmatmul.bf16.gmra.mxu0 %v6409
        %v9009 = vpop.f32.mrf.mxu0
        %v9010 = vadd.f32 %v8981, %v9009
        %v9011 = vpop.f32.mrf.mxu0
        %v9012 = vadd.f32 %v8983, %v9011
        %9013 = vdwg.mxu0
        %9014 = vmatpush.bf16.msra.mxu0 %v7833
        %9015 = vmatpush.bf16.msra.mxu0 %v7829
        %9016 = vmatpush.bf16.msra.mxu0 %v7825
        %9017 = vmatpush.bf16.msra.mxu0 %v7821
        %9018 = vmatpush.bf16.msra.mxu0 %v7817
        %9019 = vmatpush.bf16.msra.mxu0 %v7813
        %9020 = vmatpush.bf16.msra.mxu0 %v7809
        %9021 = vmatpush.bf16.msra.mxu0 %v7805
        %9022 = vmatmul.bf16.gmra.mxu0 %v6380
        %v9023 = vpop.f32.mrf.mxu0
        %v9024 = vadd.f32 %v8995, %v9023
        %v9025 = vpop.f32.mrf.mxu0
        %v9026 = vadd.f32 %v8997, %v9025
        %9027 = vmatmul.bf16.gmra.mxu0 %v6390
        %v9028 = vpop.f32.mrf.mxu0
        %v9029 = vadd.f32 %v9000, %v9028
        %v9030 = vpop.f32.mrf.mxu0
        %v9031 = vadd.f32 %v9002, %v9030
        %9032 = vmatmul.bf16.gmra.mxu0 %v6400
        %v9033 = vpop.f32.mrf.mxu0
        %v9034 = vadd.f32 %v9005, %v9033
        %v9035 = vpop.f32.mrf.mxu0
        %v9036 = vadd.f32 %v9007, %v9035
        %9037 = vmatmul.bf16.gmra.mxu0 %v6410
        %v9038 = vpop.f32.mrf.mxu0
        %v9039 = vadd.f32 %v9010, %v9038
        %v9040 = vpop.f32.mrf.mxu0
        %v9041 = vadd.f32 %v9012, %v9040
        %9042 = vdwg.mxu0
        %9043 = vmatpush.bf16.msra.mxu0 %v7865
        %9044 = vmatpush.bf16.msra.mxu0 %v7861
        %9045 = vmatpush.bf16.msra.mxu0 %v7857
        %9046 = vmatpush.bf16.msra.mxu0 %v7853
        %9047 = vmatpush.bf16.msra.mxu0 %v7849
        %9048 = vmatpush.bf16.msra.mxu0 %v7845
        %9049 = vmatpush.bf16.msra.mxu0 %v7841
        %9050 = vmatpush.bf16.msra.mxu0 %v7837
        %9051 = vmatmul.bf16.gmra.mxu0 %v6381
        %v9052 = vpop.f32.mrf.mxu0
        %v9053 = vadd.f32 %v9024, %v9052
        %v9054 = vpop.f32.mrf.mxu0
        %v9055 = vadd.f32 %v9026, %v9054
        %9056 = vmatmul.bf16.gmra.mxu0 %v6391
        %v9057 = vpop.f32.mrf.mxu0
        %v9058 = vadd.f32 %v9029, %v9057
        %v9059 = vpop.f32.mrf.mxu0
        %v9060 = vadd.f32 %v9031, %v9059
        %9061 = vmatmul.bf16.gmra.mxu0 %v6401
        %v9062 = vpop.f32.mrf.mxu0
        %v9063 = vadd.f32 %v9034, %v9062
        %v9064 = vpop.f32.mrf.mxu0
        %v9065 = vadd.f32 %v9036, %v9064
        %9066 = vmatmul.bf16.gmra.mxu0 %v6411
        %v9067 = vpop.f32.mrf.mxu0
        %v9068 = vadd.f32 %v9039, %v9067
        %v9069 = vpop.f32.mrf.mxu0
        %v9070 = vadd.f32 %v9041, %v9069
        %9071 = vdwg.mxu0
        %9072 = vmatpush.bf16.msra.mxu0 %v7897
        %9073 = vmatpush.bf16.msra.mxu0 %v7893
        %9074 = vmatpush.bf16.msra.mxu0 %v7889
        %9075 = vmatpush.bf16.msra.mxu0 %v7885
        %9076 = vmatpush.bf16.msra.mxu0 %v7881
        %9077 = vmatpush.bf16.msra.mxu0 %v7877
        %9078 = vmatpush.bf16.msra.mxu0 %v7873
        %9079 = vmatpush.bf16.msra.mxu0 %v7869
        %9080 = vmatmul.bf16.gmra.mxu0 %v6382
        %v9081 = vpop.f32.mrf.mxu0
        %v9082 = vadd.f32 %v9053, %v9081
        %v9083 = vpop.f32.mrf.mxu0
        %v9084 = vadd.f32 %v9055, %v9083
        %9085 = vmatmul.bf16.gmra.mxu0 %v6392
        %v9086 = vpop.f32.mrf.mxu0
        %v9087 = vadd.f32 %v9058, %v9086
        %v9088 = vpop.f32.mrf.mxu0
        %v9089 = vadd.f32 %v9060, %v9088
        %9090 = vmatmul.bf16.gmra.mxu0 %v6402
        %v9091 = vpop.f32.mrf.mxu0
        %v9092 = vadd.f32 %v9063, %v9091
        %v9093 = vpop.f32.mrf.mxu0
        %v9094 = vadd.f32 %v9065, %v9093
        %9095 = vmatmul.bf16.gmra.mxu0 %v6412
        %v9096 = vpop.f32.mrf.mxu0
        %v9097 = vadd.f32 %v9068, %v9096
        %v9098 = vpop.f32.mrf.mxu0
        %v9099 = vadd.f32 %v9070, %v9098
        %9100 = vdwg.mxu0
        %9101 = vmatpush.bf16.msra.mxu0 %v7929
        %9102 = vmatpush.bf16.msra.mxu0 %v7925
        %9103 = vmatpush.bf16.msra.mxu0 %v7921
        %9104 = vmatpush.bf16.msra.mxu0 %v7917
        %9105 = vmatpush.bf16.msra.mxu0 %v7913
        %9106 = vmatpush.bf16.msra.mxu0 %v7909
        %9107 = vmatpush.bf16.msra.mxu0 %v7905
        %9108 = vmatpush.bf16.msra.mxu0 %v7901
        %9109 = vmatmul.bf16.gmra.mxu0 %v6383
        %v9110 = vpop.f32.mrf.mxu0
        %v9111 = vadd.f32 %v9082, %v9110
        %v9112 = vpop.f32.mrf.mxu0
        %v9113 = vadd.f32 %v9084, %v9112
        %9114 = vmatmul.bf16.gmra.mxu0 %v6393
        %v9115 = vpop.f32.mrf.mxu0
        %v9116 = vadd.f32 %v9087, %v9115
        %v9117 = vpop.f32.mrf.mxu0
        %v9118 = vadd.f32 %v9089, %v9117
        %9119 = vmatmul.bf16.gmra.mxu0 %v6403
        %v9120 = vpop.f32.mrf.mxu0
        %v9121 = vadd.f32 %v9092, %v9120
        %v9122 = vpop.f32.mrf.mxu0
        %v9123 = vadd.f32 %v9094, %v9122
        %9124 = vmatmul.bf16.gmra.mxu0 %v6413
        %v9125 = vpop.f32.mrf.mxu0
        %v9126 = vadd.f32 %v9097, %v9125
        %v9127 = vpop.f32.mrf.mxu0
        %v9128 = vadd.f32 %v9099, %v9127
        %9129 = vdwg.mxu0
        %9130 = vmatpush.bf16.msra.mxu0 %v7961
        %9131 = vmatpush.bf16.msra.mxu0 %v7957
        %9132 = vmatpush.bf16.msra.mxu0 %v7953
        %9133 = vmatpush.bf16.msra.mxu0 %v7949
        %9134 = vmatpush.bf16.msra.mxu0 %v7945
        %9135 = vmatpush.bf16.msra.mxu0 %v7941
        %9136 = vmatpush.bf16.msra.mxu0 %v7937
        %9137 = vmatpush.bf16.msra.mxu0 %v7933
        %9138 = vmatmul.bf16.gmra.mxu0 %v6384
        %v9139 = vpop.f32.mrf.mxu0
        %v9140 = vadd.f32 %v9111, %v9139
        %v9141 = vpop.f32.mrf.mxu0
        %v9142 = vadd.f32 %v9113, %v9141
        %9143 = vmatmul.bf16.gmra.mxu0 %v6394
        %v9144 = vpop.f32.mrf.mxu0
        %v9145 = vadd.f32 %v9116, %v9144
        %v9146 = vpop.f32.mrf.mxu0
        %v9147 = vadd.f32 %v9118, %v9146
        %9148 = vmatmul.bf16.gmra.mxu0 %v6404
        %v9149 = vpop.f32.mrf.mxu0
        %v9150 = vadd.f32 %v9121, %v9149
        %v9151 = vpop.f32.mrf.mxu0
        %v9152 = vadd.f32 %v9123, %v9151
        %9153 = vmatmul.bf16.gmra.mxu0 %v6414
        %v9154 = vpop.f32.mrf.mxu0
        %v9155 = vadd.f32 %v9126, %v9154
        %v9156 = vpop.f32.mrf.mxu0
        %v9157 = vadd.f32 %v9128, %v9156
        %9158 = vdwg.mxu0
        %9159 = vmatpush.bf16.msra.mxu0 %v7993
        %9160 = vmatpush.bf16.msra.mxu0 %v7989
        %9161 = vmatpush.bf16.msra.mxu0 %v7985
        %9162 = vmatpush.bf16.msra.mxu0 %v7981
        %9163 = vmatpush.bf16.msra.mxu0 %v7977
        %9164 = vmatpush.bf16.msra.mxu0 %v7973
        %9165 = vmatpush.bf16.msra.mxu0 %v7969
        %9166 = vmatpush.bf16.msra.mxu0 %v7965
        %9167 = vmatmul.bf16.gmra.mxu0 %v6385
        %v9168 = vpop.f32.mrf.mxu0
        %v9169 = vadd.f32 %v9140, %v9168
        %v9170 = vpop.f32.mrf.mxu0
        %v9171 = vadd.f32 %v9142, %v9170
        %9172 = vmatmul.bf16.gmra.mxu0 %v6395
        %v9173 = vpop.f32.mrf.mxu0
        %v9174 = vadd.f32 %v9145, %v9173
        %v9175 = vpop.f32.mrf.mxu0
        %v9176 = vadd.f32 %v9147, %v9175
        %9177 = vmatmul.bf16.gmra.mxu0 %v6405
        %v9178 = vpop.f32.mrf.mxu0
        %v9179 = vadd.f32 %v9150, %v9178
        %v9180 = vpop.f32.mrf.mxu0
        %v9181 = vadd.f32 %v9152, %v9180
        %9182 = vmatmul.bf16.gmra.mxu0 %v6415
        %v9183 = vpop.f32.mrf.mxu0
        %v9184 = vadd.f32 %v9155, %v9183
        %v9185 = vpop.f32.mrf.mxu0
        %v9186 = vadd.f32 %v9157, %v9185
        %9187 = vdwg.mxu0
        %9188 = vmatpush.bf16.msra.mxu0 %v8025
        %9189 = vmatpush.bf16.msra.mxu0 %v8021
        %9190 = vmatpush.bf16.msra.mxu0 %v8017
        %9191 = vmatpush.bf16.msra.mxu0 %v8013
        %9192 = vmatpush.bf16.msra.mxu0 %v8009
        %9193 = vmatpush.bf16.msra.mxu0 %v8005
        %9194 = vmatpush.bf16.msra.mxu0 %v8001
        %9195 = vmatpush.bf16.msra.mxu0 %v7997
        %9196 = vmatmul.bf16.gmra.mxu0 %v6386
        %v9197 = vpop.f32.mrf.mxu0
        %v9198 = vadd.f32 %v9169, %v9197
        %v9199 = vpop.f32.mrf.mxu0
        %v9200 = vadd.f32 %v9171, %v9199
        %9201 = vmatmul.bf16.gmra.mxu0 %v6396
        %v9202 = vpop.f32.mrf.mxu0
        %v9203 = vadd.f32 %v9174, %v9202
        %v9204 = vpop.f32.mrf.mxu0
        %v9205 = vadd.f32 %v9176, %v9204
        %9206 = vmatmul.bf16.gmra.mxu0 %v6406
        %v9207 = vpop.f32.mrf.mxu0
        %v9208 = vadd.f32 %v9179, %v9207
        %v9209 = vpop.f32.mrf.mxu0
        %v9210 = vadd.f32 %v9181, %v9209
        %9211 = vmatmul.bf16.gmra.mxu0 %v6416
        %v9212 = vpop.f32.mrf.mxu0
        %v9213 = vadd.f32 %v9184, %v9212
        %v9214 = vpop.f32.mrf.mxu0
        %v9215 = vadd.f32 %v9186, %v9214
        %9216 = vdwg.mxu0
        %9217 = vmatpush.bf16.msra.mxu0 %v7738
        %9218 = vmatpush.bf16.msra.mxu0 %v7734
        %9219 = vmatpush.bf16.msra.mxu0 %v7730
        %9220 = vmatpush.bf16.msra.mxu0 %v7726
        %9221 = vmatpush.bf16.msra.mxu0 %v7722
        %9222 = vmatpush.bf16.msra.mxu0 %v7718
        %9223 = vmatpush.bf16.msra.mxu0 %v7714
        %9224 = vmatpush.bf16.msra.mxu0 %v7710
        %9225 = vmatmul.bf16.gmra.mxu0 %v6377
        %v9226 = vpop.f32.mrf.mxu0
        %v9227 = vadd.f32 %v6742, %v9226
        %v9228 = vpop.f32.mrf.mxu0
        %v9229 = vadd.f32 %v6742, %v9228
        %9230 = vmatmul.bf16.gmra.mxu0 %v6387
        %v9231 = vpop.f32.mrf.mxu0
        %v9232 = vadd.f32 %v6742, %v9231
        %v9233 = vpop.f32.mrf.mxu0
        %v9234 = vadd.f32 %v6742, %v9233
        %9235 = vmatmul.bf16.gmra.mxu0 %v6397
        %v9236 = vpop.f32.mrf.mxu0
        %v9237 = vadd.f32 %v6742, %v9236
        %v9238 = vpop.f32.mrf.mxu0
        %v9239 = vadd.f32 %v6742, %v9238
        %9240 = vmatmul.bf16.gmra.mxu0 %v6407
        %v9241 = vpop.f32.mrf.mxu0
        %v9242 = vadd.f32 %v6742, %v9241
        %v9243 = vpop.f32.mrf.mxu0
        %v9244 = vadd.f32 %v6742, %v9243
        %9245 = vdwg.mxu0
        %9246 = vmatpush.bf16.msra.mxu0 %v7770
        %9247 = vmatpush.bf16.msra.mxu0 %v7766
        %9248 = vmatpush.bf16.msra.mxu0 %v7762
        %9249 = vmatpush.bf16.msra.mxu0 %v7758
        %9250 = vmatpush.bf16.msra.mxu0 %v7754
        %9251 = vmatpush.bf16.msra.mxu0 %v7750
        %9252 = vmatpush.bf16.msra.mxu0 %v7746
        %9253 = vmatpush.bf16.msra.mxu0 %v7742
        %9254 = vmatmul.bf16.gmra.mxu0 %v6378
        %v9255 = vpop.f32.mrf.mxu0
        %v9256 = vadd.f32 %v9227, %v9255
        %v9257 = vpop.f32.mrf.mxu0
        %v9258 = vadd.f32 %v9229, %v9257
        %9259 = vmatmul.bf16.gmra.mxu0 %v6388
        %v9260 = vpop.f32.mrf.mxu0
        %v9261 = vadd.f32 %v9232, %v9260
        %v9262 = vpop.f32.mrf.mxu0
        %v9263 = vadd.f32 %v9234, %v9262
        %9264 = vmatmul.bf16.gmra.mxu0 %v6398
        %v9265 = vpop.f32.mrf.mxu0
        %v9266 = vadd.f32 %v9237, %v9265
        %v9267 = vpop.f32.mrf.mxu0
        %v9268 = vadd.f32 %v9239, %v9267
        %9269 = vmatmul.bf16.gmra.mxu0 %v6408
        %v9270 = vpop.f32.mrf.mxu0
        %v9271 = vadd.f32 %v9242, %v9270
        %v9272 = vpop.f32.mrf.mxu0
        %v9273 = vadd.f32 %v9244, %v9272
        %9274 = vdwg.mxu0
        %9275 = vmatpush.bf16.msra.mxu0 %v7802
        %9276 = vmatpush.bf16.msra.mxu0 %v7798
        %9277 = vmatpush.bf16.msra.mxu0 %v7794
        %9278 = vmatpush.bf16.msra.mxu0 %v7790
        %9279 = vmatpush.bf16.msra.mxu0 %v7786
        %9280 = vmatpush.bf16.msra.mxu0 %v7782
        %9281 = vmatpush.bf16.msra.mxu0 %v7778
        %9282 = vmatpush.bf16.msra.mxu0 %v7774
        %9283 = vmatmul.bf16.gmra.mxu0 %v6379
        %v9284 = vpop.f32.mrf.mxu0
        %v9285 = vadd.f32 %v9256, %v9284
        %v9286 = vpop.f32.mrf.mxu0
        %v9287 = vadd.f32 %v9258, %v9286
        %9288 = vmatmul.bf16.gmra.mxu0 %v6389
        %v9289 = vpop.f32.mrf.mxu0
        %v9290 = vadd.f32 %v9261, %v9289
        %v9291 = vpop.f32.mrf.mxu0
        %v9292 = vadd.f32 %v9263, %v9291
        %9293 = vmatmul.bf16.gmra.mxu0 %v6399
        %v9294 = vpop.f32.mrf.mxu0
        %v9295 = vadd.f32 %v9266, %v9294
        %v9296 = vpop.f32.mrf.mxu0
        %v9297 = vadd.f32 %v9268, %v9296
        %9298 = vmatmul.bf16.gmra.mxu0 %v6409
        %v9299 = vpop.f32.mrf.mxu0
        %v9300 = vadd.f32 %v9271, %v9299
        %v9301 = vpop.f32.mrf.mxu0
        %v9302 = vadd.f32 %v9273, %v9301
        %9303 = vdwg.mxu0
        %9304 = vmatpush.bf16.msra.mxu0 %v7834
        %9305 = vmatpush.bf16.msra.mxu0 %v7830
        %9306 = vmatpush.bf16.msra.mxu0 %v7826
        %9307 = vmatpush.bf16.msra.mxu0 %v7822
        %9308 = vmatpush.bf16.msra.mxu0 %v7818
        %9309 = vmatpush.bf16.msra.mxu0 %v7814
        %9310 = vmatpush.bf16.msra.mxu0 %v7810
        %9311 = vmatpush.bf16.msra.mxu0 %v7806
        %9312 = vmatmul.bf16.gmra.mxu0 %v6380
        %v9313 = vpop.f32.mrf.mxu0
        %v9314 = vadd.f32 %v9285, %v9313
        %v9315 = vpop.f32.mrf.mxu0
        %v9316 = vadd.f32 %v9287, %v9315
        %9317 = vmatmul.bf16.gmra.mxu0 %v6390
        %v9318 = vpop.f32.mrf.mxu0
        %v9319 = vadd.f32 %v9290, %v9318
        %v9320 = vpop.f32.mrf.mxu0
        %v9321 = vadd.f32 %v9292, %v9320
        %9322 = vmatmul.bf16.gmra.mxu0 %v6400
        %v9323 = vpop.f32.mrf.mxu0
        %v9324 = vadd.f32 %v9295, %v9323
        %v9325 = vpop.f32.mrf.mxu0
        %v9326 = vadd.f32 %v9297, %v9325
        %9327 = vmatmul.bf16.gmra.mxu0 %v6410
        %v9328 = vpop.f32.mrf.mxu0
        %v9329 = vadd.f32 %v9300, %v9328
        %v9330 = vpop.f32.mrf.mxu0
        %v9331 = vadd.f32 %v9302, %v9330
        %9332 = vdwg.mxu0
        %9333 = vmatpush.bf16.msra.mxu0 %v7866
        %9334 = vmatpush.bf16.msra.mxu0 %v7862
        %9335 = vmatpush.bf16.msra.mxu0 %v7858
        %9336 = vmatpush.bf16.msra.mxu0 %v7854
        %9337 = vmatpush.bf16.msra.mxu0 %v7850
        %9338 = vmatpush.bf16.msra.mxu0 %v7846
        %9339 = vmatpush.bf16.msra.mxu0 %v7842
        %9340 = vmatpush.bf16.msra.mxu0 %v7838
        %9341 = vmatmul.bf16.gmra.mxu0 %v6381
        %v9342 = vpop.f32.mrf.mxu0
        %v9343 = vadd.f32 %v9314, %v9342
        %v9344 = vpop.f32.mrf.mxu0
        %v9345 = vadd.f32 %v9316, %v9344
        %9346 = vmatmul.bf16.gmra.mxu0 %v6391
        %v9347 = vpop.f32.mrf.mxu0
        %v9348 = vadd.f32 %v9319, %v9347
        %v9349 = vpop.f32.mrf.mxu0
        %v9350 = vadd.f32 %v9321, %v9349
        %9351 = vmatmul.bf16.gmra.mxu0 %v6401
        %v9352 = vpop.f32.mrf.mxu0
        %v9353 = vadd.f32 %v9324, %v9352
        %v9354 = vpop.f32.mrf.mxu0
        %v9355 = vadd.f32 %v9326, %v9354
        %9356 = vmatmul.bf16.gmra.mxu0 %v6411
        %v9357 = vpop.f32.mrf.mxu0
        %v9358 = vadd.f32 %v9329, %v9357
        %v9359 = vpop.f32.mrf.mxu0
        %v9360 = vadd.f32 %v9331, %v9359
        %9361 = vdwg.mxu0
        %9362 = vmatpush.bf16.msra.mxu0 %v7898
        %9363 = vmatpush.bf16.msra.mxu0 %v7894
        %9364 = vmatpush.bf16.msra.mxu0 %v7890
        %9365 = vmatpush.bf16.msra.mxu0 %v7886
        %9366 = vmatpush.bf16.msra.mxu0 %v7882
        %9367 = vmatpush.bf16.msra.mxu0 %v7878
        %9368 = vmatpush.bf16.msra.mxu0 %v7874
        %9369 = vmatpush.bf16.msra.mxu0 %v7870
        %9370 = vmatmul.bf16.gmra.mxu0 %v6382
        %v9371 = vpop.f32.mrf.mxu0
        %v9372 = vadd.f32 %v9343, %v9371
        %v9373 = vpop.f32.mrf.mxu0
        %v9374 = vadd.f32 %v9345, %v9373
        %9375 = vmatmul.bf16.gmra.mxu0 %v6392
        %v9376 = vpop.f32.mrf.mxu0
        %v9377 = vadd.f32 %v9348, %v9376
        %v9378 = vpop.f32.mrf.mxu0
        %v9379 = vadd.f32 %v9350, %v9378
        %9380 = vmatmul.bf16.gmra.mxu0 %v6402
        %v9381 = vpop.f32.mrf.mxu0
        %v9382 = vadd.f32 %v9353, %v9381
        %v9383 = vpop.f32.mrf.mxu0
        %v9384 = vadd.f32 %v9355, %v9383
        %9385 = vmatmul.bf16.gmra.mxu0 %v6412
        %v9386 = vpop.f32.mrf.mxu0
        %v9387 = vadd.f32 %v9358, %v9386
        %v9388 = vpop.f32.mrf.mxu0
        %v9389 = vadd.f32 %v9360, %v9388
        %9390 = vdwg.mxu0
        %9391 = vmatpush.bf16.msra.mxu0 %v7930
        %9392 = vmatpush.bf16.msra.mxu0 %v7926
        %9393 = vmatpush.bf16.msra.mxu0 %v7922
        %9394 = vmatpush.bf16.msra.mxu0 %v7918
        %9395 = vmatpush.bf16.msra.mxu0 %v7914
        %9396 = vmatpush.bf16.msra.mxu0 %v7910
        %9397 = vmatpush.bf16.msra.mxu0 %v7906
        %9398 = vmatpush.bf16.msra.mxu0 %v7902
        %9399 = vmatmul.bf16.gmra.mxu0 %v6383
        %v9400 = vpop.f32.mrf.mxu0
        %v9401 = vadd.f32 %v9372, %v9400
        %v9402 = vpop.f32.mrf.mxu0
        %v9403 = vadd.f32 %v9374, %v9402
        %9404 = vmatmul.bf16.gmra.mxu0 %v6393
        %v9405 = vpop.f32.mrf.mxu0
        %v9406 = vadd.f32 %v9377, %v9405
        %v9407 = vpop.f32.mrf.mxu0
        %v9408 = vadd.f32 %v9379, %v9407
        %9409 = vmatmul.bf16.gmra.mxu0 %v6403
        %v9410 = vpop.f32.mrf.mxu0
        %v9411 = vadd.f32 %v9382, %v9410
        %v9412 = vpop.f32.mrf.mxu0
        %v9413 = vadd.f32 %v9384, %v9412
        %9414 = vmatmul.bf16.gmra.mxu0 %v6413
        %v9415 = vpop.f32.mrf.mxu0
        %v9416 = vadd.f32 %v9387, %v9415
        %v9417 = vpop.f32.mrf.mxu0
        %v9418 = vadd.f32 %v9389, %v9417
        %9419 = vdwg.mxu0
        %9420 = vmatpush.bf16.msra.mxu0 %v7962
        %9421 = vmatpush.bf16.msra.mxu0 %v7958
        %9422 = vmatpush.bf16.msra.mxu0 %v7954
        %9423 = vmatpush.bf16.msra.mxu0 %v7950
        %9424 = vmatpush.bf16.msra.mxu0 %v7946
        %9425 = vmatpush.bf16.msra.mxu0 %v7942
        %9426 = vmatpush.bf16.msra.mxu0 %v7938
        %9427 = vmatpush.bf16.msra.mxu0 %v7934
        %9428 = vmatmul.bf16.gmra.mxu0 %v6384
        %v9429 = vpop.f32.mrf.mxu0
        %v9430 = vadd.f32 %v9401, %v9429
        %v9431 = vpop.f32.mrf.mxu0
        %v9432 = vadd.f32 %v9403, %v9431
        %9433 = vmatmul.bf16.gmra.mxu0 %v6394
        %v9434 = vpop.f32.mrf.mxu0
        %v9435 = vadd.f32 %v9406, %v9434
        %v9436 = vpop.f32.mrf.mxu0
        %v9437 = vadd.f32 %v9408, %v9436
        %9438 = vmatmul.bf16.gmra.mxu0 %v6404
        %v9439 = vpop.f32.mrf.mxu0
        %v9440 = vadd.f32 %v9411, %v9439
        %v9441 = vpop.f32.mrf.mxu0
        %v9442 = vadd.f32 %v9413, %v9441
        %9443 = vmatmul.bf16.gmra.mxu0 %v6414
        %v9444 = vpop.f32.mrf.mxu0
        %v9445 = vadd.f32 %v9416, %v9444
        %v9446 = vpop.f32.mrf.mxu0
        %v9447 = vadd.f32 %v9418, %v9446
        %9448 = vdwg.mxu0
        %9449 = vmatpush.bf16.msra.mxu0 %v7994
        %9450 = vmatpush.bf16.msra.mxu0 %v7990
        %9451 = vmatpush.bf16.msra.mxu0 %v7986
        %9452 = vmatpush.bf16.msra.mxu0 %v7982
        %9453 = vmatpush.bf16.msra.mxu0 %v7978
        %9454 = vmatpush.bf16.msra.mxu0 %v7974
        %9455 = vmatpush.bf16.msra.mxu0 %v7970
        %9456 = vmatpush.bf16.msra.mxu0 %v7966
        %9457 = vmatmul.bf16.gmra.mxu0 %v6385
        %v9458 = vpop.f32.mrf.mxu0
        %v9459 = vadd.f32 %v9430, %v9458
        %v9460 = vpop.f32.mrf.mxu0
        %v9461 = vadd.f32 %v9432, %v9460
        %9462 = vmatmul.bf16.gmra.mxu0 %v6395
        %v9463 = vpop.f32.mrf.mxu0
        %v9464 = vadd.f32 %v9435, %v9463
        %v9465 = vpop.f32.mrf.mxu0
        %v9466 = vadd.f32 %v9437, %v9465
        %9467 = vmatmul.bf16.gmra.mxu0 %v6405
        %v9468 = vpop.f32.mrf.mxu0
        %v9469 = vadd.f32 %v9440, %v9468
        %v9470 = vpop.f32.mrf.mxu0
        %v9471 = vadd.f32 %v9442, %v9470
        %9472 = vmatmul.bf16.gmra.mxu0 %v6415
        %v9473 = vpop.f32.mrf.mxu0
        %v9474 = vadd.f32 %v9445, %v9473
        %v9475 = vpop.f32.mrf.mxu0
        %v9476 = vadd.f32 %v9447, %v9475
        %9477 = vdwg.mxu0
        %9478 = vmatpush.bf16.msra.mxu0 %v8026
        %9479 = vmatpush.bf16.msra.mxu0 %v8022
        %9480 = vmatpush.bf16.msra.mxu0 %v8018
        %9481 = vmatpush.bf16.msra.mxu0 %v8014
        %9482 = vmatpush.bf16.msra.mxu0 %v8010
        %9483 = vmatpush.bf16.msra.mxu0 %v8006
        %9484 = vmatpush.bf16.msra.mxu0 %v8002
        %9485 = vmatpush.bf16.msra.mxu0 %v7998
        %9486 = vmatmul.bf16.gmra.mxu0 %v6386
        %v9487 = vpop.f32.mrf.mxu0
        %v9488 = vadd.f32 %v9459, %v9487
        %v9489 = vpop.f32.mrf.mxu0
        %v9490 = vadd.f32 %v9461, %v9489
        %9491 = vmatmul.bf16.gmra.mxu0 %v6396
        %v9492 = vpop.f32.mrf.mxu0
        %v9493 = vadd.f32 %v9464, %v9492
        %v9494 = vpop.f32.mrf.mxu0
        %v9495 = vadd.f32 %v9466, %v9494
        %9496 = vmatmul.bf16.gmra.mxu0 %v6406
        %v9497 = vpop.f32.mrf.mxu0
        %v9498 = vadd.f32 %v9469, %v9497
        %v9499 = vpop.f32.mrf.mxu0
        %v9500 = vadd.f32 %v9471, %v9499
        %9501 = vmatmul.bf16.gmra.mxu0 %v6416
        %v9502 = vpop.f32.mrf.mxu0
        %v9503 = vadd.f32 %v9474, %v9502
        %v9504 = vpop.f32.mrf.mxu0
        %v9505 = vadd.f32 %v9476, %v9504
        %9506 = vdwg.mxu0
        %v9507 = vmax.f32 %v8618, 0.0
        %v9508 = vmax.f32 %v8908, 0.0
        %v9509 = vmax.f32 %v9198, 0.0
        %v9510 = vmax.f32 %v9488, 0.0
        %v9511 = vmax.f32 %v8620, 0.0
        %v9512 = vmax.f32 %v8910, 0.0
        %v9513 = vmax.f32 %v9200, 0.0
        %v9514 = vmax.f32 %v9490, 0.0
        %v9515 = vmax.f32 %v8623, 0.0
        %v9516 = vmax.f32 %v8913, 0.0
        %v9517 = vmax.f32 %v9203, 0.0
        %v9518 = vmax.f32 %v9493, 0.0
        %v9519 = vmax.f32 %v8625, 0.0
        %v9520 = vmax.f32 %v8915, 0.0
        %v9521 = vmax.f32 %v9205, 0.0
        %v9522 = vmax.f32 %v9495, 0.0
        %v9523 = vmax.f32 %v8628, 0.0
        %v9524 = vmax.f32 %v8918, 0.0
        %v9525 = vmax.f32 %v9208, 0.0
        %v9526 = vmax.f32 %v9498, 0.0
        %v9527 = vmax.f32 %v8630, 0.0
        %v9528 = vmax.f32 %v8920, 0.0
        %v9529 = vmax.f32 %v9210, 0.0
        %v9530 = vmax.f32 %v9500, 0.0
        %v9531 = vmax.f32 %v8633, 0.0
        %v9532 = vmax.f32 %v8923, 0.0
        %v9533 = vmax.f32 %v9213, 0.0
        %v9534 = vmax.f32 %v9503, 0.0
        %v9535 = vmax.f32 %v8635, 0.0
        %v9536 = vmax.f32 %v8925, 0.0
        %v9537 = vmax.f32 %v9215, 0.0
        %v9538 = vmax.f32 %v9505, 0.0
        %v9571 = vrot.slane %v9507, 4
        %v9572 = vrot.slane %v9508, 4
        %v9573 = vrot.slane %v9509, 4
        %v9574 = vrot.slane %v9510, 4
        %v9575 = vrot.slane %v9511, 4
        %v9576 = vrot.slane %v9512, 4
        %v9577 = vrot.slane %v9513, 4
        %v9578 = vrot.slane %v9514, 4
        %v9579 = vrot.slane %v9515, 4
        %v9580 = vrot.slane %v9516, 4
        %v9581 = vrot.slane %v9517, 4
        %v9582 = vrot.slane %v9518, 4
        %v9583 = vrot.slane %v9519, 4
        %v9584 = vrot.slane %v9520, 4
        %v9585 = vrot.slane %v9521, 4
        %v9586 = vrot.slane %v9522, 4
        %v9587 = vrot.slane %v9523, 4
        %v9588 = vrot.slane %v9524, 4
        %v9589 = vrot.slane %v9525, 4
        %v9590 = vrot.slane %v9526, 4
        %v9591 = vrot.slane %v9527, 4
        %v9592 = vrot.slane %v9528, 4
        %v9593 = vrot.slane %v9529, 4
        %v9594 = vrot.slane %v9530, 4
        %v9595 = vrot.slane %v9531, 4
        %v9596 = vrot.slane %v9532, 4
        %v9597 = vrot.slane %v9533, 4
        %v9598 = vrot.slane %v9534, 4
        %v9599 = vrot.slane %v9535, 4
        %v9600 = vrot.slane %v9536, 4
        %v9601 = vrot.slane %v9537, 4
        %v9602 = vrot.slane %v9538, 4
        %v9635 = vmax.f32 %v9507, %v9571
        %v9636 = vmax.f32 %v9508, %v9572
        %v9637 = vmax.f32 %v9509, %v9573
        %v9638 = vmax.f32 %v9510, %v9574
        %v9639 = vmax.f32 %v9511, %v9575
        %v9640 = vmax.f32 %v9512, %v9576
        %v9641 = vmax.f32 %v9513, %v9577
        %v9642 = vmax.f32 %v9514, %v9578
        %v9643 = vmax.f32 %v9515, %v9579
        %v9644 = vmax.f32 %v9516, %v9580
        %v9645 = vmax.f32 %v9517, %v9581
        %v9646 = vmax.f32 %v9518, %v9582
        %v9647 = vmax.f32 %v9519, %v9583
        %v9648 = vmax.f32 %v9520, %v9584
        %v9649 = vmax.f32 %v9521, %v9585
        %v9650 = vmax.f32 %v9522, %v9586
        %v9651 = vmax.f32 %v9523, %v9587
        %v9652 = vmax.f32 %v9524, %v9588
        %v9653 = vmax.f32 %v9525, %v9589
        %v9654 = vmax.f32 %v9526, %v9590
        %v9655 = vmax.f32 %v9527, %v9591
        %v9656 = vmax.f32 %v9528, %v9592
        %v9657 = vmax.f32 %v9529, %v9593
        %v9658 = vmax.f32 %v9530, %v9594
        %v9659 = vmax.f32 %v9531, %v9595
        %v9660 = vmax.f32 %v9532, %v9596
        %v9661 = vmax.f32 %v9533, %v9597
        %v9662 = vmax.f32 %v9534, %v9598
        %v9663 = vmax.f32 %v9535, %v9599
        %v9664 = vmax.f32 %v9536, %v9600
        %v9665 = vmax.f32 %v9537, %v9601
        %v9666 = vmax.f32 %v9538, %v9602
        %v9667 = vmax.f32 %v9635, %v9637
        %v9668 = vmax.f32 %v9636, %v9638
        %v9669 = vmax.f32 %v9639, %v9641
        %v9670 = vmax.f32 %v9640, %v9642
        %v9671 = vmax.f32 %v9643, %v9645
        %v9672 = vmax.f32 %v9644, %v9646
        %v9673 = vmax.f32 %v9647, %v9649
        %v9674 = vmax.f32 %v9648, %v9650
        %v9675 = vmax.f32 %v9651, %v9653
        %v9676 = vmax.f32 %v9652, %v9654
        %v9677 = vmax.f32 %v9655, %v9657
        %v9678 = vmax.f32 %v9656, %v9658
        %v9679 = vmax.f32 %v9659, %v9661
        %v9680 = vmax.f32 %v9660, %v9662
        %v9681 = vmax.f32 %v9663, %v9665
        %v9682 = vmax.f32 %v9664, %v9666
        %v9699 = vrot.slane %v9669, 7
        %vm9700 = vcmask 1041409
        %v9701 = vsel %vm9700, %v9699, %v9667
        %v9702 = vrot.slane %v9671, 6
        %vm9703 = vcmask 1042434
        %v9704 = vsel %vm9703, %v9702, %v9701
        %v9705 = vrot.slane %v9673, 5
        %vm9706 = vcmask 1043459
        %v9707 = vsel %vm9706, %v9705, %v9704
        %v9708 = vrot.slane %v9675, 4
        %vm9709 = vcmask 1044484
        %v9710 = vsel %vm9709, %v9708, %v9707
        %v9711 = vrot.slane %v9677, 3
        %vm9712 = vcmask 1045509
        %v9713 = vsel %vm9712, %v9711, %v9710
        %v9714 = vrot.slane %v9679, 2
        %vm9715 = vcmask 1046534
        %v9716 = vsel %vm9715, %v9714, %v9713
        %v9717 = vrot.slane %v9681, 1
        %vm9718 = vcmask 1047559
        %v9719 = vsel %vm9718, %v9717, %v9716
        %v9720 = vrot.slane %v9670, 7
        %v9721 = vsel %vm9700, %v9720, %v9668
        %v9722 = vrot.slane %v9672, 6
        %v9723 = vsel %vm9703, %v9722, %v9721
        %v9724 = vrot.slane %v9674, 5
        %v9725 = vsel %vm9706, %v9724, %v9723
        %v9726 = vrot.slane %v9676, 4
        %v9727 = vsel %vm9709, %v9726, %v9725
        %v9728 = vrot.slane %v9678, 3
        %v9729 = vsel %vm9712, %v9728, %v9727
        %v9730 = vrot.slane %v9680, 2
        %v9731 = vsel %vm9715, %v9730, %v9729
        %v9732 = vrot.slane %v9682, 1
        %v9733 = vsel %vm9718, %v9732, %v9731
        %v9736 = vrot.slane %v9667, 1
        %v9737 = vsel %vm9700, %v9669, %v9736
        %v9738 = vrot.slane %v9671, 7
        %v9739 = vsel %vm9703, %v9738, %v9737
        %v9740 = vrot.slane %v9673, 6
        %v9741 = vsel %vm9706, %v9740, %v9739
        %v9742 = vrot.slane %v9675, 5
        %v9743 = vsel %vm9709, %v9742, %v9741
        %v9744 = vrot.slane %v9677, 4
        %v9745 = vsel %vm9712, %v9744, %v9743
        %v9746 = vrot.slane %v9679, 3
        %v9747 = vsel %vm9715, %v9746, %v9745
        %v9748 = vrot.slane %v9681, 2
        %v9749 = vsel %vm9718, %v9748, %v9747
        %v9750 = vrot.slane %v9668, 1
        %v9751 = vsel %vm9700, %v9670, %v9750
        %v9752 = vrot.slane %v9672, 7
        %v9753 = vsel %vm9703, %v9752, %v9751
        %v9754 = vrot.slane %v9674, 6
        %v9755 = vsel %vm9706, %v9754, %v9753
        %v9756 = vrot.slane %v9676, 5
        %v9757 = vsel %vm9709, %v9756, %v9755
        %v9758 = vrot.slane %v9678, 4
        %v9759 = vsel %vm9712, %v9758, %v9757
        %v9760 = vrot.slane %v9680, 3
        %v9761 = vsel %vm9715, %v9760, %v9759
        %v9762 = vrot.slane %v9682, 2
        %v9763 = vsel %vm9718, %v9762, %v9761
        %v9766 = vrot.slane %v9667, 2
        %v9767 = vrot.slane %v9669, 1
        %v9768 = vsel %vm9700, %v9767, %v9766
        %v9769 = vsel %vm9703, %v9671, %v9768
        %v9770 = vrot.slane %v9673, 7
        %v9771 = vsel %vm9706, %v9770, %v9769
        %v9772 = vrot.slane %v9675, 6
        %v9773 = vsel %vm9709, %v9772, %v9771
        %v9774 = vrot.slane %v9677, 5
        %v9775 = vsel %vm9712, %v9774, %v9773
        %v9776 = vrot.slane %v9679, 4
        %v9777 = vsel %vm9715, %v9776, %v9775
        %v9778 = vrot.slane %v9681, 3
        %v9779 = vsel %vm9718, %v9778, %v9777
        %v9780 = vrot.slane %v9668, 2
        %v9781 = vrot.slane %v9670, 1
        %v9782 = vsel %vm9700, %v9781, %v9780
        %v9783 = vsel %vm9703, %v9672, %v9782
        %v9784 = vrot.slane %v9674, 7
        %v9785 = vsel %vm9706, %v9784, %v9783
        %v9786 = vrot.slane %v9676, 6
        %v9787 = vsel %vm9709, %v9786, %v9785
        %v9788 = vrot.slane %v9678, 5
        %v9789 = vsel %vm9712, %v9788, %v9787
        %v9790 = vrot.slane %v9680, 4
        %v9791 = vsel %vm9715, %v9790, %v9789
        %v9792 = vrot.slane %v9682, 3
        %v9793 = vsel %vm9718, %v9792, %v9791
        %v9796 = vrot.slane %v9667, 3
        %v9797 = vrot.slane %v9669, 2
        %v9798 = vsel %vm9700, %v9797, %v9796
        %v9799 = vrot.slane %v9671, 1
        %v9800 = vsel %vm9703, %v9799, %v9798
        %v9801 = vsel %vm9706, %v9673, %v9800
        %v9802 = vrot.slane %v9675, 7
        %v9803 = vsel %vm9709, %v9802, %v9801
        %v9804 = vrot.slane %v9677, 6
        %v9805 = vsel %vm9712, %v9804, %v9803
        %v9806 = vrot.slane %v9679, 5
        %v9807 = vsel %vm9715, %v9806, %v9805
        %v9808 = vrot.slane %v9681, 4
        %v9809 = vsel %vm9718, %v9808, %v9807
        %v9810 = vrot.slane %v9668, 3
        %v9811 = vrot.slane %v9670, 2
        %v9812 = vsel %vm9700, %v9811, %v9810
        %v9813 = vrot.slane %v9672, 1
        %v9814 = vsel %vm9703, %v9813, %v9812
        %v9815 = vsel %vm9706, %v9674, %v9814
        %v9816 = vrot.slane %v9676, 7
        %v9817 = vsel %vm9709, %v9816, %v9815
        %v9818 = vrot.slane %v9678, 6
        %v9819 = vsel %vm9712, %v9818, %v9817
        %v9820 = vrot.slane %v9680, 5
        %v9821 = vsel %vm9715, %v9820, %v9819
        %v9822 = vrot.slane %v9682, 4
        %v9823 = vsel %vm9718, %v9822, %v9821
        %v9826 = vpack.c.bf16 %v9719, %v9719
        %v9827 = vpack.c.bf16 %v9733, %v9733
        %v9828 = vpack.c.bf16 %v9749, %v9749
        %v9829 = vpack.c.bf16 %v9763, %v9763
        %v9830 = vpack.c.bf16 %v9779, %v9779
        %v9831 = vpack.c.bf16 %v9793, %v9793
        %v9832 = vpack.c.bf16 %v9809, %v9809
        %v9833 = vpack.c.bf16 %v9823, %v9823
        %v9834 = vld [vmem:[#allocation10] sm:$0xff]
        %v9835 = vld [vmem:[#allocation10 + $0x8] sm:$0xff]
        %v9836 = vld [vmem:[#allocation10 + $0x10] sm:$0xff]
        %v9837 = vld [vmem:[#allocation10 + $0x18] sm:$0xff]
        %v9838 = vld [vmem:[#allocation10 + $0x20] sm:$0xff]
        %v9839 = vld [vmem:[#allocation10 + $0x28] sm:$0xff]
        %v9840 = vld [vmem:[#allocation10 + $0x30] sm:$0xff]
        %v9841 = vld [vmem:[#allocation10 + $0x38] sm:$0xff]
        %v9842 = vld [vmem:[#allocation10 + $0x40] sm:$0xff]
        %v9843 = vld [vmem:[#allocation10 + $0x48] sm:$0xff]
        %v9844 = vld [vmem:[#allocation10 + $0x50] sm:$0xff]
        %v9845 = vld [vmem:[#allocation10 + $0x58] sm:$0xff]
        %v9846 = vld [vmem:[#allocation10 + $0x60] sm:$0xff]
        %v9847 = vld [vmem:[#allocation10 + $0x68] sm:$0xff]
        %v9848 = vld [vmem:[#allocation10 + $0x70] sm:$0xff]
        %v9849 = vld [vmem:[#allocation10 + $0x78] sm:$0xff]
        %v9850 = vld [vmem:[#allocation10 + $0x80] sm:$0xff]
        %v9851 = vld [vmem:[#allocation10 + $0x88] sm:$0xff]
        %v9852 = vld [vmem:[#allocation10 + $0x90] sm:$0xff]
        %v9853 = vld [vmem:[#allocation10 + $0x98] sm:$0xff]
        %v9854 = vld [vmem:[#allocation10 + $0xa0] sm:$0xff]
        %v9855 = vld [vmem:[#allocation10 + $0xa8] sm:$0xff]
        %v9856 = vld [vmem:[#allocation10 + $0xb0] sm:$0xff]
        %v9857 = vld [vmem:[#allocation10 + $0xb8] sm:$0xff]
        %v9858 = vld [vmem:[#allocation10 + $0xc0] sm:$0xff]
        %v9859 = vld [vmem:[#allocation10 + $0xc8] sm:$0xff]
        %v9860 = vld [vmem:[#allocation10 + $0xd0] sm:$0xff]
        %v9861 = vld [vmem:[#allocation10 + $0xd8] sm:$0xff]
        %v9862 = vld [vmem:[#allocation10 + $0xe0] sm:$0xff]
        %v9863 = vld [vmem:[#allocation10 + $0xe8] sm:$0xff]
        %v9864 = vld [vmem:[#allocation10 + $0xf0] sm:$0xff]
        %v9865 = vld [vmem:[#allocation10 + $0xf8] sm:$0xff]
        %v9866 = vld [vmem:[#allocation10 + $0x100] sm:$0xff]
        %v9867 = vld [vmem:[#allocation10 + $0x108] sm:$0xff]
        %v9868 = vld [vmem:[#allocation10 + $0x110] sm:$0xff]
        %v9869 = vld [vmem:[#allocation10 + $0x118] sm:$0xff]
        %v9870 = vld [vmem:[#allocation10 + $0x120] sm:$0xff]
        %v9871 = vld [vmem:[#allocation10 + $0x128] sm:$0xff]
        %v9872 = vld [vmem:[#allocation10 + $0x130] sm:$0xff]
        %v9873 = vld [vmem:[#allocation10 + $0x138] sm:$0xff]
        %v9874 = vld [vmem:[#allocation10 + $0x140] sm:$0xff]
        %v9875 = vld [vmem:[#allocation10 + $0x148] sm:$0xff]
        %v9876 = vld [vmem:[#allocation10 + $0x150] sm:$0xff]
        %v9877 = vld [vmem:[#allocation10 + $0x158] sm:$0xff]
        %v9878 = vld [vmem:[#allocation10 + $0x160] sm:$0xff]
        %v9879 = vld [vmem:[#allocation10 + $0x168] sm:$0xff]
        %v9880 = vld [vmem:[#allocation10 + $0x170] sm:$0xff]
        %v9881 = vld [vmem:[#allocation10 + $0x178] sm:$0xff]
        %v9882 = vld [vmem:[#allocation10 + $0x180] sm:$0xff]
        %v9883 = vld [vmem:[#allocation10 + $0x188] sm:$0xff]
        %v9884 = vld [vmem:[#allocation10 + $0x190] sm:$0xff]
        %v9885 = vld [vmem:[#allocation10 + $0x198] sm:$0xff]
        %v9886 = vld [vmem:[#allocation10 + $0x1a0] sm:$0xff]
        %v9887 = vld [vmem:[#allocation10 + $0x1a8] sm:$0xff]
        %v9888 = vld [vmem:[#allocation10 + $0x1b0] sm:$0xff]
        %v9889 = vld [vmem:[#allocation10 + $0x1b8] sm:$0xff]
        %v9890 = vld [vmem:[#allocation10 + $0x1c0] sm:$0xff]
        %v9891 = vld [vmem:[#allocation10 + $0x1c8] sm:$0xff]
        %v9892 = vld [vmem:[#allocation10 + $0x1d0] sm:$0xff]
        %v9893 = vld [vmem:[#allocation10 + $0x1d8] sm:$0xff]
        %v9894 = vld [vmem:[#allocation10 + $0x1e0] sm:$0xff]
        %v9895 = vld [vmem:[#allocation10 + $0x1e8] sm:$0xff]
        %v9896 = vld [vmem:[#allocation10 + $0x1f0] sm:$0xff]
        %v9897 = vld [vmem:[#allocation10 + $0x1f8] sm:$0xff]
        %v9898 = vld [vmem:[#allocation10 + $0x200] sm:$0xff]
        %v9899 = vld [vmem:[#allocation10 + $0x208] sm:$0xff]
        %v9900 = vld [vmem:[#allocation10 + $0x210] sm:$0xff]
        %v9901 = vld [vmem:[#allocation10 + $0x218] sm:$0xff]
        %v9902 = vld [vmem:[#allocation10 + $0x220] sm:$0xff]
        %v9903 = vld [vmem:[#allocation10 + $0x228] sm:$0xff]
        %v9904 = vld [vmem:[#allocation10 + $0x230] sm:$0xff]
        %v9905 = vld [vmem:[#allocation10 + $0x238] sm:$0xff]
        %v9906 = vld [vmem:[#allocation10 + $0x240] sm:$0xff]
        %v9907 = vld [vmem:[#allocation10 + $0x248] sm:$0xff]
        %v9908 = vld [vmem:[#allocation10 + $0x250] sm:$0xff]
        %v9909 = vld [vmem:[#allocation10 + $0x258] sm:$0xff]
        %v9910 = vld [vmem:[#allocation10 + $0x260] sm:$0xff]
        %v9911 = vld [vmem:[#allocation10 + $0x268] sm:$0xff]
        %v9912 = vld [vmem:[#allocation10 + $0x270] sm:$0xff]
        %v9913 = vld [vmem:[#allocation10 + $0x278] sm:$0xff]
        %v9914 = vld [vmem:[#allocation10 + $0x280] sm:$0xff]
        %v9915 = vld [vmem:[#allocation10 + $0x288] sm:$0xff]
        %v9916 = vld [vmem:[#allocation10 + $0x290] sm:$0xff]
        %v9917 = vld [vmem:[#allocation10 + $0x298] sm:$0xff]
        %v9918 = vld [vmem:[#allocation10 + $0x2a0] sm:$0xff]
        %v9919 = vld [vmem:[#allocation10 + $0x2a8] sm:$0xff]
        %v9920 = vld [vmem:[#allocation10 + $0x2b0] sm:$0xff]
        %v9921 = vld [vmem:[#allocation10 + $0x2b8] sm:$0xff]
        %v9922 = vld [vmem:[#allocation10 + $0x2c0] sm:$0xff]
        %v9923 = vld [vmem:[#allocation10 + $0x2c8] sm:$0xff]
        %v9924 = vld [vmem:[#allocation10 + $0x2d0] sm:$0xff]
        %v9925 = vld [vmem:[#allocation10 + $0x2d8] sm:$0xff]
        %v9926 = vld [vmem:[#allocation10 + $0x2e0] sm:$0xff]
        %v9927 = vld [vmem:[#allocation10 + $0x2e8] sm:$0xff]
        %v9928 = vld [vmem:[#allocation10 + $0x2f0] sm:$0xff]
        %v9929 = vld [vmem:[#allocation10 + $0x2f8] sm:$0xff]
        %v9930 = vld [vmem:[#allocation10 + $0x300] sm:$0xff]
        %v9931 = vld [vmem:[#allocation10 + $0x308] sm:$0xff]
        %v9932 = vld [vmem:[#allocation10 + $0x310] sm:$0xff]
        %v9933 = vld [vmem:[#allocation10 + $0x318] sm:$0xff]
        %v9934 = vld [vmem:[#allocation10 + $0x320] sm:$0xff]
        %v9935 = vld [vmem:[#allocation10 + $0x328] sm:$0xff]
        %v9936 = vld [vmem:[#allocation10 + $0x330] sm:$0xff]
        %v9937 = vld [vmem:[#allocation10 + $0x338] sm:$0xff]
        %v9938 = vld [vmem:[#allocation10 + $0x340] sm:$0xff]
        %v9939 = vld [vmem:[#allocation10 + $0x348] sm:$0xff]
        %v9940 = vld [vmem:[#allocation10 + $0x350] sm:$0xff]
        %v9941 = vld [vmem:[#allocation10 + $0x358] sm:$0xff]
        %v9942 = vld [vmem:[#allocation10 + $0x360] sm:$0xff]
        %v9943 = vld [vmem:[#allocation10 + $0x368] sm:$0xff]
        %v9944 = vld [vmem:[#allocation10 + $0x370] sm:$0xff]
        %v9945 = vld [vmem:[#allocation10 + $0x378] sm:$0xff]
        %v9946 = vld [vmem:[#allocation10 + $0x380] sm:$0xff]
        %v9947 = vld [vmem:[#allocation10 + $0x388] sm:$0xff]
        %v9948 = vld [vmem:[#allocation10 + $0x390] sm:$0xff]
        %v9949 = vld [vmem:[#allocation10 + $0x398] sm:$0xff]
        %v9950 = vld [vmem:[#allocation10 + $0x3a0] sm:$0xff]
        %v9951 = vld [vmem:[#allocation10 + $0x3a8] sm:$0xff]
        %v9952 = vld [vmem:[#allocation10 + $0x3b0] sm:$0xff]
        %v9953 = vld [vmem:[#allocation10 + $0x3b8] sm:$0xff]
        %v9954 = vld [vmem:[#allocation10 + $0x3c0] sm:$0xff]
        %v9955 = vld [vmem:[#allocation10 + $0x3c8] sm:$0xff]
        %v9956 = vld [vmem:[#allocation10 + $0x3d0] sm:$0xff]
        %v9957 = vld [vmem:[#allocation10 + $0x3d8] sm:$0xff]
        %v9958 = vld [vmem:[#allocation10 + $0x3e0] sm:$0xff]
        %v9959 = vld [vmem:[#allocation10 + $0x3e8] sm:$0xff]
        %v9960 = vld [vmem:[#allocation10 + $0x3f0] sm:$0xff]
        %v9961 = vld [vmem:[#allocation10 + $0x3f8] sm:$0xff]
        %v9962 = vld [vmem:[#allocation10 + $0x400] sm:$0xff]
        %v9963 = vld [vmem:[#allocation10 + $0x408] sm:$0xff]
        %v9964 = vld [vmem:[#allocation10 + $0x410] sm:$0xff]
        %v9965 = vld [vmem:[#allocation10 + $0x418] sm:$0xff]
        %v9966 = vld [vmem:[#allocation10 + $0x420] sm:$0xff]
        %v9967 = vld [vmem:[#allocation10 + $0x428] sm:$0xff]
        %v9968 = vld [vmem:[#allocation10 + $0x430] sm:$0xff]
        %v9969 = vld [vmem:[#allocation10 + $0x438] sm:$0xff]
        %v9970 = vld [vmem:[#allocation10 + $0x440] sm:$0xff]
        %v9971 = vld [vmem:[#allocation10 + $0x448] sm:$0xff]
        %v9972 = vld [vmem:[#allocation10 + $0x450] sm:$0xff]
        %v9973 = vld [vmem:[#allocation10 + $0x458] sm:$0xff]
        %v9974 = vld [vmem:[#allocation10 + $0x460] sm:$0xff]
        %v9975 = vld [vmem:[#allocation10 + $0x468] sm:$0xff]
        %v9976 = vld [vmem:[#allocation10 + $0x470] sm:$0xff]
        %v9977 = vld [vmem:[#allocation10 + $0x478] sm:$0xff]
        %v9978 = vld [vmem:[#allocation10 + $0x480] sm:$0xff]
        %v9979 = vld [vmem:[#allocation10 + $0x488] sm:$0xff]
        %v9980 = vld [vmem:[#allocation10 + $0x490] sm:$0xff]
        %v9981 = vld [vmem:[#allocation10 + $0x498] sm:$0xff]
        %v9982 = vld [vmem:[#allocation10 + $0x4a0] sm:$0xff]
        %v9983 = vld [vmem:[#allocation10 + $0x4a8] sm:$0xff]
        %v9984 = vld [vmem:[#allocation10 + $0x4b0] sm:$0xff]
        %v9985 = vld [vmem:[#allocation10 + $0x4b8] sm:$0xff]
        %v9986 = vld [vmem:[#allocation10 + $0x4c0] sm:$0xff]
        %v9987 = vld [vmem:[#allocation10 + $0x4c8] sm:$0xff]
        %v9988 = vld [vmem:[#allocation10 + $0x4d0] sm:$0xff]
        %v9989 = vld [vmem:[#allocation10 + $0x4d8] sm:$0xff]
        %v9990 = vld [vmem:[#allocation10 + $0x4e0] sm:$0xff]
        %v9991 = vld [vmem:[#allocation10 + $0x4e8] sm:$0xff]
        %v9992 = vld [vmem:[#allocation10 + $0x4f0] sm:$0xff]
        %v9993 = vld [vmem:[#allocation10 + $0x4f8] sm:$0xff]
        %v9994 = vld [vmem:[#allocation10 + $0x500] sm:$0xff]
        %v9995 = vld [vmem:[#allocation10 + $0x508] sm:$0xff]
        %v9996 = vld [vmem:[#allocation10 + $0x510] sm:$0xff]
        %v9997 = vld [vmem:[#allocation10 + $0x518] sm:$0xff]
        %v9998 = vld [vmem:[#allocation10 + $0x520] sm:$0xff]
        %v9999 = vld [vmem:[#allocation10 + $0x528] sm:$0xff]
        %v10000 = vld [vmem:[#allocation10 + $0x530] sm:$0xff]
        %v10001 = vld [vmem:[#allocation10 + $0x538] sm:$0xff]
        %v10002 = vld [vmem:[#allocation10 + $0x540] sm:$0xff]
        %v10003 = vld [vmem:[#allocation10 + $0x548] sm:$0xff]
        %v10004 = vld [vmem:[#allocation10 + $0x550] sm:$0xff]
        %v10005 = vld [vmem:[#allocation10 + $0x558] sm:$0xff]
        %v10006 = vld [vmem:[#allocation10 + $0x560] sm:$0xff]
        %v10007 = vld [vmem:[#allocation10 + $0x568] sm:$0xff]
        %v10008 = vld [vmem:[#allocation10 + $0x570] sm:$0xff]
        %v10009 = vld [vmem:[#allocation10 + $0x578] sm:$0xff]
        %v10010 = vld [vmem:[#allocation10 + $0x580] sm:$0xff]
        %v10011 = vld [vmem:[#allocation10 + $0x588] sm:$0xff]
        %v10012 = vld [vmem:[#allocation10 + $0x590] sm:$0xff]
        %v10013 = vld [vmem:[#allocation10 + $0x598] sm:$0xff]
        %v10014 = vld [vmem:[#allocation10 + $0x5a0] sm:$0xff]
        %v10015 = vld [vmem:[#allocation10 + $0x5a8] sm:$0xff]
        %v10016 = vld [vmem:[#allocation10 + $0x5b0] sm:$0xff]
        %v10017 = vld [vmem:[#allocation10 + $0x5b8] sm:$0xff]
        %v10018 = vld [vmem:[#allocation10 + $0x5c0] sm:$0xff]
        %v10019 = vld [vmem:[#allocation10 + $0x5c8] sm:$0xff]
        %v10020 = vld [vmem:[#allocation10 + $0x5d0] sm:$0xff]
        %v10021 = vld [vmem:[#allocation10 + $0x5d8] sm:$0xff]
        %v10022 = vld [vmem:[#allocation10 + $0x5e0] sm:$0xff]
        %v10023 = vld [vmem:[#allocation10 + $0x5e8] sm:$0xff]
        %v10024 = vld [vmem:[#allocation10 + $0x5f0] sm:$0xff]
        %v10025 = vld [vmem:[#allocation10 + $0x5f8] sm:$0xff]
        %v10026 = vld [vmem:[#allocation10 + $0x600] sm:$0xff]
        %v10027 = vld [vmem:[#allocation10 + $0x608] sm:$0xff]
        %v10028 = vld [vmem:[#allocation10 + $0x610] sm:$0xff]
        %v10029 = vld [vmem:[#allocation10 + $0x618] sm:$0xff]
        %v10030 = vld [vmem:[#allocation10 + $0x620] sm:$0xff]
        %v10031 = vld [vmem:[#allocation10 + $0x628] sm:$0xff]
        %v10032 = vld [vmem:[#allocation10 + $0x630] sm:$0xff]
        %v10033 = vld [vmem:[#allocation10 + $0x638] sm:$0xff]
        %v10034 = vld [vmem:[#allocation10 + $0x640] sm:$0xff]
        %v10035 = vld [vmem:[#allocation10 + $0x648] sm:$0xff]
        %v10036 = vld [vmem:[#allocation10 + $0x650] sm:$0xff]
        %v10037 = vld [vmem:[#allocation10 + $0x658] sm:$0xff]
        %v10038 = vld [vmem:[#allocation10 + $0x660] sm:$0xff]
        %v10039 = vld [vmem:[#allocation10 + $0x668] sm:$0xff]
        %v10040 = vld [vmem:[#allocation10 + $0x670] sm:$0xff]
        %v10041 = vld [vmem:[#allocation10 + $0x678] sm:$0xff]
        %v10042 = vld [vmem:[#allocation10 + $0x680] sm:$0xff]
        %v10043 = vld [vmem:[#allocation10 + $0x688] sm:$0xff]
        %v10044 = vld [vmem:[#allocation10 + $0x690] sm:$0xff]
        %v10045 = vld [vmem:[#allocation10 + $0x698] sm:$0xff]
        %v10046 = vld [vmem:[#allocation10 + $0x6a0] sm:$0xff]
        %v10047 = vld [vmem:[#allocation10 + $0x6a8] sm:$0xff]
        %v10048 = vld [vmem:[#allocation10 + $0x6b0] sm:$0xff]
        %v10049 = vld [vmem:[#allocation10 + $0x6b8] sm:$0xff]
        %v10050 = vld [vmem:[#allocation10 + $0x6c0] sm:$0xff]
        %v10051 = vld [vmem:[#allocation10 + $0x6c8] sm:$0xff]
        %v10052 = vld [vmem:[#allocation10 + $0x6d0] sm:$0xff]
        %v10053 = vld [vmem:[#allocation10 + $0x6d8] sm:$0xff]
        %v10054 = vld [vmem:[#allocation10 + $0x6e0] sm:$0xff]
        %v10055 = vld [vmem:[#allocation10 + $0x6e8] sm:$0xff]
        %v10056 = vld [vmem:[#allocation10 + $0x6f0] sm:$0xff]
        %v10057 = vld [vmem:[#allocation10 + $0x6f8] sm:$0xff]
        %v10058 = vld [vmem:[#allocation10 + $0x700] sm:$0xff]
        %v10059 = vld [vmem:[#allocation10 + $0x708] sm:$0xff]
        %v10060 = vld [vmem:[#allocation10 + $0x710] sm:$0xff]
        %v10061 = vld [vmem:[#allocation10 + $0x718] sm:$0xff]
        %v10062 = vld [vmem:[#allocation10 + $0x720] sm:$0xff]
        %v10063 = vld [vmem:[#allocation10 + $0x728] sm:$0xff]
        %v10064 = vld [vmem:[#allocation10 + $0x730] sm:$0xff]
        %v10065 = vld [vmem:[#allocation10 + $0x738] sm:$0xff]
        %v10066 = vld [vmem:[#allocation10 + $0x740] sm:$0xff]
        %v10067 = vld [vmem:[#allocation10 + $0x748] sm:$0xff]
        %v10068 = vld [vmem:[#allocation10 + $0x750] sm:$0xff]
        %v10069 = vld [vmem:[#allocation10 + $0x758] sm:$0xff]
        %v10070 = vld [vmem:[#allocation10 + $0x760] sm:$0xff]
        %v10071 = vld [vmem:[#allocation10 + $0x768] sm:$0xff]
        %v10072 = vld [vmem:[#allocation10 + $0x770] sm:$0xff]
        %v10073 = vld [vmem:[#allocation10 + $0x778] sm:$0xff]
        %v10074 = vld [vmem:[#allocation10 + $0x780] sm:$0xff]
        %v10075 = vld [vmem:[#allocation10 + $0x788] sm:$0xff]
        %v10076 = vld [vmem:[#allocation10 + $0x790] sm:$0xff]
        %v10077 = vld [vmem:[#allocation10 + $0x798] sm:$0xff]
        %v10078 = vld [vmem:[#allocation10 + $0x7a0] sm:$0xff]
        %v10079 = vld [vmem:[#allocation10 + $0x7a8] sm:$0xff]
        %v10080 = vld [vmem:[#allocation10 + $0x7b0] sm:$0xff]
        %v10081 = vld [vmem:[#allocation10 + $0x7b8] sm:$0xff]
        %v10082 = vld [vmem:[#allocation10 + $0x7c0] sm:$0xff]
        %v10083 = vld [vmem:[#allocation10 + $0x7c8] sm:$0xff]
        %v10084 = vld [vmem:[#allocation10 + $0x7d0] sm:$0xff]
        %v10085 = vld [vmem:[#allocation10 + $0x7d8] sm:$0xff]
        %v10086 = vld [vmem:[#allocation10 + $0x7e0] sm:$0xff]
        %v10087 = vld [vmem:[#allocation10 + $0x7e8] sm:$0xff]
        %v10088 = vld [vmem:[#allocation10 + $0x7f0] sm:$0xff]
        %v10089 = vld [vmem:[#allocation10 + $0x7f8] sm:$0xff]
        %v10090 = vld [vmem:[#allocation11] sm:$0xf]
        %v10092 = vperm.slane %v10090, 0
        %v10093 = vperm.slane %v10090, 1
        %v10094 = vperm.slane %v10090, 2
        %v10095 = vperm.slane %v10090, 3
        %v10356 = vunpack.c.l.b16 %v9834
        %v10357 = vunpack.c.h.b16 %v9834
        %v10358 = vunpack.c.l.b16 %v9835
        %v10359 = vunpack.c.h.b16 %v9835
        %v10360 = vunpack.c.l.b16 %v9836
        %v10361 = vunpack.c.h.b16 %v9836
        %v10362 = vunpack.c.l.b16 %v9837
        %v10363 = vunpack.c.h.b16 %v9837
        %v10364 = vunpack.c.l.b16 %v9838
        %v10365 = vunpack.c.h.b16 %v9838
        %v10366 = vunpack.c.l.b16 %v9839
        %v10367 = vunpack.c.h.b16 %v9839
        %v10368 = vunpack.c.l.b16 %v9840
        %v10369 = vunpack.c.h.b16 %v9840
        %v10370 = vunpack.c.l.b16 %v9841
        %v10371 = vunpack.c.h.b16 %v9841
        %v10372 = vunpack.c.l.b16 %v9842
        %v10373 = vunpack.c.h.b16 %v9842
        %v10374 = vunpack.c.l.b16 %v9843
        %v10375 = vunpack.c.h.b16 %v9843
        %v10376 = vunpack.c.l.b16 %v9844
        %v10377 = vunpack.c.h.b16 %v9844
        %v10378 = vunpack.c.l.b16 %v9845
        %v10379 = vunpack.c.h.b16 %v9845
        %v10380 = vunpack.c.l.b16 %v9846
        %v10381 = vunpack.c.h.b16 %v9846
        %v10382 = vunpack.c.l.b16 %v9847
        %v10383 = vunpack.c.h.b16 %v9847
        %v10384 = vunpack.c.l.b16 %v9848
        %v10385 = vunpack.c.h.b16 %v9848
        %v10386 = vunpack.c.l.b16 %v9849
        %v10387 = vunpack.c.h.b16 %v9849
        %v10388 = vunpack.c.l.b16 %v9850
        %v10389 = vunpack.c.h.b16 %v9850
        %v10390 = vunpack.c.l.b16 %v9851
        %v10391 = vunpack.c.h.b16 %v9851
        %v10392 = vunpack.c.l.b16 %v9852
        %v10393 = vunpack.c.h.b16 %v9852
        %v10394 = vunpack.c.l.b16 %v9853
        %v10395 = vunpack.c.h.b16 %v9853
        %v10396 = vunpack.c.l.b16 %v9854
        %v10397 = vunpack.c.h.b16 %v9854
        %v10398 = vunpack.c.l.b16 %v9855
        %v10399 = vunpack.c.h.b16 %v9855
        %v10400 = vunpack.c.l.b16 %v9856
        %v10401 = vunpack.c.h.b16 %v9856
        %v10402 = vunpack.c.l.b16 %v9857
        %v10403 = vunpack.c.h.b16 %v9857
        %v10404 = vunpack.c.l.b16 %v9858
        %v10405 = vunpack.c.h.b16 %v9858
        %v10406 = vunpack.c.l.b16 %v9859
        %v10407 = vunpack.c.h.b16 %v9859
        %v10408 = vunpack.c.l.b16 %v9860
        %v10409 = vunpack.c.h.b16 %v9860
        %v10410 = vunpack.c.l.b16 %v9861
        %v10411 = vunpack.c.h.b16 %v9861
        %v10412 = vunpack.c.l.b16 %v9862
        %v10413 = vunpack.c.h.b16 %v9862
        %v10414 = vunpack.c.l.b16 %v9863
        %v10415 = vunpack.c.h.b16 %v9863
        %v10416 = vunpack.c.l.b16 %v9864
        %v10417 = vunpack.c.h.b16 %v9864
        %v10418 = vunpack.c.l.b16 %v9865
        %v10419 = vunpack.c.h.b16 %v9865
        %v10420 = vunpack.c.l.b16 %v9866
        %v10421 = vunpack.c.h.b16 %v9866
        %v10422 = vunpack.c.l.b16 %v9867
        %v10423 = vunpack.c.h.b16 %v9867
        %v10424 = vunpack.c.l.b16 %v9868
        %v10425 = vunpack.c.h.b16 %v9868
        %v10426 = vunpack.c.l.b16 %v9869
        %v10427 = vunpack.c.h.b16 %v9869
        %v10428 = vunpack.c.l.b16 %v9870
        %v10429 = vunpack.c.h.b16 %v9870
        %v10430 = vunpack.c.l.b16 %v9871
        %v10431 = vunpack.c.h.b16 %v9871
        %v10432 = vunpack.c.l.b16 %v9872
        %v10433 = vunpack.c.h.b16 %v9872
        %v10434 = vunpack.c.l.b16 %v9873
        %v10435 = vunpack.c.h.b16 %v9873
        %v10436 = vunpack.c.l.b16 %v9874
        %v10437 = vunpack.c.h.b16 %v9874
        %v10438 = vunpack.c.l.b16 %v9875
        %v10439 = vunpack.c.h.b16 %v9875
        %v10440 = vunpack.c.l.b16 %v9876
        %v10441 = vunpack.c.h.b16 %v9876
        %v10442 = vunpack.c.l.b16 %v9877
        %v10443 = vunpack.c.h.b16 %v9877
        %v10444 = vunpack.c.l.b16 %v9878
        %v10445 = vunpack.c.h.b16 %v9878
        %v10446 = vunpack.c.l.b16 %v9879
        %v10447 = vunpack.c.h.b16 %v9879
        %v10448 = vunpack.c.l.b16 %v9880
        %v10449 = vunpack.c.h.b16 %v9880
        %v10450 = vunpack.c.l.b16 %v9881
        %v10451 = vunpack.c.h.b16 %v9881
        %v10452 = vunpack.c.l.b16 %v9882
        %v10453 = vunpack.c.h.b16 %v9882
        %v10454 = vunpack.c.l.b16 %v9883
        %v10455 = vunpack.c.h.b16 %v9883
        %v10456 = vunpack.c.l.b16 %v9884
        %v10457 = vunpack.c.h.b16 %v9884
        %v10458 = vunpack.c.l.b16 %v9885
        %v10459 = vunpack.c.h.b16 %v9885
        %v10460 = vunpack.c.l.b16 %v9886
        %v10461 = vunpack.c.h.b16 %v9886
        %v10462 = vunpack.c.l.b16 %v9887
        %v10463 = vunpack.c.h.b16 %v9887
        %v10464 = vunpack.c.l.b16 %v9888
        %v10465 = vunpack.c.h.b16 %v9888
        %v10466 = vunpack.c.l.b16 %v9889
        %v10467 = vunpack.c.h.b16 %v9889
        %v10468 = vunpack.c.l.b16 %v9890
        %v10469 = vunpack.c.h.b16 %v9890
        %v10470 = vunpack.c.l.b16 %v9891
        %v10471 = vunpack.c.h.b16 %v9891
        %v10472 = vunpack.c.l.b16 %v9892
        %v10473 = vunpack.c.h.b16 %v9892
        %v10474 = vunpack.c.l.b16 %v9893
        %v10475 = vunpack.c.h.b16 %v9893
        %v10476 = vunpack.c.l.b16 %v9894
        %v10477 = vunpack.c.h.b16 %v9894
        %v10478 = vunpack.c.l.b16 %v9895
        %v10479 = vunpack.c.h.b16 %v9895
        %v10480 = vunpack.c.l.b16 %v9896
        %v10481 = vunpack.c.h.b16 %v9896
        %v10482 = vunpack.c.l.b16 %v9897
        %v10483 = vunpack.c.h.b16 %v9897
        %v10484 = vunpack.c.l.b16 %v9898
        %v10485 = vunpack.c.h.b16 %v9898
        %v10486 = vunpack.c.l.b16 %v9899
        %v10487 = vunpack.c.h.b16 %v9899
        %v10488 = vunpack.c.l.b16 %v9900
        %v10489 = vunpack.c.h.b16 %v9900
        %v10490 = vunpack.c.l.b16 %v9901
        %v10491 = vunpack.c.h.b16 %v9901
        %v10492 = vunpack.c.l.b16 %v9902
        %v10493 = vunpack.c.h.b16 %v9902
        %v10494 = vunpack.c.l.b16 %v9903
        %v10495 = vunpack.c.h.b16 %v9903
        %v10496 = vunpack.c.l.b16 %v9904
        %v10497 = vunpack.c.h.b16 %v9904
        %v10498 = vunpack.c.l.b16 %v9905
        %v10499 = vunpack.c.h.b16 %v9905
        %v10500 = vunpack.c.l.b16 %v9906
        %v10501 = vunpack.c.h.b16 %v9906
        %v10502 = vunpack.c.l.b16 %v9907
        %v10503 = vunpack.c.h.b16 %v9907
        %v10504 = vunpack.c.l.b16 %v9908
        %v10505 = vunpack.c.h.b16 %v9908
        %v10506 = vunpack.c.l.b16 %v9909
        %v10507 = vunpack.c.h.b16 %v9909
        %v10508 = vunpack.c.l.b16 %v9910
        %v10509 = vunpack.c.h.b16 %v9910
        %v10510 = vunpack.c.l.b16 %v9911
        %v10511 = vunpack.c.h.b16 %v9911
        %v10512 = vunpack.c.l.b16 %v9912
        %v10513 = vunpack.c.h.b16 %v9912
        %v10514 = vunpack.c.l.b16 %v9913
        %v10515 = vunpack.c.h.b16 %v9913
        %v10516 = vunpack.c.l.b16 %v9914
        %v10517 = vunpack.c.h.b16 %v9914
        %v10518 = vunpack.c.l.b16 %v9915
        %v10519 = vunpack.c.h.b16 %v9915
        %v10520 = vunpack.c.l.b16 %v9916
        %v10521 = vunpack.c.h.b16 %v9916
        %v10522 = vunpack.c.l.b16 %v9917
        %v10523 = vunpack.c.h.b16 %v9917
        %v10524 = vunpack.c.l.b16 %v9918
        %v10525 = vunpack.c.h.b16 %v9918
        %v10526 = vunpack.c.l.b16 %v9919
        %v10527 = vunpack.c.h.b16 %v9919
        %v10528 = vunpack.c.l.b16 %v9920
        %v10529 = vunpack.c.h.b16 %v9920
        %v10530 = vunpack.c.l.b16 %v9921
        %v10531 = vunpack.c.h.b16 %v9921
        %v10532 = vunpack.c.l.b16 %v9922
        %v10533 = vunpack.c.h.b16 %v9922
        %v10534 = vunpack.c.l.b16 %v9923
        %v10535 = vunpack.c.h.b16 %v9923
        %v10536 = vunpack.c.l.b16 %v9924
        %v10537 = vunpack.c.h.b16 %v9924
        %v10538 = vunpack.c.l.b16 %v9925
        %v10539 = vunpack.c.h.b16 %v9925
        %v10540 = vunpack.c.l.b16 %v9926
        %v10541 = vunpack.c.h.b16 %v9926
        %v10542 = vunpack.c.l.b16 %v9927
        %v10543 = vunpack.c.h.b16 %v9927
        %v10544 = vunpack.c.l.b16 %v9928
        %v10545 = vunpack.c.h.b16 %v9928
        %v10546 = vunpack.c.l.b16 %v9929
        %v10547 = vunpack.c.h.b16 %v9929
        %v10548 = vunpack.c.l.b16 %v9930
        %v10549 = vunpack.c.h.b16 %v9930
        %v10550 = vunpack.c.l.b16 %v9931
        %v10551 = vunpack.c.h.b16 %v9931
        %v10552 = vunpack.c.l.b16 %v9932
        %v10553 = vunpack.c.h.b16 %v9932
        %v10554 = vunpack.c.l.b16 %v9933
        %v10555 = vunpack.c.h.b16 %v9933
        %v10556 = vunpack.c.l.b16 %v9934
        %v10557 = vunpack.c.h.b16 %v9934
        %v10558 = vunpack.c.l.b16 %v9935
        %v10559 = vunpack.c.h.b16 %v9935
        %v10560 = vunpack.c.l.b16 %v9936
        %v10561 = vunpack.c.h.b16 %v9936
        %v10562 = vunpack.c.l.b16 %v9937
        %v10563 = vunpack.c.h.b16 %v9937
        %v10564 = vunpack.c.l.b16 %v9938
        %v10565 = vunpack.c.h.b16 %v9938
        %v10566 = vunpack.c.l.b16 %v9939
        %v10567 = vunpack.c.h.b16 %v9939
        %v10568 = vunpack.c.l.b16 %v9940
        %v10569 = vunpack.c.h.b16 %v9940
        %v10570 = vunpack.c.l.b16 %v9941
        %v10571 = vunpack.c.h.b16 %v9941
        %v10572 = vunpack.c.l.b16 %v9942
        %v10573 = vunpack.c.h.b16 %v9942
        %v10574 = vunpack.c.l.b16 %v9943
        %v10575 = vunpack.c.h.b16 %v9943
        %v10576 = vunpack.c.l.b16 %v9944
        %v10577 = vunpack.c.h.b16 %v9944
        %v10578 = vunpack.c.l.b16 %v9945
        %v10579 = vunpack.c.h.b16 %v9945
        %v10580 = vunpack.c.l.b16 %v9946
        %v10581 = vunpack.c.h.b16 %v9946
        %v10582 = vunpack.c.l.b16 %v9947
        %v10583 = vunpack.c.h.b16 %v9947
        %v10584 = vunpack.c.l.b16 %v9948
        %v10585 = vunpack.c.h.b16 %v9948
        %v10586 = vunpack.c.l.b16 %v9949
        %v10587 = vunpack.c.h.b16 %v9949
        %v10588 = vunpack.c.l.b16 %v9950
        %v10589 = vunpack.c.h.b16 %v9950
        %v10590 = vunpack.c.l.b16 %v9951
        %v10591 = vunpack.c.h.b16 %v9951
        %v10592 = vunpack.c.l.b16 %v9952
        %v10593 = vunpack.c.h.b16 %v9952
        %v10594 = vunpack.c.l.b16 %v9953
        %v10595 = vunpack.c.h.b16 %v9953
        %v10596 = vunpack.c.l.b16 %v9954
        %v10597 = vunpack.c.h.b16 %v9954
        %v10598 = vunpack.c.l.b16 %v9955
        %v10599 = vunpack.c.h.b16 %v9955
        %v10600 = vunpack.c.l.b16 %v9956
        %v10601 = vunpack.c.h.b16 %v9956
        %v10602 = vunpack.c.l.b16 %v9957
        %v10603 = vunpack.c.h.b16 %v9957
        %v10604 = vunpack.c.l.b16 %v9958
        %v10605 = vunpack.c.h.b16 %v9958
        %v10606 = vunpack.c.l.b16 %v9959
        %v10607 = vunpack.c.h.b16 %v9959
        %v10608 = vunpack.c.l.b16 %v9960
        %v10609 = vunpack.c.h.b16 %v9960
        %v10610 = vunpack.c.l.b16 %v9961
        %v10611 = vunpack.c.h.b16 %v9961
        %v10612 = vunpack.c.l.b16 %v9962
        %v10613 = vunpack.c.h.b16 %v9962
        %v10614 = vunpack.c.l.b16 %v9963
        %v10615 = vunpack.c.h.b16 %v9963
        %v10616 = vunpack.c.l.b16 %v9964
        %v10617 = vunpack.c.h.b16 %v9964
        %v10618 = vunpack.c.l.b16 %v9965
        %v10619 = vunpack.c.h.b16 %v9965
        %v10620 = vunpack.c.l.b16 %v9966
        %v10621 = vunpack.c.h.b16 %v9966
        %v10622 = vunpack.c.l.b16 %v9967
        %v10623 = vunpack.c.h.b16 %v9967
        %v10624 = vunpack.c.l.b16 %v9968
        %v10625 = vunpack.c.h.b16 %v9968
        %v10626 = vunpack.c.l.b16 %v9969
        %v10627 = vunpack.c.h.b16 %v9969
        %v10628 = vunpack.c.l.b16 %v9970
        %v10629 = vunpack.c.h.b16 %v9970
        %v10630 = vunpack.c.l.b16 %v9971
        %v10631 = vunpack.c.h.b16 %v9971
        %v10632 = vunpack.c.l.b16 %v9972
        %v10633 = vunpack.c.h.b16 %v9972
        %v10634 = vunpack.c.l.b16 %v9973
        %v10635 = vunpack.c.h.b16 %v9973
        %v10636 = vunpack.c.l.b16 %v9974
        %v10637 = vunpack.c.h.b16 %v9974
        %v10638 = vunpack.c.l.b16 %v9975
        %v10639 = vunpack.c.h.b16 %v9975
        %v10640 = vunpack.c.l.b16 %v9976
        %v10641 = vunpack.c.h.b16 %v9976
        %v10642 = vunpack.c.l.b16 %v9977
        %v10643 = vunpack.c.h.b16 %v9977
        %v10644 = vunpack.c.l.b16 %v9978
        %v10645 = vunpack.c.h.b16 %v9978
        %v10646 = vunpack.c.l.b16 %v9979
        %v10647 = vunpack.c.h.b16 %v9979
        %v10648 = vunpack.c.l.b16 %v9980
        %v10649 = vunpack.c.h.b16 %v9980
        %v10650 = vunpack.c.l.b16 %v9981
        %v10651 = vunpack.c.h.b16 %v9981
        %v10652 = vunpack.c.l.b16 %v9982
        %v10653 = vunpack.c.h.b16 %v9982
        %v10654 = vunpack.c.l.b16 %v9983
        %v10655 = vunpack.c.h.b16 %v9983
        %v10656 = vunpack.c.l.b16 %v9984
        %v10657 = vunpack.c.h.b16 %v9984
        %v10658 = vunpack.c.l.b16 %v9985
        %v10659 = vunpack.c.h.b16 %v9985
        %v10660 = vunpack.c.l.b16 %v9986
        %v10661 = vunpack.c.h.b16 %v9986
        %v10662 = vunpack.c.l.b16 %v9987
        %v10663 = vunpack.c.h.b16 %v9987
        %v10664 = vunpack.c.l.b16 %v9988
        %v10665 = vunpack.c.h.b16 %v9988
        %v10666 = vunpack.c.l.b16 %v9989
        %v10667 = vunpack.c.h.b16 %v9989
        %v10668 = vunpack.c.l.b16 %v9990
        %v10669 = vunpack.c.h.b16 %v9990
        %v10670 = vunpack.c.l.b16 %v9991
        %v10671 = vunpack.c.h.b16 %v9991
        %v10672 = vunpack.c.l.b16 %v9992
        %v10673 = vunpack.c.h.b16 %v9992
        %v10674 = vunpack.c.l.b16 %v9993
        %v10675 = vunpack.c.h.b16 %v9993
        %v10676 = vunpack.c.l.b16 %v9994
        %v10677 = vunpack.c.h.b16 %v9994
        %v10678 = vunpack.c.l.b16 %v9995
        %v10679 = vunpack.c.h.b16 %v9995
        %v10680 = vunpack.c.l.b16 %v9996
        %v10681 = vunpack.c.h.b16 %v9996
        %v10682 = vunpack.c.l.b16 %v9997
        %v10683 = vunpack.c.h.b16 %v9997
        %v10684 = vunpack.c.l.b16 %v9998
        %v10685 = vunpack.c.h.b16 %v9998
        %v10686 = vunpack.c.l.b16 %v9999
        %v10687 = vunpack.c.h.b16 %v9999
        %v10688 = vunpack.c.l.b16 %v10000
        %v10689 = vunpack.c.h.b16 %v10000
        %v10690 = vunpack.c.l.b16 %v10001
        %v10691 = vunpack.c.h.b16 %v10001
        %v10692 = vunpack.c.l.b16 %v10002
        %v10693 = vunpack.c.h.b16 %v10002
        %v10694 = vunpack.c.l.b16 %v10003
        %v10695 = vunpack.c.h.b16 %v10003
        %v10696 = vunpack.c.l.b16 %v10004
        %v10697 = vunpack.c.h.b16 %v10004
        %v10698 = vunpack.c.l.b16 %v10005
        %v10699 = vunpack.c.h.b16 %v10005
        %v10700 = vunpack.c.l.b16 %v10006
        %v10701 = vunpack.c.h.b16 %v10006
        %v10702 = vunpack.c.l.b16 %v10007
        %v10703 = vunpack.c.h.b16 %v10007
        %v10704 = vunpack.c.l.b16 %v10008
        %v10705 = vunpack.c.h.b16 %v10008
        %v10706 = vunpack.c.l.b16 %v10009
        %v10707 = vunpack.c.h.b16 %v10009
        %v10708 = vunpack.c.l.b16 %v10010
        %v10709 = vunpack.c.h.b16 %v10010
        %v10710 = vunpack.c.l.b16 %v10011
        %v10711 = vunpack.c.h.b16 %v10011
        %v10712 = vunpack.c.l.b16 %v10012
        %v10713 = vunpack.c.h.b16 %v10012
        %v10714 = vunpack.c.l.b16 %v10013
        %v10715 = vunpack.c.h.b16 %v10013
        %v10716 = vunpack.c.l.b16 %v10014
        %v10717 = vunpack.c.h.b16 %v10014
        %v10718 = vunpack.c.l.b16 %v10015
        %v10719 = vunpack.c.h.b16 %v10015
        %v10720 = vunpack.c.l.b16 %v10016
        %v10721 = vunpack.c.h.b16 %v10016
        %v10722 = vunpack.c.l.b16 %v10017
        %v10723 = vunpack.c.h.b16 %v10017
        %v10724 = vunpack.c.l.b16 %v10018
        %v10725 = vunpack.c.h.b16 %v10018
        %v10726 = vunpack.c.l.b16 %v10019
        %v10727 = vunpack.c.h.b16 %v10019
        %v10728 = vunpack.c.l.b16 %v10020
        %v10729 = vunpack.c.h.b16 %v10020
        %v10730 = vunpack.c.l.b16 %v10021
        %v10731 = vunpack.c.h.b16 %v10021
        %v10732 = vunpack.c.l.b16 %v10022
        %v10733 = vunpack.c.h.b16 %v10022
        %v10734 = vunpack.c.l.b16 %v10023
        %v10735 = vunpack.c.h.b16 %v10023
        %v10736 = vunpack.c.l.b16 %v10024
        %v10737 = vunpack.c.h.b16 %v10024
        %v10738 = vunpack.c.l.b16 %v10025
        %v10739 = vunpack.c.h.b16 %v10025
        %v10740 = vunpack.c.l.b16 %v10026
        %v10741 = vunpack.c.h.b16 %v10026
        %v10742 = vunpack.c.l.b16 %v10027
        %v10743 = vunpack.c.h.b16 %v10027
        %v10744 = vunpack.c.l.b16 %v10028
        %v10745 = vunpack.c.h.b16 %v10028
        %v10746 = vunpack.c.l.b16 %v10029
        %v10747 = vunpack.c.h.b16 %v10029
        %v10748 = vunpack.c.l.b16 %v10030
        %v10749 = vunpack.c.h.b16 %v10030
        %v10750 = vunpack.c.l.b16 %v10031
        %v10751 = vunpack.c.h.b16 %v10031
        %v10752 = vunpack.c.l.b16 %v10032
        %v10753 = vunpack.c.h.b16 %v10032
        %v10754 = vunpack.c.l.b16 %v10033
        %v10755 = vunpack.c.h.b16 %v10033
        %v10756 = vunpack.c.l.b16 %v10034
        %v10757 = vunpack.c.h.b16 %v10034
        %v10758 = vunpack.c.l.b16 %v10035
        %v10759 = vunpack.c.h.b16 %v10035
        %v10760 = vunpack.c.l.b16 %v10036
        %v10761 = vunpack.c.h.b16 %v10036
        %v10762 = vunpack.c.l.b16 %v10037
        %v10763 = vunpack.c.h.b16 %v10037
        %v10764 = vunpack.c.l.b16 %v10038
        %v10765 = vunpack.c.h.b16 %v10038
        %v10766 = vunpack.c.l.b16 %v10039
        %v10767 = vunpack.c.h.b16 %v10039
        %v10768 = vunpack.c.l.b16 %v10040
        %v10769 = vunpack.c.h.b16 %v10040
        %v10770 = vunpack.c.l.b16 %v10041
        %v10771 = vunpack.c.h.b16 %v10041
        %v10772 = vunpack.c.l.b16 %v10042
        %v10773 = vunpack.c.h.b16 %v10042
        %v10774 = vunpack.c.l.b16 %v10043
        %v10775 = vunpack.c.h.b16 %v10043
        %v10776 = vunpack.c.l.b16 %v10044
        %v10777 = vunpack.c.h.b16 %v10044
        %v10778 = vunpack.c.l.b16 %v10045
        %v10779 = vunpack.c.h.b16 %v10045
        %v10780 = vunpack.c.l.b16 %v10046
        %v10781 = vunpack.c.h.b16 %v10046
        %v10782 = vunpack.c.l.b16 %v10047
        %v10783 = vunpack.c.h.b16 %v10047
        %v10784 = vunpack.c.l.b16 %v10048
        %v10785 = vunpack.c.h.b16 %v10048
        %v10786 = vunpack.c.l.b16 %v10049
        %v10787 = vunpack.c.h.b16 %v10049
        %v10788 = vunpack.c.l.b16 %v10050
        %v10789 = vunpack.c.h.b16 %v10050
        %v10790 = vunpack.c.l.b16 %v10051
        %v10791 = vunpack.c.h.b16 %v10051
        %v10792 = vunpack.c.l.b16 %v10052
        %v10793 = vunpack.c.h.b16 %v10052
        %v10794 = vunpack.c.l.b16 %v10053
        %v10795 = vunpack.c.h.b16 %v10053
        %v10796 = vunpack.c.l.b16 %v10054
        %v10797 = vunpack.c.h.b16 %v10054
        %v10798 = vunpack.c.l.b16 %v10055
        %v10799 = vunpack.c.h.b16 %v10055
        %v10800 = vunpack.c.l.b16 %v10056
        %v10801 = vunpack.c.h.b16 %v10056
        %v10802 = vunpack.c.l.b16 %v10057
        %v10803 = vunpack.c.h.b16 %v10057
        %v10804 = vunpack.c.l.b16 %v10058
        %v10805 = vunpack.c.h.b16 %v10058
        %v10806 = vunpack.c.l.b16 %v10059
        %v10807 = vunpack.c.h.b16 %v10059
        %v10808 = vunpack.c.l.b16 %v10060
        %v10809 = vunpack.c.h.b16 %v10060
        %v10810 = vunpack.c.l.b16 %v10061
        %v10811 = vunpack.c.h.b16 %v10061
        %v10812 = vunpack.c.l.b16 %v10062
        %v10813 = vunpack.c.h.b16 %v10062
        %v10814 = vunpack.c.l.b16 %v10063
        %v10815 = vunpack.c.h.b16 %v10063
        %v10816 = vunpack.c.l.b16 %v10064
        %v10817 = vunpack.c.h.b16 %v10064
        %v10818 = vunpack.c.l.b16 %v10065
        %v10819 = vunpack.c.h.b16 %v10065
        %v10820 = vunpack.c.l.b16 %v10066
        %v10821 = vunpack.c.h.b16 %v10066
        %v10822 = vunpack.c.l.b16 %v10067
        %v10823 = vunpack.c.h.b16 %v10067
        %v10824 = vunpack.c.l.b16 %v10068
        %v10825 = vunpack.c.h.b16 %v10068
        %v10826 = vunpack.c.l.b16 %v10069
        %v10827 = vunpack.c.h.b16 %v10069
        %v10828 = vunpack.c.l.b16 %v10070
        %v10829 = vunpack.c.h.b16 %v10070
        %v10830 = vunpack.c.l.b16 %v10071
        %v10831 = vunpack.c.h.b16 %v10071
        %v10832 = vunpack.c.l.b16 %v10072
        %v10833 = vunpack.c.h.b16 %v10072
        %v10834 = vunpack.c.l.b16 %v10073
        %v10835 = vunpack.c.h.b16 %v10073
        %v10836 = vunpack.c.l.b16 %v10074
        %v10837 = vunpack.c.h.b16 %v10074
        %v10838 = vunpack.c.l.b16 %v10075
        %v10839 = vunpack.c.h.b16 %v10075
        %v10840 = vunpack.c.l.b16 %v10076
        %v10841 = vunpack.c.h.b16 %v10076
        %v10842 = vunpack.c.l.b16 %v10077
        %v10843 = vunpack.c.h.b16 %v10077
        %v10844 = vunpack.c.l.b16 %v10078
        %v10845 = vunpack.c.h.b16 %v10078
        %v10846 = vunpack.c.l.b16 %v10079
        %v10847 = vunpack.c.h.b16 %v10079
        %v10848 = vunpack.c.l.b16 %v10080
        %v10849 = vunpack.c.h.b16 %v10080
        %v10850 = vunpack.c.l.b16 %v10081
        %v10851 = vunpack.c.h.b16 %v10081
        %v10852 = vunpack.c.l.b16 %v10082
        %v10853 = vunpack.c.h.b16 %v10082
        %v10854 = vunpack.c.l.b16 %v10083
        %v10855 = vunpack.c.h.b16 %v10083
        %v10856 = vunpack.c.l.b16 %v10084
        %v10857 = vunpack.c.h.b16 %v10084
        %v10858 = vunpack.c.l.b16 %v10085
        %v10859 = vunpack.c.h.b16 %v10085
        %v10860 = vunpack.c.l.b16 %v10086
        %v10861 = vunpack.c.h.b16 %v10086
        %v10862 = vunpack.c.l.b16 %v10087
        %v10863 = vunpack.c.h.b16 %v10087
        %v10864 = vunpack.c.l.b16 %v10088
        %v10865 = vunpack.c.h.b16 %v10088
        %v10866 = vunpack.c.l.b16 %v10089
        %v10867 = vunpack.c.h.b16 %v10089
        %v10868 = vpack.c.b16 %v10360, %v10356
        %v10869 = vpack.c.b16 %v10361, %v10357
        %v10870 = vpack.c.b16 %v10362, %v10358
        %v10871 = vpack.c.b16 %v10363, %v10359
        %v10872 = vpack.c.b16 %v10368, %v10364
        %v10873 = vpack.c.b16 %v10369, %v10365
        %v10874 = vpack.c.b16 %v10370, %v10366
        %v10875 = vpack.c.b16 %v10371, %v10367
        %v10876 = vpack.c.b16 %v10376, %v10372
        %v10877 = vpack.c.b16 %v10377, %v10373
        %v10878 = vpack.c.b16 %v10378, %v10374
        %v10879 = vpack.c.b16 %v10379, %v10375
        %v10880 = vpack.c.b16 %v10384, %v10380
        %v10881 = vpack.c.b16 %v10385, %v10381
        %v10882 = vpack.c.b16 %v10386, %v10382
        %v10883 = vpack.c.b16 %v10387, %v10383
        %v10884 = vpack.c.b16 %v10392, %v10388
        %v10885 = vpack.c.b16 %v10393, %v10389
        %v10886 = vpack.c.b16 %v10394, %v10390
        %v10887 = vpack.c.b16 %v10395, %v10391
        %v10888 = vpack.c.b16 %v10400, %v10396
        %v10889 = vpack.c.b16 %v10401, %v10397
        %v10890 = vpack.c.b16 %v10402, %v10398
        %v10891 = vpack.c.b16 %v10403, %v10399
        %v10892 = vpack.c.b16 %v10408, %v10404
        %v10893 = vpack.c.b16 %v10409, %v10405
        %v10894 = vpack.c.b16 %v10410, %v10406
        %v10895 = vpack.c.b16 %v10411, %v10407
        %v10896 = vpack.c.b16 %v10416, %v10412
        %v10897 = vpack.c.b16 %v10417, %v10413
        %v10898 = vpack.c.b16 %v10418, %v10414
        %v10899 = vpack.c.b16 %v10419, %v10415
        %v10900 = vpack.c.b16 %v10424, %v10420
        %v10901 = vpack.c.b16 %v10425, %v10421
        %v10902 = vpack.c.b16 %v10426, %v10422
        %v10903 = vpack.c.b16 %v10427, %v10423
        %v10904 = vpack.c.b16 %v10432, %v10428
        %v10905 = vpack.c.b16 %v10433, %v10429
        %v10906 = vpack.c.b16 %v10434, %v10430
        %v10907 = vpack.c.b16 %v10435, %v10431
        %v10908 = vpack.c.b16 %v10440, %v10436
        %v10909 = vpack.c.b16 %v10441, %v10437
        %v10910 = vpack.c.b16 %v10442, %v10438
        %v10911 = vpack.c.b16 %v10443, %v10439
        %v10912 = vpack.c.b16 %v10448, %v10444
        %v10913 = vpack.c.b16 %v10449, %v10445
        %v10914 = vpack.c.b16 %v10450, %v10446
        %v10915 = vpack.c.b16 %v10451, %v10447
        %v10916 = vpack.c.b16 %v10456, %v10452
        %v10917 = vpack.c.b16 %v10457, %v10453
        %v10918 = vpack.c.b16 %v10458, %v10454
        %v10919 = vpack.c.b16 %v10459, %v10455
        %v10920 = vpack.c.b16 %v10464, %v10460
        %v10921 = vpack.c.b16 %v10465, %v10461
        %v10922 = vpack.c.b16 %v10466, %v10462
        %v10923 = vpack.c.b16 %v10467, %v10463
        %v10924 = vpack.c.b16 %v10472, %v10468
        %v10925 = vpack.c.b16 %v10473, %v10469
        %v10926 = vpack.c.b16 %v10474, %v10470
        %v10927 = vpack.c.b16 %v10475, %v10471
        %v10928 = vpack.c.b16 %v10480, %v10476
        %v10929 = vpack.c.b16 %v10481, %v10477
        %v10930 = vpack.c.b16 %v10482, %v10478
        %v10931 = vpack.c.b16 %v10483, %v10479
        %v10932 = vpack.c.b16 %v10488, %v10484
        %v10933 = vpack.c.b16 %v10489, %v10485
        %v10934 = vpack.c.b16 %v10490, %v10486
        %v10935 = vpack.c.b16 %v10491, %v10487
        %v10936 = vpack.c.b16 %v10496, %v10492
        %v10937 = vpack.c.b16 %v10497, %v10493
        %v10938 = vpack.c.b16 %v10498, %v10494
        %v10939 = vpack.c.b16 %v10499, %v10495
        %v10940 = vpack.c.b16 %v10504, %v10500
        %v10941 = vpack.c.b16 %v10505, %v10501
        %v10942 = vpack.c.b16 %v10506, %v10502
        %v10943 = vpack.c.b16 %v10507, %v10503
        %v10944 = vpack.c.b16 %v10512, %v10508
        %v10945 = vpack.c.b16 %v10513, %v10509
        %v10946 = vpack.c.b16 %v10514, %v10510
        %v10947 = vpack.c.b16 %v10515, %v10511
        %v10948 = vpack.c.b16 %v10520, %v10516
        %v10949 = vpack.c.b16 %v10521, %v10517
        %v10950 = vpack.c.b16 %v10522, %v10518
        %v10951 = vpack.c.b16 %v10523, %v10519
        %v10952 = vpack.c.b16 %v10528, %v10524
        %v10953 = vpack.c.b16 %v10529, %v10525
        %v10954 = vpack.c.b16 %v10530, %v10526
        %v10955 = vpack.c.b16 %v10531, %v10527
        %v10956 = vpack.c.b16 %v10536, %v10532
        %v10957 = vpack.c.b16 %v10537, %v10533
        %v10958 = vpack.c.b16 %v10538, %v10534
        %v10959 = vpack.c.b16 %v10539, %v10535
        %v10960 = vpack.c.b16 %v10544, %v10540
        %v10961 = vpack.c.b16 %v10545, %v10541
        %v10962 = vpack.c.b16 %v10546, %v10542
        %v10963 = vpack.c.b16 %v10547, %v10543
        %v10964 = vpack.c.b16 %v10552, %v10548
        %v10965 = vpack.c.b16 %v10553, %v10549
        %v10966 = vpack.c.b16 %v10554, %v10550
        %v10967 = vpack.c.b16 %v10555, %v10551
        %v10968 = vpack.c.b16 %v10560, %v10556
        %v10969 = vpack.c.b16 %v10561, %v10557
        %v10970 = vpack.c.b16 %v10562, %v10558
        %v10971 = vpack.c.b16 %v10563, %v10559
        %v10972 = vpack.c.b16 %v10568, %v10564
        %v10973 = vpack.c.b16 %v10569, %v10565
        %v10974 = vpack.c.b16 %v10570, %v10566
        %v10975 = vpack.c.b16 %v10571, %v10567
        %v10976 = vpack.c.b16 %v10576, %v10572
        %v10977 = vpack.c.b16 %v10577, %v10573
        %v10978 = vpack.c.b16 %v10578, %v10574
        %v10979 = vpack.c.b16 %v10579, %v10575
        %v10980 = vpack.c.b16 %v10584, %v10580
        %v10981 = vpack.c.b16 %v10585, %v10581
        %v10982 = vpack.c.b16 %v10586, %v10582
        %v10983 = vpack.c.b16 %v10587, %v10583
        %v10984 = vpack.c.b16 %v10592, %v10588
        %v10985 = vpack.c.b16 %v10593, %v10589
        %v10986 = vpack.c.b16 %v10594, %v10590
        %v10987 = vpack.c.b16 %v10595, %v10591
        %v10988 = vpack.c.b16 %v10600, %v10596
        %v10989 = vpack.c.b16 %v10601, %v10597
        %v10990 = vpack.c.b16 %v10602, %v10598
        %v10991 = vpack.c.b16 %v10603, %v10599
        %v10992 = vpack.c.b16 %v10608, %v10604
        %v10993 = vpack.c.b16 %v10609, %v10605
        %v10994 = vpack.c.b16 %v10610, %v10606
        %v10995 = vpack.c.b16 %v10611, %v10607
        %v10996 = vpack.c.b16 %v10616, %v10612
        %v10997 = vpack.c.b16 %v10617, %v10613
        %v10998 = vpack.c.b16 %v10618, %v10614
        %v10999 = vpack.c.b16 %v10619, %v10615
        %v11000 = vpack.c.b16 %v10624, %v10620
        %v11001 = vpack.c.b16 %v10625, %v10621
        %v11002 = vpack.c.b16 %v10626, %v10622
        %v11003 = vpack.c.b16 %v10627, %v10623
        %v11004 = vpack.c.b16 %v10632, %v10628
        %v11005 = vpack.c.b16 %v10633, %v10629
        %v11006 = vpack.c.b16 %v10634, %v10630
        %v11007 = vpack.c.b16 %v10635, %v10631
        %v11008 = vpack.c.b16 %v10640, %v10636
        %v11009 = vpack.c.b16 %v10641, %v10637
        %v11010 = vpack.c.b16 %v10642, %v10638
        %v11011 = vpack.c.b16 %v10643, %v10639
        %v11012 = vpack.c.b16 %v10648, %v10644
        %v11013 = vpack.c.b16 %v10649, %v10645
        %v11014 = vpack.c.b16 %v10650, %v10646
        %v11015 = vpack.c.b16 %v10651, %v10647
        %v11016 = vpack.c.b16 %v10656, %v10652
        %v11017 = vpack.c.b16 %v10657, %v10653
        %v11018 = vpack.c.b16 %v10658, %v10654
        %v11019 = vpack.c.b16 %v10659, %v10655
        %v11020 = vpack.c.b16 %v10664, %v10660
        %v11021 = vpack.c.b16 %v10665, %v10661
        %v11022 = vpack.c.b16 %v10666, %v10662
        %v11023 = vpack.c.b16 %v10667, %v10663
        %v11024 = vpack.c.b16 %v10672, %v10668
        %v11025 = vpack.c.b16 %v10673, %v10669
        %v11026 = vpack.c.b16 %v10674, %v10670
        %v11027 = vpack.c.b16 %v10675, %v10671
        %v11028 = vpack.c.b16 %v10680, %v10676
        %v11029 = vpack.c.b16 %v10681, %v10677
        %v11030 = vpack.c.b16 %v10682, %v10678
        %v11031 = vpack.c.b16 %v10683, %v10679
        %v11032 = vpack.c.b16 %v10688, %v10684
        %v11033 = vpack.c.b16 %v10689, %v10685
        %v11034 = vpack.c.b16 %v10690, %v10686
        %v11035 = vpack.c.b16 %v10691, %v10687
        %v11036 = vpack.c.b16 %v10696, %v10692
        %v11037 = vpack.c.b16 %v10697, %v10693
        %v11038 = vpack.c.b16 %v10698, %v10694
        %v11039 = vpack.c.b16 %v10699, %v10695
        %v11040 = vpack.c.b16 %v10704, %v10700
        %v11041 = vpack.c.b16 %v10705, %v10701
        %v11042 = vpack.c.b16 %v10706, %v10702
        %v11043 = vpack.c.b16 %v10707, %v10703
        %v11044 = vpack.c.b16 %v10712, %v10708
        %v11045 = vpack.c.b16 %v10713, %v10709
        %v11046 = vpack.c.b16 %v10714, %v10710
        %v11047 = vpack.c.b16 %v10715, %v10711
        %v11048 = vpack.c.b16 %v10720, %v10716
        %v11049 = vpack.c.b16 %v10721, %v10717
        %v11050 = vpack.c.b16 %v10722, %v10718
        %v11051 = vpack.c.b16 %v10723, %v10719
        %v11052 = vpack.c.b16 %v10728, %v10724
        %v11053 = vpack.c.b16 %v10729, %v10725
        %v11054 = vpack.c.b16 %v10730, %v10726
        %v11055 = vpack.c.b16 %v10731, %v10727
        %v11056 = vpack.c.b16 %v10736, %v10732
        %v11057 = vpack.c.b16 %v10737, %v10733
        %v11058 = vpack.c.b16 %v10738, %v10734
        %v11059 = vpack.c.b16 %v10739, %v10735
        %v11060 = vpack.c.b16 %v10744, %v10740
        %v11061 = vpack.c.b16 %v10745, %v10741
        %v11062 = vpack.c.b16 %v10746, %v10742
        %v11063 = vpack.c.b16 %v10747, %v10743
        %v11064 = vpack.c.b16 %v10752, %v10748
        %v11065 = vpack.c.b16 %v10753, %v10749
        %v11066 = vpack.c.b16 %v10754, %v10750
        %v11067 = vpack.c.b16 %v10755, %v10751
        %v11068 = vpack.c.b16 %v10760, %v10756
        %v11069 = vpack.c.b16 %v10761, %v10757
        %v11070 = vpack.c.b16 %v10762, %v10758
        %v11071 = vpack.c.b16 %v10763, %v10759
        %v11072 = vpack.c.b16 %v10768, %v10764
        %v11073 = vpack.c.b16 %v10769, %v10765
        %v11074 = vpack.c.b16 %v10770, %v10766
        %v11075 = vpack.c.b16 %v10771, %v10767
        %v11076 = vpack.c.b16 %v10776, %v10772
        %v11077 = vpack.c.b16 %v10777, %v10773
        %v11078 = vpack.c.b16 %v10778, %v10774
        %v11079 = vpack.c.b16 %v10779, %v10775
        %v11080 = vpack.c.b16 %v10784, %v10780
        %v11081 = vpack.c.b16 %v10785, %v10781
        %v11082 = vpack.c.b16 %v10786, %v10782
        %v11083 = vpack.c.b16 %v10787, %v10783
        %v11084 = vpack.c.b16 %v10792, %v10788
        %v11085 = vpack.c.b16 %v10793, %v10789
        %v11086 = vpack.c.b16 %v10794, %v10790
        %v11087 = vpack.c.b16 %v10795, %v10791
        %v11088 = vpack.c.b16 %v10800, %v10796
        %v11089 = vpack.c.b16 %v10801, %v10797
        %v11090 = vpack.c.b16 %v10802, %v10798
        %v11091 = vpack.c.b16 %v10803, %v10799
        %v11092 = vpack.c.b16 %v10808, %v10804
        %v11093 = vpack.c.b16 %v10809, %v10805
        %v11094 = vpack.c.b16 %v10810, %v10806
        %v11095 = vpack.c.b16 %v10811, %v10807
        %v11096 = vpack.c.b16 %v10816, %v10812
        %v11097 = vpack.c.b16 %v10817, %v10813
        %v11098 = vpack.c.b16 %v10818, %v10814
        %v11099 = vpack.c.b16 %v10819, %v10815
        %v11100 = vpack.c.b16 %v10824, %v10820
        %v11101 = vpack.c.b16 %v10825, %v10821
        %v11102 = vpack.c.b16 %v10826, %v10822
        %v11103 = vpack.c.b16 %v10827, %v10823
        %v11104 = vpack.c.b16 %v10832, %v10828
        %v11105 = vpack.c.b16 %v10833, %v10829
        %v11106 = vpack.c.b16 %v10834, %v10830
        %v11107 = vpack.c.b16 %v10835, %v10831
        %v11108 = vpack.c.b16 %v10840, %v10836
        %v11109 = vpack.c.b16 %v10841, %v10837
        %v11110 = vpack.c.b16 %v10842, %v10838
        %v11111 = vpack.c.b16 %v10843, %v10839
        %v11112 = vpack.c.b16 %v10848, %v10844
        %v11113 = vpack.c.b16 %v10849, %v10845
        %v11114 = vpack.c.b16 %v10850, %v10846
        %v11115 = vpack.c.b16 %v10851, %v10847
        %v11116 = vpack.c.b16 %v10856, %v10852
        %v11117 = vpack.c.b16 %v10857, %v10853
        %v11118 = vpack.c.b16 %v10858, %v10854
        %v11119 = vpack.c.b16 %v10859, %v10855
        %v11120 = vpack.c.b16 %v10864, %v10860
        %v11121 = vpack.c.b16 %v10865, %v10861
        %v11122 = vpack.c.b16 %v10866, %v10862
        %v11123 = vpack.c.b16 %v10867, %v10863
        %11380 = vmatpush.bf16.msra.mxu0 %v10896
        %11381 = vmatpush.bf16.msra.mxu0 %v10892
        %11382 = vmatpush.bf16.msra.mxu0 %v10888
        %11383 = vmatpush.bf16.msra.mxu0 %v10884
        %11384 = vmatpush.bf16.msra.mxu0 %v10880
        %11385 = vmatpush.bf16.msra.mxu0 %v10876
        %11386 = vmatpush.bf16.msra.mxu0 %v10872
        %11387 = vmatpush.bf16.msra.mxu0 %v10868
        %11388 = vmatmul.bf16.gmra.mxu0 %v9826
        %v11389 = vpop.f32.mrf.mxu0
        %v11390 = vadd.f32 %v10092, %v11389
        %v11391 = vpop.f32.mrf.mxu0
        %11392 = vdwg.mxu0
        %11393 = vmatpush.bf16.msra.mxu0 %v10928
        %11394 = vmatpush.bf16.msra.mxu0 %v10924
        %11395 = vmatpush.bf16.msra.mxu0 %v10920
        %11396 = vmatpush.bf16.msra.mxu0 %v10916
        %11397 = vmatpush.bf16.msra.mxu0 %v10912
        %11398 = vmatpush.bf16.msra.mxu0 %v10908
        %11399 = vmatpush.bf16.msra.mxu0 %v10904
        %11400 = vmatpush.bf16.msra.mxu0 %v10900
        %11401 = vmatmul.bf16.gmra.mxu0 %v9827
        %v11402 = vpop.f32.mrf.mxu0
        %v11403 = vadd.f32 %v11390, %v11402
        %v11404 = vpop.f32.mrf.mxu0
        %11405 = vdwg.mxu0
        %11406 = vmatpush.bf16.msra.mxu0 %v10960
        %11407 = vmatpush.bf16.msra.mxu0 %v10956
        %11408 = vmatpush.bf16.msra.mxu0 %v10952
        %11409 = vmatpush.bf16.msra.mxu0 %v10948
        %11410 = vmatpush.bf16.msra.mxu0 %v10944
        %11411 = vmatpush.bf16.msra.mxu0 %v10940
        %11412 = vmatpush.bf16.msra.mxu0 %v10936
        %11413 = vmatpush.bf16.msra.mxu0 %v10932
        %11414 = vmatmul.bf16.gmra.mxu0 %v9828
        %v11415 = vpop.f32.mrf.mxu0
        %v11416 = vadd.f32 %v11403, %v11415
        %v11417 = vpop.f32.mrf.mxu0
        %11418 = vdwg.mxu0
        %11419 = vmatpush.bf16.msra.mxu0 %v10992
        %11420 = vmatpush.bf16.msra.mxu0 %v10988
        %11421 = vmatpush.bf16.msra.mxu0 %v10984
        %11422 = vmatpush.bf16.msra.mxu0 %v10980
        %11423 = vmatpush.bf16.msra.mxu0 %v10976
        %11424 = vmatpush.bf16.msra.mxu0 %v10972
        %11425 = vmatpush.bf16.msra.mxu0 %v10968
        %11426 = vmatpush.bf16.msra.mxu0 %v10964
        %11427 = vmatmul.bf16.gmra.mxu0 %v9829
        %v11428 = vpop.f32.mrf.mxu0
        %v11429 = vadd.f32 %v11416, %v11428
        %v11430 = vpop.f32.mrf.mxu0
        %11431 = vdwg.mxu0
        %11432 = vmatpush.bf16.msra.mxu0 %v11024
        %11433 = vmatpush.bf16.msra.mxu0 %v11020
        %11434 = vmatpush.bf16.msra.mxu0 %v11016
        %11435 = vmatpush.bf16.msra.mxu0 %v11012
        %11436 = vmatpush.bf16.msra.mxu0 %v11008
        %11437 = vmatpush.bf16.msra.mxu0 %v11004
        %11438 = vmatpush.bf16.msra.mxu0 %v11000
        %11439 = vmatpush.bf16.msra.mxu0 %v10996
        %11440 = vmatmul.bf16.gmra.mxu0 %v9830
        %v11441 = vpop.f32.mrf.mxu0
        %v11442 = vadd.f32 %v11429, %v11441
        %v11443 = vpop.f32.mrf.mxu0
        %11444 = vdwg.mxu0
        %11445 = vmatpush.bf16.msra.mxu0 %v11056
        %11446 = vmatpush.bf16.msra.mxu0 %v11052
        %11447 = vmatpush.bf16.msra.mxu0 %v11048
        %11448 = vmatpush.bf16.msra.mxu0 %v11044
        %11449 = vmatpush.bf16.msra.mxu0 %v11040
        %11450 = vmatpush.bf16.msra.mxu0 %v11036
        %11451 = vmatpush.bf16.msra.mxu0 %v11032
        %11452 = vmatpush.bf16.msra.mxu0 %v11028
        %11453 = vmatmul.bf16.gmra.mxu0 %v9831
        %v11454 = vpop.f32.mrf.mxu0
        %v11455 = vadd.f32 %v11442, %v11454
        %v11456 = vpop.f32.mrf.mxu0
        %11457 = vdwg.mxu0
        %11458 = vmatpush.bf16.msra.mxu0 %v11088
        %11459 = vmatpush.bf16.msra.mxu0 %v11084
        %11460 = vmatpush.bf16.msra.mxu0 %v11080
        %11461 = vmatpush.bf16.msra.mxu0 %v11076
        %11462 = vmatpush.bf16.msra.mxu0 %v11072
        %11463 = vmatpush.bf16.msra.mxu0 %v11068
        %11464 = vmatpush.bf16.msra.mxu0 %v11064
        %11465 = vmatpush.bf16.msra.mxu0 %v11060
        %11466 = vmatmul.bf16.gmra.mxu0 %v9832
        %v11467 = vpop.f32.mrf.mxu0
        %v11468 = vadd.f32 %v11455, %v11467
        %v11469 = vpop.f32.mrf.mxu0
        %11470 = vdwg.mxu0
        %11471 = vmatpush.bf16.msra.mxu0 %v11120
        %11472 = vmatpush.bf16.msra.mxu0 %v11116
        %11473 = vmatpush.bf16.msra.mxu0 %v11112
        %11474 = vmatpush.bf16.msra.mxu0 %v11108
        %11475 = vmatpush.bf16.msra.mxu0 %v11104
        %11476 = vmatpush.bf16.msra.mxu0 %v11100
        %11477 = vmatpush.bf16.msra.mxu0 %v11096
        %11478 = vmatpush.bf16.msra.mxu0 %v11092
        %11479 = vmatmul.bf16.gmra.mxu0 %v9833
        %v11480 = vpop.f32.mrf.mxu0
        %v11481 = vadd.f32 %v11468, %v11480
        %v11482 = vpop.f32.mrf.mxu0
        %11483 = vdwg.mxu0
        %11484 = vmatpush.bf16.msra.mxu0 %v10897
        %11485 = vmatpush.bf16.msra.mxu0 %v10893
        %11486 = vmatpush.bf16.msra.mxu0 %v10889
        %11487 = vmatpush.bf16.msra.mxu0 %v10885
        %11488 = vmatpush.bf16.msra.mxu0 %v10881
        %11489 = vmatpush.bf16.msra.mxu0 %v10877
        %11490 = vmatpush.bf16.msra.mxu0 %v10873
        %11491 = vmatpush.bf16.msra.mxu0 %v10869
        %11492 = vmatmul.bf16.gmra.mxu0 %v9826
        %v11493 = vpop.f32.mrf.mxu0
        %v11494 = vadd.f32 %v10093, %v11493
        %v11495 = vpop.f32.mrf.mxu0
        %11496 = vdwg.mxu0
        %11497 = vmatpush.bf16.msra.mxu0 %v10929
        %11498 = vmatpush.bf16.msra.mxu0 %v10925
        %11499 = vmatpush.bf16.msra.mxu0 %v10921
        %11500 = vmatpush.bf16.msra.mxu0 %v10917
        %11501 = vmatpush.bf16.msra.mxu0 %v10913
        %11502 = vmatpush.bf16.msra.mxu0 %v10909
        %11503 = vmatpush.bf16.msra.mxu0 %v10905
        %11504 = vmatpush.bf16.msra.mxu0 %v10901
        %11505 = vmatmul.bf16.gmra.mxu0 %v9827
        %v11506 = vpop.f32.mrf.mxu0
        %v11507 = vadd.f32 %v11494, %v11506
        %v11508 = vpop.f32.mrf.mxu0
        %11509 = vdwg.mxu0
        %11510 = vmatpush.bf16.msra.mxu0 %v10961
        %11511 = vmatpush.bf16.msra.mxu0 %v10957
        %11512 = vmatpush.bf16.msra.mxu0 %v10953
        %11513 = vmatpush.bf16.msra.mxu0 %v10949
        %11514 = vmatpush.bf16.msra.mxu0 %v10945
        %11515 = vmatpush.bf16.msra.mxu0 %v10941
        %11516 = vmatpush.bf16.msra.mxu0 %v10937
        %11517 = vmatpush.bf16.msra.mxu0 %v10933
        %11518 = vmatmul.bf16.gmra.mxu0 %v9828
        %v11519 = vpop.f32.mrf.mxu0
        %v11520 = vadd.f32 %v11507, %v11519
        %v11521 = vpop.f32.mrf.mxu0
        %11522 = vdwg.mxu0
        %11523 = vmatpush.bf16.msra.mxu0 %v10993
        %11524 = vmatpush.bf16.msra.mxu0 %v10989
        %11525 = vmatpush.bf16.msra.mxu0 %v10985
        %11526 = vmatpush.bf16.msra.mxu0 %v10981
        %11527 = vmatpush.bf16.msra.mxu0 %v10977
        %11528 = vmatpush.bf16.msra.mxu0 %v10973
        %11529 = vmatpush.bf16.msra.mxu0 %v10969
        %11530 = vmatpush.bf16.msra.mxu0 %v10965
        %11531 = vmatmul.bf16.gmra.mxu0 %v9829
        %v11532 = vpop.f32.mrf.mxu0
        %v11533 = vadd.f32 %v11520, %v11532
        %v11534 = vpop.f32.mrf.mxu0
        %11535 = vdwg.mxu0
        %11536 = vmatpush.bf16.msra.mxu0 %v11025
        %11537 = vmatpush.bf16.msra.mxu0 %v11021
        %11538 = vmatpush.bf16.msra.mxu0 %v11017
        %11539 = vmatpush.bf16.msra.mxu0 %v11013
        %11540 = vmatpush.bf16.msra.mxu0 %v11009
        %11541 = vmatpush.bf16.msra.mxu0 %v11005
        %11542 = vmatpush.bf16.msra.mxu0 %v11001
        %11543 = vmatpush.bf16.msra.mxu0 %v10997
        %11544 = vmatmul.bf16.gmra.mxu0 %v9830
        %v11545 = vpop.f32.mrf.mxu0
        %v11546 = vadd.f32 %v11533, %v11545
        %v11547 = vpop.f32.mrf.mxu0
        %11548 = vdwg.mxu0
        %11549 = vmatpush.bf16.msra.mxu0 %v11057
        %11550 = vmatpush.bf16.msra.mxu0 %v11053
        %11551 = vmatpush.bf16.msra.mxu0 %v11049
        %11552 = vmatpush.bf16.msra.mxu0 %v11045
        %11553 = vmatpush.bf16.msra.mxu0 %v11041
        %11554 = vmatpush.bf16.msra.mxu0 %v11037
        %11555 = vmatpush.bf16.msra.mxu0 %v11033
        %11556 = vmatpush.bf16.msra.mxu0 %v11029
        %11557 = vmatmul.bf16.gmra.mxu0 %v9831
        %v11558 = vpop.f32.mrf.mxu0
        %v11559 = vadd.f32 %v11546, %v11558
        %v11560 = vpop.f32.mrf.mxu0
        %11561 = vdwg.mxu0
        %11562 = vmatpush.bf16.msra.mxu0 %v11089
        %11563 = vmatpush.bf16.msra.mxu0 %v11085
        %11564 = vmatpush.bf16.msra.mxu0 %v11081
        %11565 = vmatpush.bf16.msra.mxu0 %v11077
        %11566 = vmatpush.bf16.msra.mxu0 %v11073
        %11567 = vmatpush.bf16.msra.mxu0 %v11069
        %11568 = vmatpush.bf16.msra.mxu0 %v11065
        %11569 = vmatpush.bf16.msra.mxu0 %v11061
        %11570 = vmatmul.bf16.gmra.mxu0 %v9832
        %v11571 = vpop.f32.mrf.mxu0
        %v11572 = vadd.f32 %v11559, %v11571
        %v11573 = vpop.f32.mrf.mxu0
        %11574 = vdwg.mxu0
        %11575 = vmatpush.bf16.msra.mxu0 %v11121
        %11576 = vmatpush.bf16.msra.mxu0 %v11117
        %11577 = vmatpush.bf16.msra.mxu0 %v11113
        %11578 = vmatpush.bf16.msra.mxu0 %v11109
        %11579 = vmatpush.bf16.msra.mxu0 %v11105
        %11580 = vmatpush.bf16.msra.mxu0 %v11101
        %11581 = vmatpush.bf16.msra.mxu0 %v11097
        %11582 = vmatpush.bf16.msra.mxu0 %v11093
        %11583 = vmatmul.bf16.gmra.mxu0 %v9833
        %v11584 = vpop.f32.mrf.mxu0
        %v11585 = vadd.f32 %v11572, %v11584
        %v11586 = vpop.f32.mrf.mxu0
        %11587 = vdwg.mxu0
        %11588 = vmatpush.bf16.msra.mxu0 %v10898
        %11589 = vmatpush.bf16.msra.mxu0 %v10894
        %11590 = vmatpush.bf16.msra.mxu0 %v10890
        %11591 = vmatpush.bf16.msra.mxu0 %v10886
        %11592 = vmatpush.bf16.msra.mxu0 %v10882
        %11593 = vmatpush.bf16.msra.mxu0 %v10878
        %11594 = vmatpush.bf16.msra.mxu0 %v10874
        %11595 = vmatpush.bf16.msra.mxu0 %v10870
        %11596 = vmatmul.bf16.gmra.mxu0 %v9826
        %v11597 = vpop.f32.mrf.mxu0
        %v11598 = vadd.f32 %v10094, %v11597
        %v11599 = vpop.f32.mrf.mxu0
        %11600 = vdwg.mxu0
        %11601 = vmatpush.bf16.msra.mxu0 %v10930
        %11602 = vmatpush.bf16.msra.mxu0 %v10926
        %11603 = vmatpush.bf16.msra.mxu0 %v10922
        %11604 = vmatpush.bf16.msra.mxu0 %v10918
        %11605 = vmatpush.bf16.msra.mxu0 %v10914
        %11606 = vmatpush.bf16.msra.mxu0 %v10910
        %11607 = vmatpush.bf16.msra.mxu0 %v10906
        %11608 = vmatpush.bf16.msra.mxu0 %v10902
        %11609 = vmatmul.bf16.gmra.mxu0 %v9827
        %v11610 = vpop.f32.mrf.mxu0
        %v11611 = vadd.f32 %v11598, %v11610
        %v11612 = vpop.f32.mrf.mxu0
        %11613 = vdwg.mxu0
        %11614 = vmatpush.bf16.msra.mxu0 %v10962
        %11615 = vmatpush.bf16.msra.mxu0 %v10958
        %11616 = vmatpush.bf16.msra.mxu0 %v10954
        %11617 = vmatpush.bf16.msra.mxu0 %v10950
        %11618 = vmatpush.bf16.msra.mxu0 %v10946
        %11619 = vmatpush.bf16.msra.mxu0 %v10942
        %11620 = vmatpush.bf16.msra.mxu0 %v10938
        %11621 = vmatpush.bf16.msra.mxu0 %v10934
        %11622 = vmatmul.bf16.gmra.mxu0 %v9828
        %v11623 = vpop.f32.mrf.mxu0
        %v11624 = vadd.f32 %v11611, %v11623
        %v11625 = vpop.f32.mrf.mxu0
        %11626 = vdwg.mxu0
        %11627 = vmatpush.bf16.msra.mxu0 %v10994
        %11628 = vmatpush.bf16.msra.mxu0 %v10990
        %11629 = vmatpush.bf16.msra.mxu0 %v10986
        %11630 = vmatpush.bf16.msra.mxu0 %v10982
        %11631 = vmatpush.bf16.msra.mxu0 %v10978
        %11632 = vmatpush.bf16.msra.mxu0 %v10974
        %11633 = vmatpush.bf16.msra.mxu0 %v10970
        %11634 = vmatpush.bf16.msra.mxu0 %v10966
        %11635 = vmatmul.bf16.gmra.mxu0 %v9829
        %v11636 = vpop.f32.mrf.mxu0
        %v11637 = vadd.f32 %v11624, %v11636
        %v11638 = vpop.f32.mrf.mxu0
        %11639 = vdwg.mxu0
        %11640 = vmatpush.bf16.msra.mxu0 %v11026
        %11641 = vmatpush.bf16.msra.mxu0 %v11022
        %11642 = vmatpush.bf16.msra.mxu0 %v11018
        %11643 = vmatpush.bf16.msra.mxu0 %v11014
        %11644 = vmatpush.bf16.msra.mxu0 %v11010
        %11645 = vmatpush.bf16.msra.mxu0 %v11006
        %11646 = vmatpush.bf16.msra.mxu0 %v11002
        %11647 = vmatpush.bf16.msra.mxu0 %v10998
        %11648 = vmatmul.bf16.gmra.mxu0 %v9830
        %v11649 = vpop.f32.mrf.mxu0
        %v11650 = vadd.f32 %v11637, %v11649
        %v11651 = vpop.f32.mrf.mxu0
        %11652 = vdwg.mxu0
        %11653 = vmatpush.bf16.msra.mxu0 %v11058
        %11654 = vmatpush.bf16.msra.mxu0 %v11054
        %11655 = vmatpush.bf16.msra.mxu0 %v11050
        %11656 = vmatpush.bf16.msra.mxu0 %v11046
        %11657 = vmatpush.bf16.msra.mxu0 %v11042
        %11658 = vmatpush.bf16.msra.mxu0 %v11038
        %11659 = vmatpush.bf16.msra.mxu0 %v11034
        %11660 = vmatpush.bf16.msra.mxu0 %v11030
        %11661 = vmatmul.bf16.gmra.mxu0 %v9831
        %v11662 = vpop.f32.mrf.mxu0
        %v11663 = vadd.f32 %v11650, %v11662
        %v11664 = vpop.f32.mrf.mxu0
        %11665 = vdwg.mxu0
        %11666 = vmatpush.bf16.msra.mxu0 %v11090
        %11667 = vmatpush.bf16.msra.mxu0 %v11086
        %11668 = vmatpush.bf16.msra.mxu0 %v11082
        %11669 = vmatpush.bf16.msra.mxu0 %v11078
        %11670 = vmatpush.bf16.msra.mxu0 %v11074
        %11671 = vmatpush.bf16.msra.mxu0 %v11070
        %11672 = vmatpush.bf16.msra.mxu0 %v11066
        %11673 = vmatpush.bf16.msra.mxu0 %v11062
        %11674 = vmatmul.bf16.gmra.mxu0 %v9832
        %v11675 = vpop.f32.mrf.mxu0
        %v11676 = vadd.f32 %v11663, %v11675
        %v11677 = vpop.f32.mrf.mxu0
        %11678 = vdwg.mxu0
        %11679 = vmatpush.bf16.msra.mxu0 %v11122
        %11680 = vmatpush.bf16.msra.mxu0 %v11118
        %11681 = vmatpush.bf16.msra.mxu0 %v11114
        %11682 = vmatpush.bf16.msra.mxu0 %v11110
        %11683 = vmatpush.bf16.msra.mxu0 %v11106
        %11684 = vmatpush.bf16.msra.mxu0 %v11102
        %11685 = vmatpush.bf16.msra.mxu0 %v11098
        %11686 = vmatpush.bf16.msra.mxu0 %v11094
        %11687 = vmatmul.bf16.gmra.mxu0 %v9833
        %v11688 = vpop.f32.mrf.mxu0
        %v11689 = vadd.f32 %v11676, %v11688
        %v11690 = vpop.f32.mrf.mxu0
        %11691 = vdwg.mxu0
        %11692 = vmatpush.bf16.msra.mxu0 %v10899
        %11693 = vmatpush.bf16.msra.mxu0 %v10895
        %11694 = vmatpush.bf16.msra.mxu0 %v10891
        %11695 = vmatpush.bf16.msra.mxu0 %v10887
        %11696 = vmatpush.bf16.msra.mxu0 %v10883
        %11697 = vmatpush.bf16.msra.mxu0 %v10879
        %11698 = vmatpush.bf16.msra.mxu0 %v10875
        %11699 = vmatpush.bf16.msra.mxu0 %v10871
        %11700 = vmatmul.bf16.gmra.mxu0 %v9826
        %v11701 = vpop.f32.mrf.mxu0
        %v11702 = vadd.f32 %v10095, %v11701
        %v11703 = vpop.f32.mrf.mxu0
        %11704 = vdwg.mxu0
        %11705 = vmatpush.bf16.msra.mxu0 %v10931
        %11706 = vmatpush.bf16.msra.mxu0 %v10927
        %11707 = vmatpush.bf16.msra.mxu0 %v10923
        %11708 = vmatpush.bf16.msra.mxu0 %v10919
        %11709 = vmatpush.bf16.msra.mxu0 %v10915
        %11710 = vmatpush.bf16.msra.mxu0 %v10911
        %11711 = vmatpush.bf16.msra.mxu0 %v10907
        %11712 = vmatpush.bf16.msra.mxu0 %v10903
        %11713 = vmatmul.bf16.gmra.mxu0 %v9827
        %v11714 = vpop.f32.mrf.mxu0
        %v11715 = vadd.f32 %v11702, %v11714
        %v11716 = vpop.f32.mrf.mxu0
        %11717 = vdwg.mxu0
        %11718 = vmatpush.bf16.msra.mxu0 %v10963
        %11719 = vmatpush.bf16.msra.mxu0 %v10959
        %11720 = vmatpush.bf16.msra.mxu0 %v10955
        %11721 = vmatpush.bf16.msra.mxu0 %v10951
        %11722 = vmatpush.bf16.msra.mxu0 %v10947
        %11723 = vmatpush.bf16.msra.mxu0 %v10943
        %11724 = vmatpush.bf16.msra.mxu0 %v10939
        %11725 = vmatpush.bf16.msra.mxu0 %v10935
        %11726 = vmatmul.bf16.gmra.mxu0 %v9828
        %v11727 = vpop.f32.mrf.mxu0
        %v11728 = vadd.f32 %v11715, %v11727
        %v11729 = vpop.f32.mrf.mxu0
        %11730 = vdwg.mxu0
        %11731 = vmatpush.bf16.msra.mxu0 %v10995
        %11732 = vmatpush.bf16.msra.mxu0 %v10991
        %11733 = vmatpush.bf16.msra.mxu0 %v10987
        %11734 = vmatpush.bf16.msra.mxu0 %v10983
        %11735 = vmatpush.bf16.msra.mxu0 %v10979
        %11736 = vmatpush.bf16.msra.mxu0 %v10975
        %11737 = vmatpush.bf16.msra.mxu0 %v10971
        %11738 = vmatpush.bf16.msra.mxu0 %v10967
        %11739 = vmatmul.bf16.gmra.mxu0 %v9829
        %v11740 = vpop.f32.mrf.mxu0
        %v11741 = vadd.f32 %v11728, %v11740
        %v11742 = vpop.f32.mrf.mxu0
        %11743 = vdwg.mxu0
        %11744 = vmatpush.bf16.msra.mxu0 %v11027
        %11745 = vmatpush.bf16.msra.mxu0 %v11023
        %11746 = vmatpush.bf16.msra.mxu0 %v11019
        %11747 = vmatpush.bf16.msra.mxu0 %v11015
        %11748 = vmatpush.bf16.msra.mxu0 %v11011
        %11749 = vmatpush.bf16.msra.mxu0 %v11007
        %11750 = vmatpush.bf16.msra.mxu0 %v11003
        %11751 = vmatpush.bf16.msra.mxu0 %v10999
        %11752 = vmatmul.bf16.gmra.mxu0 %v9830
        %v11753 = vpop.f32.mrf.mxu0
        %v11754 = vadd.f32 %v11741, %v11753
        %v11755 = vpop.f32.mrf.mxu0
        %11756 = vdwg.mxu0
        %11757 = vmatpush.bf16.msra.mxu0 %v11059
        %11758 = vmatpush.bf16.msra.mxu0 %v11055
        %11759 = vmatpush.bf16.msra.mxu0 %v11051
        %11760 = vmatpush.bf16.msra.mxu0 %v11047
        %11761 = vmatpush.bf16.msra.mxu0 %v11043
        %11762 = vmatpush.bf16.msra.mxu0 %v11039
        %11763 = vmatpush.bf16.msra.mxu0 %v11035
        %11764 = vmatpush.bf16.msra.mxu0 %v11031
        %11765 = vmatmul.bf16.gmra.mxu0 %v9831
        %v11766 = vpop.f32.mrf.mxu0
        %v11767 = vadd.f32 %v11754, %v11766
        %v11768 = vpop.f32.mrf.mxu0
        %11769 = vdwg.mxu0
        %11770 = vmatpush.bf16.msra.mxu0 %v11091
        %11771 = vmatpush.bf16.msra.mxu0 %v11087
        %11772 = vmatpush.bf16.msra.mxu0 %v11083
        %11773 = vmatpush.bf16.msra.mxu0 %v11079
        %11774 = vmatpush.bf16.msra.mxu0 %v11075
        %11775 = vmatpush.bf16.msra.mxu0 %v11071
        %11776 = vmatpush.bf16.msra.mxu0 %v11067
        %11777 = vmatpush.bf16.msra.mxu0 %v11063
        %11778 = vmatmul.bf16.gmra.mxu0 %v9832
        %v11779 = vpop.f32.mrf.mxu0
        %v11780 = vadd.f32 %v11767, %v11779
        %v11781 = vpop.f32.mrf.mxu0
        %11782 = vdwg.mxu0
        %11783 = vmatpush.bf16.msra.mxu0 %v11123
        %11784 = vmatpush.bf16.msra.mxu0 %v11119
        %11785 = vmatpush.bf16.msra.mxu0 %v11115
        %11786 = vmatpush.bf16.msra.mxu0 %v11111
        %11787 = vmatpush.bf16.msra.mxu0 %v11107
        %11788 = vmatpush.bf16.msra.mxu0 %v11103
        %11789 = vmatpush.bf16.msra.mxu0 %v11099
        %11790 = vmatpush.bf16.msra.mxu0 %v11095
        %11791 = vmatmul.bf16.gmra.mxu0 %v9833
        %v11792 = vpop.f32.mrf.mxu0
        %v11793 = vadd.f32 %v11780, %v11792
        %v11794 = vpop.f32.mrf.mxu0
        %11795 = vdwg.mxu0
        %v11796 = vmax.f32 %v11481, 0.0
        %v11797 = vmax.f32 %v11585, 0.0
        %v11798 = vmax.f32 %v11689, 0.0
        %v11799 = vmax.f32 %v11793, 0.0
        %v11800 = vpack.c.bf16 %v11796, %v11796
        %v11801 = vpack.c.bf16 %v11797, %v11797
        %v11802 = vpack.c.bf16 %v11798, %v11798
        %v11803 = vpack.c.bf16 %v11799, %v11799
        %v11804 = vld [vmem:[#allocation13] sm:$0xf]
        %v11805 = vld [vmem:[#allocation13 + $0x4] sm:$0xf]
        %v11806 = vld [vmem:[#allocation13 + $0x8] sm:$0xf]
        %v11807 = vld [vmem:[#allocation13 + $0xc] sm:$0xf]
        %v11808 = vld [vmem:[#allocation13 + $0x10] sm:$0xf]
        %v11809 = vld [vmem:[#allocation13 + $0x14] sm:$0xf]
        %v11810 = vld [vmem:[#allocation13 + $0x18] sm:$0xf]
        %v11811 = vld [vmem:[#allocation13 + $0x1c] sm:$0xf]
        %v11812 = vld [vmem:[#allocation13 + $0x20] sm:$0xf]
        %v11813 = vld [vmem:[#allocation13 + $0x24] sm:$0xf]
        %v11814 = vld [vmem:[#allocation13 + $0x28] sm:$0xf]
        %v11815 = vld [vmem:[#allocation13 + $0x2c] sm:$0xf]
        %v11816 = vld [vmem:[#allocation13 + $0x30] sm:$0xf]
        %v11817 = vld [vmem:[#allocation13 + $0x34] sm:$0xf]
        %v11818 = vld [vmem:[#allocation13 + $0x38] sm:$0xf]
        %v11819 = vld [vmem:[#allocation13 + $0x3c] sm:$0xf]
        %v11820 = vld [vmem:[#allocation13 + $0x40] sm:$0xf]
        %v11821 = vld [vmem:[#allocation13 + $0x44] sm:$0xf]
        %v11822 = vld [vmem:[#allocation13 + $0x48] sm:$0xf]
        %v11823 = vld [vmem:[#allocation13 + $0x4c] sm:$0xf]
        %v11824 = vld [vmem:[#allocation13 + $0x50] sm:$0xf]
        %v11825 = vld [vmem:[#allocation13 + $0x54] sm:$0xf]
        %v11826 = vld [vmem:[#allocation13 + $0x58] sm:$0xf]
        %v11827 = vld [vmem:[#allocation13 + $0x5c] sm:$0xf]
        %v11828 = vld [vmem:[#allocation13 + $0x60] sm:$0xf]
        %v11829 = vld [vmem:[#allocation13 + $0x64] sm:$0xf]
        %v11830 = vld [vmem:[#allocation13 + $0x68] sm:$0xf]
        %v11831 = vld [vmem:[#allocation13 + $0x6c] sm:$0xf]
        %v11832 = vld [vmem:[#allocation13 + $0x70] sm:$0xf]
        %v11833 = vld [vmem:[#allocation13 + $0x74] sm:$0xf]
        %v11834 = vld [vmem:[#allocation13 + $0x78] sm:$0xf]
        %v11835 = vld [vmem:[#allocation13 + $0x7c] sm:$0xf]
        %v11836 = vld [vmem:[#allocation13 + $0x80] sm:$0xf]
        %v11837 = vld [vmem:[#allocation13 + $0x84] sm:$0xf]
        %v11838 = vld [vmem:[#allocation13 + $0x88] sm:$0xf]
        %v11839 = vld [vmem:[#allocation13 + $0x8c] sm:$0xf]
        %v11840 = vld [vmem:[#allocation13 + $0x90] sm:$0xf]
        %v11841 = vld [vmem:[#allocation13 + $0x94] sm:$0xf]
        %v11842 = vld [vmem:[#allocation13 + $0x98] sm:$0xf]
        %v11843 = vld [vmem:[#allocation13 + $0x9c] sm:$0xf]
        %v11844 = vld [vmem:[#allocation13 + $0xa0] sm:$0xf]
        %v11845 = vld [vmem:[#allocation13 + $0xa4] sm:$0xf]
        %v11846 = vld [vmem:[#allocation13 + $0xa8] sm:$0xf]
        %v11847 = vld [vmem:[#allocation13 + $0xac] sm:$0xf]
        %v11848 = vld [vmem:[#allocation13 + $0xb0] sm:$0xf]
        %v11849 = vld [vmem:[#allocation13 + $0xb4] sm:$0xf]
        %v11850 = vld [vmem:[#allocation13 + $0xb8] sm:$0xf]
        %v11851 = vld [vmem:[#allocation13 + $0xbc] sm:$0xf]
        %v11852 = vld [vmem:[#allocation13 + $0xc0] sm:$0xf]
        %v11853 = vld [vmem:[#allocation13 + $0xc4] sm:$0xf]
        %v11854 = vld [vmem:[#allocation13 + $0xc8] sm:$0xf]
        %v11855 = vld [vmem:[#allocation13 + $0xcc] sm:$0xf]
        %v11856 = vld [vmem:[#allocation13 + $0xd0] sm:$0xf]
        %v11857 = vld [vmem:[#allocation13 + $0xd4] sm:$0xf]
        %v11858 = vld [vmem:[#allocation13 + $0xd8] sm:$0xf]
        %v11859 = vld [vmem:[#allocation13 + $0xdc] sm:$0xf]
        %v11860 = vld [vmem:[#allocation13 + $0xe0] sm:$0xf]
        %v11861 = vld [vmem:[#allocation13 + $0xe4] sm:$0xf]
        %v11862 = vld [vmem:[#allocation13 + $0xe8] sm:$0xf]
        %v11863 = vld [vmem:[#allocation13 + $0xec] sm:$0xf]
        %v11864 = vld [vmem:[#allocation13 + $0xf0] sm:$0xf]
        %v11865 = vld [vmem:[#allocation13 + $0xf4] sm:$0xf]
        %v11866 = vld [vmem:[#allocation13 + $0xf8] sm:$0xf]
        %v11867 = vld [vmem:[#allocation13 + $0xfc] sm:$0xf]
        %v11868 = vld [vmem:[#allocation14] sm:$0x1]
        %v11870 = vperm.slane %v11868, 0
        %v11936 = vunpack.c.l.b16 %v11804
        %v11937 = vunpack.c.l.b16 %v11805
        %v11938 = vunpack.c.l.b16 %v11806
        %v11939 = vunpack.c.l.b16 %v11807
        %v11940 = vunpack.c.l.b16 %v11808
        %v11941 = vunpack.c.l.b16 %v11809
        %v11942 = vunpack.c.l.b16 %v11810
        %v11943 = vunpack.c.l.b16 %v11811
        %v11944 = vunpack.c.l.b16 %v11812
        %v11945 = vunpack.c.l.b16 %v11813
        %v11946 = vunpack.c.l.b16 %v11814
        %v11947 = vunpack.c.l.b16 %v11815
        %v11948 = vunpack.c.l.b16 %v11816
        %v11949 = vunpack.c.l.b16 %v11817
        %v11950 = vunpack.c.l.b16 %v11818
        %v11951 = vunpack.c.l.b16 %v11819
        %v11952 = vunpack.c.l.b16 %v11820
        %v11953 = vunpack.c.l.b16 %v11821
        %v11954 = vunpack.c.l.b16 %v11822
        %v11955 = vunpack.c.l.b16 %v11823
        %v11956 = vunpack.c.l.b16 %v11824
        %v11957 = vunpack.c.l.b16 %v11825
        %v11958 = vunpack.c.l.b16 %v11826
        %v11959 = vunpack.c.l.b16 %v11827
        %v11960 = vunpack.c.l.b16 %v11828
        %v11961 = vunpack.c.l.b16 %v11829
        %v11962 = vunpack.c.l.b16 %v11830
        %v11963 = vunpack.c.l.b16 %v11831
        %v11964 = vunpack.c.l.b16 %v11832
        %v11965 = vunpack.c.l.b16 %v11833
        %v11966 = vunpack.c.l.b16 %v11834
        %v11967 = vunpack.c.l.b16 %v11835
        %v11968 = vunpack.c.l.b16 %v11836
        %v11969 = vunpack.c.l.b16 %v11837
        %v11970 = vunpack.c.l.b16 %v11838
        %v11971 = vunpack.c.l.b16 %v11839
        %v11972 = vunpack.c.l.b16 %v11840
        %v11973 = vunpack.c.l.b16 %v11841
        %v11974 = vunpack.c.l.b16 %v11842
        %v11975 = vunpack.c.l.b16 %v11843
        %v11976 = vunpack.c.l.b16 %v11844
        %v11977 = vunpack.c.l.b16 %v11845
        %v11978 = vunpack.c.l.b16 %v11846
        %v11979 = vunpack.c.l.b16 %v11847
        %v11980 = vunpack.c.l.b16 %v11848
        %v11981 = vunpack.c.l.b16 %v11849
        %v11982 = vunpack.c.l.b16 %v11850
        %v11983 = vunpack.c.l.b16 %v11851
        %v11984 = vunpack.c.l.b16 %v11852
        %v11985 = vunpack.c.l.b16 %v11853
        %v11986 = vunpack.c.l.b16 %v11854
        %v11987 = vunpack.c.l.b16 %v11855
        %v11988 = vunpack.c.l.b16 %v11856
        %v11989 = vunpack.c.l.b16 %v11857
        %v11990 = vunpack.c.l.b16 %v11858
        %v11991 = vunpack.c.l.b16 %v11859
        %v11992 = vunpack.c.l.b16 %v11860
        %v11993 = vunpack.c.l.b16 %v11861
        %v11994 = vunpack.c.l.b16 %v11862
        %v11995 = vunpack.c.l.b16 %v11863
        %v11996 = vunpack.c.l.b16 %v11864
        %v11997 = vunpack.c.l.b16 %v11865
        %v11998 = vunpack.c.l.b16 %v11866
        %v11999 = vunpack.c.l.b16 %v11867
        %v12000 = vpack.c.b16 %v11937, %v11936
        %v12001 = vpack.c.b16 %v11939, %v11938
        %v12002 = vpack.c.b16 %v11941, %v11940
        %v12003 = vpack.c.b16 %v11943, %v11942
        %v12004 = vpack.c.b16 %v11945, %v11944
        %v12005 = vpack.c.b16 %v11947, %v11946
        %v12006 = vpack.c.b16 %v11949, %v11948
        %v12007 = vpack.c.b16 %v11951, %v11950
        %v12008 = vpack.c.b16 %v11953, %v11952
        %v12009 = vpack.c.b16 %v11955, %v11954
        %v12010 = vpack.c.b16 %v11957, %v11956
        %v12011 = vpack.c.b16 %v11959, %v11958
        %v12012 = vpack.c.b16 %v11961, %v11960
        %v12013 = vpack.c.b16 %v11963, %v11962
        %v12014 = vpack.c.b16 %v11965, %v11964
        %v12015 = vpack.c.b16 %v11967, %v11966
        %v12016 = vpack.c.b16 %v11969, %v11968
        %v12017 = vpack.c.b16 %v11971, %v11970
        %v12018 = vpack.c.b16 %v11973, %v11972
        %v12019 = vpack.c.b16 %v11975, %v11974
        %v12020 = vpack.c.b16 %v11977, %v11976
        %v12021 = vpack.c.b16 %v11979, %v11978
        %v12022 = vpack.c.b16 %v11981, %v11980
        %v12023 = vpack.c.b16 %v11983, %v11982
        %v12024 = vpack.c.b16 %v11985, %v11984
        %v12025 = vpack.c.b16 %v11987, %v11986
        %v12026 = vpack.c.b16 %v11989, %v11988
        %v12027 = vpack.c.b16 %v11991, %v11990
        %v12028 = vpack.c.b16 %v11993, %v11992
        %v12029 = vpack.c.b16 %v11995, %v11994
        %v12030 = vpack.c.b16 %v11997, %v11996
        %v12031 = vpack.c.b16 %v11999, %v11998
        %12064 = vmatpush.bf16.msra.mxu0 %v12007
        %12065 = vmatpush.bf16.msra.mxu0 %v12006
        %12066 = vmatpush.bf16.msra.mxu0 %v12005
        %12067 = vmatpush.bf16.msra.mxu0 %v12004
        %12068 = vmatpush.bf16.msra.mxu0 %v12003
        %12069 = vmatpush.bf16.msra.mxu0 %v12002
        %12070 = vmatpush.bf16.msra.mxu0 %v12001
        %12071 = vmatpush.bf16.msra.mxu0 %v12000
        %12072 = vmatmul.bf16.gmra.mxu0 %v11800
        %v12073 = vpop.f32.mrf.mxu0
        %v12074 = vadd.f32 %v11870, %v12073
        %v12075 = vpop.f32.mrf.mxu0
        %12076 = vdwg.mxu0
        %12077 = vmatpush.bf16.msra.mxu0 %v12015
        %12078 = vmatpush.bf16.msra.mxu0 %v12014
        %12079 = vmatpush.bf16.msra.mxu0 %v12013
        %12080 = vmatpush.bf16.msra.mxu0 %v12012
        %12081 = vmatpush.bf16.msra.mxu0 %v12011
        %12082 = vmatpush.bf16.msra.mxu0 %v12010
        %12083 = vmatpush.bf16.msra.mxu0 %v12009
        %12084 = vmatpush.bf16.msra.mxu0 %v12008
        %12085 = vmatmul.bf16.gmra.mxu0 %v11801
        %v12086 = vpop.f32.mrf.mxu0
        %v12087 = vadd.f32 %v12074, %v12086
        %v12088 = vpop.f32.mrf.mxu0
        %12089 = vdwg.mxu0
        %12090 = vmatpush.bf16.msra.mxu0 %v12023
        %12091 = vmatpush.bf16.msra.mxu0 %v12022
        %12092 = vmatpush.bf16.msra.mxu0 %v12021
        %12093 = vmatpush.bf16.msra.mxu0 %v12020
        %12094 = vmatpush.bf16.msra.mxu0 %v12019
        %12095 = vmatpush.bf16.msra.mxu0 %v12018
        %12096 = vmatpush.bf16.msra.mxu0 %v12017
        %12097 = vmatpush.bf16.msra.mxu0 %v12016
        %12098 = vmatmul.bf16.gmra.mxu0 %v11802
        %v12099 = vpop.f32.mrf.mxu0
        %v12100 = vadd.f32 %v12087, %v12099
        %v12101 = vpop.f32.mrf.mxu0
        %12102 = vdwg.mxu0
        %12103 = vmatpush.bf16.msra.mxu0 %v12031
        %12104 = vmatpush.bf16.msra.mxu0 %v12030
        %12105 = vmatpush.bf16.msra.mxu0 %v12029
        %12106 = vmatpush.bf16.msra.mxu0 %v12028
        %12107 = vmatpush.bf16.msra.mxu0 %v12027
        %12108 = vmatpush.bf16.msra.mxu0 %v12026
        %12109 = vmatpush.bf16.msra.mxu0 %v12025
        %12110 = vmatpush.bf16.msra.mxu0 %v12024
        %12111 = vmatmul.bf16.gmra.mxu0 %v11803
        %v12112 = vpop.f32.mrf.mxu0
        %v12113 = vadd.f32 %v12100, %v12112
        %v12114 = vpop.f32.mrf.mxu0
        %12115 = vdwg.mxu0
        %12116 = vmax.xlane.f32.xlu0 %v12113
        %v12117 = vpop.xlane.xlu0 %12116
        %v12118 = vsub.f32 %v12113, %v12117
        %v12119 = vmul.f32 %v12118, 1.442695
        %v12120 = vpow.pop %v12119
        %12121 = vadd.xlane.f32.xlu0 %v12120
        %v12122 = vpop.xlane.xlu0 %12121
        %v12123 = vlog2.pop %v12122
        %v12124 = vmul.f32 %v12123, 0.6931472
        %v12125 = vsub.f32 %v12118, %v12124
        %12126 = vst [vmem:[%s453] sm:$0xff] %v12125
        %s12127 = sand.u32 %s230, 1
        %s12128 = scalar_lea.sflag [#allocation4], %s12127
        %s12129 = sand.u32 %s230, 1
        %s12130 = smul.addr %s12129, 8
        %s12131 = scalar_lea.vmem [#allocation16], %s12130
        // Predicated region
        $region89: #{net_forward.1} parent=55 // pred_check
          %p12132 = pneg %p240
        $region90: #{net_forward.1} parent=55 // pred_check_branch
          %12134 = sbr.rel (%p12132) target = $region92
        $region91: #{net_forward.1} parent=55 // pred_region
          %12136 = vsyncadd %s12128, 0
          %s12137 = smul.addr %s28, 8
          %s12138 = scalar_lea.hbm %s9, %s12137
          %s12140 = sshll.u32 %s12131, 4
          %s12141 = int_to_ptr.vmem [resolvable:$true] %s12140
          %s12142 = sshll.u32 %s12138, 4
          %s12143 = int_to_ptr.hbm [resolvable:$true] %s12142
          %12145 = dma.vmem_to_hbm [thread:$0]  %s12141, 128, %s12143, %s12128
        $region92: #{net_forward.1} parent=55 // pred_fallthru
          _
      $region56: #{net_forward.1} parent=5 // pred_fallthru
        _
      %p12146 = scmp.le.s32.totalorder 2, %s23
      // Predicated region
      $region93: #{net_forward.1} parent=5 // pred_check
        %p12147 = pneg %p12146
      $region94: #{net_forward.1} parent=5 // pred_check_branch
        %12149 = sbr.rel (%p12147) target = $region96
      $region95: #{net_forward.1} parent=5 // pred_region
        %s12150 = ssub.s32 %s23, 2
        // Predicated region
        $region97: #{net_forward.1} parent=95 // pred_check
          %p12151 = pneg %p246
        $region98: #{net_forward.1} parent=95 // pred_check_branch
          %12153 = sbr.rel (%p12151) target = $region100
        $region99: #{net_forward.1} parent=95 // pred_region
          %s12154 = sand.u32 %s231, 1
          %s12155 = scalar_lea.sflag [#allocation4], %s12154
          %s12156 = sand.u32 %s231, 1
          %s12157 = smul.addr %s12156, 8
          %s12158 = scalar_lea.vmem [#allocation16], %s12157
          %12160 = dma.done %s12155, 128
        $region100: #{net_forward.1} parent=95 // pred_fallthru
          _
      $region96: #{net_forward.1} parent=5 // pred_fallthru
        _
    $region6: #{net_forward.1} parent=1 // loop_footer
      %s27 = sadd.s32 1, %s23
    $region7: #{net_forward.1} parent=1 // loop_footer_branch
      %22 = sbr.rel target = $region3
    $region8: #{net_forward.1} parent=1 // loop_exit
      _
    %12161 = vsyncpa [#allocation3], 1
    %s12162 = scalar_lea.sflag [#allocation3], 1
    %12163 = vsyncpa %s12162, 1
    %12164 = vsyncpa [#allocation6], 1
    %12165 = vsyncpa [#allocation9], 1
    %12166 = vsyncpa [#allocation12], 1
    %12167 = vsyncpa [#allocation15], 1
    %12168 = vsyncpa [#allocation4], 1
    %s12169 = scalar_lea.sflag [#allocation4], 1
    %12170 = vsyncpa %s12169, 1

</llo_original>
